<compile_context>
chip_gen: v7x
topology: tpu7x:2x2x1
jax: 0.10.0
libtpu: 0.0.40
codegen_flags: <defaults>
</compile_context>

<pallas_src>
import math
import numpy as np
import jax
import jax.numpy as jnp
from jax.experimental import pallas as pl
from jax.experimental.pallas import tpu as pltpu

# ----------------------------- model constants ------------------------------
LATENT = 128
NOISE = 128
IMG_FEAT_CHANNEL = 256
S_IN = int(IMG_FEAT_CHANNEL * 2.25)    # 576 = sentence_receiver image_feat_channel
W_IN = int(IMG_FEAT_CHANNEL * 2.0625)  # 528 = word_receiver image_feat_channel
S_PAD = 640                            # 576 -> next multiple of 128
W_PAD = 640                            # 528 -> next multiple of 128
BN_EPS = 1e-5

# TILE_B: multiple of 16 (bf16 sublane packing); sized so resident weights
# (~1.1 MB) + double-buffered (TILE_B, 640) bf16 input tiles + f32
# intermediates stay far inside the 32 MiB scoped-VMEM default and v7x's
# 64 MiB physical VMEM.
TILE_B_MAX = 256


def _round_up(x, m):
    return ((x + m - 1) // m) * m


# --------------------------------- kernel -----------------------------------
def _make_kernel(b_real, tile_b):
    """Builds the staged kernel; b_real / tile_b are static Python ints."""
    inv_n = 1.0 / float(b_real)

    def kernel(
        # activations (bf16, batch padded to tile_b multiple, K padded to 640)
        noise_ref, img_s_ref, img_w_ref,
        # text_values (BN affine folded into w_tv1/b_tv1)
        w_tv0_ref, b_tv0_ref, w_tv1_ref, b_tv1_ref,
        # receivers: fused [channel_weights | values] projections
        w_s_ref, b_s_ref, w_w_ref, b_w_ref,
        # final (BN affines folded into w_f1/w_f2)
        w_f1_ref, bb_f1_ref, w_f2_ref, bb_f2_ref, w_f3_ref, bb_f3_ref,
        # output
        out_ref,
        # persistent scratch: rows 0/1 BN_tv sum/sumsq, 2/3 BN_f1, 4/5 BN_f2
        stats_ref,
    ):
        f32 = jnp.float32
        bf16 = jnp.bfloat16
        stage = pl.program_id(0)
        tile = pl.program_id(1)

        # Mask of real (non-padded) batch rows in this tile.
        row = tile * tile_b + jax.lax.broadcasted_iota(jnp.int32, (tile_b, 1), 0)
        mask = (row < b_real).astype(f32)

        def linear(x, w_ref, b_ref):
            # bf16 operands into the MXU, f32 accumulation, f32 bias add.
            return jnp.dot(x.astype(bf16), w_ref[...],
                           preferred_element_type=f32) + b_ref[...]

        def mish(x):
            # x * tanh(softplus(x)) == x * n / (n + 2), n = e^x (e^x + 2).
            # Single EUP exp + EUP reciprocal per element.
            e = jnp.exp(jnp.minimum(x, 20.0))
            n = e * (e + 2.0)
            return x * n * pl.reciprocal(n + 2.0, approx=True)

        def softmax_last(x):
            m = jnp.max(x, axis=-1, keepdims=True)
            e = jnp.exp(x - m)
            return e * pl.reciprocal(jnp.sum(e, axis=-1, keepdims=True), approx=True)

        def receiver(img_ref, text_feat, w_ref, b_ref):
            # SWRecevier.forward with both projections fused into one matmul.
            proj = linear(img_ref[...], w_ref, b_ref)            # (tile_b, 384)
            weights = softmax_last(proj[:, : 2 * LATENT])
            w_img = weights[:, :LATENT] + 0.5
            w_txt = weights[:, LATENT: 2 * LATENT]
            return w_img * proj[:, 2 * LATENT:] + w_txt * text_feat

        def bn_accumulate(x, r):
            xm = x * mask
            stats_ref[r:r + 1, :] = stats_ref[r:r + 1, :] + jnp.sum(
                xm, axis=0, keepdims=True)
            stats_ref[r + 1:r + 2, :] = stats_ref[r + 1:r + 2, :] + jnp.sum(
                xm * x, axis=0, keepdims=True)

        def bn_normalize(x, r):
            mean = stats_ref[r:r + 1, :] * inv_n
            var = jnp.maximum(stats_ref[r + 1:r + 2, :] * inv_n - mean * mean, 0.0)
            return (x - mean) * jax.lax.rsqrt(var + BN_EPS)

        # --- recompute chain (gamma/beta already folded into next Linear) ---
        def compute_t1():
            return mish(linear(noise_ref[...], w_tv0_ref, b_tv0_ref))

        def compute_x3():
            t = linear(bn_normalize(compute_t1(), 0), w_tv1_ref, b_tv1_ref)
            t = receiver(img_s_ref, t, w_s_ref, b_s_ref)
            t = receiver(img_w_ref, t, w_w_ref, b_w_ref)
            return mish(t)

        def compute_x5():
            x = linear(bn_normalize(compute_x3(), 2), w_f1_ref, bb_f1_ref)
            return mish(x)

        def compute_out():
            x = linear(bn_normalize(compute_x5(), 4), w_f2_ref, bb_f2_ref)
            x = mish(x)
            return linear(x, w_f3_ref, bb_f3_ref)

        @pl.when((stage == 0) & (tile == 0))
        def _init():
            stats_ref[...] = jnp.zeros_like(stats_ref)

        @pl.when(stage == 0)   # stats for text_values' BatchNorm1d
        def _stage0():
            bn_accumulate(compute_t1(), 0)

        @pl.when(stage == 1)   # stats for final[1] BatchNorm1d
        def _stage1():
            bn_accumulate(compute_x3(), 2)

        @pl.when(stage == 2)   # stats for final[4] BatchNorm1d
        def _stage2():
            bn_accumulate(compute_x5(), 4)

        @pl.when(stage == 3)   # full forward with all whole-batch stats known
        def _stage3():
            out_ref[...] = compute_out().astype(out_ref.dtype)

    return kernel


# ------------------------------- glue / setup -------------------------------
def _spectral_normalize(w):
    # spectral_norm at inference time: W / sigma_max(W). Exact SVD on host.
    # TODO(synk): PyTorch's spectral_norm uses a single power iteration; exact
    # SVD differs slightly from a checkpointed u/v estimate.
    sigma = float(np.linalg.svd(np.asarray(w), compute_uv=False)[0])
    return w / sigma


def _linear_params(key, fan_in, fan_out, spectral=True):
    kw, kb = jax.random.split(key)
    bound = 1.0 / math.sqrt(fan_in)
    w = jax.random.uniform(kw, (fan_in, fan_out), jnp.float32, -bound, bound)
    b = jax.random.uniform(kb, (1, fan_out), jnp.float32, -bound, bound)
    if spectral:
        w = _spectral_normalize(w)
    return w, b


def _bn_params(n):
    # PyTorch BatchNorm1d default init: gamma = 1, beta = 0.
    return jnp.ones((1, n), jnp.float32), jnp.zeros((1, n), jnp.float32)


def init_params(key):
    """Logical (PyTorch-layout) f32 parameters."""
    keys = jax.random.split(key, 9)
    # text_values
    w_tv0, b_tv0 = _linear_params(keys[0], NOISE, LATENT)
    g_tv, be_tv = _bn_params(LATENT)
    w_tv1, b_tv1 = _linear_params(keys[1], LATENT, LATENT)
    # sentence_receiver
    w_sv, b_sv = _linear_params(keys[2], S_IN, LATENT)
    w_scw, b_scw = _linear_params(keys[3], S_IN, 2 * LATENT)
    # word_receiver
    w_wv, b_wv = _linear_params(keys[4], W_IN, LATENT)
    w_wcw, b_wcw = _linear_params(keys[5], W_IN, 2 * LATENT)
    # final
    g_f1, be_f1 = _bn_params(LATENT)
    w_f1, bb_f1 = _linear_params(keys[6], LATENT, LATENT)
    g_f2, be_f2 = _bn_params(LATENT)
    w_f2, bb_f2 = _linear_params(keys[7], LATENT, LATENT)
    w_f3, bb_f3 = _linear_params(keys[8], LATENT, LATENT)
    return (
        w_tv0, b_tv0, g_tv, be_tv, w_tv1, b_tv1,
        w_sv, b_sv, w_scw, b_scw,
        w_wv, b_wv, w_wcw, b_wcw,
        g_f1, be_f1, w_f1, bb_f1,
        g_f2, be_f2, w_f2, bb_f2,
        w_f3, bb_f3,
    )


def prepare_params(params):
    """Pack logical params into kernel-ready form:
      - BN affine folded into the following Linear (in f32, before bf16 cast),
      - bf16 weights, f32 biases,
      - fused & 640-padded [channel_weights | values] receiver projections."""
    (w_tv0, b_tv0, g_tv, be_tv, w_tv1, b_tv1,
     w_sv, b_sv, w_scw, b_scw,
     w_wv, b_wv, w_wcw, b_wcw,
     g_f1, be_f1, w_f1, bb_f1,
     g_f2, be_f2, w_f2, bb_f2,
     w_f3, bb_f3) = params

    bf = lambda w: w.astype(jnp.bfloat16)

    def fold_bn(gamma, beta, w, b):
        # (xn*gamma + beta) @ W + b == xn @ (diag(gamma) W) + (beta @ W + b)
        return w * gamma.reshape(-1, 1), beta @ w + b

    w_tv1_f, b_tv1_f = fold_bn(g_tv, be_tv, w_tv1, b_tv1)
    w_f1_f, bb_f1_f = fold_bn(g_f1, be_f1, w_f1, bb_f1)
    w_f2_f, bb_f2_f = fold_bn(g_f2, be_f2, w_f2, bb_f2)

    def pad_rows(w, target):
        return jnp.pad(w, ((0, target - w.shape[0]), (0, 0)))

    w_s_fused = bf(jnp.concatenate(
        [pad_rows(w_scw, S_PAD), pad_rows(w_sv, S_PAD)], axis=1))   # (640, 384)
    b_s_fused = jnp.concatenate([b_scw, b_sv], axis=1)              # (1, 384)
    w_w_fused = bf(jnp.concatenate(
        [pad_rows(w_wcw, W_PAD), pad_rows(w_wv, W_PAD)], axis=1))   # (640, 384)
    b_w_fused = jnp.concatenate([b_wcw, b_wv], axis=1)              # (1, 384)

    return (
        bf(w_tv0), b_tv0, bf(w_tv1_f), b_tv1_f,
        w_s_fused, b_s_fused, w_w_fused, b_w_fused,
        bf(w_f1_f), bb_f1_f, bf(w_f2_f), bb_f2_f,
        bf(w_f3), bb_f3,
    )


def _sentence_read_img_feat(x, kernel_size):
    # TODO(synk): SentenceAttention class was not provided in the source; its
    # read_img_feat is approximated as a global spatial mean per channel.
    del kernel_size
    return jnp.mean(x, axis=(2, 3))


def _word_read_img_feat(x, kernel_size):
    # TODO(synk): WordAttention class was not provided in the source; its
    # read_img_feat is approximated as spatial avg-pool + channel-group mean
    # (group = kernel_size // 4) so the concatenated width matches 528.
    b, c, _, _ = x.shape
    pooled = jnp.mean(x, axis=(2, 3))
    group = max(kernel_size // 4, 1)
    return jnp.mean(pooled.reshape(b, c // group, group), axis=-1)


def text_from_image_g(kernel_params, noise, img_feat_4, img_feat_16):
    b = noise.shape[0]
    # read_img_feat (glue, approximated -- see TODOs above)
    img_feat_s4 = _sentence_read_img_feat(img_feat_4, 4)
    img_feat_s16 = _sentence_read_img_feat(img_feat_16, 16)
    img_feat_w4 = _word_read_img_feat(img_feat_4, 4)
    img_feat_w16 = _word_read_img_feat(img_feat_16, 16)
    img_s = jnp.concatenate([img_feat_s4, img_feat_s16], axis=1)  # (B, 576)
    img_w = jnp.concatenate([img_feat_w4, img_feat_w16], axis=1)  # (B, 528)
    assert img_s.shape == (b, S_IN) and img_w.shape == (b, W_IN)

    tile_b = min(TILE_B_MAX, _round_up(b, 16))
    b_pad = _round_up(b, tile_b)
    n_tiles = b_pad // tile_b

    # Pad batch to a sublane multiple (full vreg occupancy, unmasked stores)
    # and K to a lane multiple (full-width MXU K tiles); XLA fuses these pads
    # + bf16 casts into the pooling/concat producer fusion.
    noise_p = jnp.pad(noise, ((0, b_pad - b), (0, 0))).astype(jnp.bfloat16)
    img_s_p = jnp.pad(img_s, ((0, b_pad - b), (0, S_PAD - S_IN))).astype(jnp.bfloat16)
    img_w_p = jnp.pad(img_w, ((0, b_pad - b), (0, W_PAD - W_IN))).astype(jnp.bfloat16)

    act_specs = [
        pl.BlockSpec((tile_b, NOISE), lambda s, t: (t, 0)),
        pl.BlockSpec((tile_b, S_PAD), lambda s, t: (t, 0)),
        pl.BlockSpec((tile_b, W_PAD), lambda s, t: (t, 0)),
    ]
    # Parameters: full-extent blocks with a constant index_map -> DMA'd once,
    # VMEM-resident across all grid steps.
    param_specs = [pl.BlockSpec(p.shape, lambda s, t: (0, 0)) for p in kernel_params]

    # Advisory cost hint (staged recompute ~2.5x a single forward pass).
    flops_per_sample = 2 * (5 * LATENT * LATENT + 2 * S_PAD * 3 * LATENT)
    cost = pl.CostEstimate(
        flops=int(2.5 * flops_per_sample * b_pad),
        transcendentals=int(2.5 * (4 * LATENT + 2 * 2 * LATENT) * b_pad),
        bytes_accessed=int(4 * b_pad * 2 * (NOISE + S_PAD + W_PAD)
                           + 4 * b_pad * 4 * LATENT),
    )

    out = pl.pallas_call(
        _make_kernel(b, tile_b),
        out_shape=jax.ShapeDtypeStruct((b_pad, LATENT), jnp.float32),
        grid_spec=pltpu.PrefetchScalarGridSpec(
            num_scalar_prefetch=0,
            grid=(4, n_tiles),                 # (BN stage, batch tile)
            in_specs=act_specs + param_specs,
            out_specs=pl.BlockSpec((tile_b, LATENT), lambda s, t: (t, 0)),
            scratch_shapes=[pltpu.VMEM((8, LATENT), jnp.float32)],
        ),
        compiler_params=pltpu.CompilerParams(
            # Whole-batch BN stats create a cross-tile dependency -> sequential.
            # TODO(synk): cross-core stats reduction (or eval-mode running
            # stats) would allow ("arbitrary", "parallel") for v7x megacore.
            dimension_semantics=("arbitrary", "arbitrary"),
            vmem_limit_bytes=32 * 1024 * 1024,
        ),
        cost_estimate=cost,
    )(noise_p, img_s_p, img_w_p, *kernel_params)

    return out[:b]


# ---------------------------------- main -------------------------------------
if __name__ == "__main__":
    key = jax.random.PRNGKey(0)
    k_noise, k_f4, k_f16, k_params = jax.random.split(key, 4)

    B = 2
    # img_feat_4 carries 2*img_feat_channel channels at 4x4, img_feat_16 carries
    # img_feat_channel // 4 channels at 16x16 so the concatenated pooled
    # features match the receiver widths (576 and 528).
    noise = jax.random.normal(k_noise, (B, NOISE), jnp.float32)
    img_feat_4 = jax.random.normal(k_f4, (B, 2 * IMG_FEAT_CHANNEL, 4, 4), jnp.float32)
    img_feat_16 = jax.random.normal(k_f16, (B, IMG_FEAT_CHANNEL // 4, 16, 16), jnp.float32)

    params = init_params(k_params)
    kernel_params = prepare_params(params)

    fwd = jax.jit(text_from_image_g)
    out = fwd(kernel_params, noise, img_feat_4, img_feat_16)
    out = jax.block_until_ready(out)

    assert out.shape == (B, LATENT), out.shape
    assert bool(jnp.all(jnp.isfinite(out)))
    print("KERNEL_OK")
</pallas_src>

<mosaic_0001>
module attributes {stable_mosaic.version = 11 : i64} {
  func.func @kernel(%arg0: i32, %arg1: i32, %arg2: memref<16x128xbf16, #tpu.memory_space<vmem>>, %arg3: memref<16x640xbf16, #tpu.memory_space<vmem>>, %arg4: memref<16x640xbf16, #tpu.memory_space<vmem>>, %arg5: memref<128x128xbf16, #tpu.memory_space<vmem>>, %arg6: memref<1x128xf32, #tpu.memory_space<vmem>>, %arg7: memref<128x128xbf16, #tpu.memory_space<vmem>>, %arg8: memref<1x128xf32, #tpu.memory_space<vmem>>, %arg9: memref<640x384xbf16, #tpu.memory_space<vmem>>, %arg10: memref<1x384xf32, #tpu.memory_space<vmem>>, %arg11: memref<640x384xbf16, #tpu.memory_space<vmem>>, %arg12: memref<1x384xf32, #tpu.memory_space<vmem>>, %arg13: memref<128x128xbf16, #tpu.memory_space<vmem>>, %arg14: memref<1x128xf32, #tpu.memory_space<vmem>>, %arg15: memref<128x128xbf16, #tpu.memory_space<vmem>>, %arg16: memref<1x128xf32, #tpu.memory_space<vmem>>, %arg17: memref<128x128xbf16, #tpu.memory_space<vmem>>, %arg18: memref<1x128xf32, #tpu.memory_space<vmem>>, %arg19: memref<16x128xf32, #tpu.memory_space<vmem>>, %arg20: memref<8x128xf32, #tpu.memory_space<vmem>>) attributes {dimension_semantics = [#tpu.dimension_semantics<arbitrary>, #tpu.dimension_semantics<arbitrary>], iteration_bounds = array<i64: 4, 1>, scalar_prefetch = 0 : i64, scratch_operands = 1 : i64, tpu.core_type = #tpu.core_type<tc>, window_params = [{transform_indices = @transform_0, window_bounds = array<i64: 16, 128>}, {transform_indices = @transform_1, window_bounds = array<i64: 16, 640>}, {transform_indices = @transform_2, window_bounds = array<i64: 16, 640>}, {pipeline_mode = #tpu.pipeline_mode<synchronous>, transform_indices = @transform_3, window_bounds = array<i64: 128, 128>}, {pipeline_mode = #tpu.pipeline_mode<synchronous>, transform_indices = @transform_4, window_bounds = array<i64: 1, 128>}, {pipeline_mode = #tpu.pipeline_mode<synchronous>, transform_indices = @transform_5, window_bounds = array<i64: 128, 128>}, {pipeline_mode = #tpu.pipeline_mode<synchronous>, transform_indices = @transform_6, window_bounds = array<i64: 1, 128>}, {pipeline_mode = #tpu.pipeline_mode<synchronous>, transform_indices = @transform_7, window_bounds = array<i64: 640, 384>}, {pipeline_mode = #tpu.pipeline_mode<synchronous>, transform_indices = @transform_8, window_bounds = array<i64: 1, 384>}, {pipeline_mode = #tpu.pipeline_mode<synchronous>, transform_indices = @transform_9, window_bounds = array<i64: 640, 384>}, {pipeline_mode = #tpu.pipeline_mode<synchronous>, transform_indices = @transform_10, window_bounds = array<i64: 1, 384>}, {pipeline_mode = #tpu.pipeline_mode<synchronous>, transform_indices = @transform_11, window_bounds = array<i64: 128, 128>}, {pipeline_mode = #tpu.pipeline_mode<synchronous>, transform_indices = @transform_12, window_bounds = array<i64: 1, 128>}, {pipeline_mode = #tpu.pipeline_mode<synchronous>, transform_indices = @transform_13, window_bounds = array<i64: 128, 128>}, {pipeline_mode = #tpu.pipeline_mode<synchronous>, transform_indices = @transform_14, window_bounds = array<i64: 1, 128>}, {pipeline_mode = #tpu.pipeline_mode<synchronous>, transform_indices = @transform_15, window_bounds = array<i64: 128, 128>}, {pipeline_mode = #tpu.pipeline_mode<synchronous>, transform_indices = @transform_16, window_bounds = array<i64: 1, 128>}, {transform_indices = @transform_17, window_bounds = array<i64: 16, 128>}]} {
    %c16_i32 = arith.constant 16 : i32
    %0 = arith.muli %arg1, %c16_i32 : i32
    %1 = tpu.iota {dimensions = array<i32: 0>} : vector<16x1xi32>
    %2 = vector.broadcast %0 : i32 to vector<16x1xi32>
    %3 = arith.addi %2, %1 : vector<16x1xi32>
    %c2_i32 = arith.constant 2 : i32
    %4 = vector.broadcast %c2_i32 : i32 to vector<16x1xi32>
    %5 = arith.cmpi slt, %3, %4 : vector<16x1xi32>
    %6 = arith.extui %5 : vector<16x1xi1> to vector<16x1xi32>
    %7 = arith.sitofp %6 : vector<16x1xi32> to vector<16x1xf32>
    %c0_i32 = arith.constant 0 : i32
    %8 = arith.cmpi eq, %arg0, %c0_i32 : i32
    %c0_i32_0 = arith.constant 0 : i32
    %9 = arith.cmpi eq, %arg1, %c0_i32_0 : i32
    %10 = arith.andi %8, %9 : i1
    %11 = arith.extui %10 : i1 to i32
    %c0_i32_1 = arith.constant 0 : i32
    %12 = arith.cmpi ne, %11, %c0_i32_1 : i32
    scf.if %12 {
      %cst = arith.constant 0.000000e+00 : f32
      %25 = vector.broadcast %cst : f32 to vector<8x128xf32>
      %c0 = arith.constant 0 : index
      %c0_8 = arith.constant 0 : index
      %26 = vector.load %arg20[%c0, %c0_8] : memref<8x128xf32, #tpu.memory_space<vmem>>, vector<8x128xf32>
      tpu.vector_store %arg20[%c0, %c0_8], %25 {strides = array<i32>} : memref<8x128xf32, #tpu.memory_space<vmem>>, vector<8x128xf32>,
    } else {
    }
    %c0_i32_2 = arith.constant 0 : i32
    %13 = arith.cmpi eq, %arg0, %c0_i32_2 : i32
    %14 = arith.extui %13 : i1 to i32
    %c0_i32_3 = arith.constant 0 : i32
    %15 = arith.cmpi ne, %14, %c0_i32_3 : i32
    scf.if %15 {
      %c0 = arith.constant 0 : index
      %c0_8 = arith.constant 0 : index
      %25 = vector.load %arg2[%c0, %c0_8] : memref<16x128xbf16, #tpu.memory_space<vmem>>, vector<16x128xbf16>
      %c0_9 = arith.constant 0 : index
      %c0_10 = arith.constant 0 : index
      %26 = vector.load %arg5[%c0_9, %c0_10] : memref<128x128xbf16, #tpu.memory_space<vmem>>, vector<128x128xbf16>
      %cst = arith.constant dense<0.000000e+00> : vector<16x128xf32>
      %27 = tpu.matmul %25, %26, %cst {dimension_numbers = #tpu.dot_dimension_numbers<[1], [0], [0], [1], [0, 0, 1, 1], [], []>} : vector<16x128xbf16>, vector<128x128xbf16>, vector<16x128xf32> -> vector<16x128xf32>
      %c0_11 = arith.constant 0 : index
      %c0_12 = arith.constant 0 : index
      %28 = vector.load %arg6[%c0_11, %c0_12] : memref<1x128xf32, #tpu.memory_space<vmem>>, vector<1x128xf32>
      %29 = vector.broadcast %28 : vector<1x128xf32> to vector<16x128xf32>
      %30 = arith.addf %27, %29 : vector<16x128xf32>
      %cst_13 = arith.constant 2.000000e+01 : f32
      %31 = vector.broadcast %cst_13 : f32 to vector<16x128xf32>
      %32 = arith.minimumf %30, %31 : vector<16x128xf32>
      %33 = math.exp %32 : vector<16x128xf32>
      %cst_14 = arith.constant 2.000000e+00 : f32
      %34 = vector.broadcast %cst_14 : f32 to vector<16x128xf32>
      %35 = arith.addf %33, %34 : vector<16x128xf32>
      %36 = arith.mulf %33, %35 : vector<16x128xf32>
      %37 = arith.mulf %30, %36 : vector<16x128xf32>
      %cst_15 = arith.constant 2.000000e+00 : f32
      %38 = vector.broadcast %cst_15 : f32 to vector<16x128xf32>
      %39 = arith.addf %36, %38 : vector<16x128xf32>
      %40 = tpu.reciprocal %39 {approx = true} : vector<16x128xf32> -> vector<16x128xf32>
      %41 = arith.mulf %37, %40 : vector<16x128xf32>
      %42 = vector.broadcast %7 : vector<16x1xf32> to vector<16x128xf32>
      %43 = arith.mulf %41, %42 : vector<16x128xf32>
      %c0_16 = arith.constant 0 : index
      %c0_17 = arith.constant 0 : index
      %44 = vector.load %arg20[%c0_16, %c0_17] : memref<8x128xf32, #tpu.memory_space<vmem>>, vector<1x128xf32>
      %cst_18 = arith.constant dense<0.000000e+00> : vector<128xf32>
      %45 = vector.multi_reduction <add>, %43, %cst_18 [0] : vector<16x128xf32> to vector<128xf32>
      %46 = vector.shape_cast %45 : vector<128xf32> to vector<1x128xf32>
      %47 = arith.addf %44, %46 : vector<1x128xf32>
      %c0_19 = arith.constant 0 : index
      %c0_20 = arith.constant 0 : index
      %48 = vector.load %arg20[%c0_19, %c0_20] : memref<8x128xf32, #tpu.memory_space<vmem>>, vector<1x128xf32>
      tpu.vector_store %arg20[%c0_19, %c0_20], %47 {strides = array<i32>} : memref<8x128xf32, #tpu.memory_space<vmem>>, vector<1x128xf32>,
      %c1 = arith.constant 1 : index
      %c0_21 = arith.constant 0 : index
      %49 = vector.load %arg20[%c1, %c0_21] : memref<8x128xf32, #tpu.memory_space<vmem>>, vector<1x128xf32>
      %50 = arith.mulf %43, %41 : vector<16x128xf32>
      %cst_22 = arith.constant dense<0.000000e+00> : vector<128xf32>
      %51 = vector.multi_reduction <add>, %50, %cst_22 [0] : vector<16x128xf32> to vector<128xf32>
      %52 = vector.shape_cast %51 : vector<128xf32> to vector<1x128xf32>
      %53 = arith.addf %49, %52 : vector<1x128xf32>
      %c1_23 = arith.constant 1 : index
      %c0_24 = arith.constant 0 : index
      %54 = vector.load %arg20[%c1_23, %c0_24] : memref<8x128xf32, #tpu.memory_space<vmem>>, vector<1x128xf32>
      tpu.vector_store %arg20[%c1_23, %c0_24], %53 {strides = array<i32>} : memref<8x128xf32, #tpu.memory_space<vmem>>, vector<1x128xf32>,
    } else {
    }
    %c1_i32 = arith.constant 1 : i32
    %16 = arith.cmpi eq, %arg0, %c1_i32 : i32
    %17 = arith.extui %16 : i1 to i32
    %c0_i32_4 = arith.constant 0 : i32
    %18 = arith.cmpi ne, %17, %c0_i32_4 : i32
    scf.if %18 {
      %c0 = arith.constant 0 : index
      %c0_8 = arith.constant 0 : index
      %25 = vector.load %arg2[%c0, %c0_8] : memref<16x128xbf16, #tpu.memory_space<vmem>>, vector<16x128xbf16>
      %c0_9 = arith.constant 0 : index
      %c0_10 = arith.constant 0 : index
      %26 = vector.load %arg5[%c0_9, %c0_10] : memref<128x128xbf16, #tpu.memory_space<vmem>>, vector<128x128xbf16>
      %cst = arith.constant dense<0.000000e+00> : vector<16x128xf32>
      %27 = tpu.matmul %25, %26, %cst {dimension_numbers = #tpu.dot_dimension_numbers<[1], [0], [0], [1], [0, 0, 1, 1], [], []>} : vector<16x128xbf16>, vector<128x128xbf16>, vector<16x128xf32> -> vector<16x128xf32>
      %c0_11 = arith.constant 0 : index
      %c0_12 = arith.constant 0 : index
      %28 = vector.load %arg6[%c0_11, %c0_12] : memref<1x128xf32, #tpu.memory_space<vmem>>, vector<1x128xf32>
      %29 = vector.broadcast %28 : vector<1x128xf32> to vector<16x128xf32>
      %30 = arith.addf %27, %29 : vector<16x128xf32>
      %cst_13 = arith.constant 2.000000e+01 : f32
      %31 = vector.broadcast %cst_13 : f32 to vector<16x128xf32>
      %32 = arith.minimumf %30, %31 : vector<16x128xf32>
      %33 = math.exp %32 : vector<16x128xf32>
      %cst_14 = arith.constant 2.000000e+00 : f32
      %34 = vector.broadcast %cst_14 : f32 to vector<16x128xf32>
      %35 = arith.addf %33, %34 : vector<16x128xf32>
      %36 = arith.mulf %33, %35 : vector<16x128xf32>
      %37 = arith.mulf %30, %36 : vector<16x128xf32>
      %cst_15 = arith.constant 2.000000e+00 : f32
      %38 = vector.broadcast %cst_15 : f32 to vector<16x128xf32>
      %39 = arith.addf %36, %38 : vector<16x128xf32>
      %40 = tpu.reciprocal %39 {approx = true} : vector<16x128xf32> -> vector<16x128xf32>
      %41 = arith.mulf %37, %40 : vector<16x128xf32>
      %c0_16 = arith.constant 0 : index
      %c0_17 = arith.constant 0 : index
      %42 = vector.load %arg20[%c0_16, %c0_17] : memref<8x128xf32, #tpu.memory_space<vmem>>, vector<1x128xf32>
      %cst_18 = arith.constant 5.000000e-01 : f32
      %43 = vector.broadcast %cst_18 : f32 to vector<1x128xf32>
      %44 = arith.mulf %42, %43 : vector<1x128xf32>
      %c1 = arith.constant 1 : index
      %c0_19 = arith.constant 0 : index
      %45 = vector.load %arg20[%c1, %c0_19] : memref<8x128xf32, #tpu.memory_space<vmem>>, vector<1x128xf32>
      %cst_20 = arith.constant 5.000000e-01 : f32
      %46 = vector.broadcast %cst_20 : f32 to vector<1x128xf32>
      %47 = arith.mulf %45, %46 : vector<1x128xf32>
      %48 = arith.mulf %44, %44 : vector<1x128xf32>
      %49 = arith.subf %47, %48 : vector<1x128xf32>
      %cst_21 = arith.constant 0.000000e+00 : f32
      %50 = vector.broadcast %cst_21 : f32 to vector<1x128xf32>
      %51 = arith.maximumf %49, %50 : vector<1x128xf32>
      %52 = vector.broadcast %44 : vector<1x128xf32> to vector<16x128xf32>
      %53 = arith.subf %41, %52 : vector<16x128xf32>
      %cst_22 = arith.constant 9.99999974E-6 : f32
      %54 = vector.broadcast %cst_22 : f32 to vector<1x128xf32>
      %55 = arith.addf %51, %54 : vector<1x128xf32>
      %56 = math.rsqrt %55 : vector<1x128xf32>
      %57 = vector.broadcast %56 : vector<1x128xf32> to vector<16x128xf32>
      %58 = arith.mulf %53, %57 : vector<16x128xf32>
      %59 = arith.truncf %58 : vector<16x128xf32> to vector<16x128xbf16>
      %c0_23 = arith.constant 0 : index
      %c0_24 = arith.constant 0 : index
      %60 = vector.load %arg7[%c0_23, %c0_24] : memref<128x128xbf16, #tpu.memory_space<vmem>>, vector<128x128xbf16>
      %cst_25 = arith.constant dense<0.000000e+00> : vector<16x128xf32>
      %61 = tpu.matmul %59, %60, %cst_25 {dimension_numbers = #tpu.dot_dimension_numbers<[1], [0], [0], [1], [0, 0, 1, 1], [], []>} : vector<16x128xbf16>, vector<128x128xbf16>, vector<16x128xf32> -> vector<16x128xf32>
      %c0_26 = arith.constant 0 : index
      %c0_27 = arith.constant 0 : index
      %62 = vector.load %arg8[%c0_26, %c0_27] : memref<1x128xf32, #tpu.memory_space<vmem>>, vector<1x128xf32>
      %63 = vector.broadcast %62 : vector<1x128xf32> to vector<16x128xf32>
      %64 = arith.addf %61, %63 : vector<16x128xf32>
      %c0_28 = arith.constant 0 : index
      %c0_29 = arith.constant 0 : index
      %65 = vector.load %arg3[%c0_28, %c0_29] : memref<16x640xbf16, #tpu.memory_space<vmem>>, vector<16x640xbf16>
      %c0_30 = arith.constant 0 : index
      %c0_31 = arith.constant 0 : index
      %66 = vector.load %arg9[%c0_30, %c0_31] : memref<640x384xbf16, #tpu.memory_space<vmem>>, vector<640x384xbf16>
      %cst_32 = arith.constant dense<0.000000e+00> : vector<16x384xf32>
      %67 = tpu.matmul %65, %66, %cst_32 {dimension_numbers = #tpu.dot_dimension_numbers<[1], [0], [0], [1], [0, 0, 1, 1], [], []>} : vector<16x640xbf16>, vector<640x384xbf16>, vector<16x384xf32> -> vector<16x384xf32>
      %c0_33 = arith.constant 0 : index
      %c0_34 = arith.constant 0 : index
      %68 = vector.load %arg10[%c0_33, %c0_34] : memref<1x384xf32, #tpu.memory_space<vmem>>, vector<1x384xf32>
      %69 = vector.broadcast %68 : vector<1x384xf32> to vector<16x384xf32>
      %70 = arith.addf %67, %69 : vector<16x384xf32>
      %71 = vector.extract_strided_slice %70 {offsets = [0, 0], sizes = [16, 256], strides = [1, 1]} : vector<16x384xf32> to vector<16x256xf32>
      %cst_35 = arith.constant dense<0xFF800000> : vector<16xf32>
      %72 = vector.multi_reduction <maximumf>, %71, %cst_35 [1] : vector<16x256xf32> to vector<16xf32>
      %73 = vector.shape_cast %72 : vector<16xf32> to vector<16x1xf32>
      %74 = vector.broadcast %73 : vector<16x1xf32> to vector<16x256xf32>
      %75 = arith.subf %71, %74 : vector<16x256xf32>
      %76 = math.exp %75 : vector<16x256xf32>
      %cst_36 = arith.constant dense<0.000000e+00> : vector<16xf32>
      %77 = vector.multi_reduction <add>, %76, %cst_36 [1] : vector<16x256xf32> to vector<16xf32>
      %78 = vector.shape_cast %77 : vector<16xf32> to vector<16x1xf32>
      %79 = tpu.reciprocal %78 {approx = true} : vector<16x1xf32> -> vector<16x1xf32>
      %80 = vector.broadcast %79 : vector<16x1xf32> to vector<16x256xf32>
      %81 = arith.mulf %76, %80 : vector<16x256xf32>
      %82 = vector.extract_strided_slice %81 {offsets = [0, 0], sizes = [16, 128], strides = [1, 1]} : vector<16x256xf32> to vector<16x128xf32>
      %cst_37 = arith.constant 5.000000e-01 : f32
      %83 = vector.broadcast %cst_37 : f32 to vector<16x128xf32>
      %84 = arith.addf %82, %83 : vector<16x128xf32>
      %85 = vector.extract_strided_slice %81 {offsets = [0, 128], sizes = [16, 128], strides = [1, 1]} : vector<16x256xf32> to vector<16x128xf32>
      %86 = vector.extract_strided_slice %70 {offsets = [0, 256], sizes = [16, 128], strides = [1, 1]} : vector<16x384xf32> to vector<16x128xf32>
      %87 = arith.mulf %84, %86 : vector<16x128xf32>
      %88 = arith.mulf %85, %64 : vector<16x128xf32>
      %89 = arith.addf %87, %88 : vector<16x128xf32>
      %c0_38 = arith.constant 0 : index
      %c0_39 = arith.constant 0 : index
      %90 = vector.load %arg4[%c0_38, %c0_39] : memref<16x640xbf16, #tpu.memory_space<vmem>>, vector<16x640xbf16>
      %c0_40 = arith.constant 0 : index
      %c0_41 = arith.constant 0 : index
      %91 = vector.load %arg11[%c0_40, %c0_41] : memref<640x384xbf16, #tpu.memory_space<vmem>>, vector<640x384xbf16>
      %cst_42 = arith.constant dense<0.000000e+00> : vector<16x384xf32>
      %92 = tpu.matmul %90, %91, %cst_42 {dimension_numbers = #tpu.dot_dimension_numbers<[1], [0], [0], [1], [0, 0, 1, 1], [], []>} : vector<16x640xbf16>, vector<640x384xbf16>, vector<16x384xf32> -> vector<16x384xf32>
      %c0_43 = arith.constant 0 : index
      %c0_44 = arith.constant 0 : index
      %93 = vector.load %arg12[%c0_43, %c0_44] : memref<1x384xf32, #tpu.memory_space<vmem>>, vector<1x384xf32>
      %94 = vector.broadcast %93 : vector<1x384xf32> to vector<16x384xf32>
      %95 = arith.addf %92, %94 : vector<16x384xf32>
      %96 = vector.extract_strided_slice %95 {offsets = [0, 0], sizes = [16, 256], strides = [1, 1]} : vector<16x384xf32> to vector<16x256xf32>
      %cst_45 = arith.constant dense<0xFF800000> : vector<16xf32>
      %97 = vector.multi_reduction <maximumf>, %96, %cst_45 [1] : vector<16x256xf32> to vector<16xf32>
      %98 = vector.shape_cast %97 : vector<16xf32> to vector<16x1xf32>
      %99 = vector.broadcast %98 : vector<16x1xf32> to vector<16x256xf32>
      %100 = arith.subf %96, %99 : vector<16x256xf32>
      %101 = math.exp %100 : vector<16x256xf32>
      %cst_46 = arith.constant dense<0.000000e+00> : vector<16xf32>
      %102 = vector.multi_reduction <add>, %101, %cst_46 [1] : vector<16x256xf32> to vector<16xf32>
      %103 = vector.shape_cast %102 : vector<16xf32> to vector<16x1xf32>
      %104 = tpu.reciprocal %103 {approx = true} : vector<16x1xf32> -> vector<16x1xf32>
      %105 = vector.broadcast %104 : vector<16x1xf32> to vector<16x256xf32>
      %106 = arith.mulf %101, %105 : vector<16x256xf32>
      %107 = vector.extract_strided_slice %106 {offsets = [0, 0], sizes = [16, 128], strides = [1, 1]} : vector<16x256xf32> to vector<16x128xf32>
      %cst_47 = arith.constant 5.000000e-01 : f32
      %108 = vector.broadcast %cst_47 : f32 to vector<16x128xf32>
      %109 = arith.addf %107, %108 : vector<16x128xf32>
      %110 = vector.extract_strided_slice %106 {offsets = [0, 128], sizes = [16, 128], strides = [1, 1]} : vector<16x256xf32> to vector<16x128xf32>
      %111 = vector.extract_strided_slice %95 {offsets = [0, 256], sizes = [16, 128], strides = [1, 1]} : vector<16x384xf32> to vector<16x128xf32>
      %112 = arith.mulf %109, %111 : vector<16x128xf32>
      %113 = arith.mulf %110, %89 : vector<16x128xf32>
      %114 = arith.addf %112, %113 : vector<16x128xf32>
      %cst_48 = arith.constant 2.000000e+01 : f32
      %115 = vector.broadcast %cst_48 : f32 to vector<16x128xf32>
      %116 = arith.minimumf %114, %115 : vector<16x128xf32>
      %117 = math.exp %116 : vector<16x128xf32>
      %cst_49 = arith.constant 2.000000e+00 : f32
      %118 = vector.broadcast %cst_49 : f32 to vector<16x128xf32>
      %119 = arith.addf %117, %118 : vector<16x128xf32>
      %120 = arith.mulf %117, %119 : vector<16x128xf32>
      %121 = arith.mulf %114, %120 : vector<16x128xf32>
      %cst_50 = arith.constant 2.000000e+00 : f32
      %122 = vector.broadcast %cst_50 : f32 to vector<16x128xf32>
      %123 = arith.addf %120, %122 : vector<16x128xf32>
      %124 = tpu.reciprocal %123 {approx = true} : vector<16x128xf32> -> vector<16x128xf32>
      %125 = arith.mulf %121, %124 : vector<16x128xf32>
      %126 = vector.broadcast %7 : vector<16x1xf32> to vector<16x128xf32>
      %127 = arith.mulf %125, %126 : vector<16x128xf32>
      %c2 = arith.constant 2 : index
      %c0_51 = arith.constant 0 : index
      %128 = vector.load %arg20[%c2, %c0_51] : memref<8x128xf32, #tpu.memory_space<vmem>>, vector<1x128xf32>
      %cst_52 = arith.constant dense<0.000000e+00> : vector<128xf32>
      %129 = vector.multi_reduction <add>, %127, %cst_52 [0] : vector<16x128xf32> to vector<128xf32>
      %130 = vector.shape_cast %129 : vector<128xf32> to vector<1x128xf32>
      %131 = arith.addf %128, %130 : vector<1x128xf32>
      %c2_53 = arith.constant 2 : index
      %c0_54 = arith.constant 0 : index
      %132 = vector.load %arg20[%c2_53, %c0_54] : memref<8x128xf32, #tpu.memory_space<vmem>>, vector<1x128xf32>
      tpu.vector_store %arg20[%c2_53, %c0_54], %131 {strides = array<i32>} : memref<8x128xf32, #tpu.memory_space<vmem>>, vector<1x128xf32>,
      %c3 = arith.constant 3 : index
      %c0_55 = arith.constant 0 : index
      %133 = vector.load %arg20[%c3, %c0_55] : memref<8x128xf32, #tpu.memory_space<vmem>>, vector<1x128xf32>
      %134 = arith.mulf %127, %125 : vector<16x128xf32>
      %cst_56 = arith.constant dense<0.000000e+00> : vector<128xf32>
      %135 = vector.multi_reduction <add>, %134, %cst_56 [0] : vector<16x128xf32> to vector<128xf32>
      %136 = vector.shape_cast %135 : vector<128xf32> to vector<1x128xf32>
      %137 = arith.addf %133, %136 : vector<1x128xf32>
      %c3_57 = arith.constant 3 : index
      %c0_58 = arith.constant 0 : index
      %138 = vector.load %arg20[%c3_57, %c0_58] : memref<8x128xf32, #tpu.memory_space<vmem>>, vector<1x128xf32>
      tpu.vector_store %arg20[%c3_57, %c0_58], %137 {strides = array<i32>} : memref<8x128xf32, #tpu.memory_space<vmem>>, vector<1x128xf32>,
    } else {
    }
    %c2_i32_5 = arith.constant 2 : i32
    %19 = arith.cmpi eq, %arg0, %c2_i32_5 : i32
    %20 = arith.extui %19 : i1 to i32
    %c0_i32_6 = arith.constant 0 : i32
    %21 = arith.cmpi ne, %20, %c0_i32_6 : i32
    scf.if %21 {
      %c0 = arith.constant 0 : index
      %c0_8 = arith.constant 0 : index
      %25 = vector.load %arg2[%c0, %c0_8] : memref<16x128xbf16, #tpu.memory_space<vmem>>, vector<16x128xbf16>
      %c0_9 = arith.constant 0 : index
      %c0_10 = arith.constant 0 : index
      %26 = vector.load %arg5[%c0_9, %c0_10] : memref<128x128xbf16, #tpu.memory_space<vmem>>, vector<128x128xbf16>
      %cst = arith.constant dense<0.000000e+00> : vector<16x128xf32>
      %27 = tpu.matmul %25, %26, %cst {dimension_numbers = #tpu.dot_dimension_numbers<[1], [0], [0], [1], [0, 0, 1, 1], [], []>} : vector<16x128xbf16>, vector<128x128xbf16>, vector<16x128xf32> -> vector<16x128xf32>
      %c0_11 = arith.constant 0 : index
      %c0_12 = arith.constant 0 : index
      %28 = vector.load %arg6[%c0_11, %c0_12] : memref<1x128xf32, #tpu.memory_space<vmem>>, vector<1x128xf32>
      %29 = vector.broadcast %28 : vector<1x128xf32> to vector<16x128xf32>
      %30 = arith.addf %27, %29 : vector<16x128xf32>
      %cst_13 = arith.constant 2.000000e+01 : f32
      %31 = vector.broadcast %cst_13 : f32 to vector<16x128xf32>
      %32 = arith.minimumf %30, %31 : vector<16x128xf32>
      %33 = math.exp %32 : vector<16x128xf32>
      %cst_14 = arith.constant 2.000000e+00 : f32
      %34 = vector.broadcast %cst_14 : f32 to vector<16x128xf32>
      %35 = arith.addf %33, %34 : vector<16x128xf32>
      %36 = arith.mulf %33, %35 : vector<16x128xf32>
      %37 = arith.mulf %30, %36 : vector<16x128xf32>
      %cst_15 = arith.constant 2.000000e+00 : f32
      %38 = vector.broadcast %cst_15 : f32 to vector<16x128xf32>
      %39 = arith.addf %36, %38 : vector<16x128xf32>
      %40 = tpu.reciprocal %39 {approx = true} : vector<16x128xf32> -> vector<16x128xf32>
      %41 = arith.mulf %37, %40 : vector<16x128xf32>
      %c0_16 = arith.constant 0 : index
      %c0_17 = arith.constant 0 : index
      %42 = vector.load %arg20[%c0_16, %c0_17] : memref<8x128xf32, #tpu.memory_space<vmem>>, vector<1x128xf32>
      %cst_18 = arith.constant 5.000000e-01 : f32
      %43 = vector.broadcast %cst_18 : f32 to vector<1x128xf32>
      %44 = arith.mulf %42, %43 : vector<1x128xf32>
      %c1 = arith.constant 1 : index
      %c0_19 = arith.constant 0 : index
      %45 = vector.load %arg20[%c1, %c0_19] : memref<8x128xf32, #tpu.memory_space<vmem>>, vector<1x128xf32>
      %cst_20 = arith.constant 5.000000e-01 : f32
      %46 = vector.broadcast %cst_20 : f32 to vector<1x128xf32>
      %47 = arith.mulf %45, %46 : vector<1x128xf32>
      %48 = arith.mulf %44, %44 : vector<1x128xf32>
      %49 = arith.subf %47, %48 : vector<1x128xf32>
      %cst_21 = arith.constant 0.000000e+00 : f32
      %50 = vector.broadcast %cst_21 : f32 to vector<1x128xf32>
      %51 = arith.maximumf %49, %50 : vector<1x128xf32>
      %52 = vector.broadcast %44 : vector<1x128xf32> to vector<16x128xf32>
      %53 = arith.subf %41, %52 : vector<16x128xf32>
      %cst_22 = arith.constant 9.99999974E-6 : f32
      %54 = vector.broadcast %cst_22 : f32 to vector<1x128xf32>
      %55 = arith.addf %51, %54 : vector<1x128xf32>
      %56 = math.rsqrt %55 : vector<1x128xf32>
      %57 = vector.broadcast %56 : vector<1x128xf32> to vector<16x128xf32>
      %58 = arith.mulf %53, %57 : vector<16x128xf32>
      %59 = arith.truncf %58 : vector<16x128xf32> to vector<16x128xbf16>
      %c0_23 = arith.constant 0 : index
      %c0_24 = arith.constant 0 : index
      %60 = vector.load %arg7[%c0_23, %c0_24] : memref<128x128xbf16, #tpu.memory_space<vmem>>, vector<128x128xbf16>
      %cst_25 = arith.constant dense<0.000000e+00> : vector<16x128xf32>
      %61 = tpu.matmul %59, %60, %cst_25 {dimension_numbers = #tpu.dot_dimension_numbers<[1], [0], [0], [1], [0, 0, 1, 1], [], []>} : vector<16x128xbf16>, vector<128x128xbf16>, vector<16x128xf32> -> vector<16x128xf32>
      %c0_26 = arith.constant 0 : index
      %c0_27 = arith.constant 0 : index
      %62 = vector.load %arg8[%c0_26, %c0_27] : memref<1x128xf32, #tpu.memory_space<vmem>>, vector<1x128xf32>
      %63 = vector.broadcast %62 : vector<1x128xf32> to vector<16x128xf32>
      %64 = arith.addf %61, %63 : vector<16x128xf32>
      %c0_28 = arith.constant 0 : index
      %c0_29 = arith.constant 0 : index
      %65 = vector.load %arg3[%c0_28, %c0_29] : memref<16x640xbf16, #tpu.memory_space<vmem>>, vector<16x640xbf16>
      %c0_30 = arith.constant 0 : index
      %c0_31 = arith.constant 0 : index
      %66 = vector.load %arg9[%c0_30, %c0_31] : memref<640x384xbf16, #tpu.memory_space<vmem>>, vector<640x384xbf16>
      %cst_32 = arith.constant dense<0.000000e+00> : vector<16x384xf32>
      %67 = tpu.matmul %65, %66, %cst_32 {dimension_numbers = #tpu.dot_dimension_numbers<[1], [0], [0], [1], [0, 0, 1, 1], [], []>} : vector<16x640xbf16>, vector<640x384xbf16>, vector<16x384xf32> -> vector<16x384xf32>
      %c0_33 = arith.constant 0 : index
      %c0_34 = arith.constant 0 : index
      %68 = vector.load %arg10[%c0_33, %c0_34] : memref<1x384xf32, #tpu.memory_space<vmem>>, vector<1x384xf32>
      %69 = vector.broadcast %68 : vector<1x384xf32> to vector<16x384xf32>
      %70 = arith.addf %67, %69 : vector<16x384xf32>
      %71 = vector.extract_strided_slice %70 {offsets = [0, 0], sizes = [16, 256], strides = [1, 1]} : vector<16x384xf32> to vector<16x256xf32>
      %cst_35 = arith.constant dense<0xFF800000> : vector<16xf32>
      %72 = vector.multi_reduction <maximumf>, %71, %cst_35 [1] : vector<16x256xf32> to vector<16xf32>
      %73 = vector.shape_cast %72 : vector<16xf32> to vector<16x1xf32>
      %74 = vector.broadcast %73 : vector<16x1xf32> to vector<16x256xf32>
      %75 = arith.subf %71, %74 : vector<16x256xf32>
      %76 = math.exp %75 : vector<16x256xf32>
      %cst_36 = arith.constant dense<0.000000e+00> : vector<16xf32>
      %77 = vector.multi_reduction <add>, %76, %cst_36 [1] : vector<16x256xf32> to vector<16xf32>
      %78 = vector.shape_cast %77 : vector<16xf32> to vector<16x1xf32>
      %79 = tpu.reciprocal %78 {approx = true} : vector<16x1xf32> -> vector<16x1xf32>
      %80 = vector.broadcast %79 : vector<16x1xf32> to vector<16x256xf32>
      %81 = arith.mulf %76, %80 : vector<16x256xf32>
      %82 = vector.extract_strided_slice %81 {offsets = [0, 0], sizes = [16, 128], strides = [1, 1]} : vector<16x256xf32> to vector<16x128xf32>
      %cst_37 = arith.constant 5.000000e-01 : f32
      %83 = vector.broadcast %cst_37 : f32 to vector<16x128xf32>
      %84 = arith.addf %82, %83 : vector<16x128xf32>
      %85 = vector.extract_strided_slice %81 {offsets = [0, 128], sizes = [16, 128], strides = [1, 1]} : vector<16x256xf32> to vector<16x128xf32>
      %86 = vector.extract_strided_slice %70 {offsets = [0, 256], sizes = [16, 128], strides = [1, 1]} : vector<16x384xf32> to vector<16x128xf32>
      %87 = arith.mulf %84, %86 : vector<16x128xf32>
      %88 = arith.mulf %85, %64 : vector<16x128xf32>
      %89 = arith.addf %87, %88 : vector<16x128xf32>
      %c0_38 = arith.constant 0 : index
      %c0_39 = arith.constant 0 : index
      %90 = vector.load %arg4[%c0_38, %c0_39] : memref<16x640xbf16, #tpu.memory_space<vmem>>, vector<16x640xbf16>
      %c0_40 = arith.constant 0 : index
      %c0_41 = arith.constant 0 : index
      %91 = vector.load %arg11[%c0_40, %c0_41] : memref<640x384xbf16, #tpu.memory_space<vmem>>, vector<640x384xbf16>
      %cst_42 = arith.constant dense<0.000000e+00> : vector<16x384xf32>
      %92 = tpu.matmul %90, %91, %cst_42 {dimension_numbers = #tpu.dot_dimension_numbers<[1], [0], [0], [1], [0, 0, 1, 1], [], []>} : vector<16x640xbf16>, vector<640x384xbf16>, vector<16x384xf32> -> vector<16x384xf32>
      %c0_43 = arith.constant 0 : index
      %c0_44 = arith.constant 0 : index
      %93 = vector.load %arg12[%c0_43, %c0_44] : memref<1x384xf32, #tpu.memory_space<vmem>>, vector<1x384xf32>
      %94 = vector.broadcast %93 : vector<1x384xf32> to vector<16x384xf32>
      %95 = arith.addf %92, %94 : vector<16x384xf32>
      %96 = vector.extract_strided_slice %95 {offsets = [0, 0], sizes = [16, 256], strides = [1, 1]} : vector<16x384xf32> to vector<16x256xf32>
      %cst_45 = arith.constant dense<0xFF800000> : vector<16xf32>
      %97 = vector.multi_reduction <maximumf>, %96, %cst_45 [1] : vector<16x256xf32> to vector<16xf32>
      %98 = vector.shape_cast %97 : vector<16xf32> to vector<16x1xf32>
      %99 = vector.broadcast %98 : vector<16x1xf32> to vector<16x256xf32>
      %100 = arith.subf %96, %99 : vector<16x256xf32>
      %101 = math.exp %100 : vector<16x256xf32>
      %cst_46 = arith.constant dense<0.000000e+00> : vector<16xf32>
      %102 = vector.multi_reduction <add>, %101, %cst_46 [1] : vector<16x256xf32> to vector<16xf32>
      %103 = vector.shape_cast %102 : vector<16xf32> to vector<16x1xf32>
      %104 = tpu.reciprocal %103 {approx = true} : vector<16x1xf32> -> vector<16x1xf32>
      %105 = vector.broadcast %104 : vector<16x1xf32> to vector<16x256xf32>
      %106 = arith.mulf %101, %105 : vector<16x256xf32>
      %107 = vector.extract_strided_slice %106 {offsets = [0, 0], sizes = [16, 128], strides = [1, 1]} : vector<16x256xf32> to vector<16x128xf32>
      %cst_47 = arith.constant 5.000000e-01 : f32
      %108 = vector.broadcast %cst_47 : f32 to vector<16x128xf32>
      %109 = arith.addf %107, %108 : vector<16x128xf32>
      %110 = vector.extract_strided_slice %106 {offsets = [0, 128], sizes = [16, 128], strides = [1, 1]} : vector<16x256xf32> to vector<16x128xf32>
      %111 = vector.extract_strided_slice %95 {offsets = [0, 256], sizes = [16, 128], strides = [1, 1]} : vector<16x384xf32> to vector<16x128xf32>
      %112 = arith.mulf %109, %111 : vector<16x128xf32>
      %113 = arith.mulf %110, %89 : vector<16x128xf32>
      %114 = arith.addf %112, %113 : vector<16x128xf32>
      %cst_48 = arith.constant 2.000000e+01 : f32
      %115 = vector.broadcast %cst_48 : f32 to vector<16x128xf32>
      %116 = arith.minimumf %114, %115 : vector<16x128xf32>
      %117 = math.exp %116 : vector<16x128xf32>
      %cst_49 = arith.constant 2.000000e+00 : f32
      %118 = vector.broadcast %cst_49 : f32 to vector<16x128xf32>
      %119 = arith.addf %117, %118 : vector<16x128xf32>
      %120 = arith.mulf %117, %119 : vector<16x128xf32>
      %121 = arith.mulf %114, %120 : vector<16x128xf32>
      %cst_50 = arith.constant 2.000000e+00 : f32
      %122 = vector.broadcast %cst_50 : f32 to vector<16x128xf32>
      %123 = arith.addf %120, %122 : vector<16x128xf32>
      %124 = tpu.reciprocal %123 {approx = true} : vector<16x128xf32> -> vector<16x128xf32>
      %125 = arith.mulf %121, %124 : vector<16x128xf32>
      %c2 = arith.constant 2 : index
      %c0_51 = arith.constant 0 : index
      %126 = vector.load %arg20[%c2, %c0_51] : memref<8x128xf32, #tpu.memory_space<vmem>>, vector<1x128xf32>
      %cst_52 = arith.constant 5.000000e-01 : f32
      %127 = vector.broadcast %cst_52 : f32 to vector<1x128xf32>
      %128 = arith.mulf %126, %127 : vector<1x128xf32>
      %c3 = arith.constant 3 : index
      %c0_53 = arith.constant 0 : index
      %129 = vector.load %arg20[%c3, %c0_53] : memref<8x128xf32, #tpu.memory_space<vmem>>, vector<1x128xf32>
      %cst_54 = arith.constant 5.000000e-01 : f32
      %130 = vector.broadcast %cst_54 : f32 to vector<1x128xf32>
      %131 = arith.mulf %129, %130 : vector<1x128xf32>
      %132 = arith.mulf %128, %128 : vector<1x128xf32>
      %133 = arith.subf %131, %132 : vector<1x128xf32>
      %cst_55 = arith.constant 0.000000e+00 : f32
      %134 = vector.broadcast %cst_55 : f32 to vector<1x128xf32>
      %135 = arith.maximumf %133, %134 : vector<1x128xf32>
      %136 = vector.broadcast %128 : vector<1x128xf32> to vector<16x128xf32>
      %137 = arith.subf %125, %136 : vector<16x128xf32>
      %cst_56 = arith.constant 9.99999974E-6 : f32
      %138 = vector.broadcast %cst_56 : f32 to vector<1x128xf32>
      %139 = arith.addf %135, %138 : vector<1x128xf32>
      %140 = math.rsqrt %139 : vector<1x128xf32>
      %141 = vector.broadcast %140 : vector<1x128xf32> to vector<16x128xf32>
      %142 = arith.mulf %137, %141 : vector<16x128xf32>
      %143 = arith.truncf %142 : vector<16x128xf32> to vector<16x128xbf16>
      %c0_57 = arith.constant 0 : index
      %c0_58 = arith.constant 0 : index
      %144 = vector.load %arg13[%c0_57, %c0_58] : memref<128x128xbf16, #tpu.memory_space<vmem>>, vector<128x128xbf16>
      %cst_59 = arith.constant dense<0.000000e+00> : vector<16x128xf32>
      %145 = tpu.matmul %143, %144, %cst_59 {dimension_numbers = #tpu.dot_dimension_numbers<[1], [0], [0], [1], [0, 0, 1, 1], [], []>} : vector<16x128xbf16>, vector<128x128xbf16>, vector<16x128xf32> -> vector<16x128xf32>
      %c0_60 = arith.constant 0 : index
      %c0_61 = arith.constant 0 : index
      %146 = vector.load %arg14[%c0_60, %c0_61] : memref<1x128xf32, #tpu.memory_space<vmem>>, vector<1x128xf32>
      %147 = vector.broadcast %146 : vector<1x128xf32> to vector<16x128xf32>
      %148 = arith.addf %145, %147 : vector<16x128xf32>
      %cst_62 = arith.constant 2.000000e+01 : f32
      %149 = vector.broadcast %cst_62 : f32 to vector<16x128xf32>
      %150 = arith.minimumf %148, %149 : vector<16x128xf32>
      %151 = math.exp %150 : vector<16x128xf32>
      %cst_63 = arith.constant 2.000000e+00 : f32
      %152 = vector.broadcast %cst_63 : f32 to vector<16x128xf32>
      %153 = arith.addf %151, %152 : vector<16x128xf32>
      %154 = arith.mulf %151, %153 : vector<16x128xf32>
      %155 = arith.mulf %148, %154 : vector<16x128xf32>
      %cst_64 = arith.constant 2.000000e+00 : f32
      %156 = vector.broadcast %cst_64 : f32 to vector<16x128xf32>
      %157 = arith.addf %154, %156 : vector<16x128xf32>
      %158 = tpu.reciprocal %157 {approx = true} : vector<16x128xf32> -> vector<16x128xf32>
      %159 = arith.mulf %155, %158 : vector<16x128xf32>
      %160 = vector.broadcast %7 : vector<16x1xf32> to vector<16x128xf32>
      %161 = arith.mulf %159, %160 : vector<16x128xf32>
      %c4 = arith.constant 4 : index
      %c0_65 = arith.constant 0 : index
      %162 = vector.load %arg20[%c4, %c0_65] : memref<8x128xf32, #tpu.memory_space<vmem>>, vector<1x128xf32>
      %cst_66 = arith.constant dense<0.000000e+00> : vector<128xf32>
      %163 = vector.multi_reduction <add>, %161, %cst_66 [0] : vector<16x128xf32> to vector<128xf32>
      %164 = vector.shape_cast %163 : vector<128xf32> to vector<1x128xf32>
      %165 = arith.addf %162, %164 : vector<1x128xf32>
      %c4_67 = arith.constant 4 : index
      %c0_68 = arith.constant 0 : index
      %166 = vector.load %arg20[%c4_67, %c0_68] : memref<8x128xf32, #tpu.memory_space<vmem>>, vector<1x128xf32>
      tpu.vector_store %arg20[%c4_67, %c0_68], %165 {strides = array<i32>} : memref<8x128xf32, #tpu.memory_space<vmem>>, vector<1x128xf32>,
      %c5 = arith.constant 5 : index
      %c0_69 = arith.constant 0 : index
      %167 = vector.load %arg20[%c5, %c0_69] : memref<8x128xf32, #tpu.memory_space<vmem>>, vector<1x128xf32>
      %168 = arith.mulf %161, %159 : vector<16x128xf32>
      %cst_70 = arith.constant dense<0.000000e+00> : vector<128xf32>
      %169 = vector.multi_reduction <add>, %168, %cst_70 [0] : vector<16x128xf32> to vector<128xf32>
      %170 = vector.shape_cast %169 : vector<128xf32> to vector<1x128xf32>
      %171 = arith.addf %167, %170 : vector<1x128xf32>
      %c5_71 = arith.constant 5 : index
      %c0_72 = arith.constant 0 : index
      %172 = vector.load %arg20[%c5_71, %c0_72] : memref<8x128xf32, #tpu.memory_space<vmem>>, vector<1x128xf32>
      tpu.vector_store %arg20[%c5_71, %c0_72], %171 {strides = array<i32>} : memref<8x128xf32, #tpu.memory_space<vmem>>, vector<1x128xf32>,
    } else {
    }
    %c3_i32 = arith.constant 3 : i32
    %22 = arith.cmpi eq, %arg0, %c3_i32 : i32
    %23 = arith.extui %22 : i1 to i32
    %c0_i32_7 = arith.constant 0 : i32
    %24 = arith.cmpi ne, %23, %c0_i32_7 : i32
    scf.if %24 {
      %c0 = arith.constant 0 : index
      %c0_8 = arith.constant 0 : index
      %25 = vector.load %arg2[%c0, %c0_8] : memref<16x128xbf16, #tpu.memory_space<vmem>>, vector<16x128xbf16>
      %c0_9 = arith.constant 0 : index
      %c0_10 = arith.constant 0 : index
      %26 = vector.load %arg5[%c0_9, %c0_10] : memref<128x128xbf16, #tpu.memory_space<vmem>>, vector<128x128xbf16>
      %cst = arith.constant dense<0.000000e+00> : vector<16x128xf32>
      %27 = tpu.matmul %25, %26, %cst {dimension_numbers = #tpu.dot_dimension_numbers<[1], [0], [0], [1], [0, 0, 1, 1], [], []>} : vector<16x128xbf16>, vector<128x128xbf16>, vector<16x128xf32> -> vector<16x128xf32>
      %c0_11 = arith.constant 0 : index
      %c0_12 = arith.constant 0 : index
      %28 = vector.load %arg6[%c0_11, %c0_12] : memref<1x128xf32, #tpu.memory_space<vmem>>, vector<1x128xf32>
      %29 = vector.broadcast %28 : vector<1x128xf32> to vector<16x128xf32>
      %30 = arith.addf %27, %29 : vector<16x128xf32>
      %cst_13 = arith.constant 2.000000e+01 : f32
      %31 = vector.broadcast %cst_13 : f32 to vector<16x128xf32>
      %32 = arith.minimumf %30, %31 : vector<16x128xf32>
      %33 = math.exp %32 : vector<16x128xf32>
      %cst_14 = arith.constant 2.000000e+00 : f32
      %34 = vector.broadcast %cst_14 : f32 to vector<16x128xf32>
      %35 = arith.addf %33, %34 : vector<16x128xf32>
      %36 = arith.mulf %33, %35 : vector<16x128xf32>
      %37 = arith.mulf %30, %36 : vector<16x128xf32>
      %cst_15 = arith.constant 2.000000e+00 : f32
      %38 = vector.broadcast %cst_15 : f32 to vector<16x128xf32>
      %39 = arith.addf %36, %38 : vector<16x128xf32>
      %40 = tpu.reciprocal %39 {approx = true} : vector<16x128xf32> -> vector<16x128xf32>
      %41 = arith.mulf %37, %40 : vector<16x128xf32>
      %c0_16 = arith.constant 0 : index
      %c0_17 = arith.constant 0 : index
      %42 = vector.load %arg20[%c0_16, %c0_17] : memref<8x128xf32, #tpu.memory_space<vmem>>, vector<1x128xf32>
      %cst_18 = arith.constant 5.000000e-01 : f32
      %43 = vector.broadcast %cst_18 : f32 to vector<1x128xf32>
      %44 = arith.mulf %42, %43 : vector<1x128xf32>
      %c1 = arith.constant 1 : index
      %c0_19 = arith.constant 0 : index
      %45 = vector.load %arg20[%c1, %c0_19] : memref<8x128xf32, #tpu.memory_space<vmem>>, vector<1x128xf32>
      %cst_20 = arith.constant 5.000000e-01 : f32
      %46 = vector.broadcast %cst_20 : f32 to vector<1x128xf32>
      %47 = arith.mulf %45, %46 : vector<1x128xf32>
      %48 = arith.mulf %44, %44 : vector<1x128xf32>
      %49 = arith.subf %47, %48 : vector<1x128xf32>
      %cst_21 = arith.constant 0.000000e+00 : f32
      %50 = vector.broadcast %cst_21 : f32 to vector<1x128xf32>
      %51 = arith.maximumf %49, %50 : vector<1x128xf32>
      %52 = vector.broadcast %44 : vector<1x128xf32> to vector<16x128xf32>
      %53 = arith.subf %41, %52 : vector<16x128xf32>
      %cst_22 = arith.constant 9.99999974E-6 : f32
      %54 = vector.broadcast %cst_22 : f32 to vector<1x128xf32>
      %55 = arith.addf %51, %54 : vector<1x128xf32>
      %56 = math.rsqrt %55 : vector<1x128xf32>
      %57 = vector.broadcast %56 : vector<1x128xf32> to vector<16x128xf32>
      %58 = arith.mulf %53, %57 : vector<16x128xf32>
      %59 = arith.truncf %58 : vector<16x128xf32> to vector<16x128xbf16>
      %c0_23 = arith.constant 0 : index
      %c0_24 = arith.constant 0 : index
      %60 = vector.load %arg7[%c0_23, %c0_24] : memref<128x128xbf16, #tpu.memory_space<vmem>>, vector<128x128xbf16>
      %cst_25 = arith.constant dense<0.000000e+00> : vector<16x128xf32>
      %61 = tpu.matmul %59, %60, %cst_25 {dimension_numbers = #tpu.dot_dimension_numbers<[1], [0], [0], [1], [0, 0, 1, 1], [], []>} : vector<16x128xbf16>, vector<128x128xbf16>, vector<16x128xf32> -> vector<16x128xf32>
      %c0_26 = arith.constant 0 : index
      %c0_27 = arith.constant 0 : index
      %62 = vector.load %arg8[%c0_26, %c0_27] : memref<1x128xf32, #tpu.memory_space<vmem>>, vector<1x128xf32>
      %63 = vector.broadcast %62 : vector<1x128xf32> to vector<16x128xf32>
      %64 = arith.addf %61, %63 : vector<16x128xf32>
      %c0_28 = arith.constant 0 : index
      %c0_29 = arith.constant 0 : index
      %65 = vector.load %arg3[%c0_28, %c0_29] : memref<16x640xbf16, #tpu.memory_space<vmem>>, vector<16x640xbf16>
      %c0_30 = arith.constant 0 : index
      %c0_31 = arith.constant 0 : index
      %66 = vector.load %arg9[%c0_30, %c0_31] : memref<640x384xbf16, #tpu.memory_space<vmem>>, vector<640x384xbf16>
      %cst_32 = arith.constant dense<0.000000e+00> : vector<16x384xf32>
      %67 = tpu.matmul %65, %66, %cst_32 {dimension_numbers = #tpu.dot_dimension_numbers<[1], [0], [0], [1], [0, 0, 1, 1], [], []>} : vector<16x640xbf16>, vector<640x384xbf16>, vector<16x384xf32> -> vector<16x384xf32>
      %c0_33 = arith.constant 0 : index
      %c0_34 = arith.constant 0 : index
      %68 = vector.load %arg10[%c0_33, %c0_34] : memref<1x384xf32, #tpu.memory_space<vmem>>, vector<1x384xf32>
      %69 = vector.broadcast %68 : vector<1x384xf32> to vector<16x384xf32>
      %70 = arith.addf %67, %69 : vector<16x384xf32>
      %71 = vector.extract_strided_slice %70 {offsets = [0, 0], sizes = [16, 256], strides = [1, 1]} : vector<16x384xf32> to vector<16x256xf32>
      %cst_35 = arith.constant dense<0xFF800000> : vector<16xf32>
      %72 = vector.multi_reduction <maximumf>, %71, %cst_35 [1] : vector<16x256xf32> to vector<16xf32>
      %73 = vector.shape_cast %72 : vector<16xf32> to vector<16x1xf32>
      %74 = vector.broadcast %73 : vector<16x1xf32> to vector<16x256xf32>
      %75 = arith.subf %71, %74 : vector<16x256xf32>
      %76 = math.exp %75 : vector<16x256xf32>
      %cst_36 = arith.constant dense<0.000000e+00> : vector<16xf32>
      %77 = vector.multi_reduction <add>, %76, %cst_36 [1] : vector<16x256xf32> to vector<16xf32>
      %78 = vector.shape_cast %77 : vector<16xf32> to vector<16x1xf32>
      %79 = tpu.reciprocal %78 {approx = true} : vector<16x1xf32> -> vector<16x1xf32>
      %80 = vector.broadcast %79 : vector<16x1xf32> to vector<16x256xf32>
      %81 = arith.mulf %76, %80 : vector<16x256xf32>
      %82 = vector.extract_strided_slice %81 {offsets = [0, 0], sizes = [16, 128], strides = [1, 1]} : vector<16x256xf32> to vector<16x128xf32>
      %cst_37 = arith.constant 5.000000e-01 : f32
      %83 = vector.broadcast %cst_37 : f32 to vector<16x128xf32>
      %84 = arith.addf %82, %83 : vector<16x128xf32>
      %85 = vector.extract_strided_slice %81 {offsets = [0, 128], sizes = [16, 128], strides = [1, 1]} : vector<16x256xf32> to vector<16x128xf32>
      %86 = vector.extract_strided_slice %70 {offsets = [0, 256], sizes = [16, 128], strides = [1, 1]} : vector<16x384xf32> to vector<16x128xf32>
      %87 = arith.mulf %84, %86 : vector<16x128xf32>
      %88 = arith.mulf %85, %64 : vector<16x128xf32>
      %89 = arith.addf %87, %88 : vector<16x128xf32>
      %c0_38 = arith.constant 0 : index
      %c0_39 = arith.constant 0 : index
      %90 = vector.load %arg4[%c0_38, %c0_39] : memref<16x640xbf16, #tpu.memory_space<vmem>>, vector<16x640xbf16>
      %c0_40 = arith.constant 0 : index
      %c0_41 = arith.constant 0 : index
      %91 = vector.load %arg11[%c0_40, %c0_41] : memref<640x384xbf16, #tpu.memory_space<vmem>>, vector<640x384xbf16>
      %cst_42 = arith.constant dense<0.000000e+00> : vector<16x384xf32>
      %92 = tpu.matmul %90, %91, %cst_42 {dimension_numbers = #tpu.dot_dimension_numbers<[1], [0], [0], [1], [0, 0, 1, 1], [], []>} : vector<16x640xbf16>, vector<640x384xbf16>, vector<16x384xf32> -> vector<16x384xf32>
      %c0_43 = arith.constant 0 : index
      %c0_44 = arith.constant 0 : index
      %93 = vector.load %arg12[%c0_43, %c0_44] : memref<1x384xf32, #tpu.memory_space<vmem>>, vector<1x384xf32>
      %94 = vector.broadcast %93 : vector<1x384xf32> to vector<16x384xf32>
      %95 = arith.addf %92, %94 : vector<16x384xf32>
      %96 = vector.extract_strided_slice %95 {offsets = [0, 0], sizes = [16, 256], strides = [1, 1]} : vector<16x384xf32> to vector<16x256xf32>
      %cst_45 = arith.constant dense<0xFF800000> : vector<16xf32>
      %97 = vector.multi_reduction <maximumf>, %96, %cst_45 [1] : vector<16x256xf32> to vector<16xf32>
      %98 = vector.shape_cast %97 : vector<16xf32> to vector<16x1xf32>
      %99 = vector.broadcast %98 : vector<16x1xf32> to vector<16x256xf32>
      %100 = arith.subf %96, %99 : vector<16x256xf32>
      %101 = math.exp %100 : vector<16x256xf32>
      %cst_46 = arith.constant dense<0.000000e+00> : vector<16xf32>
      %102 = vector.multi_reduction <add>, %101, %cst_46 [1] : vector<16x256xf32> to vector<16xf32>
      %103 = vector.shape_cast %102 : vector<16xf32> to vector<16x1xf32>
      %104 = tpu.reciprocal %103 {approx = true} : vector<16x1xf32> -> vector<16x1xf32>
      %105 = vector.broadcast %104 : vector<16x1xf32> to vector<16x256xf32>
      %106 = arith.mulf %101, %105 : vector<16x256xf32>
      %107 = vector.extract_strided_slice %106 {offsets = [0, 0], sizes = [16, 128], strides = [1, 1]} : vector<16x256xf32> to vector<16x128xf32>
      %cst_47 = arith.constant 5.000000e-01 : f32
      %108 = vector.broadcast %cst_47 : f32 to vector<16x128xf32>
      %109 = arith.addf %107, %108 : vector<16x128xf32>
      %110 = vector.extract_strided_slice %106 {offsets = [0, 128], sizes = [16, 128], strides = [1, 1]} : vector<16x256xf32> to vector<16x128xf32>
      %111 = vector.extract_strided_slice %95 {offsets = [0, 256], sizes = [16, 128], strides = [1, 1]} : vector<16x384xf32> to vector<16x128xf32>
      %112 = arith.mulf %109, %111 : vector<16x128xf32>
      %113 = arith.mulf %110, %89 : vector<16x128xf32>
      %114 = arith.addf %112, %113 : vector<16x128xf32>
      %cst_48 = arith.constant 2.000000e+01 : f32
      %115 = vector.broadcast %cst_48 : f32 to vector<16x128xf32>
      %116 = arith.minimumf %114, %115 : vector<16x128xf32>
      %117 = math.exp %116 : vector<16x128xf32>
      %cst_49 = arith.constant 2.000000e+00 : f32
      %118 = vector.broadcast %cst_49 : f32 to vector<16x128xf32>
      %119 = arith.addf %117, %118 : vector<16x128xf32>
      %120 = arith.mulf %117, %119 : vector<16x128xf32>
      %121 = arith.mulf %114, %120 : vector<16x128xf32>
      %cst_50 = arith.constant 2.000000e+00 : f32
      %122 = vector.broadcast %cst_50 : f32 to vector<16x128xf32>
      %123 = arith.addf %120, %122 : vector<16x128xf32>
      %124 = tpu.reciprocal %123 {approx = true} : vector<16x128xf32> -> vector<16x128xf32>
      %125 = arith.mulf %121, %124 : vector<16x128xf32>
      %c2 = arith.constant 2 : index
      %c0_51 = arith.constant 0 : index
      %126 = vector.load %arg20[%c2, %c0_51] : memref<8x128xf32, #tpu.memory_space<vmem>>, vector<1x128xf32>
      %cst_52 = arith.constant 5.000000e-01 : f32
      %127 = vector.broadcast %cst_52 : f32 to vector<1x128xf32>
      %128 = arith.mulf %126, %127 : vector<1x128xf32>
      %c3 = arith.constant 3 : index
      %c0_53 = arith.constant 0 : index
      %129 = vector.load %arg20[%c3, %c0_53] : memref<8x128xf32, #tpu.memory_space<vmem>>, vector<1x128xf32>
      %cst_54 = arith.constant 5.000000e-01 : f32
      %130 = vector.broadcast %cst_54 : f32 to vector<1x128xf32>
      %131 = arith.mulf %129, %130 : vector<1x128xf32>
      %132 = arith.mulf %128, %128 : vector<1x128xf32>
      %133 = arith.subf %131, %132 : vector<1x128xf32>
      %cst_55 = arith.constant 0.000000e+00 : f32
      %134 = vector.broadcast %cst_55 : f32 to vector<1x128xf32>
      %135 = arith.maximumf %133, %134 : vector<1x128xf32>
      %136 = vector.broadcast %128 : vector<1x128xf32> to vector<16x128xf32>
      %137 = arith.subf %125, %136 : vector<16x128xf32>
      %cst_56 = arith.constant 9.99999974E-6 : f32
      %138 = vector.broadcast %cst_56 : f32 to vector<1x128xf32>
      %139 = arith.addf %135, %138 : vector<1x128xf32>
      %140 = math.rsqrt %139 : vector<1x128xf32>
      %141 = vector.broadcast %140 : vector<1x128xf32> to vector<16x128xf32>
      %142 = arith.mulf %137, %141 : vector<16x128xf32>
      %143 = arith.truncf %142 : vector<16x128xf32> to vector<16x128xbf16>
      %c0_57 = arith.constant 0 : index
      %c0_58 = arith.constant 0 : index
      %144 = vector.load %arg13[%c0_57, %c0_58] : memref<128x128xbf16, #tpu.memory_space<vmem>>, vector<128x128xbf16>
      %cst_59 = arith.constant dense<0.000000e+00> : vector<16x128xf32>
      %145 = tpu.matmul %143, %144, %cst_59 {dimension_numbers = #tpu.dot_dimension_numbers<[1], [0], [0], [1], [0, 0, 1, 1], [], []>} : vector<16x128xbf16>, vector<128x128xbf16>, vector<16x128xf32> -> vector<16x128xf32>
      %c0_60 = arith.constant 0 : index
      %c0_61 = arith.constant 0 : index
      %146 = vector.load %arg14[%c0_60, %c0_61] : memref<1x128xf32, #tpu.memory_space<vmem>>, vector<1x128xf32>
      %147 = vector.broadcast %146 : vector<1x128xf32> to vector<16x128xf32>
      %148 = arith.addf %145, %147 : vector<16x128xf32>
      %cst_62 = arith.constant 2.000000e+01 : f32
      %149 = vector.broadcast %cst_62 : f32 to vector<16x128xf32>
      %150 = arith.minimumf %148, %149 : vector<16x128xf32>
      %151 = math.exp %150 : vector<16x128xf32>
      %cst_63 = arith.constant 2.000000e+00 : f32
      %152 = vector.broadcast %cst_63 : f32 to vector<16x128xf32>
      %153 = arith.addf %151, %152 : vector<16x128xf32>
      %154 = arith.mulf %151, %153 : vector<16x128xf32>
      %155 = arith.mulf %148, %154 : vector<16x128xf32>
      %cst_64 = arith.constant 2.000000e+00 : f32
      %156 = vector.broadcast %cst_64 : f32 to vector<16x128xf32>
      %157 = arith.addf %154, %156 : vector<16x128xf32>
      %158 = tpu.reciprocal %157 {approx = true} : vector<16x128xf32> -> vector<16x128xf32>
      %159 = arith.mulf %155, %158 : vector<16x128xf32>
      %c4 = arith.constant 4 : index
      %c0_65 = arith.constant 0 : index
      %160 = vector.load %arg20[%c4, %c0_65] : memref<8x128xf32, #tpu.memory_space<vmem>>, vector<1x128xf32>
      %cst_66 = arith.constant 5.000000e-01 : f32
      %161 = vector.broadcast %cst_66 : f32 to vector<1x128xf32>
      %162 = arith.mulf %160, %161 : vector<1x128xf32>
      %c5 = arith.constant 5 : index
      %c0_67 = arith.constant 0 : index
      %163 = vector.load %arg20[%c5, %c0_67] : memref<8x128xf32, #tpu.memory_space<vmem>>, vector<1x128xf32>
      %cst_68 = arith.constant 5.000000e-01 : f32
      %164 = vector.broadcast %cst_68 : f32 to vector<1x128xf32>
      %165 = arith.mulf %163, %164 : vector<1x128xf32>
      %166 = arith.mulf %162, %162 : vector<1x128xf32>
      %167 = arith.subf %165, %166 : vector<1x128xf32>
      %cst_69 = arith.constant 0.000000e+00 : f32
      %168 = vector.broadcast %cst_69 : f32 to vector<1x128xf32>
      %169 = arith.maximumf %167, %168 : vector<1x128xf32>
      %170 = vector.broadcast %162 : vector<1x128xf32> to vector<16x128xf32>
      %171 = arith.subf %159, %170 : vector<16x128xf32>
      %cst_70 = arith.constant 9.99999974E-6 : f32
      %172 = vector.broadcast %cst_70 : f32 to vector<1x128xf32>
      %173 = arith.addf %169, %172 : vector<1x128xf32>
      %174 = math.rsqrt %173 : vector<1x128xf32>
      %175 = vector.broadcast %174 : vector<1x128xf32> to vector<16x128xf32>
      %176 = arith.mulf %171, %175 : vector<16x128xf32>
      %177 = arith.truncf %176 : vector<16x128xf32> to vector<16x128xbf16>
      %c0_71 = arith.constant 0 : index
      %c0_72 = arith.constant 0 : index
      %178 = vector.load %arg15[%c0_71, %c0_72] : memref<128x128xbf16, #tpu.memory_space<vmem>>, vector<128x128xbf16>
      %cst_73 = arith.constant dense<0.000000e+00> : vector<16x128xf32>
      %179 = tpu.matmul %177, %178, %cst_73 {dimension_numbers = #tpu.dot_dimension_numbers<[1], [0], [0], [1], [0, 0, 1, 1], [], []>} : vector<16x128xbf16>, vector<128x128xbf16>, vector<16x128xf32> -> vector<16x128xf32>
      %c0_74 = arith.constant 0 : index
      %c0_75 = arith.constant 0 : index
      %180 = vector.load %arg16[%c0_74, %c0_75] : memref<1x128xf32, #tpu.memory_space<vmem>>, vector<1x128xf32>
      %181 = vector.broadcast %180 : vector<1x128xf32> to vector<16x128xf32>
      %182 = arith.addf %179, %181 : vector<16x128xf32>
      %cst_76 = arith.constant 2.000000e+01 : f32
      %183 = vector.broadcast %cst_76 : f32 to vector<16x128xf32>
      %184 = arith.minimumf %182, %183 : vector<16x128xf32>
      %185 = math.exp %184 : vector<16x128xf32>
      %cst_77 = arith.constant 2.000000e+00 : f32
      %186 = vector.broadcast %cst_77 : f32 to vector<16x128xf32>
      %187 = arith.addf %185, %186 : vector<16x128xf32>
      %188 = arith.mulf %185, %187 : vector<16x128xf32>
      %189 = arith.mulf %182, %188 : vector<16x128xf32>
      %cst_78 = arith.constant 2.000000e+00 : f32
      %190 = vector.broadcast %cst_78 : f32 to vector<16x128xf32>
      %191 = arith.addf %188, %190 : vector<16x128xf32>
      %192 = tpu.reciprocal %191 {approx = true} : vector<16x128xf32> -> vector<16x128xf32>
      %193 = arith.mulf %189, %192 : vector<16x128xf32>
      %194 = arith.truncf %193 : vector<16x128xf32> to vector<16x128xbf16>
      %c0_79 = arith.constant 0 : index
      %c0_80 = arith.constant 0 : index
      %195 = vector.load %arg17[%c0_79, %c0_80] : memref<128x128xbf16, #tpu.memory_space<vmem>>, vector<128x128xbf16>
      %cst_81 = arith.constant dense<0.000000e+00> : vector<16x128xf32>
      %196 = tpu.matmul %194, %195, %cst_81 {dimension_numbers = #tpu.dot_dimension_numbers<[1], [0], [0], [1], [0, 0, 1, 1], [], []>} : vector<16x128xbf16>, vector<128x128xbf16>, vector<16x128xf32> -> vector<16x128xf32>
      %c0_82 = arith.constant 0 : index
      %c0_83 = arith.constant 0 : index
      %197 = vector.load %arg18[%c0_82, %c0_83] : memref<1x128xf32, #tpu.memory_space<vmem>>, vector<1x128xf32>
      %198 = vector.broadcast %197 : vector<1x128xf32> to vector<16x128xf32>
      %199 = arith.addf %196, %198 : vector<16x128xf32>
      %c0_84 = arith.constant 0 : index
      %c0_85 = arith.constant 0 : index
      %200 = vector.load %arg19[%c0_84, %c0_85] : memref<16x128xf32, #tpu.memory_space<vmem>>, vector<16x128xf32>
      tpu.vector_store %arg19[%c0_84, %c0_85], %199 {strides = array<i32>} : memref<16x128xf32, #tpu.memory_space<vmem>>, vector<16x128xf32>,
    } else {
    }
    return
  }
  func.func @transform_0(%arg0: i32, %arg1: i32) -> (i32, i32) {
    %c0_i32 = arith.constant 0 : i32
    %c0_i32_0 = arith.constant 0 : i32
    return %arg1, %c0_i32 : i32, i32
  }
  func.func @transform_1(%arg0: i32, %arg1: i32) -> (i32, i32) {
    %c0_i32 = arith.constant 0 : i32
    %c0_i32_0 = arith.constant 0 : i32
    return %arg1, %c0_i32 : i32, i32
  }
  func.func @transform_2(%arg0: i32, %arg1: i32) -> (i32, i32) {
    %c0_i32 = arith.constant 0 : i32
    %c0_i32_0 = arith.constant 0 : i32
    return %arg1, %c0_i32 : i32, i32
  }
  func.func @transform_3(%arg0: i32, %arg1: i32) -> (i32, i32) {
    %c0_i32 = arith.constant 0 : i32
    %c0_i32_0 = arith.constant 0 : i32
    %c0_i32_1 = arith.constant 0 : i32
    return %c0_i32, %c0_i32_0 : i32, i32
  }
  func.func @transform_4(%arg0: i32, %arg1: i32) -> (i32, i32) {
    %c0_i32 = arith.constant 0 : i32
    %c0_i32_0 = arith.constant 0 : i32
    %c0_i32_1 = arith.constant 0 : i32
    return %c0_i32, %c0_i32_0 : i32, i32
  }
  func.func @transform_5(%arg0: i32, %arg1: i32) -> (i32, i32) {
    %c0_i32 = arith.constant 0 : i32
    %c0_i32_0 = arith.constant 0 : i32
    %c0_i32_1 = arith.constant 0 : i32
    return %c0_i32, %c0_i32_0 : i32, i32
  }
  func.func @transform_6(%arg0: i32, %arg1: i32) -> (i32, i32) {
    %c0_i32 = arith.constant 0 : i32
    %c0_i32_0 = arith.constant 0 : i32
    %c0_i32_1 = arith.constant 0 : i32
    return %c0_i32, %c0_i32_0 : i32, i32
  }
  func.func @transform_7(%arg0: i32, %arg1: i32) -> (i32, i32) {
    %c0_i32 = arith.constant 0 : i32
    %c0_i32_0 = arith.constant 0 : i32
    %c0_i32_1 = arith.constant 0 : i32
    return %c0_i32, %c0_i32_0 : i32, i32
  }
  func.func @transform_8(%arg0: i32, %arg1: i32) -> (i32, i32) {
    %c0_i32 = arith.constant 0 : i32
    %c0_i32_0 = arith.constant 0 : i32
    %c0_i32_1 = arith.constant 0 : i32
    return %c0_i32, %c0_i32_0 : i32, i32
  }
  func.func @transform_9(%arg0: i32, %arg1: i32) -> (i32, i32) {
    %c0_i32 = arith.constant 0 : i32
    %c0_i32_0 = arith.constant 0 : i32
    %c0_i32_1 = arith.constant 0 : i32
    return %c0_i32, %c0_i32_0 : i32, i32
  }
  func.func @transform_10(%arg0: i32, %arg1: i32) -> (i32, i32) {
    %c0_i32 = arith.constant 0 : i32
    %c0_i32_0 = arith.constant 0 : i32
    %c0_i32_1 = arith.constant 0 : i32
    return %c0_i32, %c0_i32_0 : i32, i32
  }
  func.func @transform_11(%arg0: i32, %arg1: i32) -> (i32, i32) {
    %c0_i32 = arith.constant 0 : i32
    %c0_i32_0 = arith.constant 0 : i32
    %c0_i32_1 = arith.constant 0 : i32
    return %c0_i32, %c0_i32_0 : i32, i32
  }
  func.func @transform_12(%arg0: i32, %arg1: i32) -> (i32, i32) {
    %c0_i32 = arith.constant 0 : i32
    %c0_i32_0 = arith.constant 0 : i32
    %c0_i32_1 = arith.constant 0 : i32
    return %c0_i32, %c0_i32_0 : i32, i32
  }
  func.func @transform_13(%arg0: i32, %arg1: i32) -> (i32, i32) {
    %c0_i32 = arith.constant 0 : i32
    %c0_i32_0 = arith.constant 0 : i32
    %c0_i32_1 = arith.constant 0 : i32
    return %c0_i32, %c0_i32_0 : i32, i32
  }
  func.func @transform_14(%arg0: i32, %arg1: i32) -> (i32, i32) {
    %c0_i32 = arith.constant 0 : i32
    %c0_i32_0 = arith.constant 0 : i32
    %c0_i32_1 = arith.constant 0 : i32
    return %c0_i32, %c0_i32_0 : i32, i32
  }
  func.func @transform_15(%arg0: i32, %arg1: i32) -> (i32, i32) {
    %c0_i32 = arith.constant 0 : i32
    %c0_i32_0 = arith.constant 0 : i32
    %c0_i32_1 = arith.constant 0 : i32
    return %c0_i32, %c0_i32_0 : i32, i32
  }
  func.func @transform_16(%arg0: i32, %arg1: i32) -> (i32, i32) {
    %c0_i32 = arith.constant 0 : i32
    %c0_i32_0 = arith.constant 0 : i32
    %c0_i32_1 = arith.constant 0 : i32
    return %c0_i32, %c0_i32_0 : i32, i32
  }
  func.func @transform_17(%arg0: i32, %arg1: i32) -> (i32, i32) {
    %c0_i32 = arith.constant 0 : i32
    %c0_i32_0 = arith.constant 0 : i32
    return %arg1, %c0_i32 : i32, i32
  }
}

</mosaic_0001>

<llo_original>
// kernel: text_from_image_g.1
$region0: #{text_from_image_g.1}
  #allocation0 [shape = 'u32[]', space=smem, size = 0x4, offset = 0x4, fixed_abs, tag = 'smem constant byte address 0x4 - core index']
  #allocation1 [shape = 'u32[144,128]{1,0:T(1,128)}', space=vmem, size = 0x12000, scoped, tag = 'internal scratch']
  #allocation2 [shape = 'f32[8,128]{1,0:T(8,128)}', space=vmem, size = 0x1000, scoped, tag = 'scratch operand']
  %s0 = inlined_call_operand.vmem [shape: bf16[16,128], index: 0, kind: input, shape index: {}]
  %s1 = inlined_call_operand.vmem [shape: bf16[16,640], index: 1, kind: input, shape index: {}]
  %s2 = inlined_call_operand.vmem [shape: bf16[16,640], index: 2, kind: input, shape index: {}]
  %s3 = inlined_call_operand.vmem [shape: bf16[128,128], index: 3, kind: input, shape index: {}]
  %s4 = inlined_call_operand.vmem [shape: f32[1,128], index: 4, kind: input, shape index: {}]
  %s5 = inlined_call_operand.vmem [shape: bf16[128,128], index: 5, kind: input, shape index: {}]
  %s6 = inlined_call_operand.vmem [shape: f32[1,128], index: 6, kind: input, shape index: {}]
  %s7 = inlined_call_operand.hbm [shape: bf16[640,384], index: 7, kind: input, shape index: {}]
  %s8 = inlined_call_operand.vmem [shape: f32[1,384], index: 8, kind: input, shape index: {}]
  %s9 = inlined_call_operand.hbm [shape: bf16[640,384], index: 9, kind: input, shape index: {}]
  %s10 = inlined_call_operand.vmem [shape: f32[1,384], index: 10, kind: input, shape index: {}]
  %s11 = inlined_call_operand.vmem [shape: bf16[128,128], index: 11, kind: input, shape index: {}]
  %s12 = inlined_call_operand.vmem [shape: f32[1,128], index: 12, kind: input, shape index: {}]
  %s13 = inlined_call_operand.vmem [shape: bf16[128,128], index: 13, kind: input, shape index: {}]
  %s14 = inlined_call_operand.vmem [shape: f32[1,128], index: 14, kind: input, shape index: {}]
  %s15 = inlined_call_operand.vmem [shape: bf16[128,128], index: 15, kind: input, shape index: {}]
  %s16 = inlined_call_operand.vmem [shape: f32[1,128], index: 16, kind: input, shape index: {}]
  %s17 = inlined_call_operand.vmem [shape: f32[16,128], index: 17, kind: output, shape index: {}]
  %s18 = sld [smem:[#allocation0]]
  $region129: #{text_from_image_g.1} parent=0
    _
  %s20 = ssub.s32 1, %s18
  %s21 = scalar_select 0, %s20, %s18
  $region1: #{text_from_image_g.1} parent=0
    #allocation3 [shape = 'u8[491520]{0}', space=vmem, size = 0x78000, scoped, tag = 'input window, operand 7, single buffered']
    #allocation4 [shape = 's32[2]{0}', space=sflag, size = 0x8, scoped, tag = 'scoped memory for text_from_image_g.1']
    #allocation5 [shape = 'u8[491520]{0}', space=vmem, size = 0x78000, scoped, tag = 'input window, operand 9, single buffered']
    #allocation6 [shape = 's32[1]{0}', space=sflag, size = 0x4, scoped, tag = 'scoped memory for text_from_image_g.1']
    %22 = vsyncpa [#allocation4], 0
    %23 = vsyncpa [#allocation6], 0
    loop: start=0, step=1, limit=6
    $region2: #{text_from_image_g.1} parent=1 // loop_pre_header
      _
    $region3: #{text_from_image_g.1} parent=1 // loop_header
      %s25 = sphi 0, %s29
      %p26 = scmp.ge.s32.totalorder %s25, 6
      %s32 = sphi 0, %s44
      %s33 = sphi 0, %s40
      %s34 = sphi 0, %s32
      %s35 = sphi 0, %s33
      %s36 = sphi 0, %s34
      %s37 = sphi 0, %s35
      %s47 = sphi 0, %s49
      %s50 = sphi 0, %s47
      %s51 = sphi 0, %s50
      %s67 = sphi 0, %s51
      %s73 = sphi 0, %s75
      %s76 = sphi 0, %s73
      %s77 = sphi 0, %s76
      %s93 = sphi 0, %s77
      %s99 = sphi 0, %s101
      %s102 = sphi 0, %s99
      %s103 = sphi 0, %s102
      %s119 = sphi 0, %s103
      %s123 = sphi 0, %s123
      %s125 = sphi 0, %s123
      %s126 = sphi 0, %s125
      %s140 = sphi 0, %s126
      %s144 = sphi 0, %s144
      %s146 = sphi 0, %s144
      %s147 = sphi 0, %s146
      %s161 = sphi 0, %s147
      %s165 = sphi 0, %s165
      %s167 = sphi 0, %s165
      %s168 = sphi 0, %s167
      %s182 = sphi 0, %s168
      %s186 = sphi 0, %s186
      %s188 = sphi 0, %s186
      %s189 = sphi 0, %s188
      %s203 = sphi 0, %s189
      %s207 = sphi 0, %s207
      %s209 = sphi 0, %s207
      %s210 = sphi 0, %s209
      %s224 = sphi 0, %s210
      %s228 = sphi 0, %s228
      %s230 = sphi 0, %s228
      %s231 = sphi 0, %s230
      %s245 = sphi 0, %s231
      %s249 = sphi 0, %s249
      %s251 = sphi 0, %s249
      %s252 = sphi 0, %s251
      %s266 = sphi 0, %s252
      %s270 = sphi 0, %s270
      %s272 = sphi 0, %s270
      %s273 = sphi 0, %s272
      %s287 = sphi 0, %s273
      %s291 = sphi 0, %s291
      %s293 = sphi 0, %s291
      %s294 = sphi 0, %s293
      %s308 = sphi 0, %s294
      %s312 = sphi 0, %s312
      %s314 = sphi 0, %s312
      %s315 = sphi 0, %s314
      %s329 = sphi 0, %s315
      %s333 = sphi 0, %s333
      %s335 = sphi 0, %s333
      %s336 = sphi 0, %s335
      %s350 = sphi 0, %s336
      %s354 = sphi 0, %s354
      %s356 = sphi 0, %s354
      %s357 = sphi 0, %s356
      %s371 = sphi 0, %s357
      %s375 = sphi 0, %s375
      %s377 = sphi 0, %s375
      %s378 = sphi 0, %s377
      %s392 = sphi 0, %s378
      %s396 = sphi 0, %s396
      %s398 = sphi 0, %s396
      %s399 = sphi 0, %s398
      %s413 = sphi 0, %s399
      %s419 = sphi 0, %s421
      %s422 = sphi 0, %s419
      %s423 = sphi 0, %s422
      %s439 = sphi 0, %s423
    $region4: #{text_from_image_g.1} parent=1 // loop_header_branch
      %28 = sbr.rel (%p26) target = $region8
    $region5: #{text_from_image_g.1} parent=1 // loop_body
      %s30 = ssub.s32 %s25, 1
      %s31 = ssub.s32 %s25, 2
      %s38 = sadd.s32 1, %s33
      %p39 = scmp.ge.s32.totalorder %s38, 1
      %s40 = scalar_select %p39, 0, %s38
      %s41 = sadd.s32 1, %s32
      %s42 = scalar_select %p39, %s41, %s32
      %p43 = scmp.ge.s32.totalorder %s42, 4
      %s44 = scalar_select %p43, 0, %s42
      %s45 = ssub.s32 %s33, %s40
      %p46 = scmp.eq.s32.totalorder %s45, 0
      %s48 = sadd.s32 %s47, 1
      %s49 = scalar_select %p46, %s47, %s48
      %p52 = pneg %p46
      %p53 = scmp.eq.s32.totalorder %s25, 3
      %p54 = por %p52, %p53
      %p55 = scmp.ne.s32.totalorder %s47, %s50
      %p56 = scmp.eq.s32.totalorder %s25, 0
      %p57 = por %p55, %p56
      %p58 = scmp.ne.s32.totalorder %s47, %s50
      %p59 = scmp.eq.s32.totalorder %s30, 3
      %p60 = por %p58, %p59
      %p61 = scmp.ne.s32.totalorder %s50, %s51
      %p62 = scmp.eq.s32.totalorder %s30, 0
      %p63 = por %p61, %p62
      %p64 = scmp.ne.s32.totalorder %s50, %s51
      %p65 = scmp.eq.s32.totalorder %s31, 3
      %p66 = por %p64, %p65
      %p68 = scmp.ne.s32.totalorder %s51, %s67
      %p69 = scmp.eq.s32.totalorder %s31, 0
      %p70 = por %p68, %p69
      %s71 = ssub.s32 %s33, %s40
      %p72 = scmp.eq.s32.totalorder %s71, 0
      %s74 = sadd.s32 %s73, 1
      %s75 = scalar_select %p72, %s73, %s74
      %p78 = pneg %p72
      %p79 = scmp.eq.s32.totalorder %s25, 3
      %p80 = por %p78, %p79
      %p81 = scmp.ne.s32.totalorder %s73, %s76
      %p82 = scmp.eq.s32.totalorder %s25, 0
      %p83 = por %p81, %p82
      %p84 = scmp.ne.s32.totalorder %s73, %s76
      %p85 = scmp.eq.s32.totalorder %s30, 3
      %p86 = por %p84, %p85
      %p87 = scmp.ne.s32.totalorder %s76, %s77
      %p88 = scmp.eq.s32.totalorder %s30, 0
      %p89 = por %p87, %p88
      %p90 = scmp.ne.s32.totalorder %s76, %s77
      %p91 = scmp.eq.s32.totalorder %s31, 3
      %p92 = por %p90, %p91
      %p94 = scmp.ne.s32.totalorder %s77, %s93
      %p95 = scmp.eq.s32.totalorder %s31, 0
      %p96 = por %p94, %p95
      %s97 = ssub.s32 %s33, %s40
      %p98 = scmp.eq.s32.totalorder %s97, 0
      %s100 = sadd.s32 %s99, 1
      %s101 = scalar_select %p98, %s99, %s100
      %p104 = pneg %p98
      %p105 = scmp.eq.s32.totalorder %s25, 3
      %p106 = por %p104, %p105
      %p107 = scmp.ne.s32.totalorder %s99, %s102
      %p108 = scmp.eq.s32.totalorder %s25, 0
      %p109 = por %p107, %p108
      %p110 = scmp.ne.s32.totalorder %s99, %s102
      %p111 = scmp.eq.s32.totalorder %s30, 3
      %p112 = por %p110, %p111
      %p113 = scmp.ne.s32.totalorder %s102, %s103
      %p114 = scmp.eq.s32.totalorder %s30, 0
      %p115 = por %p113, %p114
      %p116 = scmp.ne.s32.totalorder %s102, %s103
      %p117 = scmp.eq.s32.totalorder %s31, 3
      %p118 = por %p116, %p117
      %p120 = scmp.ne.s32.totalorder %s103, %s119
      %p121 = scmp.eq.s32.totalorder %s31, 0
      %p122 = por %p120, %p121
      %s124 = sadd.s32 %s123, 1
      %p127 = scmp.eq.s32.totalorder %s25, 3
      %p128 = scmp.ne.s32.totalorder %s123, %s125
      %p129 = scmp.eq.s32.totalorder %s25, 0
      %p130 = por %p128, %p129
      %p131 = scmp.ne.s32.totalorder %s123, %s125
      %p132 = scmp.eq.s32.totalorder %s30, 3
      %p133 = por %p131, %p132
      %p134 = scmp.ne.s32.totalorder %s125, %s126
      %p135 = scmp.eq.s32.totalorder %s30, 0
      %p136 = por %p134, %p135
      %p137 = scmp.ne.s32.totalorder %s125, %s126
      %p138 = scmp.eq.s32.totalorder %s31, 3
      %p139 = por %p137, %p138
      %p141 = scmp.ne.s32.totalorder %s126, %s140
      %p142 = scmp.eq.s32.totalorder %s31, 0
      %p143 = por %p141, %p142
      %s145 = sadd.s32 %s144, 1
      %p148 = scmp.eq.s32.totalorder %s25, 3
      %p149 = scmp.ne.s32.totalorder %s144, %s146
      %p150 = scmp.eq.s32.totalorder %s25, 0
      %p151 = por %p149, %p150
      %p152 = scmp.ne.s32.totalorder %s144, %s146
      %p153 = scmp.eq.s32.totalorder %s30, 3
      %p154 = por %p152, %p153
      %p155 = scmp.ne.s32.totalorder %s146, %s147
      %p156 = scmp.eq.s32.totalorder %s30, 0
      %p157 = por %p155, %p156
      %p158 = scmp.ne.s32.totalorder %s146, %s147
      %p159 = scmp.eq.s32.totalorder %s31, 3
      %p160 = por %p158, %p159
      %p162 = scmp.ne.s32.totalorder %s147, %s161
      %p163 = scmp.eq.s32.totalorder %s31, 0
      %p164 = por %p162, %p163
      %s166 = sadd.s32 %s165, 1
      %p169 = scmp.eq.s32.totalorder %s25, 3
      %p170 = scmp.ne.s32.totalorder %s165, %s167
      %p171 = scmp.eq.s32.totalorder %s25, 0
      %p172 = por %p170, %p171
      %p173 = scmp.ne.s32.totalorder %s165, %s167
      %p174 = scmp.eq.s32.totalorder %s30, 3
      %p175 = por %p173, %p174
      %p176 = scmp.ne.s32.totalorder %s167, %s168
      %p177 = scmp.eq.s32.totalorder %s30, 0
      %p178 = por %p176, %p177
      %p179 = scmp.ne.s32.totalorder %s167, %s168
      %p180 = scmp.eq.s32.totalorder %s31, 3
      %p181 = por %p179, %p180
      %p183 = scmp.ne.s32.totalorder %s168, %s182
      %p184 = scmp.eq.s32.totalorder %s31, 0
      %p185 = por %p183, %p184
      %s187 = sadd.s32 %s186, 1
      %p190 = scmp.eq.s32.totalorder %s25, 3
      %p191 = scmp.ne.s32.totalorder %s186, %s188
      %p192 = scmp.eq.s32.totalorder %s25, 0
      %p193 = por %p191, %p192
      %p194 = scmp.ne.s32.totalorder %s186, %s188
      %p195 = scmp.eq.s32.totalorder %s30, 3
      %p196 = por %p194, %p195
      %p197 = scmp.ne.s32.totalorder %s188, %s189
      %p198 = scmp.eq.s32.totalorder %s30, 0
      %p199 = por %p197, %p198
      %p200 = scmp.ne.s32.totalorder %s188, %s189
      %p201 = scmp.eq.s32.totalorder %s31, 3
      %p202 = por %p200, %p201
      %p204 = scmp.ne.s32.totalorder %s189, %s203
      %p205 = scmp.eq.s32.totalorder %s31, 0
      %p206 = por %p204, %p205
      %s208 = sadd.s32 %s207, 1
      %p211 = scmp.eq.s32.totalorder %s25, 3
      %p212 = scmp.ne.s32.totalorder %s207, %s209
      %p213 = scmp.eq.s32.totalorder %s25, 0
      %p214 = por %p212, %p213
      %p215 = scmp.ne.s32.totalorder %s207, %s209
      %p216 = scmp.eq.s32.totalorder %s30, 3
      %p217 = por %p215, %p216
      %p218 = scmp.ne.s32.totalorder %s209, %s210
      %p219 = scmp.eq.s32.totalorder %s30, 0
      %p220 = por %p218, %p219
      %p221 = scmp.ne.s32.totalorder %s209, %s210
      %p222 = scmp.eq.s32.totalorder %s31, 3
      %p223 = por %p221, %p222
      %p225 = scmp.ne.s32.totalorder %s210, %s224
      %p226 = scmp.eq.s32.totalorder %s31, 0
      %p227 = por %p225, %p226
      %s229 = sadd.s32 %s228, 1
      %p232 = scmp.eq.s32.totalorder %s25, 3
      %p233 = scmp.ne.s32.totalorder %s228, %s230
      %p234 = scmp.eq.s32.totalorder %s25, 0
      %p235 = por %p233, %p234
      %p236 = scmp.ne.s32.totalorder %s228, %s230
      %p237 = scmp.eq.s32.totalorder %s30, 3
      %p238 = por %p236, %p237
      %p239 = scmp.ne.s32.totalorder %s230, %s231
      %p240 = scmp.eq.s32.totalorder %s30, 0
      %p241 = por %p239, %p240
      %p242 = scmp.ne.s32.totalorder %s230, %s231
      %p243 = scmp.eq.s32.totalorder %s31, 3
      %p244 = por %p242, %p243
      %p246 = scmp.ne.s32.totalorder %s231, %s245
      %p247 = scmp.eq.s32.totalorder %s31, 0
      %p248 = por %p246, %p247
      %s250 = sadd.s32 %s249, 1
      %p253 = scmp.eq.s32.totalorder %s25, 3
      %p254 = scmp.ne.s32.totalorder %s249, %s251
      %p255 = scmp.eq.s32.totalorder %s25, 0
      %p256 = por %p254, %p255
      %p257 = scmp.ne.s32.totalorder %s249, %s251
      %p258 = scmp.eq.s32.totalorder %s30, 3
      %p259 = por %p257, %p258
      %p260 = scmp.ne.s32.totalorder %s251, %s252
      %p261 = scmp.eq.s32.totalorder %s30, 0
      %p262 = por %p260, %p261
      %p263 = scmp.ne.s32.totalorder %s251, %s252
      %p264 = scmp.eq.s32.totalorder %s31, 3
      %p265 = por %p263, %p264
      %p267 = scmp.ne.s32.totalorder %s252, %s266
      %p268 = scmp.eq.s32.totalorder %s31, 0
      %p269 = por %p267, %p268
      %s271 = sadd.s32 %s270, 1
      %p274 = scmp.eq.s32.totalorder %s25, 3
      %p275 = scmp.ne.s32.totalorder %s270, %s272
      %p276 = scmp.eq.s32.totalorder %s25, 0
      %p277 = por %p275, %p276
      %p278 = scmp.ne.s32.totalorder %s270, %s272
      %p279 = scmp.eq.s32.totalorder %s30, 3
      %p280 = por %p278, %p279
      %p281 = scmp.ne.s32.totalorder %s272, %s273
      %p282 = scmp.eq.s32.totalorder %s30, 0
      %p283 = por %p281, %p282
      %p284 = scmp.ne.s32.totalorder %s272, %s273
      %p285 = scmp.eq.s32.totalorder %s31, 3
      %p286 = por %p284, %p285
      %p288 = scmp.ne.s32.totalorder %s273, %s287
      %p289 = scmp.eq.s32.totalorder %s31, 0
      %p290 = por %p288, %p289
      %s292 = sadd.s32 %s291, 1
      %p295 = scmp.eq.s32.totalorder %s25, 3
      %p296 = scmp.ne.s32.totalorder %s291, %s293
      %p297 = scmp.eq.s32.totalorder %s25, 0
      %p298 = por %p296, %p297
      %p299 = scmp.ne.s32.totalorder %s291, %s293
      %p300 = scmp.eq.s32.totalorder %s30, 3
      %p301 = por %p299, %p300
      %p302 = scmp.ne.s32.totalorder %s293, %s294
      %p303 = scmp.eq.s32.totalorder %s30, 0
      %p304 = por %p302, %p303
      %p305 = scmp.ne.s32.totalorder %s293, %s294
      %p306 = scmp.eq.s32.totalorder %s31, 3
      %p307 = por %p305, %p306
      %p309 = scmp.ne.s32.totalorder %s294, %s308
      %p310 = scmp.eq.s32.totalorder %s31, 0
      %p311 = por %p309, %p310
      %s313 = sadd.s32 %s312, 1
      %p316 = scmp.eq.s32.totalorder %s25, 3
      %p317 = scmp.ne.s32.totalorder %s312, %s314
      %p318 = scmp.eq.s32.totalorder %s25, 0
      %p319 = por %p317, %p318
      %p320 = scmp.ne.s32.totalorder %s312, %s314
      %p321 = scmp.eq.s32.totalorder %s30, 3
      %p322 = por %p320, %p321
      %p323 = scmp.ne.s32.totalorder %s314, %s315
      %p324 = scmp.eq.s32.totalorder %s30, 0
      %p325 = por %p323, %p324
      %p326 = scmp.ne.s32.totalorder %s314, %s315
      %p327 = scmp.eq.s32.totalorder %s31, 3
      %p328 = por %p326, %p327
      %p330 = scmp.ne.s32.totalorder %s315, %s329
      %p331 = scmp.eq.s32.totalorder %s31, 0
      %p332 = por %p330, %p331
      %s334 = sadd.s32 %s333, 1
      %p337 = scmp.eq.s32.totalorder %s25, 3
      %p338 = scmp.ne.s32.totalorder %s333, %s335
      %p339 = scmp.eq.s32.totalorder %s25, 0
      %p340 = por %p338, %p339
      %p341 = scmp.ne.s32.totalorder %s333, %s335
      %p342 = scmp.eq.s32.totalorder %s30, 3
      %p343 = por %p341, %p342
      %p344 = scmp.ne.s32.totalorder %s335, %s336
      %p345 = scmp.eq.s32.totalorder %s30, 0
      %p346 = por %p344, %p345
      %p347 = scmp.ne.s32.totalorder %s335, %s336
      %p348 = scmp.eq.s32.totalorder %s31, 3
      %p349 = por %p347, %p348
      %p351 = scmp.ne.s32.totalorder %s336, %s350
      %p352 = scmp.eq.s32.totalorder %s31, 0
      %p353 = por %p351, %p352
      %s355 = sadd.s32 %s354, 1
      %p358 = scmp.eq.s32.totalorder %s25, 3
      %p359 = scmp.ne.s32.totalorder %s354, %s356
      %p360 = scmp.eq.s32.totalorder %s25, 0
      %p361 = por %p359, %p360
      %p362 = scmp.ne.s32.totalorder %s354, %s356
      %p363 = scmp.eq.s32.totalorder %s30, 3
      %p364 = por %p362, %p363
      %p365 = scmp.ne.s32.totalorder %s356, %s357
      %p366 = scmp.eq.s32.totalorder %s30, 0
      %p367 = por %p365, %p366
      %p368 = scmp.ne.s32.totalorder %s356, %s357
      %p369 = scmp.eq.s32.totalorder %s31, 3
      %p370 = por %p368, %p369
      %p372 = scmp.ne.s32.totalorder %s357, %s371
      %p373 = scmp.eq.s32.totalorder %s31, 0
      %p374 = por %p372, %p373
      %s376 = sadd.s32 %s375, 1
      %p379 = scmp.eq.s32.totalorder %s25, 3
      %p380 = scmp.ne.s32.totalorder %s375, %s377
      %p381 = scmp.eq.s32.totalorder %s25, 0
      %p382 = por %p380, %p381
      %p383 = scmp.ne.s32.totalorder %s375, %s377
      %p384 = scmp.eq.s32.totalorder %s30, 3
      %p385 = por %p383, %p384
      %p386 = scmp.ne.s32.totalorder %s377, %s378
      %p387 = scmp.eq.s32.totalorder %s30, 0
      %p388 = por %p386, %p387
      %p389 = scmp.ne.s32.totalorder %s377, %s378
      %p390 = scmp.eq.s32.totalorder %s31, 3
      %p391 = por %p389, %p390
      %p393 = scmp.ne.s32.totalorder %s378, %s392
      %p394 = scmp.eq.s32.totalorder %s31, 0
      %p395 = por %p393, %p394
      %s397 = sadd.s32 %s396, 1
      %p400 = scmp.eq.s32.totalorder %s25, 3
      %p401 = scmp.ne.s32.totalorder %s396, %s398
      %p402 = scmp.eq.s32.totalorder %s25, 0
      %p403 = por %p401, %p402
      %p404 = scmp.ne.s32.totalorder %s396, %s398
      %p405 = scmp.eq.s32.totalorder %s30, 3
      %p406 = por %p404, %p405
      %p407 = scmp.ne.s32.totalorder %s398, %s399
      %p408 = scmp.eq.s32.totalorder %s30, 0
      %p409 = por %p407, %p408
      %p410 = scmp.ne.s32.totalorder %s398, %s399
      %p411 = scmp.eq.s32.totalorder %s31, 3
      %p412 = por %p410, %p411
      %p414 = scmp.ne.s32.totalorder %s399, %s413
      %p415 = scmp.eq.s32.totalorder %s31, 0
      %p416 = por %p414, %p415
      %s417 = ssub.s32 %s33, %s40
      %p418 = scmp.eq.s32.totalorder %s417, 0
      %s420 = sadd.s32 %s419, 1
      %s421 = scalar_select %p418, %s419, %s420
      %p424 = pneg %p418
      %p425 = scmp.eq.s32.totalorder %s25, 3
      %p426 = por %p424, %p425
      %p427 = scmp.ne.s32.totalorder %s419, %s422
      %p428 = scmp.eq.s32.totalorder %s25, 0
      %p429 = por %p427, %p428
      %p430 = scmp.ne.s32.totalorder %s419, %s422
      %p431 = scmp.eq.s32.totalorder %s30, 3
      %p432 = por %p430, %p431
      %p433 = scmp.ne.s32.totalorder %s422, %s423
      %p434 = scmp.eq.s32.totalorder %s30, 0
      %p435 = por %p433, %p434
      %p436 = scmp.ne.s32.totalorder %s422, %s423
      %p437 = scmp.eq.s32.totalorder %s31, 3
      %p438 = por %p436, %p437
      %p440 = scmp.ne.s32.totalorder %s423, %s439
      %p441 = scmp.eq.s32.totalorder %s31, 0
      %p442 = por %p440, %p441
      %p443 = scmp.le.s32.totalorder 1, %s25
      %p444 = scmp.lt.s32.totalorder %s25, 5
      %p445 = pnand %p443, %p444
      %p446 = pneg %p445
      // Predicated region
      $region9: #{text_from_image_g.1} parent=5 // pred_check
        _
      $region10: #{text_from_image_g.1} parent=5 // pred_check_branch
        %448 = sbr.rel (%p445) target = $region12
      $region11: #{text_from_image_g.1} parent=5 // pred_region
        %s449 = ssub.s32 %s25, 1
        // Predicated region
        $region13: #{text_from_image_g.1} parent=11 // pred_check
          %p450 = pneg %p63
        $region14: #{text_from_image_g.1} parent=11 // pred_check_branch
          %452 = sbr.rel (%p450) target = $region16
        $region15: #{text_from_image_g.1} parent=11 // pred_region
          %s453 = smul.u32 2, %s35
          %p454 = scmp.lt.s32.totalorder %s453, 1
          %s455 = scalar_select %p454, %s453, 1
          %s456 = smul.addr %s455, 4
          %s457 = scalar_lea.vmem %s0, %s456
          %s458 = smul.u32 2, %s35
        $region16: #{text_from_image_g.1} parent=11 // pred_fallthru
          _
        // Predicated region
        $region17: #{text_from_image_g.1} parent=11 // pred_check
          %p459 = pneg %p89
        $region18: #{text_from_image_g.1} parent=11 // pred_check_branch
          %461 = sbr.rel (%p459) target = $region20
        $region19: #{text_from_image_g.1} parent=11 // pred_region
          %s462 = smul.u32 2, %s35
          %p463 = scmp.lt.s32.totalorder %s462, 1
          %s464 = scalar_select %p463, %s462, 1
          %s465 = smul.addr %s464, 5
          %s466 = smul.addr %s465, 4
          %s467 = scalar_lea.vmem %s1, %s466
          %s468 = smul.u32 2, %s35
        $region20: #{text_from_image_g.1} parent=11 // pred_fallthru
          _
        // Predicated region
        $region21: #{text_from_image_g.1} parent=11 // pred_check
          %p469 = pneg %p115
        $region22: #{text_from_image_g.1} parent=11 // pred_check_branch
          %471 = sbr.rel (%p469) target = $region24
        $region23: #{text_from_image_g.1} parent=11 // pred_region
          %s472 = smul.u32 2, %s35
          %p473 = scmp.lt.s32.totalorder %s472, 1
          %s474 = scalar_select %p473, %s472, 1
          %s475 = smul.addr %s474, 5
          %s476 = smul.addr %s475, 4
          %s477 = scalar_lea.vmem %s2, %s476
          %s478 = smul.u32 2, %s35
        $region24: #{text_from_image_g.1} parent=11 // pred_fallthru
          _
        // Predicated region
        $region25: #{text_from_image_g.1} parent=11 // pred_check
          %p479 = pneg %p136
        $region26: #{text_from_image_g.1} parent=11 // pred_check_branch
          %481 = sbr.rel (%p479) target = $region28
        $region27: #{text_from_image_g.1} parent=11 // pred_region
          _
        $region28: #{text_from_image_g.1} parent=11 // pred_fallthru
          _
        // Predicated region
        $region29: #{text_from_image_g.1} parent=11 // pred_check
          %p482 = pneg %p157
        $region30: #{text_from_image_g.1} parent=11 // pred_check_branch
          %484 = sbr.rel (%p482) target = $region32
        $region31: #{text_from_image_g.1} parent=11 // pred_region
          _
        $region32: #{text_from_image_g.1} parent=11 // pred_fallthru
          _
        // Predicated region
        $region33: #{text_from_image_g.1} parent=11 // pred_check
          %p485 = pneg %p178
        $region34: #{text_from_image_g.1} parent=11 // pred_check_branch
          %487 = sbr.rel (%p485) target = $region36
        $region35: #{text_from_image_g.1} parent=11 // pred_region
          _
        $region36: #{text_from_image_g.1} parent=11 // pred_fallthru
          _
        // Predicated region
        $region37: #{text_from_image_g.1} parent=11 // pred_check
          %p488 = pneg %p199
        $region38: #{text_from_image_g.1} parent=11 // pred_check_branch
          %490 = sbr.rel (%p488) target = $region40
        $region39: #{text_from_image_g.1} parent=11 // pred_region
          _
        $region40: #{text_from_image_g.1} parent=11 // pred_fallthru
          _
        // Predicated region
        $region41: #{text_from_image_g.1} parent=11 // pred_check
          %p491 = pneg %p220
        $region42: #{text_from_image_g.1} parent=11 // pred_check_branch
          %493 = sbr.rel (%p491) target = $region44
        $region43: #{text_from_image_g.1} parent=11 // pred_region
          %s495 = ssub.s32 15360, 15360
          %496 = vsyncadd [#allocation4], %s495
          %s497 = sshll.u32 [#allocation3], 4
          %s498 = int_to_ptr.vmem [resolvable:$true] %s497
          %503 = dma.hbm_to_vmem [thread:$0]  %s7, 15360, %s498, [#allocation4], 192, 192, 12
        $region44: #{text_from_image_g.1} parent=11 // pred_fallthru
          _
        // Predicated region
        $region45: #{text_from_image_g.1} parent=11 // pred_check
          %p504 = pneg %p241
        $region46: #{text_from_image_g.1} parent=11 // pred_check_branch
          %506 = sbr.rel (%p504) target = $region48
        $region47: #{text_from_image_g.1} parent=11 // pred_region
          _
        $region48: #{text_from_image_g.1} parent=11 // pred_fallthru
          _
        // Predicated region
        $region49: #{text_from_image_g.1} parent=11 // pred_check
          %p507 = pneg %p262
        $region50: #{text_from_image_g.1} parent=11 // pred_check_branch
          %509 = sbr.rel (%p507) target = $region52
        $region51: #{text_from_image_g.1} parent=11 // pred_region
          %s511 = ssub.s32 15360, 15360
          %512 = vsyncadd [#allocation6], %s511
          %s513 = sshll.u32 [#allocation5], 4
          %s514 = int_to_ptr.vmem [resolvable:$true] %s513
          %519 = dma.hbm_to_vmem [thread:$0]  %s9, 15360, %s514, [#allocation6], 192, 192, 12
        $region52: #{text_from_image_g.1} parent=11 // pred_fallthru
          _
        // Predicated region
        $region53: #{text_from_image_g.1} parent=11 // pred_check
          %p520 = pneg %p283
        $region54: #{text_from_image_g.1} parent=11 // pred_check_branch
          %522 = sbr.rel (%p520) target = $region56
        $region55: #{text_from_image_g.1} parent=11 // pred_region
          _
        $region56: #{text_from_image_g.1} parent=11 // pred_fallthru
          _
        // Predicated region
        $region57: #{text_from_image_g.1} parent=11 // pred_check
          %p523 = pneg %p304
        $region58: #{text_from_image_g.1} parent=11 // pred_check_branch
          %525 = sbr.rel (%p523) target = $region60
        $region59: #{text_from_image_g.1} parent=11 // pred_region
          _
        $region60: #{text_from_image_g.1} parent=11 // pred_fallthru
          _
        // Predicated region
        $region61: #{text_from_image_g.1} parent=11 // pred_check
          %p526 = pneg %p325
        $region62: #{text_from_image_g.1} parent=11 // pred_check_branch
          %528 = sbr.rel (%p526) target = $region64
        $region63: #{text_from_image_g.1} parent=11 // pred_region
          _
        $region64: #{text_from_image_g.1} parent=11 // pred_fallthru
          _
        // Predicated region
        $region65: #{text_from_image_g.1} parent=11 // pred_check
          %p529 = pneg %p346
        $region66: #{text_from_image_g.1} parent=11 // pred_check_branch
          %531 = sbr.rel (%p529) target = $region68
        $region67: #{text_from_image_g.1} parent=11 // pred_region
          _
        $region68: #{text_from_image_g.1} parent=11 // pred_fallthru
          _
        // Predicated region
        $region69: #{text_from_image_g.1} parent=11 // pred_check
          %p532 = pneg %p367
        $region70: #{text_from_image_g.1} parent=11 // pred_check_branch
          %534 = sbr.rel (%p532) target = $region72
        $region71: #{text_from_image_g.1} parent=11 // pred_region
          _
        $region72: #{text_from_image_g.1} parent=11 // pred_fallthru
          _
        // Predicated region
        $region73: #{text_from_image_g.1} parent=11 // pred_check
          %p535 = pneg %p388
        $region74: #{text_from_image_g.1} parent=11 // pred_check_branch
          %537 = sbr.rel (%p535) target = $region76
        $region75: #{text_from_image_g.1} parent=11 // pred_region
          _
        $region76: #{text_from_image_g.1} parent=11 // pred_fallthru
          _
        // Predicated region
        $region77: #{text_from_image_g.1} parent=11 // pred_check
          %p538 = pneg %p409
        $region78: #{text_from_image_g.1} parent=11 // pred_check_branch
          %540 = sbr.rel (%p538) target = $region80
        $region79: #{text_from_image_g.1} parent=11 // pred_region
          _
        $region80: #{text_from_image_g.1} parent=11 // pred_fallthru
          _
      $region12: #{text_from_image_g.1} parent=5 // pred_fallthru
        _
      %p541 = scmp.lt.s32.totalorder %s25, 4
      // Predicated region
      $region81: #{text_from_image_g.1} parent=5 // pred_check
        %p542 = pneg %p541
      $region82: #{text_from_image_g.1} parent=5 // pred_check_branch
        %544 = sbr.rel (%p542) target = $region84
      $region83: #{text_from_image_g.1} parent=5 // pred_region
        _
      $region84: #{text_from_image_g.1} parent=5 // pred_fallthru
        _
      %p545 = scmp.le.s32.totalorder 1, %s25
      %p546 = scmp.lt.s32.totalorder %s25, 5
      %p547 = pnand %p545, %p546
      %p548 = pneg %p547
      // Predicated region
      $region85: #{text_from_image_g.1} parent=5 // pred_check
        _
      $region86: #{text_from_image_g.1} parent=5 // pred_check_branch
        %550 = sbr.rel (%p547) target = $region88
      $region87: #{text_from_image_g.1} parent=5 // pred_region
        %s551 = ssub.s32 %s25, 1
        // Predicated region
        $region89: #{text_from_image_g.1} parent=87 // pred_check
          %p552 = pneg %p220
        $region90: #{text_from_image_g.1} parent=87 // pred_check_branch
          %554 = sbr.rel (%p552) target = $region92
        $region91: #{text_from_image_g.1} parent=87 // pred_region
          %555 = dma.done [#allocation4], 15360
        $region92: #{text_from_image_g.1} parent=87 // pred_fallthru
          _
        // Predicated region
        $region93: #{text_from_image_g.1} parent=87 // pred_check
          %p556 = pneg %p262
        $region94: #{text_from_image_g.1} parent=87 // pred_check_branch
          %558 = sbr.rel (%p556) target = $region96
        $region95: #{text_from_image_g.1} parent=87 // pred_region
          %559 = dma.done [#allocation6], 15360
        $region96: #{text_from_image_g.1} parent=87 // pred_fallthru
          _
        %s560 = smul.u32 2, %s35
        %p561 = scmp.lt.s32.totalorder %s560, 1
        %s562 = scalar_select %p561, %s560, 1
        %s563 = smul.addr %s562, 4
        %s564 = scalar_lea.vmem %s0, %s563
        %p565 = pneg %p63
        %p566 = pneg %p60
        %s567 = smul.u32 2, %s35
        %p568 = scmp.lt.s32.totalorder %s567, 1
        %s569 = scalar_select %p568, %s567, 1
        %s570 = smul.addr %s569, 5
        %s571 = smul.addr %s570, 4
        %s572 = scalar_lea.vmem %s1, %s571
        %p573 = pneg %p89
        %p574 = pneg %p86
        %s575 = smul.u32 2, %s35
        %p576 = scmp.lt.s32.totalorder %s575, 1
        %s577 = scalar_select %p576, %s575, 1
        %s578 = smul.addr %s577, 5
        %s579 = smul.addr %s578, 4
        %s580 = scalar_lea.vmem %s2, %s579
        %p581 = pneg %p115
        %p582 = pneg %p112
        %p583 = pneg %p136
        %p584 = pneg %p133
        %p585 = pneg %p157
        %p586 = pneg %p154
        %p587 = pneg %p178
        %p588 = pneg %p175
        %p589 = pneg %p199
        %p590 = pneg %p196
        %p591 = pneg %p220
        %p592 = pneg %p217
        %p593 = pneg %p241
        %p594 = pneg %p238
        %p595 = pneg %p262
        %p596 = pneg %p259
        %p597 = pneg %p283
        %p598 = pneg %p280
        %p599 = pneg %p304
        %p600 = pneg %p301
        %p601 = pneg %p325
        %p602 = pneg %p322
        %p603 = pneg %p346
        %p604 = pneg %p343
        %p605 = pneg %p367
        %p606 = pneg %p364
        %p607 = pneg %p388
        %p608 = pneg %p385
        %p609 = pneg %p409
        %p610 = pneg %p406
        %p611 = pneg %p435
        %p612 = pneg %p432
        %s613 = smul.u32 2, %s35
        %p614 = scmp.lt.s32.totalorder %s613, 1
        %s615 = scalar_select %p614, %s613, 1
        %s616 = smul.addr %s615, 8
        %s617 = scalar_lea.vmem %s17, %s616
        %s618 = smul.u32 2, %s35
        %p619 = scmp.lt.s32.totalorder %s618, 1
        %s620 = scalar_select %p619, %s618, 1
        %s621 = smul.addr %s620, 4
        %s622 = scalar_lea.vmem %s0, %s621
        %s623 = smul.u32 2, %s35
        %s624 = smul.u32 2, %s35
        %p625 = scmp.lt.s32.totalorder %s624, 1
        %s626 = scalar_select %p625, %s624, 1
        %s627 = smul.addr %s626, 5
        %s628 = smul.addr %s627, 4
        %s629 = scalar_lea.vmem %s1, %s628
        %s630 = smul.u32 2, %s35
        %s631 = smul.u32 2, %s35
        %p632 = scmp.lt.s32.totalorder %s631, 1
        %s633 = scalar_select %p632, %s631, 1
        %s634 = smul.addr %s633, 5
        %s635 = smul.addr %s634, 4
        %s636 = scalar_lea.vmem %s2, %s635
        %s637 = smul.u32 2, %s35
        %s638 = smul.u32 2, %s35
        %p639 = scmp.lt.s32.totalorder %s638, 1
        %s640 = scalar_select %p639, %s638, 1
        %s641 = smul.addr %s640, 8
        %s642 = scalar_lea.vmem %s17, %s641
        %s643 = smul.u32 2, %s35
        %s645 = smul.u32 %s35, 16
        %v646 = vlaneseq
        %v647 = vshrl.u32 %v646, 7
        %v648 = vadd.s32 %v647, 8
        %v649 = vstv %s645
        %v650 = vadd.s32 %v649, %v647
        %v651 = vadd.s32 %v649, %v648
        %vm652 = vcmp.lt.s32.totalorder %v650, 2
        %vm653 = vcmp.lt.s32.totalorder %v651, 2
        %v654 = vsel %vm652, 1, 0
        %v655 = vsel %vm653, 1, 0
        %v656 = vcvt.s32.f32 %v654
        %v657 = vcvt.s32.f32 %v655
        %p658 = scmp.eq.s32.totalorder %s34, 0
        %p659 = scmp.eq.s32.totalorder %s35, 0
        %p660 = pnand %p658, %p659
        %p661 = pneg %p660
        // Predicated region
        $region97: #{text_from_image_g.1} parent=87 // pred_check
          _
        $region98: #{text_from_image_g.1} parent=87 // pred_check_branch
          %663 = sbr.rel (%p660) target = $region100
        $region99: #{text_from_image_g.1} parent=87 // pred_region
          %664 = vst [vmem:[#allocation2] sm:$0xff] 0.0
        $region100: #{text_from_image_g.1} parent=87 // pred_fallthru
          _
        // Predicated region
        $region101: #{text_from_image_g.1} parent=87 // pred_check
          %p665 = pneg %p658
        $region102: #{text_from_image_g.1} parent=87 // pred_check_branch
          %667 = sbr.rel (%p665) target = $region104
        $region103: #{text_from_image_g.1} parent=87 // pred_region
          %v668 = vld [vmem:[%s622] sm:$0xf]
          %v669 = vld [vmem:[%s622 + $0x4] sm:$0xf]
          %v670 = vld [vmem:[%s3] sm:$0xf]
          %v671 = vld [vmem:[%s3 + $0x4] sm:$0xf]
          %v672 = vld [vmem:[%s3 + $0x8] sm:$0xf]
          %v673 = vld [vmem:[%s3 + $0xc] sm:$0xf]
          %v674 = vld [vmem:[%s3 + $0x10] sm:$0xf]
          %v675 = vld [vmem:[%s3 + $0x14] sm:$0xf]
          %v676 = vld [vmem:[%s3 + $0x18] sm:$0xf]
          %v677 = vld [vmem:[%s3 + $0x1c] sm:$0xf]
          %v678 = vld [vmem:[%s3 + $0x20] sm:$0xf]
          %v679 = vld [vmem:[%s3 + $0x24] sm:$0xf]
          %v680 = vld [vmem:[%s3 + $0x28] sm:$0xf]
          %v681 = vld [vmem:[%s3 + $0x2c] sm:$0xf]
          %v682 = vld [vmem:[%s3 + $0x30] sm:$0xf]
          %v683 = vld [vmem:[%s3 + $0x34] sm:$0xf]
          %v684 = vld [vmem:[%s3 + $0x38] sm:$0xf]
          %v685 = vld [vmem:[%s3 + $0x3c] sm:$0xf]
          %v686 = vld [vmem:[%s4] sm:$0x1]
          %v688 = vlaneseq
          %v689 = vshrl.u32 %v688, 7
          %v690 = vsub.s32 0, %v689
          %v691 = vrot.slane %v686, %v690
          %v695 = vunpack.c.l.b16 %v668
          %v696 = vunpack.c.l.b16 %v669
          %v697 = vpack.c.b16 %v696, %v695
          %v715 = vunpack.c.l.b16 %v670
          %v716 = vunpack.c.l.b16 %v671
          %v717 = vunpack.c.l.b16 %v672
          %v718 = vunpack.c.l.b16 %v673
          %v719 = vunpack.c.l.b16 %v674
          %v720 = vunpack.c.l.b16 %v675
          %v721 = vunpack.c.l.b16 %v676
          %v722 = vunpack.c.l.b16 %v677
          %v723 = vunpack.c.l.b16 %v678
          %v724 = vunpack.c.l.b16 %v679
          %v725 = vunpack.c.l.b16 %v680
          %v726 = vunpack.c.l.b16 %v681
          %v727 = vunpack.c.l.b16 %v682
          %v728 = vunpack.c.l.b16 %v683
          %v729 = vunpack.c.l.b16 %v684
          %v730 = vunpack.c.l.b16 %v685
          %v731 = vpack.c.b16 %v716, %v715
          %v732 = vpack.c.b16 %v718, %v717
          %v733 = vpack.c.b16 %v720, %v719
          %v734 = vpack.c.b16 %v722, %v721
          %v735 = vpack.c.b16 %v724, %v723
          %v736 = vpack.c.b16 %v726, %v725
          %v737 = vpack.c.b16 %v728, %v727
          %v738 = vpack.c.b16 %v730, %v729
          %747 = vmatprep.subr.bf16.mxu0 0
          %748 = vmatpush1.bf16.msra.mxu0 %v731
          %749 = vmatprep.subr.bf16.mxu0 0
          %750 = vmatpush1.bf16.msra.mxu0 %v732
          %751 = vmatprep.subr.bf16.mxu0 0
          %752 = vmatpush1.bf16.msra.mxu0 %v733
          %753 = vmatprep.subr.bf16.mxu0 0
          %754 = vmatpush1.bf16.msra.mxu0 %v734
          %755 = vmatprep.subr.bf16.mxu0 0
          %756 = vmatpush1.bf16.msra.mxu0 %v735
          %757 = vmatprep.subr.bf16.mxu0 0
          %758 = vmatpush1.bf16.msra.mxu0 %v736
          %759 = vmatprep.subr.bf16.mxu0 0
          %760 = vmatpush1.bf16.msra.mxu0 %v737
          %761 = vmatprep.subr.bf16.mxu0 0
          %762 = vmatpush1.bf16.msra.mxu0 %v738
          %763 = vmatprep.subr.bf16.mxu0 0
          %764 = vmatpush1.bf16.msra.mxu0 0
          %765 = vmatprep.subr.bf16.mxu0 0
          %766 = vmatpush1.bf16.msra.mxu0 0
          %767 = vmatprep.subr.bf16.mxu0 0
          %768 = vmatpush1.bf16.msra.mxu0 0
          %769 = vmatprep.subr.bf16.mxu0 0
          %770 = vmatpush1.bf16.msra.mxu0 0
          %771 = vmatprep.subr.bf16.mxu0 0
          %772 = vmatpush1.bf16.msra.mxu0 0
          %773 = vmatprep.subr.bf16.mxu0 0
          %774 = vmatpush1.bf16.msra.mxu0 0
          %775 = vmatprep.subr.bf16.mxu0 0
          %776 = vmatpush1.bf16.msra.mxu0 0
          %777 = vmatprep.subr.bf16.mxu0 0
          %778 = vmatpush1.bf16.msra.mxu0 0
          %779 = vmatprep.mubr.bf16.mxu0 0
          %780 = vmatmul.mubr.bf16.gmra.mrb[0].mxu0 %v697
          %v781 = vpop.f32.mrb[0].mxu0
          %v782 = vadd.f32 %v691, %v781
          %v783 = vpop.f32.mrb[0].mxu0
          %v784 = vpop.f32.mrb[0].mxu0
          %v785 = vadd.f32 %v691, %v784
          %v786 = vpop.f32.mrb[0].mxu0
          %787 = vdwg.mxu0
          %v788 = vmin.f32 %v782, 20.0
          %v789 = vmin.f32 %v785, 20.0
          %v790 = vmul.f32 %v788, 1.442695
          %v791 = vpow.pop %v790
          %v792 = vmul.f32 %v789, 1.442695
          %v793 = vpow.pop %v792
          %v794 = vadd.f32 %v791, 2.0
          %v795 = vadd.f32 %v793, 2.0
          %v796 = vmul.f32 %v791, %v794
          %v797 = vmul.f32 %v793, %v795
          %v798 = vmul.f32 %v782, %v796
          %v799 = vmul.f32 %v785, %v797
          %v800 = vadd.f32 %v796, 2.0
          %v801 = vadd.f32 %v797, 2.0
          %v802 = vrcp.pop %v800
          %v803 = vrcp.pop %v801
          %v804 = vmul.f32 %v798, %v802
          %v805 = vmul.f32 %v799, %v803
          %v806 = vmul.f32 %v804, %v656
          %v807 = vmul.f32 %v805, %v657
          %v808 = vld [vmem:[#allocation2] sm:$0x1]
          %v809 = vadd.f32 %v806, %v807
          %v810 = vrot.slane %v809, 4
          %v811 = vadd.f32 %v809, %v810
          %v812 = vrot.slane %v811, 2
          %v813 = vadd.f32 %v811, %v812
          %v814 = vrot.slane %v813, 1
          %v815 = vadd.f32 %v813, %v814
          %v816 = vadd.f32 %v808, %v815
          %817 = vst [vmem:[#allocation2] sm:$0x1] %v816
          %v818 = vld [vmem:[#allocation2 + $0x1] sm:$0x1]
          %v819 = vmul.f32 %v806, %v804
          %v820 = vmul.f32 %v807, %v805
          %v821 = vadd.f32 %v819, %v820
          %v822 = vrot.slane %v821, 4
          %v823 = vadd.f32 %v821, %v822
          %v824 = vrot.slane %v823, 2
          %v825 = vadd.f32 %v823, %v824
          %v826 = vrot.slane %v825, 1
          %v827 = vadd.f32 %v825, %v826
          %v828 = vadd.f32 %v818, %v827
          %829 = vst [vmem:[#allocation2 + $0x1] sm:$0x1] %v828
        $region104: #{text_from_image_g.1} parent=87 // pred_fallthru
          _
        %p830 = scmp.eq.s32.totalorder %s34, 1
        // Predicated region
        $region105: #{text_from_image_g.1} parent=87 // pred_check
          %p831 = pneg %p830
        $region106: #{text_from_image_g.1} parent=87 // pred_check_branch
          %833 = sbr.rel (%p831) target = $region108
        $region107: #{text_from_image_g.1} parent=87 // pred_region
          %v834 = vld [vmem:[%s622] sm:$0xf]
          %v835 = vld [vmem:[%s622 + $0x4] sm:$0xf]
          %v836 = vld [vmem:[%s3] sm:$0xf]
          %v837 = vld [vmem:[%s3 + $0x4] sm:$0xf]
          %v838 = vld [vmem:[%s3 + $0x8] sm:$0xf]
          %v839 = vld [vmem:[%s3 + $0xc] sm:$0xf]
          %v840 = vld [vmem:[%s3 + $0x10] sm:$0xf]
          %v841 = vld [vmem:[%s3 + $0x14] sm:$0xf]
          %v842 = vld [vmem:[%s3 + $0x18] sm:$0xf]
          %v843 = vld [vmem:[%s3 + $0x1c] sm:$0xf]
          %v844 = vld [vmem:[%s3 + $0x20] sm:$0xf]
          %v845 = vld [vmem:[%s3 + $0x24] sm:$0xf]
          %v846 = vld [vmem:[%s3 + $0x28] sm:$0xf]
          %v847 = vld [vmem:[%s3 + $0x2c] sm:$0xf]
          %v848 = vld [vmem:[%s3 + $0x30] sm:$0xf]
          %v849 = vld [vmem:[%s3 + $0x34] sm:$0xf]
          %v850 = vld [vmem:[%s3 + $0x38] sm:$0xf]
          %v851 = vld [vmem:[%s3 + $0x3c] sm:$0xf]
          %v852 = vld [vmem:[%s4] sm:$0x1]
          %v854 = vlaneseq
          %v855 = vshrl.u32 %v854, 7
          %v856 = vsub.s32 0, %v855
          %v857 = vrot.slane %v852, %v856
          %v861 = vunpack.c.l.b16 %v834
          %v862 = vunpack.c.l.b16 %v835
          %v863 = vpack.c.b16 %v862, %v861
          %v881 = vunpack.c.l.b16 %v836
          %v882 = vunpack.c.l.b16 %v837
          %v883 = vunpack.c.l.b16 %v838
          %v884 = vunpack.c.l.b16 %v839
          %v885 = vunpack.c.l.b16 %v840
          %v886 = vunpack.c.l.b16 %v841
          %v887 = vunpack.c.l.b16 %v842
          %v888 = vunpack.c.l.b16 %v843
          %v889 = vunpack.c.l.b16 %v844
          %v890 = vunpack.c.l.b16 %v845
          %v891 = vunpack.c.l.b16 %v846
          %v892 = vunpack.c.l.b16 %v847
          %v893 = vunpack.c.l.b16 %v848
          %v894 = vunpack.c.l.b16 %v849
          %v895 = vunpack.c.l.b16 %v850
          %v896 = vunpack.c.l.b16 %v851
          %v897 = vpack.c.b16 %v882, %v881
          %v898 = vpack.c.b16 %v884, %v883
          %v899 = vpack.c.b16 %v886, %v885
          %v900 = vpack.c.b16 %v888, %v887
          %v901 = vpack.c.b16 %v890, %v889
          %v902 = vpack.c.b16 %v892, %v891
          %v903 = vpack.c.b16 %v894, %v893
          %v904 = vpack.c.b16 %v896, %v895
          %913 = vmatprep.subr.bf16.mxu0 0
          %914 = vmatpush1.bf16.msra.mxu0 %v897
          %915 = vmatprep.subr.bf16.mxu0 0
          %916 = vmatpush1.bf16.msra.mxu0 %v898
          %917 = vmatprep.subr.bf16.mxu0 0
          %918 = vmatpush1.bf16.msra.mxu0 %v899
          %919 = vmatprep.subr.bf16.mxu0 0
          %920 = vmatpush1.bf16.msra.mxu0 %v900
          %921 = vmatprep.subr.bf16.mxu0 0
          %922 = vmatpush1.bf16.msra.mxu0 %v901
          %923 = vmatprep.subr.bf16.mxu0 0
          %924 = vmatpush1.bf16.msra.mxu0 %v902
          %925 = vmatprep.subr.bf16.mxu0 0
          %926 = vmatpush1.bf16.msra.mxu0 %v903
          %927 = vmatprep.subr.bf16.mxu0 0
          %928 = vmatpush1.bf16.msra.mxu0 %v904
          %929 = vmatprep.subr.bf16.mxu0 0
          %930 = vmatpush1.bf16.msra.mxu0 0
          %931 = vmatprep.subr.bf16.mxu0 0
          %932 = vmatpush1.bf16.msra.mxu0 0
          %933 = vmatprep.subr.bf16.mxu0 0
          %934 = vmatpush1.bf16.msra.mxu0 0
          %935 = vmatprep.subr.bf16.mxu0 0
          %936 = vmatpush1.bf16.msra.mxu0 0
          %937 = vmatprep.subr.bf16.mxu0 0
          %938 = vmatpush1.bf16.msra.mxu0 0
          %939 = vmatprep.subr.bf16.mxu0 0
          %940 = vmatpush1.bf16.msra.mxu0 0
          %941 = vmatprep.subr.bf16.mxu0 0
          %942 = vmatpush1.bf16.msra.mxu0 0
          %943 = vmatprep.subr.bf16.mxu0 0
          %944 = vmatpush1.bf16.msra.mxu0 0
          %945 = vmatprep.mubr.bf16.mxu0 0
          %946 = vmatmul.mubr.bf16.gmra.mrb[0].mxu0 %v863
          %v947 = vpop.f32.mrb[0].mxu0
          %v948 = vadd.f32 %v857, %v947
          %v949 = vpop.f32.mrb[0].mxu0
          %v950 = vpop.f32.mrb[0].mxu0
          %v951 = vadd.f32 %v857, %v950
          %v952 = vpop.f32.mrb[0].mxu0
          %953 = vdwg.mxu0
          %v954 = vmin.f32 %v948, 20.0
          %v955 = vmin.f32 %v951, 20.0
          %v956 = vmul.f32 %v954, 1.442695
          %v957 = vpow.pop %v956
          %v958 = vmul.f32 %v955, 1.442695
          %v959 = vpow.pop %v958
          %v960 = vadd.f32 %v957, 2.0
          %v961 = vadd.f32 %v959, 2.0
          %v962 = vmul.f32 %v957, %v960
          %v963 = vmul.f32 %v959, %v961
          %v964 = vmul.f32 %v948, %v962
          %v965 = vmul.f32 %v951, %v963
          %v966 = vadd.f32 %v962, 2.0
          %v967 = vadd.f32 %v963, 2.0
          %v968 = vrcp.pop %v966
          %v969 = vrcp.pop %v967
          %v970 = vmul.f32 %v964, %v968
          %v971 = vmul.f32 %v965, %v969
          %v972 = vld [vmem:[#allocation2] sm:$0x1]
          %v973 = vmul.f32 %v972, 0.5
          %v974 = vld [vmem:[#allocation2 + $0x1] sm:$0x1]
          %v975 = vmul.f32 %v974, 0.5
          %v976 = vmul.f32 %v973, %v973
          %v977 = vsub.f32 %v975, %v976
          %v978 = vmax.f32 %v977, 0.0
          %v979 = vlaneseq
          %v980 = vshrl.u32 %v979, 7
          %v981 = vsub.s32 0, %v980
          %v982 = vrot.slane %v973, %v981
          %v983 = vsub.f32 %v970, %v982
          %v984 = vsub.f32 %v971, %v982
          %v985 = vadd.f32 %v978, 1e-05
          %v986 = vrsqrt.pop %v985
          %v987 = vlaneseq
          %v988 = vshrl.u32 %v987, 7
          %v989 = vsub.s32 0, %v988
          %v990 = vrot.slane %v986, %v989
          %v991 = vmul.f32 %v983, %v990
          %v992 = vmul.f32 %v984, %v990
          %v993 = vpack.c.bf16 %v992, %v991
          %v994 = vld [vmem:[%s5] sm:$0xf]
          %v995 = vld [vmem:[%s5 + $0x4] sm:$0xf]
          %v996 = vld [vmem:[%s5 + $0x8] sm:$0xf]
          %v997 = vld [vmem:[%s5 + $0xc] sm:$0xf]
          %v998 = vld [vmem:[%s5 + $0x10] sm:$0xf]
          %v999 = vld [vmem:[%s5 + $0x14] sm:$0xf]
          %v1000 = vld [vmem:[%s5 + $0x18] sm:$0xf]
          %v1001 = vld [vmem:[%s5 + $0x1c] sm:$0xf]
          %v1002 = vld [vmem:[%s5 + $0x20] sm:$0xf]
          %v1003 = vld [vmem:[%s5 + $0x24] sm:$0xf]
          %v1004 = vld [vmem:[%s5 + $0x28] sm:$0xf]
          %v1005 = vld [vmem:[%s5 + $0x2c] sm:$0xf]
          %v1006 = vld [vmem:[%s5 + $0x30] sm:$0xf]
          %v1007 = vld [vmem:[%s5 + $0x34] sm:$0xf]
          %v1008 = vld [vmem:[%s5 + $0x38] sm:$0xf]
          %v1009 = vld [vmem:[%s5 + $0x3c] sm:$0xf]
          %v1010 = vld [vmem:[%s6] sm:$0x1]
          %v1012 = vlaneseq
          %v1013 = vshrl.u32 %v1012, 7
          %v1014 = vsub.s32 0, %v1013
          %v1015 = vrot.slane %v1010, %v1014
          %v1033 = vunpack.c.l.b16 %v994
          %v1034 = vunpack.c.l.b16 %v995
          %v1035 = vunpack.c.l.b16 %v996
          %v1036 = vunpack.c.l.b16 %v997
          %v1037 = vunpack.c.l.b16 %v998
          %v1038 = vunpack.c.l.b16 %v999
          %v1039 = vunpack.c.l.b16 %v1000
          %v1040 = vunpack.c.l.b16 %v1001
          %v1041 = vunpack.c.l.b16 %v1002
          %v1042 = vunpack.c.l.b16 %v1003
          %v1043 = vunpack.c.l.b16 %v1004
          %v1044 = vunpack.c.l.b16 %v1005
          %v1045 = vunpack.c.l.b16 %v1006
          %v1046 = vunpack.c.l.b16 %v1007
          %v1047 = vunpack.c.l.b16 %v1008
          %v1048 = vunpack.c.l.b16 %v1009
          %v1049 = vpack.c.b16 %v1034, %v1033
          %v1050 = vpack.c.b16 %v1036, %v1035
          %v1051 = vpack.c.b16 %v1038, %v1037
          %v1052 = vpack.c.b16 %v1040, %v1039
          %v1053 = vpack.c.b16 %v1042, %v1041
          %v1054 = vpack.c.b16 %v1044, %v1043
          %v1055 = vpack.c.b16 %v1046, %v1045
          %v1056 = vpack.c.b16 %v1048, %v1047
          %1065 = vmatprep.subr.bf16.mxu0 0
          %1066 = vmatpush1.bf16.msra.mxu0 %v1049
          %1067 = vmatprep.subr.bf16.mxu0 0
          %1068 = vmatpush1.bf16.msra.mxu0 %v1050
          %1069 = vmatprep.subr.bf16.mxu0 0
          %1070 = vmatpush1.bf16.msra.mxu0 %v1051
          %1071 = vmatprep.subr.bf16.mxu0 0
          %1072 = vmatpush1.bf16.msra.mxu0 %v1052
          %1073 = vmatprep.subr.bf16.mxu0 0
          %1074 = vmatpush1.bf16.msra.mxu0 %v1053
          %1075 = vmatprep.subr.bf16.mxu0 0
          %1076 = vmatpush1.bf16.msra.mxu0 %v1054
          %1077 = vmatprep.subr.bf16.mxu0 0
          %1078 = vmatpush1.bf16.msra.mxu0 %v1055
          %1079 = vmatprep.subr.bf16.mxu0 0
          %1080 = vmatpush1.bf16.msra.mxu0 %v1056
          %1081 = vmatprep.subr.bf16.mxu0 0
          %1082 = vmatpush1.bf16.msra.mxu0 0
          %1083 = vmatprep.subr.bf16.mxu0 0
          %1084 = vmatpush1.bf16.msra.mxu0 0
          %1085 = vmatprep.subr.bf16.mxu0 0
          %1086 = vmatpush1.bf16.msra.mxu0 0
          %1087 = vmatprep.subr.bf16.mxu0 0
          %1088 = vmatpush1.bf16.msra.mxu0 0
          %1089 = vmatprep.subr.bf16.mxu0 0
          %1090 = vmatpush1.bf16.msra.mxu0 0
          %1091 = vmatprep.subr.bf16.mxu0 0
          %1092 = vmatpush1.bf16.msra.mxu0 0
          %1093 = vmatprep.subr.bf16.mxu0 0
          %1094 = vmatpush1.bf16.msra.mxu0 0
          %1095 = vmatprep.subr.bf16.mxu0 0
          %1096 = vmatpush1.bf16.msra.mxu0 0
          %1097 = vmatprep.mubr.bf16.mxu0 0
          %1098 = vmatmul.mubr.bf16.gmra.mrb[0].mxu0 %v993
          %v1099 = vpop.f32.mrb[0].mxu0
          %v1100 = vadd.f32 %v1015, %v1099
          %v1101 = vpop.f32.mrb[0].mxu0
          %v1102 = vpop.f32.mrb[0].mxu0
          %v1103 = vadd.f32 %v1015, %v1102
          %v1104 = vpop.f32.mrb[0].mxu0
          %1105 = vdwg.mxu0
          %v1106 = vld [vmem:[%s629] sm:$0xff]
          %v1107 = vld [vmem:[%s629 + $0x8] sm:$0xff]
          %v1108 = vld [vmem:[%s629 + $0x10] sm:$0xf]
          %v1109 = vld [vmem:[%s629 + $0x14] sm:$0xff]
          %v1110 = vld [vmem:[%s629 + $0x1c] sm:$0xff]
          %v1111 = vld [vmem:[%s629 + $0x24] sm:$0xf]
          %v1112 = vld [vmem:[#allocation3] sm:$0xff]
          %v1113 = vld [vmem:[#allocation3 + $0x8] sm:$0xf]
          %v1114 = vld [vmem:[#allocation3 + $0xc] sm:$0xff]
          %v1115 = vld [vmem:[#allocation3 + $0x14] sm:$0xf]
          %v1116 = vld [vmem:[#allocation3 + $0x18] sm:$0xff]
          %v1117 = vld [vmem:[#allocation3 + $0x20] sm:$0xf]
          %v1118 = vld [vmem:[#allocation3 + $0x24] sm:$0xff]
          %v1119 = vld [vmem:[#allocation3 + $0x2c] sm:$0xf]
          %v1120 = vld [vmem:[#allocation3 + $0x30] sm:$0xff]
          %v1121 = vld [vmem:[#allocation3 + $0x38] sm:$0xf]
          %v1122 = vld [vmem:[#allocation3 + $0x3c] sm:$0xff]
          %v1123 = vld [vmem:[#allocation3 + $0x44] sm:$0xf]
          %v1124 = vld [vmem:[#allocation3 + $0x48] sm:$0xff]
          %v1125 = vld [vmem:[#allocation3 + $0x50] sm:$0xf]
          %v1126 = vld [vmem:[#allocation3 + $0x54] sm:$0xff]
          %v1127 = vld [vmem:[#allocation3 + $0x5c] sm:$0xf]
          %v1128 = vld [vmem:[#allocation3 + $0x60] sm:$0xff]
          %v1129 = vld [vmem:[#allocation3 + $0x68] sm:$0xf]
          %v1130 = vld [vmem:[#allocation3 + $0x6c] sm:$0xff]
          %v1131 = vld [vmem:[#allocation3 + $0x74] sm:$0xf]
          %v1132 = vld [vmem:[#allocation3 + $0x78] sm:$0xff]
          %v1133 = vld [vmem:[#allocation3 + $0x80] sm:$0xf]
          %v1134 = vld [vmem:[#allocation3 + $0x84] sm:$0xff]
          %v1135 = vld [vmem:[#allocation3 + $0x8c] sm:$0xf]
          %v1136 = vld [vmem:[#allocation3 + $0x90] sm:$0xff]
          %v1137 = vld [vmem:[#allocation3 + $0x98] sm:$0xf]
          %v1138 = vld [vmem:[#allocation3 + $0x9c] sm:$0xff]
          %v1139 = vld [vmem:[#allocation3 + $0xa4] sm:$0xf]
          %v1140 = vld [vmem:[#allocation3 + $0xa8] sm:$0xff]
          %v1141 = vld [vmem:[#allocation3 + $0xb0] sm:$0xf]
          %v1142 = vld [vmem:[#allocation3 + $0xb4] sm:$0xff]
          %v1143 = vld [vmem:[#allocation3 + $0xbc] sm:$0xf]
          %v1144 = vld [vmem:[#allocation3 + $0xc0] sm:$0xff]
          %v1145 = vld [vmem:[#allocation3 + $0xc8] sm:$0xf]
          %v1146 = vld [vmem:[#allocation3 + $0xcc] sm:$0xff]
          %v1147 = vld [vmem:[#allocation3 + $0xd4] sm:$0xf]
          %v1148 = vld [vmem:[#allocation3 + $0xd8] sm:$0xff]
          %v1149 = vld [vmem:[#allocation3 + $0xe0] sm:$0xf]
          %v1150 = vld [vmem:[#allocation3 + $0xe4] sm:$0xff]
          %v1151 = vld [vmem:[#allocation3 + $0xec] sm:$0xf]
          %v1152 = vld [vmem:[#allocation3 + $0xf0] sm:$0xff]
          %v1153 = vld [vmem:[#allocation3 + $0xf8] sm:$0xf]
          %v1154 = vld [vmem:[#allocation3 + $0xfc] sm:$0xff]
          %v1155 = vld [vmem:[#allocation3 + $0x104] sm:$0xf]
          %v1156 = vld [vmem:[#allocation3 + $0x108] sm:$0xff]
          %v1157 = vld [vmem:[#allocation3 + $0x110] sm:$0xf]
          %v1158 = vld [vmem:[#allocation3 + $0x114] sm:$0xff]
          %v1159 = vld [vmem:[#allocation3 + $0x11c] sm:$0xf]
          %v1160 = vld [vmem:[#allocation3 + $0x120] sm:$0xff]
          %v1161 = vld [vmem:[#allocation3 + $0x128] sm:$0xf]
          %v1162 = vld [vmem:[#allocation3 + $0x12c] sm:$0xff]
          %v1163 = vld [vmem:[#allocation3 + $0x134] sm:$0xf]
          %v1164 = vld [vmem:[#allocation3 + $0x138] sm:$0xff]
          %v1165 = vld [vmem:[#allocation3 + $0x140] sm:$0xf]
          %v1166 = vld [vmem:[#allocation3 + $0x144] sm:$0xff]
          %v1167 = vld [vmem:[#allocation3 + $0x14c] sm:$0xf]
          %v1168 = vld [vmem:[#allocation3 + $0x150] sm:$0xff]
          %v1169 = vld [vmem:[#allocation3 + $0x158] sm:$0xf]
          %v1170 = vld [vmem:[#allocation3 + $0x15c] sm:$0xff]
          %v1171 = vld [vmem:[#allocation3 + $0x164] sm:$0xf]
          %v1172 = vld [vmem:[#allocation3 + $0x168] sm:$0xff]
          %v1173 = vld [vmem:[#allocation3 + $0x170] sm:$0xf]
          %v1174 = vld [vmem:[#allocation3 + $0x174] sm:$0xff]
          %v1175 = vld [vmem:[#allocation3 + $0x17c] sm:$0xf]
          %v1176 = vld [vmem:[#allocation3 + $0x180] sm:$0xff]
          %v1177 = vld [vmem:[#allocation3 + $0x188] sm:$0xf]
          %v1178 = vld [vmem:[#allocation3 + $0x18c] sm:$0xff]
          %v1179 = vld [vmem:[#allocation3 + $0x194] sm:$0xf]
          %v1180 = vld [vmem:[#allocation3 + $0x198] sm:$0xff]
          %v1181 = vld [vmem:[#allocation3 + $0x1a0] sm:$0xf]
          %v1182 = vld [vmem:[#allocation3 + $0x1a4] sm:$0xff]
          %v1183 = vld [vmem:[#allocation3 + $0x1ac] sm:$0xf]
          %v1184 = vld [vmem:[#allocation3 + $0x1b0] sm:$0xff]
          %v1185 = vld [vmem:[#allocation3 + $0x1b8] sm:$0xf]
          %v1186 = vld [vmem:[#allocation3 + $0x1bc] sm:$0xff]
          %v1187 = vld [vmem:[#allocation3 + $0x1c4] sm:$0xf]
          %v1188 = vld [vmem:[#allocation3 + $0x1c8] sm:$0xff]
          %v1189 = vld [vmem:[#allocation3 + $0x1d0] sm:$0xf]
          %v1190 = vld [vmem:[#allocation3 + $0x1d4] sm:$0xff]
          %v1191 = vld [vmem:[#allocation3 + $0x1dc] sm:$0xf]
          %v1192 = vld [vmem:[#allocation3 + $0x1e0] sm:$0xff]
          %v1193 = vld [vmem:[#allocation3 + $0x1e8] sm:$0xf]
          %v1194 = vld [vmem:[#allocation3 + $0x1ec] sm:$0xff]
          %v1195 = vld [vmem:[#allocation3 + $0x1f4] sm:$0xf]
          %v1196 = vld [vmem:[#allocation3 + $0x1f8] sm:$0xff]
          %v1197 = vld [vmem:[#allocation3 + $0x200] sm:$0xf]
          %v1198 = vld [vmem:[#allocation3 + $0x204] sm:$0xff]
          %v1199 = vld [vmem:[#allocation3 + $0x20c] sm:$0xf]
          %v1200 = vld [vmem:[#allocation3 + $0x210] sm:$0xff]
          %v1201 = vld [vmem:[#allocation3 + $0x218] sm:$0xf]
          %v1202 = vld [vmem:[#allocation3 + $0x21c] sm:$0xff]
          %v1203 = vld [vmem:[#allocation3 + $0x224] sm:$0xf]
          %v1204 = vld [vmem:[#allocation3 + $0x228] sm:$0xff]
          %v1205 = vld [vmem:[#allocation3 + $0x230] sm:$0xf]
          %v1206 = vld [vmem:[#allocation3 + $0x234] sm:$0xff]
          %v1207 = vld [vmem:[#allocation3 + $0x23c] sm:$0xf]
          %v1208 = vld [vmem:[#allocation3 + $0x240] sm:$0xff]
          %v1209 = vld [vmem:[#allocation3 + $0x248] sm:$0xf]
          %v1210 = vld [vmem:[#allocation3 + $0x24c] sm:$0xff]
          %v1211 = vld [vmem:[#allocation3 + $0x254] sm:$0xf]
          %v1212 = vld [vmem:[#allocation3 + $0x258] sm:$0xff]
          %v1213 = vld [vmem:[#allocation3 + $0x260] sm:$0xf]
          %v1214 = vld [vmem:[#allocation3 + $0x264] sm:$0xff]
          %v1215 = vld [vmem:[#allocation3 + $0x26c] sm:$0xf]
          %v1216 = vld [vmem:[#allocation3 + $0x270] sm:$0xff]
          %v1217 = vld [vmem:[#allocation3 + $0x278] sm:$0xf]
          %v1218 = vld [vmem:[#allocation3 + $0x27c] sm:$0xff]
          %v1219 = vld [vmem:[#allocation3 + $0x284] sm:$0xf]
          %v1220 = vld [vmem:[#allocation3 + $0x288] sm:$0xff]
          %v1221 = vld [vmem:[#allocation3 + $0x290] sm:$0xf]
          %v1222 = vld [vmem:[#allocation3 + $0x294] sm:$0xff]
          %v1223 = vld [vmem:[#allocation3 + $0x29c] sm:$0xf]
          %v1224 = vld [vmem:[#allocation3 + $0x2a0] sm:$0xff]
          %v1225 = vld [vmem:[#allocation3 + $0x2a8] sm:$0xf]
          %v1226 = vld [vmem:[#allocation3 + $0x2ac] sm:$0xff]
          %v1227 = vld [vmem:[#allocation3 + $0x2b4] sm:$0xf]
          %v1228 = vld [vmem:[#allocation3 + $0x2b8] sm:$0xff]
          %v1229 = vld [vmem:[#allocation3 + $0x2c0] sm:$0xf]
          %v1230 = vld [vmem:[#allocation3 + $0x2c4] sm:$0xff]
          %v1231 = vld [vmem:[#allocation3 + $0x2cc] sm:$0xf]
          %v1232 = vld [vmem:[#allocation3 + $0x2d0] sm:$0xff]
          %v1233 = vld [vmem:[#allocation3 + $0x2d8] sm:$0xf]
          %v1234 = vld [vmem:[#allocation3 + $0x2dc] sm:$0xff]
          %v1235 = vld [vmem:[#allocation3 + $0x2e4] sm:$0xf]
          %v1236 = vld [vmem:[#allocation3 + $0x2e8] sm:$0xff]
          %v1237 = vld [vmem:[#allocation3 + $0x2f0] sm:$0xf]
          %v1238 = vld [vmem:[#allocation3 + $0x2f4] sm:$0xff]
          %v1239 = vld [vmem:[#allocation3 + $0x2fc] sm:$0xf]
          %v1240 = vld [vmem:[#allocation3 + $0x300] sm:$0xff]
          %v1241 = vld [vmem:[#allocation3 + $0x308] sm:$0xf]
          %v1242 = vld [vmem:[#allocation3 + $0x30c] sm:$0xff]
          %v1243 = vld [vmem:[#allocation3 + $0x314] sm:$0xf]
          %v1244 = vld [vmem:[#allocation3 + $0x318] sm:$0xff]
          %v1245 = vld [vmem:[#allocation3 + $0x320] sm:$0xf]
          %v1246 = vld [vmem:[#allocation3 + $0x324] sm:$0xff]
          %v1247 = vld [vmem:[#allocation3 + $0x32c] sm:$0xf]
          %v1248 = vld [vmem:[#allocation3 + $0x330] sm:$0xff]
          %v1249 = vld [vmem:[#allocation3 + $0x338] sm:$0xf]
          %v1250 = vld [vmem:[#allocation3 + $0x33c] sm:$0xff]
          %v1251 = vld [vmem:[#allocation3 + $0x344] sm:$0xf]
          %v1252 = vld [vmem:[#allocation3 + $0x348] sm:$0xff]
          %v1253 = vld [vmem:[#allocation3 + $0x350] sm:$0xf]
          %v1254 = vld [vmem:[#allocation3 + $0x354] sm:$0xff]
          %v1255 = vld [vmem:[#allocation3 + $0x35c] sm:$0xf]
          %v1256 = vld [vmem:[#allocation3 + $0x360] sm:$0xff]
          %v1257 = vld [vmem:[#allocation3 + $0x368] sm:$0xf]
          %v1258 = vld [vmem:[#allocation3 + $0x36c] sm:$0xff]
          %v1259 = vld [vmem:[#allocation3 + $0x374] sm:$0xf]
          %v1260 = vld [vmem:[#allocation3 + $0x378] sm:$0xff]
          %v1261 = vld [vmem:[#allocation3 + $0x380] sm:$0xf]
          %v1262 = vld [vmem:[#allocation3 + $0x384] sm:$0xff]
          %v1263 = vld [vmem:[#allocation3 + $0x38c] sm:$0xf]
          %v1264 = vld [vmem:[#allocation3 + $0x390] sm:$0xff]
          %v1265 = vld [vmem:[#allocation3 + $0x398] sm:$0xf]
          %v1266 = vld [vmem:[#allocation3 + $0x39c] sm:$0xff]
          %v1267 = vld [vmem:[#allocation3 + $0x3a4] sm:$0xf]
          %v1268 = vld [vmem:[#allocation3 + $0x3a8] sm:$0xff]
          %v1269 = vld [vmem:[#allocation3 + $0x3b0] sm:$0xf]
          %v1270 = vld [vmem:[#allocation3 + $0x3b4] sm:$0xff]
          %v1271 = vld [vmem:[#allocation3 + $0x3bc] sm:$0xf]
          %v1272 = vld [vmem:[%s8] sm:$0x7]
          %v1274 = vlaneseq
          %v1275 = vshrl.u32 %v1274, 7
          %v1276 = vsub.s32 0, %v1275
          %v1277 = vrot.slane %v1272, %v1276
          %v1278 = vlaneseq
          %v1279 = vshrl.u32 %v1278, 7
          %v1280 = vsub.s32 1, %v1279
          %v1281 = vrot.slane %v1272, %v1280
          %v1282 = vlaneseq
          %v1283 = vshrl.u32 %v1282, 7
          %v1284 = vsub.s32 2, %v1283
          %v1285 = vrot.slane %v1272, %v1284
          %v1295 = vunpack.c.l.b16 %v1106
          %v1296 = vunpack.c.h.b16 %v1106
          %v1297 = vunpack.c.l.b16 %v1107
          %v1298 = vunpack.c.h.b16 %v1107
          %v1299 = vunpack.c.l.b16 %v1108
          %v1300 = vunpack.c.l.b16 %v1109
          %v1301 = vunpack.c.h.b16 %v1109
          %v1302 = vunpack.c.l.b16 %v1110
          %v1303 = vunpack.c.h.b16 %v1110
          %v1304 = vunpack.c.l.b16 %v1111
          %v1305 = vpack.c.b16 %v1300, %v1295
          %v1306 = vpack.c.b16 %v1301, %v1296
          %v1307 = vpack.c.b16 %v1302, %v1297
          %v1308 = vpack.c.b16 %v1303, %v1298
          %v1309 = vpack.c.b16 %v1304, %v1299
          %v1475 = vunpack.c.l.b16 %v1112
          %v1476 = vunpack.c.h.b16 %v1112
          %v1477 = vunpack.c.l.b16 %v1113
          %v1478 = vunpack.c.l.b16 %v1114
          %v1479 = vunpack.c.h.b16 %v1114
          %v1480 = vunpack.c.l.b16 %v1115
          %v1481 = vunpack.c.l.b16 %v1116
          %v1482 = vunpack.c.h.b16 %v1116
          %v1483 = vunpack.c.l.b16 %v1117
          %v1484 = vunpack.c.l.b16 %v1118
          %v1485 = vunpack.c.h.b16 %v1118
          %v1486 = vunpack.c.l.b16 %v1119
          %v1487 = vunpack.c.l.b16 %v1120
          %v1488 = vunpack.c.h.b16 %v1120
          %v1489 = vunpack.c.l.b16 %v1121
          %v1490 = vunpack.c.l.b16 %v1122
          %v1491 = vunpack.c.h.b16 %v1122
          %v1492 = vunpack.c.l.b16 %v1123
          %v1493 = vunpack.c.l.b16 %v1124
          %v1494 = vunpack.c.h.b16 %v1124
          %v1495 = vunpack.c.l.b16 %v1125
          %v1496 = vunpack.c.l.b16 %v1126
          %v1497 = vunpack.c.h.b16 %v1126
          %v1498 = vunpack.c.l.b16 %v1127
          %v1499 = vunpack.c.l.b16 %v1128
          %v1500 = vunpack.c.h.b16 %v1128
          %v1501 = vunpack.c.l.b16 %v1129
          %v1502 = vunpack.c.l.b16 %v1130
          %v1503 = vunpack.c.h.b16 %v1130
          %v1504 = vunpack.c.l.b16 %v1131
          %v1505 = vunpack.c.l.b16 %v1132
          %v1506 = vunpack.c.h.b16 %v1132
          %v1507 = vunpack.c.l.b16 %v1133
          %v1508 = vunpack.c.l.b16 %v1134
          %v1509 = vunpack.c.h.b16 %v1134
          %v1510 = vunpack.c.l.b16 %v1135
          %v1511 = vunpack.c.l.b16 %v1136
          %v1512 = vunpack.c.h.b16 %v1136
          %v1513 = vunpack.c.l.b16 %v1137
          %v1514 = vunpack.c.l.b16 %v1138
          %v1515 = vunpack.c.h.b16 %v1138
          %v1516 = vunpack.c.l.b16 %v1139
          %v1517 = vunpack.c.l.b16 %v1140
          %v1518 = vunpack.c.h.b16 %v1140
          %v1519 = vunpack.c.l.b16 %v1141
          %v1520 = vunpack.c.l.b16 %v1142
          %v1521 = vunpack.c.h.b16 %v1142
          %v1522 = vunpack.c.l.b16 %v1143
          %v1523 = vunpack.c.l.b16 %v1144
          %v1524 = vunpack.c.h.b16 %v1144
          %v1525 = vunpack.c.l.b16 %v1145
          %v1526 = vunpack.c.l.b16 %v1146
          %v1527 = vunpack.c.h.b16 %v1146
          %v1528 = vunpack.c.l.b16 %v1147
          %v1529 = vunpack.c.l.b16 %v1148
          %v1530 = vunpack.c.h.b16 %v1148
          %v1531 = vunpack.c.l.b16 %v1149
          %v1532 = vunpack.c.l.b16 %v1150
          %v1533 = vunpack.c.h.b16 %v1150
          %v1534 = vunpack.c.l.b16 %v1151
          %v1535 = vunpack.c.l.b16 %v1152
          %v1536 = vunpack.c.h.b16 %v1152
          %v1537 = vunpack.c.l.b16 %v1153
          %v1538 = vunpack.c.l.b16 %v1154
          %v1539 = vunpack.c.h.b16 %v1154
          %v1540 = vunpack.c.l.b16 %v1155
          %v1541 = vunpack.c.l.b16 %v1156
          %v1542 = vunpack.c.h.b16 %v1156
          %v1543 = vunpack.c.l.b16 %v1157
          %v1544 = vunpack.c.l.b16 %v1158
          %v1545 = vunpack.c.h.b16 %v1158
          %v1546 = vunpack.c.l.b16 %v1159
          %v1547 = vunpack.c.l.b16 %v1160
          %v1548 = vunpack.c.h.b16 %v1160
          %v1549 = vunpack.c.l.b16 %v1161
          %v1550 = vunpack.c.l.b16 %v1162
          %v1551 = vunpack.c.h.b16 %v1162
          %v1552 = vunpack.c.l.b16 %v1163
          %v1553 = vunpack.c.l.b16 %v1164
          %v1554 = vunpack.c.h.b16 %v1164
          %v1555 = vunpack.c.l.b16 %v1165
          %v1556 = vunpack.c.l.b16 %v1166
          %v1557 = vunpack.c.h.b16 %v1166
          %v1558 = vunpack.c.l.b16 %v1167
          %v1559 = vunpack.c.l.b16 %v1168
          %v1560 = vunpack.c.h.b16 %v1168
          %v1561 = vunpack.c.l.b16 %v1169
          %v1562 = vunpack.c.l.b16 %v1170
          %v1563 = vunpack.c.h.b16 %v1170
          %v1564 = vunpack.c.l.b16 %v1171
          %v1565 = vunpack.c.l.b16 %v1172
          %v1566 = vunpack.c.h.b16 %v1172
          %v1567 = vunpack.c.l.b16 %v1173
          %v1568 = vunpack.c.l.b16 %v1174
          %v1569 = vunpack.c.h.b16 %v1174
          %v1570 = vunpack.c.l.b16 %v1175
          %v1571 = vunpack.c.l.b16 %v1176
          %v1572 = vunpack.c.h.b16 %v1176
          %v1573 = vunpack.c.l.b16 %v1177
          %v1574 = vunpack.c.l.b16 %v1178
          %v1575 = vunpack.c.h.b16 %v1178
          %v1576 = vunpack.c.l.b16 %v1179
          %v1577 = vunpack.c.l.b16 %v1180
          %v1578 = vunpack.c.h.b16 %v1180
          %v1579 = vunpack.c.l.b16 %v1181
          %v1580 = vunpack.c.l.b16 %v1182
          %v1581 = vunpack.c.h.b16 %v1182
          %v1582 = vunpack.c.l.b16 %v1183
          %v1583 = vunpack.c.l.b16 %v1184
          %v1584 = vunpack.c.h.b16 %v1184
          %v1585 = vunpack.c.l.b16 %v1185
          %v1586 = vunpack.c.l.b16 %v1186
          %v1587 = vunpack.c.h.b16 %v1186
          %v1588 = vunpack.c.l.b16 %v1187
          %v1589 = vunpack.c.l.b16 %v1188
          %v1590 = vunpack.c.h.b16 %v1188
          %v1591 = vunpack.c.l.b16 %v1189
          %v1592 = vunpack.c.l.b16 %v1190
          %v1593 = vunpack.c.h.b16 %v1190
          %v1594 = vunpack.c.l.b16 %v1191
          %v1595 = vunpack.c.l.b16 %v1192
          %v1596 = vunpack.c.h.b16 %v1192
          %v1597 = vunpack.c.l.b16 %v1193
          %v1598 = vunpack.c.l.b16 %v1194
          %v1599 = vunpack.c.h.b16 %v1194
          %v1600 = vunpack.c.l.b16 %v1195
          %v1601 = vunpack.c.l.b16 %v1196
          %v1602 = vunpack.c.h.b16 %v1196
          %v1603 = vunpack.c.l.b16 %v1197
          %v1604 = vunpack.c.l.b16 %v1198
          %v1605 = vunpack.c.h.b16 %v1198
          %v1606 = vunpack.c.l.b16 %v1199
          %v1607 = vunpack.c.l.b16 %v1200
          %v1608 = vunpack.c.h.b16 %v1200
          %v1609 = vunpack.c.l.b16 %v1201
          %v1610 = vunpack.c.l.b16 %v1202
          %v1611 = vunpack.c.h.b16 %v1202
          %v1612 = vunpack.c.l.b16 %v1203
          %v1613 = vunpack.c.l.b16 %v1204
          %v1614 = vunpack.c.h.b16 %v1204
          %v1615 = vunpack.c.l.b16 %v1205
          %v1616 = vunpack.c.l.b16 %v1206
          %v1617 = vunpack.c.h.b16 %v1206
          %v1618 = vunpack.c.l.b16 %v1207
          %v1619 = vunpack.c.l.b16 %v1208
          %v1620 = vunpack.c.h.b16 %v1208
          %v1621 = vunpack.c.l.b16 %v1209
          %v1622 = vunpack.c.l.b16 %v1210
          %v1623 = vunpack.c.h.b16 %v1210
          %v1624 = vunpack.c.l.b16 %v1211
          %v1625 = vunpack.c.l.b16 %v1212
          %v1626 = vunpack.c.h.b16 %v1212
          %v1627 = vunpack.c.l.b16 %v1213
          %v1628 = vunpack.c.l.b16 %v1214
          %v1629 = vunpack.c.h.b16 %v1214
          %v1630 = vunpack.c.l.b16 %v1215
          %v1631 = vunpack.c.l.b16 %v1216
          %v1632 = vunpack.c.h.b16 %v1216
          %v1633 = vunpack.c.l.b16 %v1217
          %v1634 = vunpack.c.l.b16 %v1218
          %v1635 = vunpack.c.h.b16 %v1218
          %v1636 = vunpack.c.l.b16 %v1219
          %v1637 = vunpack.c.l.b16 %v1220
          %v1638 = vunpack.c.h.b16 %v1220
          %v1639 = vunpack.c.l.b16 %v1221
          %v1640 = vunpack.c.l.b16 %v1222
          %v1641 = vunpack.c.h.b16 %v1222
          %v1642 = vunpack.c.l.b16 %v1223
          %v1643 = vunpack.c.l.b16 %v1224
          %v1644 = vunpack.c.h.b16 %v1224
          %v1645 = vunpack.c.l.b16 %v1225
          %v1646 = vunpack.c.l.b16 %v1226
          %v1647 = vunpack.c.h.b16 %v1226
          %v1648 = vunpack.c.l.b16 %v1227
          %v1649 = vunpack.c.l.b16 %v1228
          %v1650 = vunpack.c.h.b16 %v1228
          %v1651 = vunpack.c.l.b16 %v1229
          %v1652 = vunpack.c.l.b16 %v1230
          %v1653 = vunpack.c.h.b16 %v1230
          %v1654 = vunpack.c.l.b16 %v1231
          %v1655 = vunpack.c.l.b16 %v1232
          %v1656 = vunpack.c.h.b16 %v1232
          %v1657 = vunpack.c.l.b16 %v1233
          %v1658 = vunpack.c.l.b16 %v1234
          %v1659 = vunpack.c.h.b16 %v1234
          %v1660 = vunpack.c.l.b16 %v1235
          %v1661 = vunpack.c.l.b16 %v1236
          %v1662 = vunpack.c.h.b16 %v1236
          %v1663 = vunpack.c.l.b16 %v1237
          %v1664 = vunpack.c.l.b16 %v1238
          %v1665 = vunpack.c.h.b16 %v1238
          %v1666 = vunpack.c.l.b16 %v1239
          %v1667 = vunpack.c.l.b16 %v1240
          %v1668 = vunpack.c.h.b16 %v1240
          %v1669 = vunpack.c.l.b16 %v1241
          %v1670 = vunpack.c.l.b16 %v1242
          %v1671 = vunpack.c.h.b16 %v1242
          %v1672 = vunpack.c.l.b16 %v1243
          %v1673 = vunpack.c.l.b16 %v1244
          %v1674 = vunpack.c.h.b16 %v1244
          %v1675 = vunpack.c.l.b16 %v1245
          %v1676 = vunpack.c.l.b16 %v1246
          %v1677 = vunpack.c.h.b16 %v1246
          %v1678 = vunpack.c.l.b16 %v1247
          %v1679 = vunpack.c.l.b16 %v1248
          %v1680 = vunpack.c.h.b16 %v1248
          %v1681 = vunpack.c.l.b16 %v1249
          %v1682 = vunpack.c.l.b16 %v1250
          %v1683 = vunpack.c.h.b16 %v1250
          %v1684 = vunpack.c.l.b16 %v1251
          %v1685 = vunpack.c.l.b16 %v1252
          %v1686 = vunpack.c.h.b16 %v1252
          %v1687 = vunpack.c.l.b16 %v1253
          %v1688 = vunpack.c.l.b16 %v1254
          %v1689 = vunpack.c.h.b16 %v1254
          %v1690 = vunpack.c.l.b16 %v1255
          %v1691 = vunpack.c.l.b16 %v1256
          %v1692 = vunpack.c.h.b16 %v1256
          %v1693 = vunpack.c.l.b16 %v1257
          %v1694 = vunpack.c.l.b16 %v1258
          %v1695 = vunpack.c.h.b16 %v1258
          %v1696 = vunpack.c.l.b16 %v1259
          %v1697 = vunpack.c.l.b16 %v1260
          %v1698 = vunpack.c.h.b16 %v1260
          %v1699 = vunpack.c.l.b16 %v1261
          %v1700 = vunpack.c.l.b16 %v1262
          %v1701 = vunpack.c.h.b16 %v1262
          %v1702 = vunpack.c.l.b16 %v1263
          %v1703 = vunpack.c.l.b16 %v1264
          %v1704 = vunpack.c.h.b16 %v1264
          %v1705 = vunpack.c.l.b16 %v1265
          %v1706 = vunpack.c.l.b16 %v1266
          %v1707 = vunpack.c.h.b16 %v1266
          %v1708 = vunpack.c.l.b16 %v1267
          %v1709 = vunpack.c.l.b16 %v1268
          %v1710 = vunpack.c.h.b16 %v1268
          %v1711 = vunpack.c.l.b16 %v1269
          %v1712 = vunpack.c.l.b16 %v1270
          %v1713 = vunpack.c.h.b16 %v1270
          %v1714 = vunpack.c.l.b16 %v1271
          %v1715 = vpack.c.b16 %v1478, %v1475
          %v1716 = vpack.c.b16 %v1479, %v1476
          %v1717 = vpack.c.b16 %v1480, %v1477
          %v1718 = vpack.c.b16 %v1484, %v1481
          %v1719 = vpack.c.b16 %v1485, %v1482
          %v1720 = vpack.c.b16 %v1486, %v1483
          %v1721 = vpack.c.b16 %v1490, %v1487
          %v1722 = vpack.c.b16 %v1491, %v1488
          %v1723 = vpack.c.b16 %v1492, %v1489
          %v1724 = vpack.c.b16 %v1496, %v1493
          %v1725 = vpack.c.b16 %v1497, %v1494
          %v1726 = vpack.c.b16 %v1498, %v1495
          %v1727 = vpack.c.b16 %v1502, %v1499
          %v1728 = vpack.c.b16 %v1503, %v1500
          %v1729 = vpack.c.b16 %v1504, %v1501
          %v1730 = vpack.c.b16 %v1508, %v1505
          %v1731 = vpack.c.b16 %v1509, %v1506
          %v1732 = vpack.c.b16 %v1510, %v1507
          %v1733 = vpack.c.b16 %v1514, %v1511
          %v1734 = vpack.c.b16 %v1515, %v1512
          %v1735 = vpack.c.b16 %v1516, %v1513
          %v1736 = vpack.c.b16 %v1520, %v1517
          %v1737 = vpack.c.b16 %v1521, %v1518
          %v1738 = vpack.c.b16 %v1522, %v1519
          %v1739 = vpack.c.b16 %v1526, %v1523
          %v1740 = vpack.c.b16 %v1527, %v1524
          %v1741 = vpack.c.b16 %v1528, %v1525
          %v1742 = vpack.c.b16 %v1532, %v1529
          %v1743 = vpack.c.b16 %v1533, %v1530
          %v1744 = vpack.c.b16 %v1534, %v1531
          %v1745 = vpack.c.b16 %v1538, %v1535
          %v1746 = vpack.c.b16 %v1539, %v1536
          %v1747 = vpack.c.b16 %v1540, %v1537
          %v1748 = vpack.c.b16 %v1544, %v1541
          %v1749 = vpack.c.b16 %v1545, %v1542
          %v1750 = vpack.c.b16 %v1546, %v1543
          %v1751 = vpack.c.b16 %v1550, %v1547
          %v1752 = vpack.c.b16 %v1551, %v1548
          %v1753 = vpack.c.b16 %v1552, %v1549
          %v1754 = vpack.c.b16 %v1556, %v1553
          %v1755 = vpack.c.b16 %v1557, %v1554
          %v1756 = vpack.c.b16 %v1558, %v1555
          %v1757 = vpack.c.b16 %v1562, %v1559
          %v1758 = vpack.c.b16 %v1563, %v1560
          %v1759 = vpack.c.b16 %v1564, %v1561
          %v1760 = vpack.c.b16 %v1568, %v1565
          %v1761 = vpack.c.b16 %v1569, %v1566
          %v1762 = vpack.c.b16 %v1570, %v1567
          %v1763 = vpack.c.b16 %v1574, %v1571
          %v1764 = vpack.c.b16 %v1575, %v1572
          %v1765 = vpack.c.b16 %v1576, %v1573
          %v1766 = vpack.c.b16 %v1580, %v1577
          %v1767 = vpack.c.b16 %v1581, %v1578
          %v1768 = vpack.c.b16 %v1582, %v1579
          %v1769 = vpack.c.b16 %v1586, %v1583
          %v1770 = vpack.c.b16 %v1587, %v1584
          %v1771 = vpack.c.b16 %v1588, %v1585
          %v1772 = vpack.c.b16 %v1592, %v1589
          %v1773 = vpack.c.b16 %v1593, %v1590
          %v1774 = vpack.c.b16 %v1594, %v1591
          %v1775 = vpack.c.b16 %v1598, %v1595
          %v1776 = vpack.c.b16 %v1599, %v1596
          %v1777 = vpack.c.b16 %v1600, %v1597
          %v1778 = vpack.c.b16 %v1604, %v1601
          %v1779 = vpack.c.b16 %v1605, %v1602
          %v1780 = vpack.c.b16 %v1606, %v1603
          %v1781 = vpack.c.b16 %v1610, %v1607
          %v1782 = vpack.c.b16 %v1611, %v1608
          %v1783 = vpack.c.b16 %v1612, %v1609
          %v1784 = vpack.c.b16 %v1616, %v1613
          %v1785 = vpack.c.b16 %v1617, %v1614
          %v1786 = vpack.c.b16 %v1618, %v1615
          %v1787 = vpack.c.b16 %v1622, %v1619
          %v1788 = vpack.c.b16 %v1623, %v1620
          %v1789 = vpack.c.b16 %v1624, %v1621
          %v1790 = vpack.c.b16 %v1628, %v1625
          %v1791 = vpack.c.b16 %v1629, %v1626
          %v1792 = vpack.c.b16 %v1630, %v1627
          %v1793 = vpack.c.b16 %v1634, %v1631
          %v1794 = vpack.c.b16 %v1635, %v1632
          %v1795 = vpack.c.b16 %v1636, %v1633
          %v1796 = vpack.c.b16 %v1640, %v1637
          %v1797 = vpack.c.b16 %v1641, %v1638
          %v1798 = vpack.c.b16 %v1642, %v1639
          %v1799 = vpack.c.b16 %v1646, %v1643
          %v1800 = vpack.c.b16 %v1647, %v1644
          %v1801 = vpack.c.b16 %v1648, %v1645
          %v1802 = vpack.c.b16 %v1652, %v1649
          %v1803 = vpack.c.b16 %v1653, %v1650
          %v1804 = vpack.c.b16 %v1654, %v1651
          %v1805 = vpack.c.b16 %v1658, %v1655
          %v1806 = vpack.c.b16 %v1659, %v1656
          %v1807 = vpack.c.b16 %v1660, %v1657
          %v1808 = vpack.c.b16 %v1664, %v1661
          %v1809 = vpack.c.b16 %v1665, %v1662
          %v1810 = vpack.c.b16 %v1666, %v1663
          %v1811 = vpack.c.b16 %v1670, %v1667
          %v1812 = vpack.c.b16 %v1671, %v1668
          %v1813 = vpack.c.b16 %v1672, %v1669
          %v1814 = vpack.c.b16 %v1676, %v1673
          %v1815 = vpack.c.b16 %v1677, %v1674
          %v1816 = vpack.c.b16 %v1678, %v1675
          %v1817 = vpack.c.b16 %v1682, %v1679
          %v1818 = vpack.c.b16 %v1683, %v1680
          %v1819 = vpack.c.b16 %v1684, %v1681
          %v1820 = vpack.c.b16 %v1688, %v1685
          %v1821 = vpack.c.b16 %v1689, %v1686
          %v1822 = vpack.c.b16 %v1690, %v1687
          %v1823 = vpack.c.b16 %v1694, %v1691
          %v1824 = vpack.c.b16 %v1695, %v1692
          %v1825 = vpack.c.b16 %v1696, %v1693
          %v1826 = vpack.c.b16 %v1700, %v1697
          %v1827 = vpack.c.b16 %v1701, %v1698
          %v1828 = vpack.c.b16 %v1702, %v1699
          %v1829 = vpack.c.b16 %v1706, %v1703
          %v1830 = vpack.c.b16 %v1707, %v1704
          %v1831 = vpack.c.b16 %v1708, %v1705
          %v1832 = vpack.c.b16 %v1712, %v1709
          %v1833 = vpack.c.b16 %v1713, %v1710
          %v1834 = vpack.c.b16 %v1714, %v1711
          %1955 = vmatprep.subr.bf16.mxu0 %v1716
          %1956 = vmatpush1.bf16.msra.mxu0 %v1715
          %1957 = vmatprep.subr.bf16.mxu0 %v1719
          %1958 = vmatpush1.bf16.msra.mxu0 %v1718
          %1959 = vmatprep.subr.bf16.mxu0 %v1722
          %1960 = vmatpush1.bf16.msra.mxu0 %v1721
          %1961 = vmatprep.subr.bf16.mxu0 %v1725
          %1962 = vmatpush1.bf16.msra.mxu0 %v1724
          %1963 = vmatprep.subr.bf16.mxu0 %v1728
          %1964 = vmatpush1.bf16.msra.mxu0 %v1727
          %1965 = vmatprep.subr.bf16.mxu0 %v1731
          %1966 = vmatpush1.bf16.msra.mxu0 %v1730
          %1967 = vmatprep.subr.bf16.mxu0 %v1734
          %1968 = vmatpush1.bf16.msra.mxu0 %v1733
          %1969 = vmatprep.subr.bf16.mxu0 %v1737
          %1970 = vmatpush1.bf16.msra.mxu0 %v1736
          %1971 = vmatprep.subr.bf16.mxu0 %v1740
          %1972 = vmatpush1.bf16.msra.mxu0 %v1739
          %1973 = vmatprep.subr.bf16.mxu0 %v1743
          %1974 = vmatpush1.bf16.msra.mxu0 %v1742
          %1975 = vmatprep.subr.bf16.mxu0 %v1746
          %1976 = vmatpush1.bf16.msra.mxu0 %v1745
          %1977 = vmatprep.subr.bf16.mxu0 %v1749
          %1978 = vmatpush1.bf16.msra.mxu0 %v1748
          %1979 = vmatprep.subr.bf16.mxu0 %v1752
          %1980 = vmatpush1.bf16.msra.mxu0 %v1751
          %1981 = vmatprep.subr.bf16.mxu0 %v1755
          %1982 = vmatpush1.bf16.msra.mxu0 %v1754
          %1983 = vmatprep.subr.bf16.mxu0 %v1758
          %1984 = vmatpush1.bf16.msra.mxu0 %v1757
          %1985 = vmatprep.subr.bf16.mxu0 %v1761
          %1986 = vmatpush1.bf16.msra.mxu0 %v1760
          %1987 = vmatprep.mubr.bf16.mxu0 %v1306
          %1988 = vmatmul.mubr.bf16.gmra.mrb[0].mxu0 %v1305
          %v1989 = vpop.f32.mrb[0].mxu0
          %v1990 = vadd.f32 %v1277, %v1989
          %v1991 = vpop.f32.mrb[0].mxu0
          %v1992 = vadd.f32 %v1281, %v1991
          %v1993 = vpop.f32.mrb[0].mxu0
          %v1994 = vadd.f32 %v1277, %v1993
          %v1995 = vpop.f32.mrb[0].mxu0
          %v1996 = vadd.f32 %v1281, %v1995
          %1997 = vdwg.mxu0
          %1998 = vmatprep.subr.bf16.mxu0 %v1764
          %1999 = vmatpush1.bf16.msra.mxu0 %v1763
          %2000 = vmatprep.subr.bf16.mxu0 %v1767
          %2001 = vmatpush1.bf16.msra.mxu0 %v1766
          %2002 = vmatprep.subr.bf16.mxu0 %v1770
          %2003 = vmatpush1.bf16.msra.mxu0 %v1769
          %2004 = vmatprep.subr.bf16.mxu0 %v1773
          %2005 = vmatpush1.bf16.msra.mxu0 %v1772
          %2006 = vmatprep.subr.bf16.mxu0 %v1776
          %2007 = vmatpush1.bf16.msra.mxu0 %v1775
          %2008 = vmatprep.subr.bf16.mxu0 %v1779
          %2009 = vmatpush1.bf16.msra.mxu0 %v1778
          %2010 = vmatprep.subr.bf16.mxu0 %v1782
          %2011 = vmatpush1.bf16.msra.mxu0 %v1781
          %2012 = vmatprep.subr.bf16.mxu0 %v1785
          %2013 = vmatpush1.bf16.msra.mxu0 %v1784
          %2014 = vmatprep.subr.bf16.mxu0 %v1788
          %2015 = vmatpush1.bf16.msra.mxu0 %v1787
          %2016 = vmatprep.subr.bf16.mxu0 %v1791
          %2017 = vmatpush1.bf16.msra.mxu0 %v1790
          %2018 = vmatprep.subr.bf16.mxu0 %v1794
          %2019 = vmatpush1.bf16.msra.mxu0 %v1793
          %2020 = vmatprep.subr.bf16.mxu0 %v1797
          %2021 = vmatpush1.bf16.msra.mxu0 %v1796
          %2022 = vmatprep.subr.bf16.mxu0 %v1800
          %2023 = vmatpush1.bf16.msra.mxu0 %v1799
          %2024 = vmatprep.subr.bf16.mxu0 %v1803
          %2025 = vmatpush1.bf16.msra.mxu0 %v1802
          %2026 = vmatprep.subr.bf16.mxu0 %v1806
          %2027 = vmatpush1.bf16.msra.mxu0 %v1805
          %2028 = vmatprep.subr.bf16.mxu0 %v1809
          %2029 = vmatpush1.bf16.msra.mxu0 %v1808
          %2030 = vmatprep.mubr.bf16.mxu0 %v1308
          %2031 = vmatmul.mubr.bf16.gmra.mrb[0].mxu0 %v1307
          %v2032 = vpop.f32.mrb[0].mxu0
          %v2033 = vadd.f32 %v1990, %v2032
          %v2034 = vpop.f32.mrb[0].mxu0
          %v2035 = vadd.f32 %v1992, %v2034
          %v2036 = vpop.f32.mrb[0].mxu0
          %v2037 = vadd.f32 %v1994, %v2036
          %v2038 = vpop.f32.mrb[0].mxu0
          %v2039 = vadd.f32 %v1996, %v2038
          %2040 = vdwg.mxu0
          %2041 = vmatprep.subr.bf16.mxu0 %v1812
          %2042 = vmatpush1.bf16.msra.mxu0 %v1811
          %2043 = vmatprep.subr.bf16.mxu0 %v1815
          %2044 = vmatpush1.bf16.msra.mxu0 %v1814
          %2045 = vmatprep.subr.bf16.mxu0 %v1818
          %2046 = vmatpush1.bf16.msra.mxu0 %v1817
          %2047 = vmatprep.subr.bf16.mxu0 %v1821
          %2048 = vmatpush1.bf16.msra.mxu0 %v1820
          %2049 = vmatprep.subr.bf16.mxu0 %v1824
          %2050 = vmatpush1.bf16.msra.mxu0 %v1823
          %2051 = vmatprep.subr.bf16.mxu0 %v1827
          %2052 = vmatpush1.bf16.msra.mxu0 %v1826
          %2053 = vmatprep.subr.bf16.mxu0 %v1830
          %2054 = vmatpush1.bf16.msra.mxu0 %v1829
          %2055 = vmatprep.subr.bf16.mxu0 %v1833
          %2056 = vmatpush1.bf16.msra.mxu0 %v1832
          %2057 = vmatprep.subr.bf16.mxu0 0
          %2058 = vmatpush1.bf16.msra.mxu0 0
          %2059 = vmatprep.subr.bf16.mxu0 0
          %2060 = vmatpush1.bf16.msra.mxu0 0
          %2061 = vmatprep.subr.bf16.mxu0 0
          %2062 = vmatpush1.bf16.msra.mxu0 0
          %2063 = vmatprep.subr.bf16.mxu0 0
          %2064 = vmatpush1.bf16.msra.mxu0 0
          %2065 = vmatprep.subr.bf16.mxu0 0
          %2066 = vmatpush1.bf16.msra.mxu0 0
          %2067 = vmatprep.subr.bf16.mxu0 0
          %2068 = vmatpush1.bf16.msra.mxu0 0
          %2069 = vmatprep.subr.bf16.mxu0 0
          %2070 = vmatpush1.bf16.msra.mxu0 0
          %2071 = vmatprep.subr.bf16.mxu0 0
          %2072 = vmatpush1.bf16.msra.mxu0 0
          %2073 = vmatprep.mubr.bf16.mxu0 0
          %2074 = vmatmul.mubr.bf16.gmra.mrb[0].mxu0 %v1309
          %v2075 = vpop.f32.mrb[0].mxu0
          %v2076 = vadd.f32 %v2033, %v2075
          %v2077 = vpop.f32.mrb[0].mxu0
          %v2078 = vadd.f32 %v2035, %v2077
          %v2079 = vpop.f32.mrb[0].mxu0
          %v2080 = vadd.f32 %v2037, %v2079
          %v2081 = vpop.f32.mrb[0].mxu0
          %v2082 = vadd.f32 %v2039, %v2081
          %2083 = vdwg.mxu0
          %2084 = vmatprep.subr.bf16.mxu0 0
          %2085 = vmatpush1.bf16.msra.mxu0 %v1717
          %2086 = vmatprep.subr.bf16.mxu0 0
          %2087 = vmatpush1.bf16.msra.mxu0 %v1720
          %2088 = vmatprep.subr.bf16.mxu0 0
          %2089 = vmatpush1.bf16.msra.mxu0 %v1723
          %2090 = vmatprep.subr.bf16.mxu0 0
          %2091 = vmatpush1.bf16.msra.mxu0 %v1726
          %2092 = vmatprep.subr.bf16.mxu0 0
          %2093 = vmatpush1.bf16.msra.mxu0 %v1729
          %2094 = vmatprep.subr.bf16.mxu0 0
          %2095 = vmatpush1.bf16.msra.mxu0 %v1732
          %2096 = vmatprep.subr.bf16.mxu0 0
          %2097 = vmatpush1.bf16.msra.mxu0 %v1735
          %2098 = vmatprep.subr.bf16.mxu0 0
          %2099 = vmatpush1.bf16.msra.mxu0 %v1738
          %2100 = vmatprep.subr.bf16.mxu0 0
          %2101 = vmatpush1.bf16.msra.mxu0 %v1741
          %2102 = vmatprep.subr.bf16.mxu0 0
          %2103 = vmatpush1.bf16.msra.mxu0 %v1744
          %2104 = vmatprep.subr.bf16.mxu0 0
          %2105 = vmatpush1.bf16.msra.mxu0 %v1747
          %2106 = vmatprep.subr.bf16.mxu0 0
          %2107 = vmatpush1.bf16.msra.mxu0 %v1750
          %2108 = vmatprep.subr.bf16.mxu0 0
          %2109 = vmatpush1.bf16.msra.mxu0 %v1753
          %2110 = vmatprep.subr.bf16.mxu0 0
          %2111 = vmatpush1.bf16.msra.mxu0 %v1756
          %2112 = vmatprep.subr.bf16.mxu0 0
          %2113 = vmatpush1.bf16.msra.mxu0 %v1759
          %2114 = vmatprep.subr.bf16.mxu0 0
          %2115 = vmatpush1.bf16.msra.mxu0 %v1762
          %2116 = vmatprep.mubr.bf16.mxu0 %v1306
          %2117 = vmatmul.mubr.bf16.gmra.mrb[0].mxu0 %v1305
          %v2118 = vpop.f32.mrb[0].mxu0
          %v2119 = vadd.f32 %v1285, %v2118
          %v2120 = vpop.f32.mrb[0].mxu0
          %v2121 = vpop.f32.mrb[0].mxu0
          %v2122 = vadd.f32 %v1285, %v2121
          %v2123 = vpop.f32.mrb[0].mxu0
          %2124 = vdwg.mxu0
          %2125 = vmatprep.subr.bf16.mxu0 0
          %2126 = vmatpush1.bf16.msra.mxu0 %v1765
          %2127 = vmatprep.subr.bf16.mxu0 0
          %2128 = vmatpush1.bf16.msra.mxu0 %v1768
          %2129 = vmatprep.subr.bf16.mxu0 0
          %2130 = vmatpush1.bf16.msra.mxu0 %v1771
          %2131 = vmatprep.subr.bf16.mxu0 0
          %2132 = vmatpush1.bf16.msra.mxu0 %v1774
          %2133 = vmatprep.subr.bf16.mxu0 0
          %2134 = vmatpush1.bf16.msra.mxu0 %v1777
          %2135 = vmatprep.subr.bf16.mxu0 0
          %2136 = vmatpush1.bf16.msra.mxu0 %v1780
          %2137 = vmatprep.subr.bf16.mxu0 0
          %2138 = vmatpush1.bf16.msra.mxu0 %v1783
          %2139 = vmatprep.subr.bf16.mxu0 0
          %2140 = vmatpush1.bf16.msra.mxu0 %v1786
          %2141 = vmatprep.subr.bf16.mxu0 0
          %2142 = vmatpush1.bf16.msra.mxu0 %v1789
          %2143 = vmatprep.subr.bf16.mxu0 0
          %2144 = vmatpush1.bf16.msra.mxu0 %v1792
          %2145 = vmatprep.subr.bf16.mxu0 0
          %2146 = vmatpush1.bf16.msra.mxu0 %v1795
          %2147 = vmatprep.subr.bf16.mxu0 0
          %2148 = vmatpush1.bf16.msra.mxu0 %v1798
          %2149 = vmatprep.subr.bf16.mxu0 0
          %2150 = vmatpush1.bf16.msra.mxu0 %v1801
          %2151 = vmatprep.subr.bf16.mxu0 0
          %2152 = vmatpush1.bf16.msra.mxu0 %v1804
          %2153 = vmatprep.subr.bf16.mxu0 0
          %2154 = vmatpush1.bf16.msra.mxu0 %v1807
          %2155 = vmatprep.subr.bf16.mxu0 0
          %2156 = vmatpush1.bf16.msra.mxu0 %v1810
          %2157 = vmatprep.mubr.bf16.mxu0 %v1308
          %2158 = vmatmul.mubr.bf16.gmra.mrb[0].mxu0 %v1307
          %v2159 = vpop.f32.mrb[0].mxu0
          %v2160 = vadd.f32 %v2119, %v2159
          %v2161 = vpop.f32.mrb[0].mxu0
          %v2162 = vpop.f32.mrb[0].mxu0
          %v2163 = vadd.f32 %v2122, %v2162
          %v2164 = vpop.f32.mrb[0].mxu0
          %2165 = vdwg.mxu0
          %2166 = vmatprep.subr.bf16.mxu0 0
          %2167 = vmatpush1.bf16.msra.mxu0 %v1813
          %2168 = vmatprep.subr.bf16.mxu0 0
          %2169 = vmatpush1.bf16.msra.mxu0 %v1816
          %2170 = vmatprep.subr.bf16.mxu0 0
          %2171 = vmatpush1.bf16.msra.mxu0 %v1819
          %2172 = vmatprep.subr.bf16.mxu0 0
          %2173 = vmatpush1.bf16.msra.mxu0 %v1822
          %2174 = vmatprep.subr.bf16.mxu0 0
          %2175 = vmatpush1.bf16.msra.mxu0 %v1825
          %2176 = vmatprep.subr.bf16.mxu0 0
          %2177 = vmatpush1.bf16.msra.mxu0 %v1828
          %2178 = vmatprep.subr.bf16.mxu0 0
          %2179 = vmatpush1.bf16.msra.mxu0 %v1831
          %2180 = vmatprep.subr.bf16.mxu0 0
          %2181 = vmatpush1.bf16.msra.mxu0 %v1834
          %2182 = vmatprep.subr.bf16.mxu0 0
          %2183 = vmatpush1.bf16.msra.mxu0 0
          %2184 = vmatprep.subr.bf16.mxu0 0
          %2185 = vmatpush1.bf16.msra.mxu0 0
          %2186 = vmatprep.subr.bf16.mxu0 0
          %2187 = vmatpush1.bf16.msra.mxu0 0
          %2188 = vmatprep.subr.bf16.mxu0 0
          %2189 = vmatpush1.bf16.msra.mxu0 0
          %2190 = vmatprep.subr.bf16.mxu0 0
          %2191 = vmatpush1.bf16.msra.mxu0 0
          %2192 = vmatprep.subr.bf16.mxu0 0
          %2193 = vmatpush1.bf16.msra.mxu0 0
          %2194 = vmatprep.subr.bf16.mxu0 0
          %2195 = vmatpush1.bf16.msra.mxu0 0
          %2196 = vmatprep.subr.bf16.mxu0 0
          %2197 = vmatpush1.bf16.msra.mxu0 0
          %2198 = vmatprep.mubr.bf16.mxu0 0
          %2199 = vmatmul.mubr.bf16.gmra.mrb[0].mxu0 %v1309
          %v2200 = vpop.f32.mrb[0].mxu0
          %v2201 = vadd.f32 %v2160, %v2200
          %v2202 = vpop.f32.mrb[0].mxu0
          %v2203 = vpop.f32.mrb[0].mxu0
          %v2204 = vadd.f32 %v2163, %v2203
          %v2205 = vpop.f32.mrb[0].mxu0
          %2206 = vdwg.mxu0
          %v2207 = vmax.f32 %v2076, %v2078
          %2208 = vmax.xlane.f32.xlu0 %v2207
          %v2209 = vpop.xlane.xlu0 %2208
          %v2210 = vmax.f32 %v2080, %v2082
          %2211 = vmax.xlane.f32.xlu0 %v2210
          %v2212 = vpop.xlane.xlu0 %2211
          %v2213 = vsub.f32 %v2076, %v2209
          %v2214 = vsub.f32 %v2078, %v2209
          %v2215 = vsub.f32 %v2080, %v2212
          %v2216 = vsub.f32 %v2082, %v2212
          %v2217 = vmul.f32 %v2213, 1.442695
          %v2218 = vpow.pop %v2217
          %v2219 = vmul.f32 %v2214, 1.442695
          %v2220 = vpow.pop %v2219
          %v2221 = vmul.f32 %v2215, 1.442695
          %v2222 = vpow.pop %v2221
          %v2223 = vmul.f32 %v2216, 1.442695
          %v2224 = vpow.pop %v2223
          %v2225 = vadd.f32 %v2218, %v2220
          %2226 = vadd.xlane.f32.xlu0 %v2225
          %v2227 = vpop.xlane.xlu0 %2226
          %v2228 = vadd.f32 %v2222, %v2224
          %2229 = vadd.xlane.f32.xlu0 %v2228
          %v2230 = vpop.xlane.xlu0 %2229
          %v2231 = vrcp.pop %v2227
          %v2232 = vrcp.pop %v2230
          %v2233 = vmul.f32 %v2218, %v2231
          %v2234 = vmul.f32 %v2220, %v2231
          %v2235 = vmul.f32 %v2222, %v2232
          %v2236 = vmul.f32 %v2224, %v2232
          %v2237 = vadd.f32 %v2233, 0.5
          %v2238 = vadd.f32 %v2235, 0.5
          %v2239 = vmul.f32 %v2237, %v2201
          %v2240 = vmul.f32 %v2238, %v2204
          %v2241 = vmul.f32 %v2234, %v1100
          %v2242 = vmul.f32 %v2236, %v1103
          %v2243 = vadd.f32 %v2239, %v2241
          %v2244 = vadd.f32 %v2240, %v2242
          %v2245 = vld [vmem:[%s636] sm:$0xff]
          %v2246 = vld [vmem:[%s636 + $0x8] sm:$0xff]
          %v2247 = vld [vmem:[%s636 + $0x10] sm:$0xf]
          %v2248 = vld [vmem:[%s636 + $0x14] sm:$0xff]
          %v2249 = vld [vmem:[%s636 + $0x1c] sm:$0xff]
          %v2250 = vld [vmem:[%s636 + $0x24] sm:$0xf]
          %v2251 = vld [vmem:[#allocation5] sm:$0xff]
          %v2252 = vld [vmem:[#allocation5 + $0x8] sm:$0xf]
          %v2253 = vld [vmem:[#allocation5 + $0xc] sm:$0xff]
          %v2254 = vld [vmem:[#allocation5 + $0x14] sm:$0xf]
          %v2255 = vld [vmem:[#allocation5 + $0x18] sm:$0xff]
          %v2256 = vld [vmem:[#allocation5 + $0x20] sm:$0xf]
          %v2257 = vld [vmem:[#allocation5 + $0x24] sm:$0xff]
          %v2258 = vld [vmem:[#allocation5 + $0x2c] sm:$0xf]
          %v2259 = vld [vmem:[#allocation5 + $0x30] sm:$0xff]
          %v2260 = vld [vmem:[#allocation5 + $0x38] sm:$0xf]
          %v2261 = vld [vmem:[#allocation5 + $0x3c] sm:$0xff]
          %v2262 = vld [vmem:[#allocation5 + $0x44] sm:$0xf]
          %v2263 = vld [vmem:[#allocation5 + $0x48] sm:$0xff]
          %v2264 = vld [vmem:[#allocation5 + $0x50] sm:$0xf]
          %v2265 = vld [vmem:[#allocation5 + $0x54] sm:$0xff]
          %v2266 = vld [vmem:[#allocation5 + $0x5c] sm:$0xf]
          %v2267 = vld [vmem:[#allocation5 + $0x60] sm:$0xff]
          %v2268 = vld [vmem:[#allocation5 + $0x68] sm:$0xf]
          %v2269 = vld [vmem:[#allocation5 + $0x6c] sm:$0xff]
          %v2270 = vld [vmem:[#allocation5 + $0x74] sm:$0xf]
          %v2271 = vld [vmem:[#allocation5 + $0x78] sm:$0xff]
          %v2272 = vld [vmem:[#allocation5 + $0x80] sm:$0xf]
          %v2273 = vld [vmem:[#allocation5 + $0x84] sm:$0xff]
          %v2274 = vld [vmem:[#allocation5 + $0x8c] sm:$0xf]
          %v2275 = vld [vmem:[#allocation5 + $0x90] sm:$0xff]
          %v2276 = vld [vmem:[#allocation5 + $0x98] sm:$0xf]
          %v2277 = vld [vmem:[#allocation5 + $0x9c] sm:$0xff]
          %v2278 = vld [vmem:[#allocation5 + $0xa4] sm:$0xf]
          %v2279 = vld [vmem:[#allocation5 + $0xa8] sm:$0xff]
          %v2280 = vld [vmem:[#allocation5 + $0xb0] sm:$0xf]
          %v2281 = vld [vmem:[#allocation5 + $0xb4] sm:$0xff]
          %v2282 = vld [vmem:[#allocation5 + $0xbc] sm:$0xf]
          %v2283 = vld [vmem:[#allocation5 + $0xc0] sm:$0xff]
          %v2284 = vld [vmem:[#allocation5 + $0xc8] sm:$0xf]
          %v2285 = vld [vmem:[#allocation5 + $0xcc] sm:$0xff]
          %v2286 = vld [vmem:[#allocation5 + $0xd4] sm:$0xf]
          %v2287 = vld [vmem:[#allocation5 + $0xd8] sm:$0xff]
          %v2288 = vld [vmem:[#allocation5 + $0xe0] sm:$0xf]
          %v2289 = vld [vmem:[#allocation5 + $0xe4] sm:$0xff]
          %v2290 = vld [vmem:[#allocation5 + $0xec] sm:$0xf]
          %v2291 = vld [vmem:[#allocation5 + $0xf0] sm:$0xff]
          %v2292 = vld [vmem:[#allocation5 + $0xf8] sm:$0xf]
          %v2293 = vld [vmem:[#allocation5 + $0xfc] sm:$0xff]
          %v2294 = vld [vmem:[#allocation5 + $0x104] sm:$0xf]
          %v2295 = vld [vmem:[#allocation5 + $0x108] sm:$0xff]
          %v2296 = vld [vmem:[#allocation5 + $0x110] sm:$0xf]
          %v2297 = vld [vmem:[#allocation5 + $0x114] sm:$0xff]
          %v2298 = vld [vmem:[#allocation5 + $0x11c] sm:$0xf]
          %v2299 = vld [vmem:[#allocation5 + $0x120] sm:$0xff]
          %v2300 = vld [vmem:[#allocation5 + $0x128] sm:$0xf]
          %v2301 = vld [vmem:[#allocation5 + $0x12c] sm:$0xff]
          %v2302 = vld [vmem:[#allocation5 + $0x134] sm:$0xf]
          %v2303 = vld [vmem:[#allocation5 + $0x138] sm:$0xff]
          %v2304 = vld [vmem:[#allocation5 + $0x140] sm:$0xf]
          %v2305 = vld [vmem:[#allocation5 + $0x144] sm:$0xff]
          %v2306 = vld [vmem:[#allocation5 + $0x14c] sm:$0xf]
          %v2307 = vld [vmem:[#allocation5 + $0x150] sm:$0xff]
          %v2308 = vld [vmem:[#allocation5 + $0x158] sm:$0xf]
          %v2309 = vld [vmem:[#allocation5 + $0x15c] sm:$0xff]
          %v2310 = vld [vmem:[#allocation5 + $0x164] sm:$0xf]
          %v2311 = vld [vmem:[#allocation5 + $0x168] sm:$0xff]
          %v2312 = vld [vmem:[#allocation5 + $0x170] sm:$0xf]
          %v2313 = vld [vmem:[#allocation5 + $0x174] sm:$0xff]
          %v2314 = vld [vmem:[#allocation5 + $0x17c] sm:$0xf]
          %v2315 = vld [vmem:[#allocation5 + $0x180] sm:$0xff]
          %v2316 = vld [vmem:[#allocation5 + $0x188] sm:$0xf]
          %v2317 = vld [vmem:[#allocation5 + $0x18c] sm:$0xff]
          %v2318 = vld [vmem:[#allocation5 + $0x194] sm:$0xf]
          %v2319 = vld [vmem:[#allocation5 + $0x198] sm:$0xff]
          %v2320 = vld [vmem:[#allocation5 + $0x1a0] sm:$0xf]
          %v2321 = vld [vmem:[#allocation5 + $0x1a4] sm:$0xff]
          %v2322 = vld [vmem:[#allocation5 + $0x1ac] sm:$0xf]
          %v2323 = vld [vmem:[#allocation5 + $0x1b0] sm:$0xff]
          %v2324 = vld [vmem:[#allocation5 + $0x1b8] sm:$0xf]
          %v2325 = vld [vmem:[#allocation5 + $0x1bc] sm:$0xff]
          %v2326 = vld [vmem:[#allocation5 + $0x1c4] sm:$0xf]
          %v2327 = vld [vmem:[#allocation5 + $0x1c8] sm:$0xff]
          %v2328 = vld [vmem:[#allocation5 + $0x1d0] sm:$0xf]
          %v2329 = vld [vmem:[#allocation5 + $0x1d4] sm:$0xff]
          %v2330 = vld [vmem:[#allocation5 + $0x1dc] sm:$0xf]
          %v2331 = vld [vmem:[#allocation5 + $0x1e0] sm:$0xff]
          %v2332 = vld [vmem:[#allocation5 + $0x1e8] sm:$0xf]
          %v2333 = vld [vmem:[#allocation5 + $0x1ec] sm:$0xff]
          %v2334 = vld [vmem:[#allocation5 + $0x1f4] sm:$0xf]
          %v2335 = vld [vmem:[#allocation5 + $0x1f8] sm:$0xff]
          %v2336 = vld [vmem:[#allocation5 + $0x200] sm:$0xf]
          %v2337 = vld [vmem:[#allocation5 + $0x204] sm:$0xff]
          %v2338 = vld [vmem:[#allocation5 + $0x20c] sm:$0xf]
          %v2339 = vld [vmem:[#allocation5 + $0x210] sm:$0xff]
          %v2340 = vld [vmem:[#allocation5 + $0x218] sm:$0xf]
          %v2341 = vld [vmem:[#allocation5 + $0x21c] sm:$0xff]
          %v2342 = vld [vmem:[#allocation5 + $0x224] sm:$0xf]
          %v2343 = vld [vmem:[#allocation5 + $0x228] sm:$0xff]
          %v2344 = vld [vmem:[#allocation5 + $0x230] sm:$0xf]
          %v2345 = vld [vmem:[#allocation5 + $0x234] sm:$0xff]
          %v2346 = vld [vmem:[#allocation5 + $0x23c] sm:$0xf]
          %v2347 = vld [vmem:[#allocation5 + $0x240] sm:$0xff]
          %v2348 = vld [vmem:[#allocation5 + $0x248] sm:$0xf]
          %v2349 = vld [vmem:[#allocation5 + $0x24c] sm:$0xff]
          %v2350 = vld [vmem:[#allocation5 + $0x254] sm:$0xf]
          %v2351 = vld [vmem:[#allocation5 + $0x258] sm:$0xff]
          %v2352 = vld [vmem:[#allocation5 + $0x260] sm:$0xf]
          %v2353 = vld [vmem:[#allocation5 + $0x264] sm:$0xff]
          %v2354 = vld [vmem:[#allocation5 + $0x26c] sm:$0xf]
          %v2355 = vld [vmem:[#allocation5 + $0x270] sm:$0xff]
          %v2356 = vld [vmem:[#allocation5 + $0x278] sm:$0xf]
          %v2357 = vld [vmem:[#allocation5 + $0x27c] sm:$0xff]
          %v2358 = vld [vmem:[#allocation5 + $0x284] sm:$0xf]
          %v2359 = vld [vmem:[#allocation5 + $0x288] sm:$0xff]
          %v2360 = vld [vmem:[#allocation5 + $0x290] sm:$0xf]
          %v2361 = vld [vmem:[#allocation5 + $0x294] sm:$0xff]
          %v2362 = vld [vmem:[#allocation5 + $0x29c] sm:$0xf]
          %v2363 = vld [vmem:[#allocation5 + $0x2a0] sm:$0xff]
          %v2364 = vld [vmem:[#allocation5 + $0x2a8] sm:$0xf]
          %v2365 = vld [vmem:[#allocation5 + $0x2ac] sm:$0xff]
          %v2366 = vld [vmem:[#allocation5 + $0x2b4] sm:$0xf]
          %v2367 = vld [vmem:[#allocation5 + $0x2b8] sm:$0xff]
          %v2368 = vld [vmem:[#allocation5 + $0x2c0] sm:$0xf]
          %v2369 = vld [vmem:[#allocation5 + $0x2c4] sm:$0xff]
          %v2370 = vld [vmem:[#allocation5 + $0x2cc] sm:$0xf]
          %v2371 = vld [vmem:[#allocation5 + $0x2d0] sm:$0xff]
          %v2372 = vld [vmem:[#allocation5 + $0x2d8] sm:$0xf]
          %v2373 = vld [vmem:[#allocation5 + $0x2dc] sm:$0xff]
          %v2374 = vld [vmem:[#allocation5 + $0x2e4] sm:$0xf]
          %v2375 = vld [vmem:[#allocation5 + $0x2e8] sm:$0xff]
          %v2376 = vld [vmem:[#allocation5 + $0x2f0] sm:$0xf]
          %v2377 = vld [vmem:[#allocation5 + $0x2f4] sm:$0xff]
          %v2378 = vld [vmem:[#allocation5 + $0x2fc] sm:$0xf]
          %v2379 = vld [vmem:[#allocation5 + $0x300] sm:$0xff]
          %v2380 = vld [vmem:[#allocation5 + $0x308] sm:$0xf]
          %v2381 = vld [vmem:[#allocation5 + $0x30c] sm:$0xff]
          %v2382 = vld [vmem:[#allocation5 + $0x314] sm:$0xf]
          %v2383 = vld [vmem:[#allocation5 + $0x318] sm:$0xff]
          %v2384 = vld [vmem:[#allocation5 + $0x320] sm:$0xf]
          %v2385 = vld [vmem:[#allocation5 + $0x324] sm:$0xff]
          %v2386 = vld [vmem:[#allocation5 + $0x32c] sm:$0xf]
          %v2387 = vld [vmem:[#allocation5 + $0x330] sm:$0xff]
          %v2388 = vld [vmem:[#allocation5 + $0x338] sm:$0xf]
          %v2389 = vld [vmem:[#allocation5 + $0x33c] sm:$0xff]
          %v2390 = vld [vmem:[#allocation5 + $0x344] sm:$0xf]
          %v2391 = vld [vmem:[#allocation5 + $0x348] sm:$0xff]
          %v2392 = vld [vmem:[#allocation5 + $0x350] sm:$0xf]
          %v2393 = vld [vmem:[#allocation5 + $0x354] sm:$0xff]
          %v2394 = vld [vmem:[#allocation5 + $0x35c] sm:$0xf]
          %v2395 = vld [vmem:[#allocation5 + $0x360] sm:$0xff]
          %v2396 = vld [vmem:[#allocation5 + $0x368] sm:$0xf]
          %v2397 = vld [vmem:[#allocation5 + $0x36c] sm:$0xff]
          %v2398 = vld [vmem:[#allocation5 + $0x374] sm:$0xf]
          %v2399 = vld [vmem:[#allocation5 + $0x378] sm:$0xff]
          %v2400 = vld [vmem:[#allocation5 + $0x380] sm:$0xf]
          %v2401 = vld [vmem:[#allocation5 + $0x384] sm:$0xff]
          %v2402 = vld [vmem:[#allocation5 + $0x38c] sm:$0xf]
          %v2403 = vld [vmem:[#allocation5 + $0x390] sm:$0xff]
          %v2404 = vld [vmem:[#allocation5 + $0x398] sm:$0xf]
          %v2405 = vld [vmem:[#allocation5 + $0x39c] sm:$0xff]
          %v2406 = vld [vmem:[#allocation5 + $0x3a4] sm:$0xf]
          %v2407 = vld [vmem:[#allocation5 + $0x3a8] sm:$0xff]
          %v2408 = vld [vmem:[#allocation5 + $0x3b0] sm:$0xf]
          %v2409 = vld [vmem:[#allocation5 + $0x3b4] sm:$0xff]
          %v2410 = vld [vmem:[#allocation5 + $0x3bc] sm:$0xf]
          %v2411 = vld [vmem:[%s10] sm:$0x7]
          %v2413 = vlaneseq
          %v2414 = vshrl.u32 %v2413, 7
          %v2415 = vsub.s32 0, %v2414
          %v2416 = vrot.slane %v2411, %v2415
          %v2417 = vlaneseq
          %v2418 = vshrl.u32 %v2417, 7
          %v2419 = vsub.s32 1, %v2418
          %v2420 = vrot.slane %v2411, %v2419
          %v2421 = vlaneseq
          %v2422 = vshrl.u32 %v2421, 7
          %v2423 = vsub.s32 2, %v2422
          %v2424 = vrot.slane %v2411, %v2423
          %v2434 = vunpack.c.l.b16 %v2245
          %v2435 = vunpack.c.h.b16 %v2245
          %v2436 = vunpack.c.l.b16 %v2246
          %v2437 = vunpack.c.h.b16 %v2246
          %v2438 = vunpack.c.l.b16 %v2247
          %v2439 = vunpack.c.l.b16 %v2248
          %v2440 = vunpack.c.h.b16 %v2248
          %v2441 = vunpack.c.l.b16 %v2249
          %v2442 = vunpack.c.h.b16 %v2249
          %v2443 = vunpack.c.l.b16 %v2250
          %v2444 = vpack.c.b16 %v2439, %v2434
          %v2445 = vpack.c.b16 %v2440, %v2435
          %v2446 = vpack.c.b16 %v2441, %v2436
          %v2447 = vpack.c.b16 %v2442, %v2437
          %v2448 = vpack.c.b16 %v2443, %v2438
          %v2614 = vunpack.c.l.b16 %v2251
          %v2615 = vunpack.c.h.b16 %v2251
          %v2616 = vunpack.c.l.b16 %v2252
          %v2617 = vunpack.c.l.b16 %v2253
          %v2618 = vunpack.c.h.b16 %v2253
          %v2619 = vunpack.c.l.b16 %v2254
          %v2620 = vunpack.c.l.b16 %v2255
          %v2621 = vunpack.c.h.b16 %v2255
          %v2622 = vunpack.c.l.b16 %v2256
          %v2623 = vunpack.c.l.b16 %v2257
          %v2624 = vunpack.c.h.b16 %v2257
          %v2625 = vunpack.c.l.b16 %v2258
          %v2626 = vunpack.c.l.b16 %v2259
          %v2627 = vunpack.c.h.b16 %v2259
          %v2628 = vunpack.c.l.b16 %v2260
          %v2629 = vunpack.c.l.b16 %v2261
          %v2630 = vunpack.c.h.b16 %v2261
          %v2631 = vunpack.c.l.b16 %v2262
          %v2632 = vunpack.c.l.b16 %v2263
          %v2633 = vunpack.c.h.b16 %v2263
          %v2634 = vunpack.c.l.b16 %v2264
          %v2635 = vunpack.c.l.b16 %v2265
          %v2636 = vunpack.c.h.b16 %v2265
          %v2637 = vunpack.c.l.b16 %v2266
          %v2638 = vunpack.c.l.b16 %v2267
          %v2639 = vunpack.c.h.b16 %v2267
          %v2640 = vunpack.c.l.b16 %v2268
          %v2641 = vunpack.c.l.b16 %v2269
          %v2642 = vunpack.c.h.b16 %v2269
          %v2643 = vunpack.c.l.b16 %v2270
          %v2644 = vunpack.c.l.b16 %v2271
          %v2645 = vunpack.c.h.b16 %v2271
          %v2646 = vunpack.c.l.b16 %v2272
          %v2647 = vunpack.c.l.b16 %v2273
          %v2648 = vunpack.c.h.b16 %v2273
          %v2649 = vunpack.c.l.b16 %v2274
          %v2650 = vunpack.c.l.b16 %v2275
          %v2651 = vunpack.c.h.b16 %v2275
          %v2652 = vunpack.c.l.b16 %v2276
          %v2653 = vunpack.c.l.b16 %v2277
          %v2654 = vunpack.c.h.b16 %v2277
          %v2655 = vunpack.c.l.b16 %v2278
          %v2656 = vunpack.c.l.b16 %v2279
          %v2657 = vunpack.c.h.b16 %v2279
          %v2658 = vunpack.c.l.b16 %v2280
          %v2659 = vunpack.c.l.b16 %v2281
          %v2660 = vunpack.c.h.b16 %v2281
          %v2661 = vunpack.c.l.b16 %v2282
          %v2662 = vunpack.c.l.b16 %v2283
          %v2663 = vunpack.c.h.b16 %v2283
          %v2664 = vunpack.c.l.b16 %v2284
          %v2665 = vunpack.c.l.b16 %v2285
          %v2666 = vunpack.c.h.b16 %v2285
          %v2667 = vunpack.c.l.b16 %v2286
          %v2668 = vunpack.c.l.b16 %v2287
          %v2669 = vunpack.c.h.b16 %v2287
          %v2670 = vunpack.c.l.b16 %v2288
          %v2671 = vunpack.c.l.b16 %v2289
          %v2672 = vunpack.c.h.b16 %v2289
          %v2673 = vunpack.c.l.b16 %v2290
          %v2674 = vunpack.c.l.b16 %v2291
          %v2675 = vunpack.c.h.b16 %v2291
          %v2676 = vunpack.c.l.b16 %v2292
          %v2677 = vunpack.c.l.b16 %v2293
          %v2678 = vunpack.c.h.b16 %v2293
          %v2679 = vunpack.c.l.b16 %v2294
          %v2680 = vunpack.c.l.b16 %v2295
          %v2681 = vunpack.c.h.b16 %v2295
          %v2682 = vunpack.c.l.b16 %v2296
          %v2683 = vunpack.c.l.b16 %v2297
          %v2684 = vunpack.c.h.b16 %v2297
          %v2685 = vunpack.c.l.b16 %v2298
          %v2686 = vunpack.c.l.b16 %v2299
          %v2687 = vunpack.c.h.b16 %v2299
          %v2688 = vunpack.c.l.b16 %v2300
          %v2689 = vunpack.c.l.b16 %v2301
          %v2690 = vunpack.c.h.b16 %v2301
          %v2691 = vunpack.c.l.b16 %v2302
          %v2692 = vunpack.c.l.b16 %v2303
          %v2693 = vunpack.c.h.b16 %v2303
          %v2694 = vunpack.c.l.b16 %v2304
          %v2695 = vunpack.c.l.b16 %v2305
          %v2696 = vunpack.c.h.b16 %v2305
          %v2697 = vunpack.c.l.b16 %v2306
          %v2698 = vunpack.c.l.b16 %v2307
          %v2699 = vunpack.c.h.b16 %v2307
          %v2700 = vunpack.c.l.b16 %v2308
          %v2701 = vunpack.c.l.b16 %v2309
          %v2702 = vunpack.c.h.b16 %v2309
          %v2703 = vunpack.c.l.b16 %v2310
          %v2704 = vunpack.c.l.b16 %v2311
          %v2705 = vunpack.c.h.b16 %v2311
          %v2706 = vunpack.c.l.b16 %v2312
          %v2707 = vunpack.c.l.b16 %v2313
          %v2708 = vunpack.c.h.b16 %v2313
          %v2709 = vunpack.c.l.b16 %v2314
          %v2710 = vunpack.c.l.b16 %v2315
          %v2711 = vunpack.c.h.b16 %v2315
          %v2712 = vunpack.c.l.b16 %v2316
          %v2713 = vunpack.c.l.b16 %v2317
          %v2714 = vunpack.c.h.b16 %v2317
          %v2715 = vunpack.c.l.b16 %v2318
          %v2716 = vunpack.c.l.b16 %v2319
          %v2717 = vunpack.c.h.b16 %v2319
          %v2718 = vunpack.c.l.b16 %v2320
          %v2719 = vunpack.c.l.b16 %v2321
          %v2720 = vunpack.c.h.b16 %v2321
          %v2721 = vunpack.c.l.b16 %v2322
          %v2722 = vunpack.c.l.b16 %v2323
          %v2723 = vunpack.c.h.b16 %v2323
          %v2724 = vunpack.c.l.b16 %v2324
          %v2725 = vunpack.c.l.b16 %v2325
          %v2726 = vunpack.c.h.b16 %v2325
          %v2727 = vunpack.c.l.b16 %v2326
          %v2728 = vunpack.c.l.b16 %v2327
          %v2729 = vunpack.c.h.b16 %v2327
          %v2730 = vunpack.c.l.b16 %v2328
          %v2731 = vunpack.c.l.b16 %v2329
          %v2732 = vunpack.c.h.b16 %v2329
          %v2733 = vunpack.c.l.b16 %v2330
          %v2734 = vunpack.c.l.b16 %v2331
          %v2735 = vunpack.c.h.b16 %v2331
          %v2736 = vunpack.c.l.b16 %v2332
          %v2737 = vunpack.c.l.b16 %v2333
          %v2738 = vunpack.c.h.b16 %v2333
          %v2739 = vunpack.c.l.b16 %v2334
          %v2740 = vunpack.c.l.b16 %v2335
          %v2741 = vunpack.c.h.b16 %v2335
          %v2742 = vunpack.c.l.b16 %v2336
          %v2743 = vunpack.c.l.b16 %v2337
          %v2744 = vunpack.c.h.b16 %v2337
          %v2745 = vunpack.c.l.b16 %v2338
          %v2746 = vunpack.c.l.b16 %v2339
          %v2747 = vunpack.c.h.b16 %v2339
          %v2748 = vunpack.c.l.b16 %v2340
          %v2749 = vunpack.c.l.b16 %v2341
          %v2750 = vunpack.c.h.b16 %v2341
          %v2751 = vunpack.c.l.b16 %v2342
          %v2752 = vunpack.c.l.b16 %v2343
          %v2753 = vunpack.c.h.b16 %v2343
          %v2754 = vunpack.c.l.b16 %v2344
          %v2755 = vunpack.c.l.b16 %v2345
          %v2756 = vunpack.c.h.b16 %v2345
          %v2757 = vunpack.c.l.b16 %v2346
          %v2758 = vunpack.c.l.b16 %v2347
          %v2759 = vunpack.c.h.b16 %v2347
          %v2760 = vunpack.c.l.b16 %v2348
          %v2761 = vunpack.c.l.b16 %v2349
          %v2762 = vunpack.c.h.b16 %v2349
          %v2763 = vunpack.c.l.b16 %v2350
          %v2764 = vunpack.c.l.b16 %v2351
          %v2765 = vunpack.c.h.b16 %v2351
          %v2766 = vunpack.c.l.b16 %v2352
          %v2767 = vunpack.c.l.b16 %v2353
          %v2768 = vunpack.c.h.b16 %v2353
          %v2769 = vunpack.c.l.b16 %v2354
          %v2770 = vunpack.c.l.b16 %v2355
          %v2771 = vunpack.c.h.b16 %v2355
          %v2772 = vunpack.c.l.b16 %v2356
          %v2773 = vunpack.c.l.b16 %v2357
          %v2774 = vunpack.c.h.b16 %v2357
          %v2775 = vunpack.c.l.b16 %v2358
          %v2776 = vunpack.c.l.b16 %v2359
          %v2777 = vunpack.c.h.b16 %v2359
          %v2778 = vunpack.c.l.b16 %v2360
          %v2779 = vunpack.c.l.b16 %v2361
          %v2780 = vunpack.c.h.b16 %v2361
          %v2781 = vunpack.c.l.b16 %v2362
          %v2782 = vunpack.c.l.b16 %v2363
          %v2783 = vunpack.c.h.b16 %v2363
          %v2784 = vunpack.c.l.b16 %v2364
          %v2785 = vunpack.c.l.b16 %v2365
          %v2786 = vunpack.c.h.b16 %v2365
          %v2787 = vunpack.c.l.b16 %v2366
          %v2788 = vunpack.c.l.b16 %v2367
          %v2789 = vunpack.c.h.b16 %v2367
          %v2790 = vunpack.c.l.b16 %v2368
          %v2791 = vunpack.c.l.b16 %v2369
          %v2792 = vunpack.c.h.b16 %v2369
          %v2793 = vunpack.c.l.b16 %v2370
          %v2794 = vunpack.c.l.b16 %v2371
          %v2795 = vunpack.c.h.b16 %v2371
          %v2796 = vunpack.c.l.b16 %v2372
          %v2797 = vunpack.c.l.b16 %v2373
          %v2798 = vunpack.c.h.b16 %v2373
          %v2799 = vunpack.c.l.b16 %v2374
          %v2800 = vunpack.c.l.b16 %v2375
          %v2801 = vunpack.c.h.b16 %v2375
          %v2802 = vunpack.c.l.b16 %v2376
          %v2803 = vunpack.c.l.b16 %v2377
          %v2804 = vunpack.c.h.b16 %v2377
          %v2805 = vunpack.c.l.b16 %v2378
          %v2806 = vunpack.c.l.b16 %v2379
          %v2807 = vunpack.c.h.b16 %v2379
          %v2808 = vunpack.c.l.b16 %v2380
          %v2809 = vunpack.c.l.b16 %v2381
          %v2810 = vunpack.c.h.b16 %v2381
          %v2811 = vunpack.c.l.b16 %v2382
          %v2812 = vunpack.c.l.b16 %v2383
          %v2813 = vunpack.c.h.b16 %v2383
          %v2814 = vunpack.c.l.b16 %v2384
          %v2815 = vunpack.c.l.b16 %v2385
          %v2816 = vunpack.c.h.b16 %v2385
          %v2817 = vunpack.c.l.b16 %v2386
          %v2818 = vunpack.c.l.b16 %v2387
          %v2819 = vunpack.c.h.b16 %v2387
          %v2820 = vunpack.c.l.b16 %v2388
          %v2821 = vunpack.c.l.b16 %v2389
          %v2822 = vunpack.c.h.b16 %v2389
          %v2823 = vunpack.c.l.b16 %v2390
          %v2824 = vunpack.c.l.b16 %v2391
          %v2825 = vunpack.c.h.b16 %v2391
          %v2826 = vunpack.c.l.b16 %v2392
          %v2827 = vunpack.c.l.b16 %v2393
          %v2828 = vunpack.c.h.b16 %v2393
          %v2829 = vunpack.c.l.b16 %v2394
          %v2830 = vunpack.c.l.b16 %v2395
          %v2831 = vunpack.c.h.b16 %v2395
          %v2832 = vunpack.c.l.b16 %v2396
          %v2833 = vunpack.c.l.b16 %v2397
          %v2834 = vunpack.c.h.b16 %v2397
          %v2835 = vunpack.c.l.b16 %v2398
          %v2836 = vunpack.c.l.b16 %v2399
          %v2837 = vunpack.c.h.b16 %v2399
          %v2838 = vunpack.c.l.b16 %v2400
          %v2839 = vunpack.c.l.b16 %v2401
          %v2840 = vunpack.c.h.b16 %v2401
          %v2841 = vunpack.c.l.b16 %v2402
          %v2842 = vunpack.c.l.b16 %v2403
          %v2843 = vunpack.c.h.b16 %v2403
          %v2844 = vunpack.c.l.b16 %v2404
          %v2845 = vunpack.c.l.b16 %v2405
          %v2846 = vunpack.c.h.b16 %v2405
          %v2847 = vunpack.c.l.b16 %v2406
          %v2848 = vunpack.c.l.b16 %v2407
          %v2849 = vunpack.c.h.b16 %v2407
          %v2850 = vunpack.c.l.b16 %v2408
          %v2851 = vunpack.c.l.b16 %v2409
          %v2852 = vunpack.c.h.b16 %v2409
          %v2853 = vunpack.c.l.b16 %v2410
          %v2854 = vpack.c.b16 %v2617, %v2614
          %v2855 = vpack.c.b16 %v2618, %v2615
          %v2856 = vpack.c.b16 %v2619, %v2616
          %v2857 = vpack.c.b16 %v2623, %v2620
          %v2858 = vpack.c.b16 %v2624, %v2621
          %v2859 = vpack.c.b16 %v2625, %v2622
          %v2860 = vpack.c.b16 %v2629, %v2626
          %v2861 = vpack.c.b16 %v2630, %v2627
          %v2862 = vpack.c.b16 %v2631, %v2628
          %v2863 = vpack.c.b16 %v2635, %v2632
          %v2864 = vpack.c.b16 %v2636, %v2633
          %v2865 = vpack.c.b16 %v2637, %v2634
          %v2866 = vpack.c.b16 %v2641, %v2638
          %v2867 = vpack.c.b16 %v2642, %v2639
          %v2868 = vpack.c.b16 %v2643, %v2640
          %v2869 = vpack.c.b16 %v2647, %v2644
          %v2870 = vpack.c.b16 %v2648, %v2645
          %v2871 = vpack.c.b16 %v2649, %v2646
          %v2872 = vpack.c.b16 %v2653, %v2650
          %v2873 = vpack.c.b16 %v2654, %v2651
          %v2874 = vpack.c.b16 %v2655, %v2652
          %v2875 = vpack.c.b16 %v2659, %v2656
          %v2876 = vpack.c.b16 %v2660, %v2657
          %v2877 = vpack.c.b16 %v2661, %v2658
          %v2878 = vpack.c.b16 %v2665, %v2662
          %v2879 = vpack.c.b16 %v2666, %v2663
          %v2880 = vpack.c.b16 %v2667, %v2664
          %v2881 = vpack.c.b16 %v2671, %v2668
          %v2882 = vpack.c.b16 %v2672, %v2669
          %v2883 = vpack.c.b16 %v2673, %v2670
          %v2884 = vpack.c.b16 %v2677, %v2674
          %v2885 = vpack.c.b16 %v2678, %v2675
          %v2886 = vpack.c.b16 %v2679, %v2676
          %v2887 = vpack.c.b16 %v2683, %v2680
          %v2888 = vpack.c.b16 %v2684, %v2681
          %v2889 = vpack.c.b16 %v2685, %v2682
          %v2890 = vpack.c.b16 %v2689, %v2686
          %v2891 = vpack.c.b16 %v2690, %v2687
          %v2892 = vpack.c.b16 %v2691, %v2688
          %v2893 = vpack.c.b16 %v2695, %v2692
          %v2894 = vpack.c.b16 %v2696, %v2693
          %v2895 = vpack.c.b16 %v2697, %v2694
          %v2896 = vpack.c.b16 %v2701, %v2698
          %v2897 = vpack.c.b16 %v2702, %v2699
          %v2898 = vpack.c.b16 %v2703, %v2700
          %v2899 = vpack.c.b16 %v2707, %v2704
          %v2900 = vpack.c.b16 %v2708, %v2705
          %v2901 = vpack.c.b16 %v2709, %v2706
          %v2902 = vpack.c.b16 %v2713, %v2710
          %v2903 = vpack.c.b16 %v2714, %v2711
          %v2904 = vpack.c.b16 %v2715, %v2712
          %v2905 = vpack.c.b16 %v2719, %v2716
          %v2906 = vpack.c.b16 %v2720, %v2717
          %v2907 = vpack.c.b16 %v2721, %v2718
          %v2908 = vpack.c.b16 %v2725, %v2722
          %v2909 = vpack.c.b16 %v2726, %v2723
          %v2910 = vpack.c.b16 %v2727, %v2724
          %v2911 = vpack.c.b16 %v2731, %v2728
          %v2912 = vpack.c.b16 %v2732, %v2729
          %v2913 = vpack.c.b16 %v2733, %v2730
          %v2914 = vpack.c.b16 %v2737, %v2734
          %v2915 = vpack.c.b16 %v2738, %v2735
          %v2916 = vpack.c.b16 %v2739, %v2736
          %v2917 = vpack.c.b16 %v2743, %v2740
          %v2918 = vpack.c.b16 %v2744, %v2741
          %v2919 = vpack.c.b16 %v2745, %v2742
          %v2920 = vpack.c.b16 %v2749, %v2746
          %v2921 = vpack.c.b16 %v2750, %v2747
          %v2922 = vpack.c.b16 %v2751, %v2748
          %v2923 = vpack.c.b16 %v2755, %v2752
          %v2924 = vpack.c.b16 %v2756, %v2753
          %v2925 = vpack.c.b16 %v2757, %v2754
          %v2926 = vpack.c.b16 %v2761, %v2758
          %v2927 = vpack.c.b16 %v2762, %v2759
          %v2928 = vpack.c.b16 %v2763, %v2760
          %v2929 = vpack.c.b16 %v2767, %v2764
          %v2930 = vpack.c.b16 %v2768, %v2765
          %v2931 = vpack.c.b16 %v2769, %v2766
          %v2932 = vpack.c.b16 %v2773, %v2770
          %v2933 = vpack.c.b16 %v2774, %v2771
          %v2934 = vpack.c.b16 %v2775, %v2772
          %v2935 = vpack.c.b16 %v2779, %v2776
          %v2936 = vpack.c.b16 %v2780, %v2777
          %v2937 = vpack.c.b16 %v2781, %v2778
          %v2938 = vpack.c.b16 %v2785, %v2782
          %v2939 = vpack.c.b16 %v2786, %v2783
          %v2940 = vpack.c.b16 %v2787, %v2784
          %v2941 = vpack.c.b16 %v2791, %v2788
          %v2942 = vpack.c.b16 %v2792, %v2789
          %v2943 = vpack.c.b16 %v2793, %v2790
          %v2944 = vpack.c.b16 %v2797, %v2794
          %v2945 = vpack.c.b16 %v2798, %v2795
          %v2946 = vpack.c.b16 %v2799, %v2796
          %v2947 = vpack.c.b16 %v2803, %v2800
          %v2948 = vpack.c.b16 %v2804, %v2801
          %v2949 = vpack.c.b16 %v2805, %v2802
          %v2950 = vpack.c.b16 %v2809, %v2806
          %v2951 = vpack.c.b16 %v2810, %v2807
          %v2952 = vpack.c.b16 %v2811, %v2808
          %v2953 = vpack.c.b16 %v2815, %v2812
          %v2954 = vpack.c.b16 %v2816, %v2813
          %v2955 = vpack.c.b16 %v2817, %v2814
          %v2956 = vpack.c.b16 %v2821, %v2818
          %v2957 = vpack.c.b16 %v2822, %v2819
          %v2958 = vpack.c.b16 %v2823, %v2820
          %v2959 = vpack.c.b16 %v2827, %v2824
          %v2960 = vpack.c.b16 %v2828, %v2825
          %v2961 = vpack.c.b16 %v2829, %v2826
          %v2962 = vpack.c.b16 %v2833, %v2830
          %v2963 = vpack.c.b16 %v2834, %v2831
          %v2964 = vpack.c.b16 %v2835, %v2832
          %v2965 = vpack.c.b16 %v2839, %v2836
          %v2966 = vpack.c.b16 %v2840, %v2837
          %v2967 = vpack.c.b16 %v2841, %v2838
          %v2968 = vpack.c.b16 %v2845, %v2842
          %v2969 = vpack.c.b16 %v2846, %v2843
          %v2970 = vpack.c.b16 %v2847, %v2844
          %v2971 = vpack.c.b16 %v2851, %v2848
          %v2972 = vpack.c.b16 %v2852, %v2849
          %v2973 = vpack.c.b16 %v2853, %v2850
          %3094 = vmatprep.subr.bf16.mxu0 %v2855
          %3095 = vmatpush1.bf16.msra.mxu0 %v2854
          %3096 = vmatprep.subr.bf16.mxu0 %v2858
          %3097 = vmatpush1.bf16.msra.mxu0 %v2857
          %3098 = vmatprep.subr.bf16.mxu0 %v2861
          %3099 = vmatpush1.bf16.msra.mxu0 %v2860
          %3100 = vmatprep.subr.bf16.mxu0 %v2864
          %3101 = vmatpush1.bf16.msra.mxu0 %v2863
          %3102 = vmatprep.subr.bf16.mxu0 %v2867
          %3103 = vmatpush1.bf16.msra.mxu0 %v2866
          %3104 = vmatprep.subr.bf16.mxu0 %v2870
          %3105 = vmatpush1.bf16.msra.mxu0 %v2869
          %3106 = vmatprep.subr.bf16.mxu0 %v2873
          %3107 = vmatpush1.bf16.msra.mxu0 %v2872
          %3108 = vmatprep.subr.bf16.mxu0 %v2876
          %3109 = vmatpush1.bf16.msra.mxu0 %v2875
          %3110 = vmatprep.subr.bf16.mxu0 %v2879
          %3111 = vmatpush1.bf16.msra.mxu0 %v2878
          %3112 = vmatprep.subr.bf16.mxu0 %v2882
          %3113 = vmatpush1.bf16.msra.mxu0 %v2881
          %3114 = vmatprep.subr.bf16.mxu0 %v2885
          %3115 = vmatpush1.bf16.msra.mxu0 %v2884
          %3116 = vmatprep.subr.bf16.mxu0 %v2888
          %3117 = vmatpush1.bf16.msra.mxu0 %v2887
          %3118 = vmatprep.subr.bf16.mxu0 %v2891
          %3119 = vmatpush1.bf16.msra.mxu0 %v2890
          %3120 = vmatprep.subr.bf16.mxu0 %v2894
          %3121 = vmatpush1.bf16.msra.mxu0 %v2893
          %3122 = vmatprep.subr.bf16.mxu0 %v2897
          %3123 = vmatpush1.bf16.msra.mxu0 %v2896
          %3124 = vmatprep.subr.bf16.mxu0 %v2900
          %3125 = vmatpush1.bf16.msra.mxu0 %v2899
          %3126 = vmatprep.mubr.bf16.mxu0 %v2445
          %3127 = vmatmul.mubr.bf16.gmra.mrb[0].mxu0 %v2444
          %v3128 = vpop.f32.mrb[0].mxu0
          %v3129 = vadd.f32 %v2416, %v3128
          %v3130 = vpop.f32.mrb[0].mxu0
          %v3131 = vadd.f32 %v2420, %v3130
          %v3132 = vpop.f32.mrb[0].mxu0
          %v3133 = vadd.f32 %v2416, %v3132
          %v3134 = vpop.f32.mrb[0].mxu0
          %v3135 = vadd.f32 %v2420, %v3134
          %3136 = vdwg.mxu0
          %3137 = vmatprep.subr.bf16.mxu0 %v2903
          %3138 = vmatpush1.bf16.msra.mxu0 %v2902
          %3139 = vmatprep.subr.bf16.mxu0 %v2906
          %3140 = vmatpush1.bf16.msra.mxu0 %v2905
          %3141 = vmatprep.subr.bf16.mxu0 %v2909
          %3142 = vmatpush1.bf16.msra.mxu0 %v2908
          %3143 = vmatprep.subr.bf16.mxu0 %v2912
          %3144 = vmatpush1.bf16.msra.mxu0 %v2911
          %3145 = vmatprep.subr.bf16.mxu0 %v2915
          %3146 = vmatpush1.bf16.msra.mxu0 %v2914
          %3147 = vmatprep.subr.bf16.mxu0 %v2918
          %3148 = vmatpush1.bf16.msra.mxu0 %v2917
          %3149 = vmatprep.subr.bf16.mxu0 %v2921
          %3150 = vmatpush1.bf16.msra.mxu0 %v2920
          %3151 = vmatprep.subr.bf16.mxu0 %v2924
          %3152 = vmatpush1.bf16.msra.mxu0 %v2923
          %3153 = vmatprep.subr.bf16.mxu0 %v2927
          %3154 = vmatpush1.bf16.msra.mxu0 %v2926
          %3155 = vmatprep.subr.bf16.mxu0 %v2930
          %3156 = vmatpush1.bf16.msra.mxu0 %v2929
          %3157 = vmatprep.subr.bf16.mxu0 %v2933
          %3158 = vmatpush1.bf16.msra.mxu0 %v2932
          %3159 = vmatprep.subr.bf16.mxu0 %v2936
          %3160 = vmatpush1.bf16.msra.mxu0 %v2935
          %3161 = vmatprep.subr.bf16.mxu0 %v2939
          %3162 = vmatpush1.bf16.msra.mxu0 %v2938
          %3163 = vmatprep.subr.bf16.mxu0 %v2942
          %3164 = vmatpush1.bf16.msra.mxu0 %v2941
          %3165 = vmatprep.subr.bf16.mxu0 %v2945
          %3166 = vmatpush1.bf16.msra.mxu0 %v2944
          %3167 = vmatprep.subr.bf16.mxu0 %v2948
          %3168 = vmatpush1.bf16.msra.mxu0 %v2947
          %3169 = vmatprep.mubr.bf16.mxu0 %v2447
          %3170 = vmatmul.mubr.bf16.gmra.mrb[0].mxu0 %v2446
          %v3171 = vpop.f32.mrb[0].mxu0
          %v3172 = vadd.f32 %v3129, %v3171
          %v3173 = vpop.f32.mrb[0].mxu0
          %v3174 = vadd.f32 %v3131, %v3173
          %v3175 = vpop.f32.mrb[0].mxu0
          %v3176 = vadd.f32 %v3133, %v3175
          %v3177 = vpop.f32.mrb[0].mxu0
          %v3178 = vadd.f32 %v3135, %v3177
          %3179 = vdwg.mxu0
          %3180 = vmatprep.subr.bf16.mxu0 %v2951
          %3181 = vmatpush1.bf16.msra.mxu0 %v2950
          %3182 = vmatprep.subr.bf16.mxu0 %v2954
          %3183 = vmatpush1.bf16.msra.mxu0 %v2953
          %3184 = vmatprep.subr.bf16.mxu0 %v2957
          %3185 = vmatpush1.bf16.msra.mxu0 %v2956
          %3186 = vmatprep.subr.bf16.mxu0 %v2960
          %3187 = vmatpush1.bf16.msra.mxu0 %v2959
          %3188 = vmatprep.subr.bf16.mxu0 %v2963
          %3189 = vmatpush1.bf16.msra.mxu0 %v2962
          %3190 = vmatprep.subr.bf16.mxu0 %v2966
          %3191 = vmatpush1.bf16.msra.mxu0 %v2965
          %3192 = vmatprep.subr.bf16.mxu0 %v2969
          %3193 = vmatpush1.bf16.msra.mxu0 %v2968
          %3194 = vmatprep.subr.bf16.mxu0 %v2972
          %3195 = vmatpush1.bf16.msra.mxu0 %v2971
          %3196 = vmatprep.subr.bf16.mxu0 0
          %3197 = vmatpush1.bf16.msra.mxu0 0
          %3198 = vmatprep.subr.bf16.mxu0 0
          %3199 = vmatpush1.bf16.msra.mxu0 0
          %3200 = vmatprep.subr.bf16.mxu0 0
          %3201 = vmatpush1.bf16.msra.mxu0 0
          %3202 = vmatprep.subr.bf16.mxu0 0
          %3203 = vmatpush1.bf16.msra.mxu0 0
          %3204 = vmatprep.subr.bf16.mxu0 0
          %3205 = vmatpush1.bf16.msra.mxu0 0
          %3206 = vmatprep.subr.bf16.mxu0 0
          %3207 = vmatpush1.bf16.msra.mxu0 0
          %3208 = vmatprep.subr.bf16.mxu0 0
          %3209 = vmatpush1.bf16.msra.mxu0 0
          %3210 = vmatprep.subr.bf16.mxu0 0
          %3211 = vmatpush1.bf16.msra.mxu0 0
          %3212 = vmatprep.mubr.bf16.mxu0 0
          %3213 = vmatmul.mubr.bf16.gmra.mrb[0].mxu0 %v2448
          %v3214 = vpop.f32.mrb[0].mxu0
          %v3215 = vadd.f32 %v3172, %v3214
          %v3216 = vpop.f32.mrb[0].mxu0
          %v3217 = vadd.f32 %v3174, %v3216
          %v3218 = vpop.f32.mrb[0].mxu0
          %v3219 = vadd.f32 %v3176, %v3218
          %v3220 = vpop.f32.mrb[0].mxu0
          %v3221 = vadd.f32 %v3178, %v3220
          %3222 = vdwg.mxu0
          %3223 = vmatprep.subr.bf16.mxu0 0
          %3224 = vmatpush1.bf16.msra.mxu0 %v2856
          %3225 = vmatprep.subr.bf16.mxu0 0
          %3226 = vmatpush1.bf16.msra.mxu0 %v2859
          %3227 = vmatprep.subr.bf16.mxu0 0
          %3228 = vmatpush1.bf16.msra.mxu0 %v2862
          %3229 = vmatprep.subr.bf16.mxu0 0
          %3230 = vmatpush1.bf16.msra.mxu0 %v2865
          %3231 = vmatprep.subr.bf16.mxu0 0
          %3232 = vmatpush1.bf16.msra.mxu0 %v2868
          %3233 = vmatprep.subr.bf16.mxu0 0
          %3234 = vmatpush1.bf16.msra.mxu0 %v2871
          %3235 = vmatprep.subr.bf16.mxu0 0
          %3236 = vmatpush1.bf16.msra.mxu0 %v2874
          %3237 = vmatprep.subr.bf16.mxu0 0
          %3238 = vmatpush1.bf16.msra.mxu0 %v2877
          %3239 = vmatprep.subr.bf16.mxu0 0
          %3240 = vmatpush1.bf16.msra.mxu0 %v2880
          %3241 = vmatprep.subr.bf16.mxu0 0
          %3242 = vmatpush1.bf16.msra.mxu0 %v2883
          %3243 = vmatprep.subr.bf16.mxu0 0
          %3244 = vmatpush1.bf16.msra.mxu0 %v2886
          %3245 = vmatprep.subr.bf16.mxu0 0
          %3246 = vmatpush1.bf16.msra.mxu0 %v2889
          %3247 = vmatprep.subr.bf16.mxu0 0
          %3248 = vmatpush1.bf16.msra.mxu0 %v2892
          %3249 = vmatprep.subr.bf16.mxu0 0
          %3250 = vmatpush1.bf16.msra.mxu0 %v2895
          %3251 = vmatprep.subr.bf16.mxu0 0
          %3252 = vmatpush1.bf16.msra.mxu0 %v2898
          %3253 = vmatprep.subr.bf16.mxu0 0
          %3254 = vmatpush1.bf16.msra.mxu0 %v2901
          %3255 = vmatprep.mubr.bf16.mxu0 %v2445
          %3256 = vmatmul.mubr.bf16.gmra.mrb[0].mxu0 %v2444
          %v3257 = vpop.f32.mrb[0].mxu0
          %v3258 = vadd.f32 %v2424, %v3257
          %v3259 = vpop.f32.mrb[0].mxu0
          %v3260 = vpop.f32.mrb[0].mxu0
          %v3261 = vadd.f32 %v2424, %v3260
          %v3262 = vpop.f32.mrb[0].mxu0
          %3263 = vdwg.mxu0
          %3264 = vmatprep.subr.bf16.mxu0 0
          %3265 = vmatpush1.bf16.msra.mxu0 %v2904
          %3266 = vmatprep.subr.bf16.mxu0 0
          %3267 = vmatpush1.bf16.msra.mxu0 %v2907
          %3268 = vmatprep.subr.bf16.mxu0 0
          %3269 = vmatpush1.bf16.msra.mxu0 %v2910
          %3270 = vmatprep.subr.bf16.mxu0 0
          %3271 = vmatpush1.bf16.msra.mxu0 %v2913
          %3272 = vmatprep.subr.bf16.mxu0 0
          %3273 = vmatpush1.bf16.msra.mxu0 %v2916
          %3274 = vmatprep.subr.bf16.mxu0 0
          %3275 = vmatpush1.bf16.msra.mxu0 %v2919
          %3276 = vmatprep.subr.bf16.mxu0 0
          %3277 = vmatpush1.bf16.msra.mxu0 %v2922
          %3278 = vmatprep.subr.bf16.mxu0 0
          %3279 = vmatpush1.bf16.msra.mxu0 %v2925
          %3280 = vmatprep.subr.bf16.mxu0 0
          %3281 = vmatpush1.bf16.msra.mxu0 %v2928
          %3282 = vmatprep.subr.bf16.mxu0 0
          %3283 = vmatpush1.bf16.msra.mxu0 %v2931
          %3284 = vmatprep.subr.bf16.mxu0 0
          %3285 = vmatpush1.bf16.msra.mxu0 %v2934
          %3286 = vmatprep.subr.bf16.mxu0 0
          %3287 = vmatpush1.bf16.msra.mxu0 %v2937
          %3288 = vmatprep.subr.bf16.mxu0 0
          %3289 = vmatpush1.bf16.msra.mxu0 %v2940
          %3290 = vmatprep.subr.bf16.mxu0 0
          %3291 = vmatpush1.bf16.msra.mxu0 %v2943
          %3292 = vmatprep.subr.bf16.mxu0 0
          %3293 = vmatpush1.bf16.msra.mxu0 %v2946
          %3294 = vmatprep.subr.bf16.mxu0 0
          %3295 = vmatpush1.bf16.msra.mxu0 %v2949
          %3296 = vmatprep.mubr.bf16.mxu0 %v2447
          %3297 = vmatmul.mubr.bf16.gmra.mrb[0].mxu0 %v2446
          %v3298 = vpop.f32.mrb[0].mxu0
          %v3299 = vadd.f32 %v3258, %v3298
          %v3300 = vpop.f32.mrb[0].mxu0
          %v3301 = vpop.f32.mrb[0].mxu0
          %v3302 = vadd.f32 %v3261, %v3301
          %v3303 = vpop.f32.mrb[0].mxu0
          %3304 = vdwg.mxu0
          %3305 = vmatprep.subr.bf16.mxu0 0
          %3306 = vmatpush1.bf16.msra.mxu0 %v2952
          %3307 = vmatprep.subr.bf16.mxu0 0
          %3308 = vmatpush1.bf16.msra.mxu0 %v2955
          %3309 = vmatprep.subr.bf16.mxu0 0
          %3310 = vmatpush1.bf16.msra.mxu0 %v2958
          %3311 = vmatprep.subr.bf16.mxu0 0
          %3312 = vmatpush1.bf16.msra.mxu0 %v2961
          %3313 = vmatprep.subr.bf16.mxu0 0
          %3314 = vmatpush1.bf16.msra.mxu0 %v2964
          %3315 = vmatprep.subr.bf16.mxu0 0
          %3316 = vmatpush1.bf16.msra.mxu0 %v2967
          %3317 = vmatprep.subr.bf16.mxu0 0
          %3318 = vmatpush1.bf16.msra.mxu0 %v2970
          %3319 = vmatprep.subr.bf16.mxu0 0
          %3320 = vmatpush1.bf16.msra.mxu0 %v2973
          %3321 = vmatprep.subr.bf16.mxu0 0
          %3322 = vmatpush1.bf16.msra.mxu0 0
          %3323 = vmatprep.subr.bf16.mxu0 0
          %3324 = vmatpush1.bf16.msra.mxu0 0
          %3325 = vmatprep.subr.bf16.mxu0 0
          %3326 = vmatpush1.bf16.msra.mxu0 0
          %3327 = vmatprep.subr.bf16.mxu0 0
          %3328 = vmatpush1.bf16.msra.mxu0 0
          %3329 = vmatprep.subr.bf16.mxu0 0
          %3330 = vmatpush1.bf16.msra.mxu0 0
          %3331 = vmatprep.subr.bf16.mxu0 0
          %3332 = vmatpush1.bf16.msra.mxu0 0
          %3333 = vmatprep.subr.bf16.mxu0 0
          %3334 = vmatpush1.bf16.msra.mxu0 0
          %3335 = vmatprep.subr.bf16.mxu0 0
          %3336 = vmatpush1.bf16.msra.mxu0 0
          %3337 = vmatprep.mubr.bf16.mxu0 0
          %3338 = vmatmul.mubr.bf16.gmra.mrb[0].mxu0 %v2448
          %v3339 = vpop.f32.mrb[0].mxu0
          %v3340 = vadd.f32 %v3299, %v3339
          %v3341 = vpop.f32.mrb[0].mxu0
          %v3342 = vpop.f32.mrb[0].mxu0
          %v3343 = vadd.f32 %v3302, %v3342
          %v3344 = vpop.f32.mrb[0].mxu0
          %3345 = vdwg.mxu0
          %v3346 = vmax.f32 %v3215, %v3217
          %3347 = vmax.xlane.f32.xlu0 %v3346
          %v3348 = vpop.xlane.xlu0 %3347
          %v3349 = vmax.f32 %v3219, %v3221
          %3350 = vmax.xlane.f32.xlu0 %v3349
          %v3351 = vpop.xlane.xlu0 %3350
          %v3352 = vsub.f32 %v3215, %v3348
          %v3353 = vsub.f32 %v3217, %v3348
          %v3354 = vsub.f32 %v3219, %v3351
          %v3355 = vsub.f32 %v3221, %v3351
          %v3356 = vmul.f32 %v3352, 1.442695
          %v3357 = vpow.pop %v3356
          %v3358 = vmul.f32 %v3353, 1.442695
          %v3359 = vpow.pop %v3358
          %v3360 = vmul.f32 %v3354, 1.442695
          %v3361 = vpow.pop %v3360
          %v3362 = vmul.f32 %v3355, 1.442695
          %v3363 = vpow.pop %v3362
          %v3364 = vadd.f32 %v3357, %v3359
          %3365 = vadd.xlane.f32.xlu0 %v3364
          %v3366 = vpop.xlane.xlu0 %3365
          %v3367 = vadd.f32 %v3361, %v3363
          %3368 = vadd.xlane.f32.xlu0 %v3367
          %v3369 = vpop.xlane.xlu0 %3368
          %v3370 = vrcp.pop %v3366
          %v3371 = vrcp.pop %v3369
          %v3372 = vmul.f32 %v3357, %v3370
          %v3373 = vmul.f32 %v3359, %v3370
          %v3374 = vmul.f32 %v3361, %v3371
          %v3375 = vmul.f32 %v3363, %v3371
          %v3376 = vadd.f32 %v3372, 0.5
          %v3377 = vadd.f32 %v3374, 0.5
          %v3378 = vmul.f32 %v3376, %v3340
          %v3379 = vmul.f32 %v3377, %v3343
          %v3380 = vmul.f32 %v3373, %v2243
          %v3381 = vmul.f32 %v3375, %v2244
          %v3382 = vadd.f32 %v3378, %v3380
          %v3383 = vadd.f32 %v3379, %v3381
          %v3384 = vmin.f32 %v3382, 20.0
          %v3385 = vmin.f32 %v3383, 20.0
          %v3386 = vmul.f32 %v3384, 1.442695
          %v3387 = vpow.pop %v3386
          %v3388 = vmul.f32 %v3385, 1.442695
          %v3389 = vpow.pop %v3388
          %v3390 = vadd.f32 %v3387, 2.0
          %v3391 = vadd.f32 %v3389, 2.0
          %v3392 = vmul.f32 %v3387, %v3390
          %v3393 = vmul.f32 %v3389, %v3391
          %v3394 = vmul.f32 %v3382, %v3392
          %v3395 = vmul.f32 %v3383, %v3393
          %v3396 = vadd.f32 %v3392, 2.0
          %v3397 = vadd.f32 %v3393, 2.0
          %v3398 = vrcp.pop %v3396
          %v3399 = vrcp.pop %v3397
          %v3400 = vmul.f32 %v3394, %v3398
          %v3401 = vmul.f32 %v3395, %v3399
          %v3402 = vmul.f32 %v3400, %v656
          %v3403 = vmul.f32 %v3401, %v657
          %v3404 = vld [vmem:[#allocation2 + $0x2] sm:$0x1]
          %v3405 = vadd.f32 %v3402, %v3403
          %v3406 = vrot.slane %v3405, 4
          %v3407 = vadd.f32 %v3405, %v3406
          %v3408 = vrot.slane %v3407, 2
          %v3409 = vadd.f32 %v3407, %v3408
          %v3410 = vrot.slane %v3409, 1
          %v3411 = vadd.f32 %v3409, %v3410
          %v3412 = vadd.f32 %v3404, %v3411
          %3413 = vst [vmem:[#allocation2 + $0x2] sm:$0x1] %v3412
          %v3414 = vld [vmem:[#allocation2 + $0x3] sm:$0x1]
          %v3415 = vmul.f32 %v3402, %v3400
          %v3416 = vmul.f32 %v3403, %v3401
          %v3417 = vadd.f32 %v3415, %v3416
          %v3418 = vrot.slane %v3417, 4
          %v3419 = vadd.f32 %v3417, %v3418
          %v3420 = vrot.slane %v3419, 2
          %v3421 = vadd.f32 %v3419, %v3420
          %v3422 = vrot.slane %v3421, 1
          %v3423 = vadd.f32 %v3421, %v3422
          %v3424 = vadd.f32 %v3414, %v3423
          %3425 = vst [vmem:[#allocation2 + $0x3] sm:$0x1] %v3424
        $region108: #{text_from_image_g.1} parent=87 // pred_fallthru
          _
        %p3426 = scmp.eq.s32.totalorder %s34, 2
        // Predicated region
        $region109: #{text_from_image_g.1} parent=87 // pred_check
          %p3427 = pneg %p3426
        $region110: #{text_from_image_g.1} parent=87 // pred_check_branch
          %3429 = sbr.rel (%p3427) target = $region112
        $region111: #{text_from_image_g.1} parent=87 // pred_region
          %v3430 = vld [vmem:[%s622] sm:$0xf]
          %v3431 = vld [vmem:[%s622 + $0x4] sm:$0xf]
          %v3432 = vld [vmem:[%s3] sm:$0xf]
          %v3433 = vld [vmem:[%s3 + $0x4] sm:$0xf]
          %v3434 = vld [vmem:[%s3 + $0x8] sm:$0xf]
          %v3435 = vld [vmem:[%s3 + $0xc] sm:$0xf]
          %v3436 = vld [vmem:[%s3 + $0x10] sm:$0xf]
          %v3437 = vld [vmem:[%s3 + $0x14] sm:$0xf]
          %v3438 = vld [vmem:[%s3 + $0x18] sm:$0xf]
          %v3439 = vld [vmem:[%s3 + $0x1c] sm:$0xf]
          %v3440 = vld [vmem:[%s3 + $0x20] sm:$0xf]
          %v3441 = vld [vmem:[%s3 + $0x24] sm:$0xf]
          %v3442 = vld [vmem:[%s3 + $0x28] sm:$0xf]
          %v3443 = vld [vmem:[%s3 + $0x2c] sm:$0xf]
          %v3444 = vld [vmem:[%s3 + $0x30] sm:$0xf]
          %v3445 = vld [vmem:[%s3 + $0x34] sm:$0xf]
          %v3446 = vld [vmem:[%s3 + $0x38] sm:$0xf]
          %v3447 = vld [vmem:[%s3 + $0x3c] sm:$0xf]
          %v3448 = vld [vmem:[%s4] sm:$0x1]
          %v3450 = vlaneseq
          %v3451 = vshrl.u32 %v3450, 7
          %v3452 = vsub.s32 0, %v3451
          %v3453 = vrot.slane %v3448, %v3452
          %v3457 = vunpack.c.l.b16 %v3430
          %v3458 = vunpack.c.l.b16 %v3431
          %v3459 = vpack.c.b16 %v3458, %v3457
          %v3477 = vunpack.c.l.b16 %v3432
          %v3478 = vunpack.c.l.b16 %v3433
          %v3479 = vunpack.c.l.b16 %v3434
          %v3480 = vunpack.c.l.b16 %v3435
          %v3481 = vunpack.c.l.b16 %v3436
          %v3482 = vunpack.c.l.b16 %v3437
          %v3483 = vunpack.c.l.b16 %v3438
          %v3484 = vunpack.c.l.b16 %v3439
          %v3485 = vunpack.c.l.b16 %v3440
          %v3486 = vunpack.c.l.b16 %v3441
          %v3487 = vunpack.c.l.b16 %v3442
          %v3488 = vunpack.c.l.b16 %v3443
          %v3489 = vunpack.c.l.b16 %v3444
          %v3490 = vunpack.c.l.b16 %v3445
          %v3491 = vunpack.c.l.b16 %v3446
          %v3492 = vunpack.c.l.b16 %v3447
          %v3493 = vpack.c.b16 %v3478, %v3477
          %v3494 = vpack.c.b16 %v3480, %v3479
          %v3495 = vpack.c.b16 %v3482, %v3481
          %v3496 = vpack.c.b16 %v3484, %v3483
          %v3497 = vpack.c.b16 %v3486, %v3485
          %v3498 = vpack.c.b16 %v3488, %v3487
          %v3499 = vpack.c.b16 %v3490, %v3489
          %v3500 = vpack.c.b16 %v3492, %v3491
          %3509 = vmatprep.subr.bf16.mxu0 0
          %3510 = vmatpush1.bf16.msra.mxu0 %v3493
          %3511 = vmatprep.subr.bf16.mxu0 0
          %3512 = vmatpush1.bf16.msra.mxu0 %v3494
          %3513 = vmatprep.subr.bf16.mxu0 0
          %3514 = vmatpush1.bf16.msra.mxu0 %v3495
          %3515 = vmatprep.subr.bf16.mxu0 0
          %3516 = vmatpush1.bf16.msra.mxu0 %v3496
          %3517 = vmatprep.subr.bf16.mxu0 0
          %3518 = vmatpush1.bf16.msra.mxu0 %v3497
          %3519 = vmatprep.subr.bf16.mxu0 0
          %3520 = vmatpush1.bf16.msra.mxu0 %v3498
          %3521 = vmatprep.subr.bf16.mxu0 0
          %3522 = vmatpush1.bf16.msra.mxu0 %v3499
          %3523 = vmatprep.subr.bf16.mxu0 0
          %3524 = vmatpush1.bf16.msra.mxu0 %v3500
          %3525 = vmatprep.subr.bf16.mxu0 0
          %3526 = vmatpush1.bf16.msra.mxu0 0
          %3527 = vmatprep.subr.bf16.mxu0 0
          %3528 = vmatpush1.bf16.msra.mxu0 0
          %3529 = vmatprep.subr.bf16.mxu0 0
          %3530 = vmatpush1.bf16.msra.mxu0 0
          %3531 = vmatprep.subr.bf16.mxu0 0
          %3532 = vmatpush1.bf16.msra.mxu0 0
          %3533 = vmatprep.subr.bf16.mxu0 0
          %3534 = vmatpush1.bf16.msra.mxu0 0
          %3535 = vmatprep.subr.bf16.mxu0 0
          %3536 = vmatpush1.bf16.msra.mxu0 0
          %3537 = vmatprep.subr.bf16.mxu0 0
          %3538 = vmatpush1.bf16.msra.mxu0 0
          %3539 = vmatprep.subr.bf16.mxu0 0
          %3540 = vmatpush1.bf16.msra.mxu0 0
          %3541 = vmatprep.mubr.bf16.mxu0 0
          %3542 = vmatmul.mubr.bf16.gmra.mrb[0].mxu0 %v3459
          %v3543 = vpop.f32.mrb[0].mxu0
          %v3544 = vadd.f32 %v3453, %v3543
          %v3545 = vpop.f32.mrb[0].mxu0
          %v3546 = vpop.f32.mrb[0].mxu0
          %v3547 = vadd.f32 %v3453, %v3546
          %v3548 = vpop.f32.mrb[0].mxu0
          %3549 = vdwg.mxu0
          %v3550 = vmin.f32 %v3544, 20.0
          %v3551 = vmin.f32 %v3547, 20.0
          %v3552 = vmul.f32 %v3550, 1.442695
          %v3553 = vpow.pop %v3552
          %v3554 = vmul.f32 %v3551, 1.442695
          %v3555 = vpow.pop %v3554
          %v3556 = vadd.f32 %v3553, 2.0
          %v3557 = vadd.f32 %v3555, 2.0
          %v3558 = vmul.f32 %v3553, %v3556
          %v3559 = vmul.f32 %v3555, %v3557
          %v3560 = vmul.f32 %v3544, %v3558
          %v3561 = vmul.f32 %v3547, %v3559
          %v3562 = vadd.f32 %v3558, 2.0
          %v3563 = vadd.f32 %v3559, 2.0
          %v3564 = vrcp.pop %v3562
          %v3565 = vrcp.pop %v3563
          %v3566 = vmul.f32 %v3560, %v3564
          %v3567 = vmul.f32 %v3561, %v3565
          %v3568 = vld [vmem:[#allocation2] sm:$0x1]
          %v3569 = vmul.f32 %v3568, 0.5
          %v3570 = vld [vmem:[#allocation2 + $0x1] sm:$0x1]
          %v3571 = vmul.f32 %v3570, 0.5
          %v3572 = vmul.f32 %v3569, %v3569
          %v3573 = vsub.f32 %v3571, %v3572
          %v3574 = vmax.f32 %v3573, 0.0
          %v3575 = vlaneseq
          %v3576 = vshrl.u32 %v3575, 7
          %v3577 = vsub.s32 0, %v3576
          %v3578 = vrot.slane %v3569, %v3577
          %v3579 = vsub.f32 %v3566, %v3578
          %v3580 = vsub.f32 %v3567, %v3578
          %v3581 = vadd.f32 %v3574, 1e-05
          %v3582 = vrsqrt.pop %v3581
          %v3583 = vlaneseq
          %v3584 = vshrl.u32 %v3583, 7
          %v3585 = vsub.s32 0, %v3584
          %v3586 = vrot.slane %v3582, %v3585
          %v3587 = vmul.f32 %v3579, %v3586
          %v3588 = vmul.f32 %v3580, %v3586
          %v3589 = vpack.c.bf16 %v3588, %v3587
          %v3590 = vld [vmem:[%s5] sm:$0xf]
          %v3591 = vld [vmem:[%s5 + $0x4] sm:$0xf]
          %v3592 = vld [vmem:[%s5 + $0x8] sm:$0xf]
          %v3593 = vld [vmem:[%s5 + $0xc] sm:$0xf]
          %v3594 = vld [vmem:[%s5 + $0x10] sm:$0xf]
          %v3595 = vld [vmem:[%s5 + $0x14] sm:$0xf]
          %v3596 = vld [vmem:[%s5 + $0x18] sm:$0xf]
          %v3597 = vld [vmem:[%s5 + $0x1c] sm:$0xf]
          %v3598 = vld [vmem:[%s5 + $0x20] sm:$0xf]
          %v3599 = vld [vmem:[%s5 + $0x24] sm:$0xf]
          %v3600 = vld [vmem:[%s5 + $0x28] sm:$0xf]
          %v3601 = vld [vmem:[%s5 + $0x2c] sm:$0xf]
          %v3602 = vld [vmem:[%s5 + $0x30] sm:$0xf]
          %v3603 = vld [vmem:[%s5 + $0x34] sm:$0xf]
          %v3604 = vld [vmem:[%s5 + $0x38] sm:$0xf]
          %v3605 = vld [vmem:[%s5 + $0x3c] sm:$0xf]
          %v3606 = vld [vmem:[%s6] sm:$0x1]
          %v3608 = vlaneseq
          %v3609 = vshrl.u32 %v3608, 7
          %v3610 = vsub.s32 0, %v3609
          %v3611 = vrot.slane %v3606, %v3610
          %v3629 = vunpack.c.l.b16 %v3590
          %v3630 = vunpack.c.l.b16 %v3591
          %v3631 = vunpack.c.l.b16 %v3592
          %v3632 = vunpack.c.l.b16 %v3593
          %v3633 = vunpack.c.l.b16 %v3594
          %v3634 = vunpack.c.l.b16 %v3595
          %v3635 = vunpack.c.l.b16 %v3596
          %v3636 = vunpack.c.l.b16 %v3597
          %v3637 = vunpack.c.l.b16 %v3598
          %v3638 = vunpack.c.l.b16 %v3599
          %v3639 = vunpack.c.l.b16 %v3600
          %v3640 = vunpack.c.l.b16 %v3601
          %v3641 = vunpack.c.l.b16 %v3602
          %v3642 = vunpack.c.l.b16 %v3603
          %v3643 = vunpack.c.l.b16 %v3604
          %v3644 = vunpack.c.l.b16 %v3605
          %v3645 = vpack.c.b16 %v3630, %v3629
          %v3646 = vpack.c.b16 %v3632, %v3631
          %v3647 = vpack.c.b16 %v3634, %v3633
          %v3648 = vpack.c.b16 %v3636, %v3635
          %v3649 = vpack.c.b16 %v3638, %v3637
          %v3650 = vpack.c.b16 %v3640, %v3639
          %v3651 = vpack.c.b16 %v3642, %v3641
          %v3652 = vpack.c.b16 %v3644, %v3643
          %3661 = vmatprep.subr.bf16.mxu0 0
          %3662 = vmatpush1.bf16.msra.mxu0 %v3645
          %3663 = vmatprep.subr.bf16.mxu0 0
          %3664 = vmatpush1.bf16.msra.mxu0 %v3646
          %3665 = vmatprep.subr.bf16.mxu0 0
          %3666 = vmatpush1.bf16.msra.mxu0 %v3647
          %3667 = vmatprep.subr.bf16.mxu0 0
          %3668 = vmatpush1.bf16.msra.mxu0 %v3648
          %3669 = vmatprep.subr.bf16.mxu0 0
          %3670 = vmatpush1.bf16.msra.mxu0 %v3649
          %3671 = vmatprep.subr.bf16.mxu0 0
          %3672 = vmatpush1.bf16.msra.mxu0 %v3650
          %3673 = vmatprep.subr.bf16.mxu0 0
          %3674 = vmatpush1.bf16.msra.mxu0 %v3651
          %3675 = vmatprep.subr.bf16.mxu0 0
          %3676 = vmatpush1.bf16.msra.mxu0 %v3652
          %3677 = vmatprep.subr.bf16.mxu0 0
          %3678 = vmatpush1.bf16.msra.mxu0 0
          %3679 = vmatprep.subr.bf16.mxu0 0
          %3680 = vmatpush1.bf16.msra.mxu0 0
          %3681 = vmatprep.subr.bf16.mxu0 0
          %3682 = vmatpush1.bf16.msra.mxu0 0
          %3683 = vmatprep.subr.bf16.mxu0 0
          %3684 = vmatpush1.bf16.msra.mxu0 0
          %3685 = vmatprep.subr.bf16.mxu0 0
          %3686 = vmatpush1.bf16.msra.mxu0 0
          %3687 = vmatprep.subr.bf16.mxu0 0
          %3688 = vmatpush1.bf16.msra.mxu0 0
          %3689 = vmatprep.subr.bf16.mxu0 0
          %3690 = vmatpush1.bf16.msra.mxu0 0
          %3691 = vmatprep.subr.bf16.mxu0 0
          %3692 = vmatpush1.bf16.msra.mxu0 0
          %3693 = vmatprep.mubr.bf16.mxu0 0
          %3694 = vmatmul.mubr.bf16.gmra.mrb[0].mxu0 %v3589
          %v3695 = vpop.f32.mrb[0].mxu0
          %v3696 = vadd.f32 %v3611, %v3695
          %v3697 = vpop.f32.mrb[0].mxu0
          %v3698 = vpop.f32.mrb[0].mxu0
          %v3699 = vadd.f32 %v3611, %v3698
          %v3700 = vpop.f32.mrb[0].mxu0
          %3701 = vdwg.mxu0
          %v3702 = vld [vmem:[%s629] sm:$0xff]
          %v3703 = vld [vmem:[%s629 + $0x8] sm:$0xff]
          %v3704 = vld [vmem:[%s629 + $0x10] sm:$0xf]
          %v3705 = vld [vmem:[%s629 + $0x14] sm:$0xff]
          %v3706 = vld [vmem:[%s629 + $0x1c] sm:$0xff]
          %v3707 = vld [vmem:[%s629 + $0x24] sm:$0xf]
          %v3708 = vld [vmem:[#allocation3] sm:$0xff]
          %v3709 = vld [vmem:[#allocation3 + $0x8] sm:$0xf]
          %v3710 = vld [vmem:[#allocation3 + $0xc] sm:$0xff]
          %v3711 = vld [vmem:[#allocation3 + $0x14] sm:$0xf]
          %v3712 = vld [vmem:[#allocation3 + $0x18] sm:$0xff]
          %v3713 = vld [vmem:[#allocation3 + $0x20] sm:$0xf]
          %v3714 = vld [vmem:[#allocation3 + $0x24] sm:$0xff]
          %v3715 = vld [vmem:[#allocation3 + $0x2c] sm:$0xf]
          %v3716 = vld [vmem:[#allocation3 + $0x30] sm:$0xff]
          %v3717 = vld [vmem:[#allocation3 + $0x38] sm:$0xf]
          %v3718 = vld [vmem:[#allocation3 + $0x3c] sm:$0xff]
          %v3719 = vld [vmem:[#allocation3 + $0x44] sm:$0xf]
          %v3720 = vld [vmem:[#allocation3 + $0x48] sm:$0xff]
          %v3721 = vld [vmem:[#allocation3 + $0x50] sm:$0xf]
          %v3722 = vld [vmem:[#allocation3 + $0x54] sm:$0xff]
          %v3723 = vld [vmem:[#allocation3 + $0x5c] sm:$0xf]
          %v3724 = vld [vmem:[#allocation3 + $0x60] sm:$0xff]
          %v3725 = vld [vmem:[#allocation3 + $0x68] sm:$0xf]
          %v3726 = vld [vmem:[#allocation3 + $0x6c] sm:$0xff]
          %v3727 = vld [vmem:[#allocation3 + $0x74] sm:$0xf]
          %v3728 = vld [vmem:[#allocation3 + $0x78] sm:$0xff]
          %v3729 = vld [vmem:[#allocation3 + $0x80] sm:$0xf]
          %v3730 = vld [vmem:[#allocation3 + $0x84] sm:$0xff]
          %v3731 = vld [vmem:[#allocation3 + $0x8c] sm:$0xf]
          %v3732 = vld [vmem:[#allocation3 + $0x90] sm:$0xff]
          %v3733 = vld [vmem:[#allocation3 + $0x98] sm:$0xf]
          %v3734 = vld [vmem:[#allocation3 + $0x9c] sm:$0xff]
          %v3735 = vld [vmem:[#allocation3 + $0xa4] sm:$0xf]
          %v3736 = vld [vmem:[#allocation3 + $0xa8] sm:$0xff]
          %v3737 = vld [vmem:[#allocation3 + $0xb0] sm:$0xf]
          %v3738 = vld [vmem:[#allocation3 + $0xb4] sm:$0xff]
          %v3739 = vld [vmem:[#allocation3 + $0xbc] sm:$0xf]
          %v3740 = vld [vmem:[#allocation3 + $0xc0] sm:$0xff]
          %v3741 = vld [vmem:[#allocation3 + $0xc8] sm:$0xf]
          %v3742 = vld [vmem:[#allocation3 + $0xcc] sm:$0xff]
          %v3743 = vld [vmem:[#allocation3 + $0xd4] sm:$0xf]
          %v3744 = vld [vmem:[#allocation3 + $0xd8] sm:$0xff]
          %v3745 = vld [vmem:[#allocation3 + $0xe0] sm:$0xf]
          %v3746 = vld [vmem:[#allocation3 + $0xe4] sm:$0xff]
          %v3747 = vld [vmem:[#allocation3 + $0xec] sm:$0xf]
          %v3748 = vld [vmem:[#allocation3 + $0xf0] sm:$0xff]
          %v3749 = vld [vmem:[#allocation3 + $0xf8] sm:$0xf]
          %v3750 = vld [vmem:[#allocation3 + $0xfc] sm:$0xff]
          %v3751 = vld [vmem:[#allocation3 + $0x104] sm:$0xf]
          %v3752 = vld [vmem:[#allocation3 + $0x108] sm:$0xff]
          %v3753 = vld [vmem:[#allocation3 + $0x110] sm:$0xf]
          %v3754 = vld [vmem:[#allocation3 + $0x114] sm:$0xff]
          %v3755 = vld [vmem:[#allocation3 + $0x11c] sm:$0xf]
          %v3756 = vld [vmem:[#allocation3 + $0x120] sm:$0xff]
          %v3757 = vld [vmem:[#allocation3 + $0x128] sm:$0xf]
          %v3758 = vld [vmem:[#allocation3 + $0x12c] sm:$0xff]
          %v3759 = vld [vmem:[#allocation3 + $0x134] sm:$0xf]
          %v3760 = vld [vmem:[#allocation3 + $0x138] sm:$0xff]
          %v3761 = vld [vmem:[#allocation3 + $0x140] sm:$0xf]
          %v3762 = vld [vmem:[#allocation3 + $0x144] sm:$0xff]
          %v3763 = vld [vmem:[#allocation3 + $0x14c] sm:$0xf]
          %v3764 = vld [vmem:[#allocation3 + $0x150] sm:$0xff]
          %v3765 = vld [vmem:[#allocation3 + $0x158] sm:$0xf]
          %v3766 = vld [vmem:[#allocation3 + $0x15c] sm:$0xff]
          %v3767 = vld [vmem:[#allocation3 + $0x164] sm:$0xf]
          %v3768 = vld [vmem:[#allocation3 + $0x168] sm:$0xff]
          %v3769 = vld [vmem:[#allocation3 + $0x170] sm:$0xf]
          %v3770 = vld [vmem:[#allocation3 + $0x174] sm:$0xff]
          %v3771 = vld [vmem:[#allocation3 + $0x17c] sm:$0xf]
          %v3772 = vld [vmem:[#allocation3 + $0x180] sm:$0xff]
          %v3773 = vld [vmem:[#allocation3 + $0x188] sm:$0xf]
          %v3774 = vld [vmem:[#allocation3 + $0x18c] sm:$0xff]
          %v3775 = vld [vmem:[#allocation3 + $0x194] sm:$0xf]
          %v3776 = vld [vmem:[#allocation3 + $0x198] sm:$0xff]
          %v3777 = vld [vmem:[#allocation3 + $0x1a0] sm:$0xf]
          %v3778 = vld [vmem:[#allocation3 + $0x1a4] sm:$0xff]
          %v3779 = vld [vmem:[#allocation3 + $0x1ac] sm:$0xf]
          %v3780 = vld [vmem:[#allocation3 + $0x1b0] sm:$0xff]
          %v3781 = vld [vmem:[#allocation3 + $0x1b8] sm:$0xf]
          %v3782 = vld [vmem:[#allocation3 + $0x1bc] sm:$0xff]
          %v3783 = vld [vmem:[#allocation3 + $0x1c4] sm:$0xf]
          %v3784 = vld [vmem:[#allocation3 + $0x1c8] sm:$0xff]
          %v3785 = vld [vmem:[#allocation3 + $0x1d0] sm:$0xf]
          %v3786 = vld [vmem:[#allocation3 + $0x1d4] sm:$0xff]
          %v3787 = vld [vmem:[#allocation3 + $0x1dc] sm:$0xf]
          %v3788 = vld [vmem:[#allocation3 + $0x1e0] sm:$0xff]
          %v3789 = vld [vmem:[#allocation3 + $0x1e8] sm:$0xf]
          %v3790 = vld [vmem:[#allocation3 + $0x1ec] sm:$0xff]
          %v3791 = vld [vmem:[#allocation3 + $0x1f4] sm:$0xf]
          %v3792 = vld [vmem:[#allocation3 + $0x1f8] sm:$0xff]
          %v3793 = vld [vmem:[#allocation3 + $0x200] sm:$0xf]
          %v3794 = vld [vmem:[#allocation3 + $0x204] sm:$0xff]
          %v3795 = vld [vmem:[#allocation3 + $0x20c] sm:$0xf]
          %v3796 = vld [vmem:[#allocation3 + $0x210] sm:$0xff]
          %v3797 = vld [vmem:[#allocation3 + $0x218] sm:$0xf]
          %v3798 = vld [vmem:[#allocation3 + $0x21c] sm:$0xff]
          %v3799 = vld [vmem:[#allocation3 + $0x224] sm:$0xf]
          %v3800 = vld [vmem:[#allocation3 + $0x228] sm:$0xff]
          %v3801 = vld [vmem:[#allocation3 + $0x230] sm:$0xf]
          %v3802 = vld [vmem:[#allocation3 + $0x234] sm:$0xff]
          %v3803 = vld [vmem:[#allocation3 + $0x23c] sm:$0xf]
          %v3804 = vld [vmem:[#allocation3 + $0x240] sm:$0xff]
          %v3805 = vld [vmem:[#allocation3 + $0x248] sm:$0xf]
          %v3806 = vld [vmem:[#allocation3 + $0x24c] sm:$0xff]
          %v3807 = vld [vmem:[#allocation3 + $0x254] sm:$0xf]
          %v3808 = vld [vmem:[#allocation3 + $0x258] sm:$0xff]
          %v3809 = vld [vmem:[#allocation3 + $0x260] sm:$0xf]
          %v3810 = vld [vmem:[#allocation3 + $0x264] sm:$0xff]
          %v3811 = vld [vmem:[#allocation3 + $0x26c] sm:$0xf]
          %v3812 = vld [vmem:[#allocation3 + $0x270] sm:$0xff]
          %v3813 = vld [vmem:[#allocation3 + $0x278] sm:$0xf]
          %v3814 = vld [vmem:[#allocation3 + $0x27c] sm:$0xff]
          %v3815 = vld [vmem:[#allocation3 + $0x284] sm:$0xf]
          %v3816 = vld [vmem:[#allocation3 + $0x288] sm:$0xff]
          %v3817 = vld [vmem:[#allocation3 + $0x290] sm:$0xf]
          %v3818 = vld [vmem:[#allocation3 + $0x294] sm:$0xff]
          %v3819 = vld [vmem:[#allocation3 + $0x29c] sm:$0xf]
          %v3820 = vld [vmem:[#allocation3 + $0x2a0] sm:$0xff]
          %v3821 = vld [vmem:[#allocation3 + $0x2a8] sm:$0xf]
          %v3822 = vld [vmem:[#allocation3 + $0x2ac] sm:$0xff]
          %v3823 = vld [vmem:[#allocation3 + $0x2b4] sm:$0xf]
          %v3824 = vld [vmem:[#allocation3 + $0x2b8] sm:$0xff]
          %v3825 = vld [vmem:[#allocation3 + $0x2c0] sm:$0xf]
          %v3826 = vld [vmem:[#allocation3 + $0x2c4] sm:$0xff]
          %v3827 = vld [vmem:[#allocation3 + $0x2cc] sm:$0xf]
          %v3828 = vld [vmem:[#allocation3 + $0x2d0] sm:$0xff]
          %v3829 = vld [vmem:[#allocation3 + $0x2d8] sm:$0xf]
          %v3830 = vld [vmem:[#allocation3 + $0x2dc] sm:$0xff]
          %v3831 = vld [vmem:[#allocation3 + $0x2e4] sm:$0xf]
          %v3832 = vld [vmem:[#allocation3 + $0x2e8] sm:$0xff]
          %v3833 = vld [vmem:[#allocation3 + $0x2f0] sm:$0xf]
          %v3834 = vld [vmem:[#allocation3 + $0x2f4] sm:$0xff]
          %v3835 = vld [vmem:[#allocation3 + $0x2fc] sm:$0xf]
          %v3836 = vld [vmem:[#allocation3 + $0x300] sm:$0xff]
          %v3837 = vld [vmem:[#allocation3 + $0x308] sm:$0xf]
          %v3838 = vld [vmem:[#allocation3 + $0x30c] sm:$0xff]
          %v3839 = vld [vmem:[#allocation3 + $0x314] sm:$0xf]
          %v3840 = vld [vmem:[#allocation3 + $0x318] sm:$0xff]
          %v3841 = vld [vmem:[#allocation3 + $0x320] sm:$0xf]
          %v3842 = vld [vmem:[#allocation3 + $0x324] sm:$0xff]
          %v3843 = vld [vmem:[#allocation3 + $0x32c] sm:$0xf]
          %v3844 = vld [vmem:[#allocation3 + $0x330] sm:$0xff]
          %v3845 = vld [vmem:[#allocation3 + $0x338] sm:$0xf]
          %v3846 = vld [vmem:[#allocation3 + $0x33c] sm:$0xff]
          %v3847 = vld [vmem:[#allocation3 + $0x344] sm:$0xf]
          %v3848 = vld [vmem:[#allocation3 + $0x348] sm:$0xff]
          %v3849 = vld [vmem:[#allocation3 + $0x350] sm:$0xf]
          %v3850 = vld [vmem:[#allocation3 + $0x354] sm:$0xff]
          %v3851 = vld [vmem:[#allocation3 + $0x35c] sm:$0xf]
          %v3852 = vld [vmem:[#allocation3 + $0x360] sm:$0xff]
          %v3853 = vld [vmem:[#allocation3 + $0x368] sm:$0xf]
          %v3854 = vld [vmem:[#allocation3 + $0x36c] sm:$0xff]
          %v3855 = vld [vmem:[#allocation3 + $0x374] sm:$0xf]
          %v3856 = vld [vmem:[#allocation3 + $0x378] sm:$0xff]
          %v3857 = vld [vmem:[#allocation3 + $0x380] sm:$0xf]
          %v3858 = vld [vmem:[#allocation3 + $0x384] sm:$0xff]
          %v3859 = vld [vmem:[#allocation3 + $0x38c] sm:$0xf]
          %v3860 = vld [vmem:[#allocation3 + $0x390] sm:$0xff]
          %v3861 = vld [vmem:[#allocation3 + $0x398] sm:$0xf]
          %v3862 = vld [vmem:[#allocation3 + $0x39c] sm:$0xff]
          %v3863 = vld [vmem:[#allocation3 + $0x3a4] sm:$0xf]
          %v3864 = vld [vmem:[#allocation3 + $0x3a8] sm:$0xff]
          %v3865 = vld [vmem:[#allocation3 + $0x3b0] sm:$0xf]
          %v3866 = vld [vmem:[#allocation3 + $0x3b4] sm:$0xff]
          %v3867 = vld [vmem:[#allocation3 + $0x3bc] sm:$0xf]
          %v3868 = vld [vmem:[%s8] sm:$0x7]
          %v3870 = vlaneseq
          %v3871 = vshrl.u32 %v3870, 7
          %v3872 = vsub.s32 0, %v3871
          %v3873 = vrot.slane %v3868, %v3872
          %v3874 = vlaneseq
          %v3875 = vshrl.u32 %v3874, 7
          %v3876 = vsub.s32 1, %v3875
          %v3877 = vrot.slane %v3868, %v3876
          %v3878 = vlaneseq
          %v3879 = vshrl.u32 %v3878, 7
          %v3880 = vsub.s32 2, %v3879
          %v3881 = vrot.slane %v3868, %v3880
          %v3891 = vunpack.c.l.b16 %v3702
          %v3892 = vunpack.c.h.b16 %v3702
          %v3893 = vunpack.c.l.b16 %v3703
          %v3894 = vunpack.c.h.b16 %v3703
          %v3895 = vunpack.c.l.b16 %v3704
          %v3896 = vunpack.c.l.b16 %v3705
          %v3897 = vunpack.c.h.b16 %v3705
          %v3898 = vunpack.c.l.b16 %v3706
          %v3899 = vunpack.c.h.b16 %v3706
          %v3900 = vunpack.c.l.b16 %v3707
          %v3901 = vpack.c.b16 %v3896, %v3891
          %v3902 = vpack.c.b16 %v3897, %v3892
          %v3903 = vpack.c.b16 %v3898, %v3893
          %v3904 = vpack.c.b16 %v3899, %v3894
          %v3905 = vpack.c.b16 %v3900, %v3895
          %v4071 = vunpack.c.l.b16 %v3708
          %v4072 = vunpack.c.h.b16 %v3708
          %v4073 = vunpack.c.l.b16 %v3709
          %v4074 = vunpack.c.l.b16 %v3710
          %v4075 = vunpack.c.h.b16 %v3710
          %v4076 = vunpack.c.l.b16 %v3711
          %v4077 = vunpack.c.l.b16 %v3712
          %v4078 = vunpack.c.h.b16 %v3712
          %v4079 = vunpack.c.l.b16 %v3713
          %v4080 = vunpack.c.l.b16 %v3714
          %v4081 = vunpack.c.h.b16 %v3714
          %v4082 = vunpack.c.l.b16 %v3715
          %v4083 = vunpack.c.l.b16 %v3716
          %v4084 = vunpack.c.h.b16 %v3716
          %v4085 = vunpack.c.l.b16 %v3717
          %v4086 = vunpack.c.l.b16 %v3718
          %v4087 = vunpack.c.h.b16 %v3718
          %v4088 = vunpack.c.l.b16 %v3719
          %v4089 = vunpack.c.l.b16 %v3720
          %v4090 = vunpack.c.h.b16 %v3720
          %v4091 = vunpack.c.l.b16 %v3721
          %v4092 = vunpack.c.l.b16 %v3722
          %v4093 = vunpack.c.h.b16 %v3722
          %v4094 = vunpack.c.l.b16 %v3723
          %v4095 = vunpack.c.l.b16 %v3724
          %v4096 = vunpack.c.h.b16 %v3724
          %v4097 = vunpack.c.l.b16 %v3725
          %v4098 = vunpack.c.l.b16 %v3726
          %v4099 = vunpack.c.h.b16 %v3726
          %v4100 = vunpack.c.l.b16 %v3727
          %v4101 = vunpack.c.l.b16 %v3728
          %v4102 = vunpack.c.h.b16 %v3728
          %v4103 = vunpack.c.l.b16 %v3729
          %v4104 = vunpack.c.l.b16 %v3730
          %v4105 = vunpack.c.h.b16 %v3730
          %v4106 = vunpack.c.l.b16 %v3731
          %v4107 = vunpack.c.l.b16 %v3732
          %v4108 = vunpack.c.h.b16 %v3732
          %v4109 = vunpack.c.l.b16 %v3733
          %v4110 = vunpack.c.l.b16 %v3734
          %v4111 = vunpack.c.h.b16 %v3734
          %v4112 = vunpack.c.l.b16 %v3735
          %v4113 = vunpack.c.l.b16 %v3736
          %v4114 = vunpack.c.h.b16 %v3736
          %v4115 = vunpack.c.l.b16 %v3737
          %v4116 = vunpack.c.l.b16 %v3738
          %v4117 = vunpack.c.h.b16 %v3738
          %v4118 = vunpack.c.l.b16 %v3739
          %v4119 = vunpack.c.l.b16 %v3740
          %v4120 = vunpack.c.h.b16 %v3740
          %v4121 = vunpack.c.l.b16 %v3741
          %v4122 = vunpack.c.l.b16 %v3742
          %v4123 = vunpack.c.h.b16 %v3742
          %v4124 = vunpack.c.l.b16 %v3743
          %v4125 = vunpack.c.l.b16 %v3744
          %v4126 = vunpack.c.h.b16 %v3744
          %v4127 = vunpack.c.l.b16 %v3745
          %v4128 = vunpack.c.l.b16 %v3746
          %v4129 = vunpack.c.h.b16 %v3746
          %v4130 = vunpack.c.l.b16 %v3747
          %v4131 = vunpack.c.l.b16 %v3748
          %v4132 = vunpack.c.h.b16 %v3748
          %v4133 = vunpack.c.l.b16 %v3749
          %v4134 = vunpack.c.l.b16 %v3750
          %v4135 = vunpack.c.h.b16 %v3750
          %v4136 = vunpack.c.l.b16 %v3751
          %v4137 = vunpack.c.l.b16 %v3752
          %v4138 = vunpack.c.h.b16 %v3752
          %v4139 = vunpack.c.l.b16 %v3753
          %v4140 = vunpack.c.l.b16 %v3754
          %v4141 = vunpack.c.h.b16 %v3754
          %v4142 = vunpack.c.l.b16 %v3755
          %v4143 = vunpack.c.l.b16 %v3756
          %v4144 = vunpack.c.h.b16 %v3756
          %v4145 = vunpack.c.l.b16 %v3757
          %v4146 = vunpack.c.l.b16 %v3758
          %v4147 = vunpack.c.h.b16 %v3758
          %v4148 = vunpack.c.l.b16 %v3759
          %v4149 = vunpack.c.l.b16 %v3760
          %v4150 = vunpack.c.h.b16 %v3760
          %v4151 = vunpack.c.l.b16 %v3761
          %v4152 = vunpack.c.l.b16 %v3762
          %v4153 = vunpack.c.h.b16 %v3762
          %v4154 = vunpack.c.l.b16 %v3763
          %v4155 = vunpack.c.l.b16 %v3764
          %v4156 = vunpack.c.h.b16 %v3764
          %v4157 = vunpack.c.l.b16 %v3765
          %v4158 = vunpack.c.l.b16 %v3766
          %v4159 = vunpack.c.h.b16 %v3766
          %v4160 = vunpack.c.l.b16 %v3767
          %v4161 = vunpack.c.l.b16 %v3768
          %v4162 = vunpack.c.h.b16 %v3768
          %v4163 = vunpack.c.l.b16 %v3769
          %v4164 = vunpack.c.l.b16 %v3770
          %v4165 = vunpack.c.h.b16 %v3770
          %v4166 = vunpack.c.l.b16 %v3771
          %v4167 = vunpack.c.l.b16 %v3772
          %v4168 = vunpack.c.h.b16 %v3772
          %v4169 = vunpack.c.l.b16 %v3773
          %v4170 = vunpack.c.l.b16 %v3774
          %v4171 = vunpack.c.h.b16 %v3774
          %v4172 = vunpack.c.l.b16 %v3775
          %v4173 = vunpack.c.l.b16 %v3776
          %v4174 = vunpack.c.h.b16 %v3776
          %v4175 = vunpack.c.l.b16 %v3777
          %v4176 = vunpack.c.l.b16 %v3778
          %v4177 = vunpack.c.h.b16 %v3778
          %v4178 = vunpack.c.l.b16 %v3779
          %v4179 = vunpack.c.l.b16 %v3780
          %v4180 = vunpack.c.h.b16 %v3780
          %v4181 = vunpack.c.l.b16 %v3781
          %v4182 = vunpack.c.l.b16 %v3782
          %v4183 = vunpack.c.h.b16 %v3782
          %v4184 = vunpack.c.l.b16 %v3783
          %v4185 = vunpack.c.l.b16 %v3784
          %v4186 = vunpack.c.h.b16 %v3784
          %v4187 = vunpack.c.l.b16 %v3785
          %v4188 = vunpack.c.l.b16 %v3786
          %v4189 = vunpack.c.h.b16 %v3786
          %v4190 = vunpack.c.l.b16 %v3787
          %v4191 = vunpack.c.l.b16 %v3788
          %v4192 = vunpack.c.h.b16 %v3788
          %v4193 = vunpack.c.l.b16 %v3789
          %v4194 = vunpack.c.l.b16 %v3790
          %v4195 = vunpack.c.h.b16 %v3790
          %v4196 = vunpack.c.l.b16 %v3791
          %v4197 = vunpack.c.l.b16 %v3792
          %v4198 = vunpack.c.h.b16 %v3792
          %v4199 = vunpack.c.l.b16 %v3793
          %v4200 = vunpack.c.l.b16 %v3794
          %v4201 = vunpack.c.h.b16 %v3794
          %v4202 = vunpack.c.l.b16 %v3795
          %v4203 = vunpack.c.l.b16 %v3796
          %v4204 = vunpack.c.h.b16 %v3796
          %v4205 = vunpack.c.l.b16 %v3797
          %v4206 = vunpack.c.l.b16 %v3798
          %v4207 = vunpack.c.h.b16 %v3798
          %v4208 = vunpack.c.l.b16 %v3799
          %v4209 = vunpack.c.l.b16 %v3800
          %v4210 = vunpack.c.h.b16 %v3800
          %v4211 = vunpack.c.l.b16 %v3801
          %v4212 = vunpack.c.l.b16 %v3802
          %v4213 = vunpack.c.h.b16 %v3802
          %v4214 = vunpack.c.l.b16 %v3803
          %v4215 = vunpack.c.l.b16 %v3804
          %v4216 = vunpack.c.h.b16 %v3804
          %v4217 = vunpack.c.l.b16 %v3805
          %v4218 = vunpack.c.l.b16 %v3806
          %v4219 = vunpack.c.h.b16 %v3806
          %v4220 = vunpack.c.l.b16 %v3807
          %v4221 = vunpack.c.l.b16 %v3808
          %v4222 = vunpack.c.h.b16 %v3808
          %v4223 = vunpack.c.l.b16 %v3809
          %v4224 = vunpack.c.l.b16 %v3810
          %v4225 = vunpack.c.h.b16 %v3810
          %v4226 = vunpack.c.l.b16 %v3811
          %v4227 = vunpack.c.l.b16 %v3812
          %v4228 = vunpack.c.h.b16 %v3812
          %v4229 = vunpack.c.l.b16 %v3813
          %v4230 = vunpack.c.l.b16 %v3814
          %v4231 = vunpack.c.h.b16 %v3814
          %v4232 = vunpack.c.l.b16 %v3815
          %v4233 = vunpack.c.l.b16 %v3816
          %v4234 = vunpack.c.h.b16 %v3816
          %v4235 = vunpack.c.l.b16 %v3817
          %v4236 = vunpack.c.l.b16 %v3818
          %v4237 = vunpack.c.h.b16 %v3818
          %v4238 = vunpack.c.l.b16 %v3819
          %v4239 = vunpack.c.l.b16 %v3820
          %v4240 = vunpack.c.h.b16 %v3820
          %v4241 = vunpack.c.l.b16 %v3821
          %v4242 = vunpack.c.l.b16 %v3822
          %v4243 = vunpack.c.h.b16 %v3822
          %v4244 = vunpack.c.l.b16 %v3823
          %v4245 = vunpack.c.l.b16 %v3824
          %v4246 = vunpack.c.h.b16 %v3824
          %v4247 = vunpack.c.l.b16 %v3825
          %v4248 = vunpack.c.l.b16 %v3826
          %v4249 = vunpack.c.h.b16 %v3826
          %v4250 = vunpack.c.l.b16 %v3827
          %v4251 = vunpack.c.l.b16 %v3828
          %v4252 = vunpack.c.h.b16 %v3828
          %v4253 = vunpack.c.l.b16 %v3829
          %v4254 = vunpack.c.l.b16 %v3830
          %v4255 = vunpack.c.h.b16 %v3830
          %v4256 = vunpack.c.l.b16 %v3831
          %v4257 = vunpack.c.l.b16 %v3832
          %v4258 = vunpack.c.h.b16 %v3832
          %v4259 = vunpack.c.l.b16 %v3833
          %v4260 = vunpack.c.l.b16 %v3834
          %v4261 = vunpack.c.h.b16 %v3834
          %v4262 = vunpack.c.l.b16 %v3835
          %v4263 = vunpack.c.l.b16 %v3836
          %v4264 = vunpack.c.h.b16 %v3836
          %v4265 = vunpack.c.l.b16 %v3837
          %v4266 = vunpack.c.l.b16 %v3838
          %v4267 = vunpack.c.h.b16 %v3838
          %v4268 = vunpack.c.l.b16 %v3839
          %v4269 = vunpack.c.l.b16 %v3840
          %v4270 = vunpack.c.h.b16 %v3840
          %v4271 = vunpack.c.l.b16 %v3841
          %v4272 = vunpack.c.l.b16 %v3842
          %v4273 = vunpack.c.h.b16 %v3842
          %v4274 = vunpack.c.l.b16 %v3843
          %v4275 = vunpack.c.l.b16 %v3844
          %v4276 = vunpack.c.h.b16 %v3844
          %v4277 = vunpack.c.l.b16 %v3845
          %v4278 = vunpack.c.l.b16 %v3846
          %v4279 = vunpack.c.h.b16 %v3846
          %v4280 = vunpack.c.l.b16 %v3847
          %v4281 = vunpack.c.l.b16 %v3848
          %v4282 = vunpack.c.h.b16 %v3848
          %v4283 = vunpack.c.l.b16 %v3849
          %v4284 = vunpack.c.l.b16 %v3850
          %v4285 = vunpack.c.h.b16 %v3850
          %v4286 = vunpack.c.l.b16 %v3851
          %v4287 = vunpack.c.l.b16 %v3852
          %v4288 = vunpack.c.h.b16 %v3852
          %v4289 = vunpack.c.l.b16 %v3853
          %v4290 = vunpack.c.l.b16 %v3854
          %v4291 = vunpack.c.h.b16 %v3854
          %v4292 = vunpack.c.l.b16 %v3855
          %v4293 = vunpack.c.l.b16 %v3856
          %v4294 = vunpack.c.h.b16 %v3856
          %v4295 = vunpack.c.l.b16 %v3857
          %v4296 = vunpack.c.l.b16 %v3858
          %v4297 = vunpack.c.h.b16 %v3858
          %v4298 = vunpack.c.l.b16 %v3859
          %v4299 = vunpack.c.l.b16 %v3860
          %v4300 = vunpack.c.h.b16 %v3860
          %v4301 = vunpack.c.l.b16 %v3861
          %v4302 = vunpack.c.l.b16 %v3862
          %v4303 = vunpack.c.h.b16 %v3862
          %v4304 = vunpack.c.l.b16 %v3863
          %v4305 = vunpack.c.l.b16 %v3864
          %v4306 = vunpack.c.h.b16 %v3864
          %v4307 = vunpack.c.l.b16 %v3865
          %v4308 = vunpack.c.l.b16 %v3866
          %v4309 = vunpack.c.h.b16 %v3866
          %v4310 = vunpack.c.l.b16 %v3867
          %v4311 = vpack.c.b16 %v4074, %v4071
          %v4312 = vpack.c.b16 %v4075, %v4072
          %v4313 = vpack.c.b16 %v4076, %v4073
          %v4314 = vpack.c.b16 %v4080, %v4077
          %v4315 = vpack.c.b16 %v4081, %v4078
          %v4316 = vpack.c.b16 %v4082, %v4079
          %v4317 = vpack.c.b16 %v4086, %v4083
          %v4318 = vpack.c.b16 %v4087, %v4084
          %v4319 = vpack.c.b16 %v4088, %v4085
          %v4320 = vpack.c.b16 %v4092, %v4089
          %v4321 = vpack.c.b16 %v4093, %v4090
          %v4322 = vpack.c.b16 %v4094, %v4091
          %v4323 = vpack.c.b16 %v4098, %v4095
          %v4324 = vpack.c.b16 %v4099, %v4096
          %v4325 = vpack.c.b16 %v4100, %v4097
          %v4326 = vpack.c.b16 %v4104, %v4101
          %v4327 = vpack.c.b16 %v4105, %v4102
          %v4328 = vpack.c.b16 %v4106, %v4103
          %v4329 = vpack.c.b16 %v4110, %v4107
          %v4330 = vpack.c.b16 %v4111, %v4108
          %v4331 = vpack.c.b16 %v4112, %v4109
          %v4332 = vpack.c.b16 %v4116, %v4113
          %v4333 = vpack.c.b16 %v4117, %v4114
          %v4334 = vpack.c.b16 %v4118, %v4115
          %v4335 = vpack.c.b16 %v4122, %v4119
          %v4336 = vpack.c.b16 %v4123, %v4120
          %v4337 = vpack.c.b16 %v4124, %v4121
          %v4338 = vpack.c.b16 %v4128, %v4125
          %v4339 = vpack.c.b16 %v4129, %v4126
          %v4340 = vpack.c.b16 %v4130, %v4127
          %v4341 = vpack.c.b16 %v4134, %v4131
          %v4342 = vpack.c.b16 %v4135, %v4132
          %v4343 = vpack.c.b16 %v4136, %v4133
          %v4344 = vpack.c.b16 %v4140, %v4137
          %v4345 = vpack.c.b16 %v4141, %v4138
          %v4346 = vpack.c.b16 %v4142, %v4139
          %v4347 = vpack.c.b16 %v4146, %v4143
          %v4348 = vpack.c.b16 %v4147, %v4144
          %v4349 = vpack.c.b16 %v4148, %v4145
          %v4350 = vpack.c.b16 %v4152, %v4149
          %v4351 = vpack.c.b16 %v4153, %v4150
          %v4352 = vpack.c.b16 %v4154, %v4151
          %v4353 = vpack.c.b16 %v4158, %v4155
          %v4354 = vpack.c.b16 %v4159, %v4156
          %v4355 = vpack.c.b16 %v4160, %v4157
          %v4356 = vpack.c.b16 %v4164, %v4161
          %v4357 = vpack.c.b16 %v4165, %v4162
          %v4358 = vpack.c.b16 %v4166, %v4163
          %v4359 = vpack.c.b16 %v4170, %v4167
          %v4360 = vpack.c.b16 %v4171, %v4168
          %v4361 = vpack.c.b16 %v4172, %v4169
          %v4362 = vpack.c.b16 %v4176, %v4173
          %v4363 = vpack.c.b16 %v4177, %v4174
          %v4364 = vpack.c.b16 %v4178, %v4175
          %v4365 = vpack.c.b16 %v4182, %v4179
          %v4366 = vpack.c.b16 %v4183, %v4180
          %v4367 = vpack.c.b16 %v4184, %v4181
          %v4368 = vpack.c.b16 %v4188, %v4185
          %v4369 = vpack.c.b16 %v4189, %v4186
          %v4370 = vpack.c.b16 %v4190, %v4187
          %v4371 = vpack.c.b16 %v4194, %v4191
          %v4372 = vpack.c.b16 %v4195, %v4192
          %v4373 = vpack.c.b16 %v4196, %v4193
          %v4374 = vpack.c.b16 %v4200, %v4197
          %v4375 = vpack.c.b16 %v4201, %v4198
          %v4376 = vpack.c.b16 %v4202, %v4199
          %v4377 = vpack.c.b16 %v4206, %v4203
          %v4378 = vpack.c.b16 %v4207, %v4204
          %v4379 = vpack.c.b16 %v4208, %v4205
          %v4380 = vpack.c.b16 %v4212, %v4209
          %v4381 = vpack.c.b16 %v4213, %v4210
          %v4382 = vpack.c.b16 %v4214, %v4211
          %v4383 = vpack.c.b16 %v4218, %v4215
          %v4384 = vpack.c.b16 %v4219, %v4216
          %v4385 = vpack.c.b16 %v4220, %v4217
          %v4386 = vpack.c.b16 %v4224, %v4221
          %v4387 = vpack.c.b16 %v4225, %v4222
          %v4388 = vpack.c.b16 %v4226, %v4223
          %v4389 = vpack.c.b16 %v4230, %v4227
          %v4390 = vpack.c.b16 %v4231, %v4228
          %v4391 = vpack.c.b16 %v4232, %v4229
          %v4392 = vpack.c.b16 %v4236, %v4233
          %v4393 = vpack.c.b16 %v4237, %v4234
          %v4394 = vpack.c.b16 %v4238, %v4235
          %v4395 = vpack.c.b16 %v4242, %v4239
          %v4396 = vpack.c.b16 %v4243, %v4240
          %v4397 = vpack.c.b16 %v4244, %v4241
          %v4398 = vpack.c.b16 %v4248, %v4245
          %v4399 = vpack.c.b16 %v4249, %v4246
          %v4400 = vpack.c.b16 %v4250, %v4247
          %v4401 = vpack.c.b16 %v4254, %v4251
          %v4402 = vpack.c.b16 %v4255, %v4252
          %v4403 = vpack.c.b16 %v4256, %v4253
          %v4404 = vpack.c.b16 %v4260, %v4257
          %v4405 = vpack.c.b16 %v4261, %v4258
          %v4406 = vpack.c.b16 %v4262, %v4259
          %v4407 = vpack.c.b16 %v4266, %v4263
          %v4408 = vpack.c.b16 %v4267, %v4264
          %v4409 = vpack.c.b16 %v4268, %v4265
          %v4410 = vpack.c.b16 %v4272, %v4269
          %v4411 = vpack.c.b16 %v4273, %v4270
          %v4412 = vpack.c.b16 %v4274, %v4271
          %v4413 = vpack.c.b16 %v4278, %v4275
          %v4414 = vpack.c.b16 %v4279, %v4276
          %v4415 = vpack.c.b16 %v4280, %v4277
          %v4416 = vpack.c.b16 %v4284, %v4281
          %v4417 = vpack.c.b16 %v4285, %v4282
          %v4418 = vpack.c.b16 %v4286, %v4283
          %v4419 = vpack.c.b16 %v4290, %v4287
          %v4420 = vpack.c.b16 %v4291, %v4288
          %v4421 = vpack.c.b16 %v4292, %v4289
          %v4422 = vpack.c.b16 %v4296, %v4293
          %v4423 = vpack.c.b16 %v4297, %v4294
          %v4424 = vpack.c.b16 %v4298, %v4295
          %v4425 = vpack.c.b16 %v4302, %v4299
          %v4426 = vpack.c.b16 %v4303, %v4300
          %v4427 = vpack.c.b16 %v4304, %v4301
          %v4428 = vpack.c.b16 %v4308, %v4305
          %v4429 = vpack.c.b16 %v4309, %v4306
          %v4430 = vpack.c.b16 %v4310, %v4307
          %4551 = vmatprep.subr.bf16.mxu0 %v4312
          %4552 = vmatpush1.bf16.msra.mxu0 %v4311
          %4553 = vmatprep.subr.bf16.mxu0 %v4315
          %4554 = vmatpush1.bf16.msra.mxu0 %v4314
          %4555 = vmatprep.subr.bf16.mxu0 %v4318
          %4556 = vmatpush1.bf16.msra.mxu0 %v4317
          %4557 = vmatprep.subr.bf16.mxu0 %v4321
          %4558 = vmatpush1.bf16.msra.mxu0 %v4320
          %4559 = vmatprep.subr.bf16.mxu0 %v4324
          %4560 = vmatpush1.bf16.msra.mxu0 %v4323
          %4561 = vmatprep.subr.bf16.mxu0 %v4327
          %4562 = vmatpush1.bf16.msra.mxu0 %v4326
          %4563 = vmatprep.subr.bf16.mxu0 %v4330
          %4564 = vmatpush1.bf16.msra.mxu0 %v4329
          %4565 = vmatprep.subr.bf16.mxu0 %v4333
          %4566 = vmatpush1.bf16.msra.mxu0 %v4332
          %4567 = vmatprep.subr.bf16.mxu0 %v4336
          %4568 = vmatpush1.bf16.msra.mxu0 %v4335
          %4569 = vmatprep.subr.bf16.mxu0 %v4339
          %4570 = vmatpush1.bf16.msra.mxu0 %v4338
          %4571 = vmatprep.subr.bf16.mxu0 %v4342
          %4572 = vmatpush1.bf16.msra.mxu0 %v4341
          %4573 = vmatprep.subr.bf16.mxu0 %v4345
          %4574 = vmatpush1.bf16.msra.mxu0 %v4344
          %4575 = vmatprep.subr.bf16.mxu0 %v4348
          %4576 = vmatpush1.bf16.msra.mxu0 %v4347
          %4577 = vmatprep.subr.bf16.mxu0 %v4351
          %4578 = vmatpush1.bf16.msra.mxu0 %v4350
          %4579 = vmatprep.subr.bf16.mxu0 %v4354
          %4580 = vmatpush1.bf16.msra.mxu0 %v4353
          %4581 = vmatprep.subr.bf16.mxu0 %v4357
          %4582 = vmatpush1.bf16.msra.mxu0 %v4356
          %4583 = vmatprep.mubr.bf16.mxu0 %v3902
          %4584 = vmatmul.mubr.bf16.gmra.mrb[0].mxu0 %v3901
          %v4585 = vpop.f32.mrb[0].mxu0
          %v4586 = vadd.f32 %v3873, %v4585
          %v4587 = vpop.f32.mrb[0].mxu0
          %v4588 = vadd.f32 %v3877, %v4587
          %v4589 = vpop.f32.mrb[0].mxu0
          %v4590 = vadd.f32 %v3873, %v4589
          %v4591 = vpop.f32.mrb[0].mxu0
          %v4592 = vadd.f32 %v3877, %v4591
          %4593 = vdwg.mxu0
          %4594 = vmatprep.subr.bf16.mxu0 %v4360
          %4595 = vmatpush1.bf16.msra.mxu0 %v4359
          %4596 = vmatprep.subr.bf16.mxu0 %v4363
          %4597 = vmatpush1.bf16.msra.mxu0 %v4362
          %4598 = vmatprep.subr.bf16.mxu0 %v4366
          %4599 = vmatpush1.bf16.msra.mxu0 %v4365
          %4600 = vmatprep.subr.bf16.mxu0 %v4369
          %4601 = vmatpush1.bf16.msra.mxu0 %v4368
          %4602 = vmatprep.subr.bf16.mxu0 %v4372
          %4603 = vmatpush1.bf16.msra.mxu0 %v4371
          %4604 = vmatprep.subr.bf16.mxu0 %v4375
          %4605 = vmatpush1.bf16.msra.mxu0 %v4374
          %4606 = vmatprep.subr.bf16.mxu0 %v4378
          %4607 = vmatpush1.bf16.msra.mxu0 %v4377
          %4608 = vmatprep.subr.bf16.mxu0 %v4381
          %4609 = vmatpush1.bf16.msra.mxu0 %v4380
          %4610 = vmatprep.subr.bf16.mxu0 %v4384
          %4611 = vmatpush1.bf16.msra.mxu0 %v4383
          %4612 = vmatprep.subr.bf16.mxu0 %v4387
          %4613 = vmatpush1.bf16.msra.mxu0 %v4386
          %4614 = vmatprep.subr.bf16.mxu0 %v4390
          %4615 = vmatpush1.bf16.msra.mxu0 %v4389
          %4616 = vmatprep.subr.bf16.mxu0 %v4393
          %4617 = vmatpush1.bf16.msra.mxu0 %v4392
          %4618 = vmatprep.subr.bf16.mxu0 %v4396
          %4619 = vmatpush1.bf16.msra.mxu0 %v4395
          %4620 = vmatprep.subr.bf16.mxu0 %v4399
          %4621 = vmatpush1.bf16.msra.mxu0 %v4398
          %4622 = vmatprep.subr.bf16.mxu0 %v4402
          %4623 = vmatpush1.bf16.msra.mxu0 %v4401
          %4624 = vmatprep.subr.bf16.mxu0 %v4405
          %4625 = vmatpush1.bf16.msra.mxu0 %v4404
          %4626 = vmatprep.mubr.bf16.mxu0 %v3904
          %4627 = vmatmul.mubr.bf16.gmra.mrb[0].mxu0 %v3903
          %v4628 = vpop.f32.mrb[0].mxu0
          %v4629 = vadd.f32 %v4586, %v4628
          %v4630 = vpop.f32.mrb[0].mxu0
          %v4631 = vadd.f32 %v4588, %v4630
          %v4632 = vpop.f32.mrb[0].mxu0
          %v4633 = vadd.f32 %v4590, %v4632
          %v4634 = vpop.f32.mrb[0].mxu0
          %v4635 = vadd.f32 %v4592, %v4634
          %4636 = vdwg.mxu0
          %4637 = vmatprep.subr.bf16.mxu0 %v4408
          %4638 = vmatpush1.bf16.msra.mxu0 %v4407
          %4639 = vmatprep.subr.bf16.mxu0 %v4411
          %4640 = vmatpush1.bf16.msra.mxu0 %v4410
          %4641 = vmatprep.subr.bf16.mxu0 %v4414
          %4642 = vmatpush1.bf16.msra.mxu0 %v4413
          %4643 = vmatprep.subr.bf16.mxu0 %v4417
          %4644 = vmatpush1.bf16.msra.mxu0 %v4416
          %4645 = vmatprep.subr.bf16.mxu0 %v4420
          %4646 = vmatpush1.bf16.msra.mxu0 %v4419
          %4647 = vmatprep.subr.bf16.mxu0 %v4423
          %4648 = vmatpush1.bf16.msra.mxu0 %v4422
          %4649 = vmatprep.subr.bf16.mxu0 %v4426
          %4650 = vmatpush1.bf16.msra.mxu0 %v4425
          %4651 = vmatprep.subr.bf16.mxu0 %v4429
          %4652 = vmatpush1.bf16.msra.mxu0 %v4428
          %4653 = vmatprep.subr.bf16.mxu0 0
          %4654 = vmatpush1.bf16.msra.mxu0 0
          %4655 = vmatprep.subr.bf16.mxu0 0
          %4656 = vmatpush1.bf16.msra.mxu0 0
          %4657 = vmatprep.subr.bf16.mxu0 0
          %4658 = vmatpush1.bf16.msra.mxu0 0
          %4659 = vmatprep.subr.bf16.mxu0 0
          %4660 = vmatpush1.bf16.msra.mxu0 0
          %4661 = vmatprep.subr.bf16.mxu0 0
          %4662 = vmatpush1.bf16.msra.mxu0 0
          %4663 = vmatprep.subr.bf16.mxu0 0
          %4664 = vmatpush1.bf16.msra.mxu0 0
          %4665 = vmatprep.subr.bf16.mxu0 0
          %4666 = vmatpush1.bf16.msra.mxu0 0
          %4667 = vmatprep.subr.bf16.mxu0 0
          %4668 = vmatpush1.bf16.msra.mxu0 0
          %4669 = vmatprep.mubr.bf16.mxu0 0
          %4670 = vmatmul.mubr.bf16.gmra.mrb[0].mxu0 %v3905
          %v4671 = vpop.f32.mrb[0].mxu0
          %v4672 = vadd.f32 %v4629, %v4671
          %v4673 = vpop.f32.mrb[0].mxu0
          %v4674 = vadd.f32 %v4631, %v4673
          %v4675 = vpop.f32.mrb[0].mxu0
          %v4676 = vadd.f32 %v4633, %v4675
          %v4677 = vpop.f32.mrb[0].mxu0
          %v4678 = vadd.f32 %v4635, %v4677
          %4679 = vdwg.mxu0
          %4680 = vmatprep.subr.bf16.mxu0 0
          %4681 = vmatpush1.bf16.msra.mxu0 %v4313
          %4682 = vmatprep.subr.bf16.mxu0 0
          %4683 = vmatpush1.bf16.msra.mxu0 %v4316
          %4684 = vmatprep.subr.bf16.mxu0 0
          %4685 = vmatpush1.bf16.msra.mxu0 %v4319
          %4686 = vmatprep.subr.bf16.mxu0 0
          %4687 = vmatpush1.bf16.msra.mxu0 %v4322
          %4688 = vmatprep.subr.bf16.mxu0 0
          %4689 = vmatpush1.bf16.msra.mxu0 %v4325
          %4690 = vmatprep.subr.bf16.mxu0 0
          %4691 = vmatpush1.bf16.msra.mxu0 %v4328
          %4692 = vmatprep.subr.bf16.mxu0 0
          %4693 = vmatpush1.bf16.msra.mxu0 %v4331
          %4694 = vmatprep.subr.bf16.mxu0 0
          %4695 = vmatpush1.bf16.msra.mxu0 %v4334
          %4696 = vmatprep.subr.bf16.mxu0 0
          %4697 = vmatpush1.bf16.msra.mxu0 %v4337
          %4698 = vmatprep.subr.bf16.mxu0 0
          %4699 = vmatpush1.bf16.msra.mxu0 %v4340
          %4700 = vmatprep.subr.bf16.mxu0 0
          %4701 = vmatpush1.bf16.msra.mxu0 %v4343
          %4702 = vmatprep.subr.bf16.mxu0 0
          %4703 = vmatpush1.bf16.msra.mxu0 %v4346
          %4704 = vmatprep.subr.bf16.mxu0 0
          %4705 = vmatpush1.bf16.msra.mxu0 %v4349
          %4706 = vmatprep.subr.bf16.mxu0 0
          %4707 = vmatpush1.bf16.msra.mxu0 %v4352
          %4708 = vmatprep.subr.bf16.mxu0 0
          %4709 = vmatpush1.bf16.msra.mxu0 %v4355
          %4710 = vmatprep.subr.bf16.mxu0 0
          %4711 = vmatpush1.bf16.msra.mxu0 %v4358
          %4712 = vmatprep.mubr.bf16.mxu0 %v3902
          %4713 = vmatmul.mubr.bf16.gmra.mrb[0].mxu0 %v3901
          %v4714 = vpop.f32.mrb[0].mxu0
          %v4715 = vadd.f32 %v3881, %v4714
          %v4716 = vpop.f32.mrb[0].mxu0
          %v4717 = vpop.f32.mrb[0].mxu0
          %v4718 = vadd.f32 %v3881, %v4717
          %v4719 = vpop.f32.mrb[0].mxu0
          %4720 = vdwg.mxu0
          %4721 = vmatprep.subr.bf16.mxu0 0
          %4722 = vmatpush1.bf16.msra.mxu0 %v4361
          %4723 = vmatprep.subr.bf16.mxu0 0
          %4724 = vmatpush1.bf16.msra.mxu0 %v4364
          %4725 = vmatprep.subr.bf16.mxu0 0
          %4726 = vmatpush1.bf16.msra.mxu0 %v4367
          %4727 = vmatprep.subr.bf16.mxu0 0
          %4728 = vmatpush1.bf16.msra.mxu0 %v4370
          %4729 = vmatprep.subr.bf16.mxu0 0
          %4730 = vmatpush1.bf16.msra.mxu0 %v4373
          %4731 = vmatprep.subr.bf16.mxu0 0
          %4732 = vmatpush1.bf16.msra.mxu0 %v4376
          %4733 = vmatprep.subr.bf16.mxu0 0
          %4734 = vmatpush1.bf16.msra.mxu0 %v4379
          %4735 = vmatprep.subr.bf16.mxu0 0
          %4736 = vmatpush1.bf16.msra.mxu0 %v4382
          %4737 = vmatprep.subr.bf16.mxu0 0
          %4738 = vmatpush1.bf16.msra.mxu0 %v4385
          %4739 = vmatprep.subr.bf16.mxu0 0
          %4740 = vmatpush1.bf16.msra.mxu0 %v4388
          %4741 = vmatprep.subr.bf16.mxu0 0
          %4742 = vmatpush1.bf16.msra.mxu0 %v4391
          %4743 = vmatprep.subr.bf16.mxu0 0
          %4744 = vmatpush1.bf16.msra.mxu0 %v4394
          %4745 = vmatprep.subr.bf16.mxu0 0
          %4746 = vmatpush1.bf16.msra.mxu0 %v4397
          %4747 = vmatprep.subr.bf16.mxu0 0
          %4748 = vmatpush1.bf16.msra.mxu0 %v4400
          %4749 = vmatprep.subr.bf16.mxu0 0
          %4750 = vmatpush1.bf16.msra.mxu0 %v4403
          %4751 = vmatprep.subr.bf16.mxu0 0
          %4752 = vmatpush1.bf16.msra.mxu0 %v4406
          %4753 = vmatprep.mubr.bf16.mxu0 %v3904
          %4754 = vmatmul.mubr.bf16.gmra.mrb[0].mxu0 %v3903
          %v4755 = vpop.f32.mrb[0].mxu0
          %v4756 = vadd.f32 %v4715, %v4755
          %v4757 = vpop.f32.mrb[0].mxu0
          %v4758 = vpop.f32.mrb[0].mxu0
          %v4759 = vadd.f32 %v4718, %v4758
          %v4760 = vpop.f32.mrb[0].mxu0
          %4761 = vdwg.mxu0
          %4762 = vmatprep.subr.bf16.mxu0 0
          %4763 = vmatpush1.bf16.msra.mxu0 %v4409
          %4764 = vmatprep.subr.bf16.mxu0 0
          %4765 = vmatpush1.bf16.msra.mxu0 %v4412
          %4766 = vmatprep.subr.bf16.mxu0 0
          %4767 = vmatpush1.bf16.msra.mxu0 %v4415
          %4768 = vmatprep.subr.bf16.mxu0 0
          %4769 = vmatpush1.bf16.msra.mxu0 %v4418
          %4770 = vmatprep.subr.bf16.mxu0 0
          %4771 = vmatpush1.bf16.msra.mxu0 %v4421
          %4772 = vmatprep.subr.bf16.mxu0 0
          %4773 = vmatpush1.bf16.msra.mxu0 %v4424
          %4774 = vmatprep.subr.bf16.mxu0 0
          %4775 = vmatpush1.bf16.msra.mxu0 %v4427
          %4776 = vmatprep.subr.bf16.mxu0 0
          %4777 = vmatpush1.bf16.msra.mxu0 %v4430
          %4778 = vmatprep.subr.bf16.mxu0 0
          %4779 = vmatpush1.bf16.msra.mxu0 0
          %4780 = vmatprep.subr.bf16.mxu0 0
          %4781 = vmatpush1.bf16.msra.mxu0 0
          %4782 = vmatprep.subr.bf16.mxu0 0
          %4783 = vmatpush1.bf16.msra.mxu0 0
          %4784 = vmatprep.subr.bf16.mxu0 0
          %4785 = vmatpush1.bf16.msra.mxu0 0
          %4786 = vmatprep.subr.bf16.mxu0 0
          %4787 = vmatpush1.bf16.msra.mxu0 0
          %4788 = vmatprep.subr.bf16.mxu0 0
          %4789 = vmatpush1.bf16.msra.mxu0 0
          %4790 = vmatprep.subr.bf16.mxu0 0
          %4791 = vmatpush1.bf16.msra.mxu0 0
          %4792 = vmatprep.subr.bf16.mxu0 0
          %4793 = vmatpush1.bf16.msra.mxu0 0
          %4794 = vmatprep.mubr.bf16.mxu0 0
          %4795 = vmatmul.mubr.bf16.gmra.mrb[0].mxu0 %v3905
          %v4796 = vpop.f32.mrb[0].mxu0
          %v4797 = vadd.f32 %v4756, %v4796
          %v4798 = vpop.f32.mrb[0].mxu0
          %v4799 = vpop.f32.mrb[0].mxu0
          %v4800 = vadd.f32 %v4759, %v4799
          %v4801 = vpop.f32.mrb[0].mxu0
          %4802 = vdwg.mxu0
          %v4803 = vmax.f32 %v4672, %v4674
          %4804 = vmax.xlane.f32.xlu0 %v4803
          %v4805 = vpop.xlane.xlu0 %4804
          %v4806 = vmax.f32 %v4676, %v4678
          %4807 = vmax.xlane.f32.xlu0 %v4806
          %v4808 = vpop.xlane.xlu0 %4807
          %v4809 = vsub.f32 %v4672, %v4805
          %v4810 = vsub.f32 %v4674, %v4805
          %v4811 = vsub.f32 %v4676, %v4808
          %v4812 = vsub.f32 %v4678, %v4808
          %v4813 = vmul.f32 %v4809, 1.442695
          %v4814 = vpow.pop %v4813
          %v4815 = vmul.f32 %v4810, 1.442695
          %v4816 = vpow.pop %v4815
          %v4817 = vmul.f32 %v4811, 1.442695
          %v4818 = vpow.pop %v4817
          %v4819 = vmul.f32 %v4812, 1.442695
          %v4820 = vpow.pop %v4819
          %v4821 = vadd.f32 %v4814, %v4816
          %4822 = vadd.xlane.f32.xlu0 %v4821
          %v4823 = vpop.xlane.xlu0 %4822
          %v4824 = vadd.f32 %v4818, %v4820
          %4825 = vadd.xlane.f32.xlu0 %v4824
          %v4826 = vpop.xlane.xlu0 %4825
          %v4827 = vrcp.pop %v4823
          %v4828 = vrcp.pop %v4826
          %v4829 = vmul.f32 %v4814, %v4827
          %v4830 = vmul.f32 %v4816, %v4827
          %v4831 = vmul.f32 %v4818, %v4828
          %v4832 = vmul.f32 %v4820, %v4828
          %v4833 = vadd.f32 %v4829, 0.5
          %v4834 = vadd.f32 %v4831, 0.5
          %v4835 = vmul.f32 %v4833, %v4797
          %v4836 = vmul.f32 %v4834, %v4800
          %v4837 = vmul.f32 %v4830, %v3696
          %v4838 = vmul.f32 %v4832, %v3699
          %v4839 = vadd.f32 %v4835, %v4837
          %v4840 = vadd.f32 %v4836, %v4838
          %v4841 = vld [vmem:[%s636] sm:$0xff]
          %v4842 = vld [vmem:[%s636 + $0x8] sm:$0xff]
          %v4843 = vld [vmem:[%s636 + $0x10] sm:$0xf]
          %v4844 = vld [vmem:[%s636 + $0x14] sm:$0xff]
          %v4845 = vld [vmem:[%s636 + $0x1c] sm:$0xff]
          %v4846 = vld [vmem:[%s636 + $0x24] sm:$0xf]
          %v4847 = vld [vmem:[#allocation5] sm:$0xff]
          %v4848 = vld [vmem:[#allocation5 + $0x8] sm:$0xf]
          %v4849 = vld [vmem:[#allocation5 + $0xc] sm:$0xff]
          %v4850 = vld [vmem:[#allocation5 + $0x14] sm:$0xf]
          %v4851 = vld [vmem:[#allocation5 + $0x18] sm:$0xff]
          %v4852 = vld [vmem:[#allocation5 + $0x20] sm:$0xf]
          %v4853 = vld [vmem:[#allocation5 + $0x24] sm:$0xff]
          %v4854 = vld [vmem:[#allocation5 + $0x2c] sm:$0xf]
          %v4855 = vld [vmem:[#allocation5 + $0x30] sm:$0xff]
          %v4856 = vld [vmem:[#allocation5 + $0x38] sm:$0xf]
          %v4857 = vld [vmem:[#allocation5 + $0x3c] sm:$0xff]
          %v4858 = vld [vmem:[#allocation5 + $0x44] sm:$0xf]
          %v4859 = vld [vmem:[#allocation5 + $0x48] sm:$0xff]
          %v4860 = vld [vmem:[#allocation5 + $0x50] sm:$0xf]
          %v4861 = vld [vmem:[#allocation5 + $0x54] sm:$0xff]
          %v4862 = vld [vmem:[#allocation5 + $0x5c] sm:$0xf]
          %v4863 = vld [vmem:[#allocation5 + $0x60] sm:$0xff]
          %v4864 = vld [vmem:[#allocation5 + $0x68] sm:$0xf]
          %v4865 = vld [vmem:[#allocation5 + $0x6c] sm:$0xff]
          %v4866 = vld [vmem:[#allocation5 + $0x74] sm:$0xf]
          %v4867 = vld [vmem:[#allocation5 + $0x78] sm:$0xff]
          %v4868 = vld [vmem:[#allocation5 + $0x80] sm:$0xf]
          %v4869 = vld [vmem:[#allocation5 + $0x84] sm:$0xff]
          %v4870 = vld [vmem:[#allocation5 + $0x8c] sm:$0xf]
          %v4871 = vld [vmem:[#allocation5 + $0x90] sm:$0xff]
          %v4872 = vld [vmem:[#allocation5 + $0x98] sm:$0xf]
          %v4873 = vld [vmem:[#allocation5 + $0x9c] sm:$0xff]
          %v4874 = vld [vmem:[#allocation5 + $0xa4] sm:$0xf]
          %v4875 = vld [vmem:[#allocation5 + $0xa8] sm:$0xff]
          %v4876 = vld [vmem:[#allocation5 + $0xb0] sm:$0xf]
          %v4877 = vld [vmem:[#allocation5 + $0xb4] sm:$0xff]
          %v4878 = vld [vmem:[#allocation5 + $0xbc] sm:$0xf]
          %v4879 = vld [vmem:[#allocation5 + $0xc0] sm:$0xff]
          %v4880 = vld [vmem:[#allocation5 + $0xc8] sm:$0xf]
          %v4881 = vld [vmem:[#allocation5 + $0xcc] sm:$0xff]
          %v4882 = vld [vmem:[#allocation5 + $0xd4] sm:$0xf]
          %v4883 = vld [vmem:[#allocation5 + $0xd8] sm:$0xff]
          %v4884 = vld [vmem:[#allocation5 + $0xe0] sm:$0xf]
          %v4885 = vld [vmem:[#allocation5 + $0xe4] sm:$0xff]
          %v4886 = vld [vmem:[#allocation5 + $0xec] sm:$0xf]
          %v4887 = vld [vmem:[#allocation5 + $0xf0] sm:$0xff]
          %v4888 = vld [vmem:[#allocation5 + $0xf8] sm:$0xf]
          %v4889 = vld [vmem:[#allocation5 + $0xfc] sm:$0xff]
          %v4890 = vld [vmem:[#allocation5 + $0x104] sm:$0xf]
          %v4891 = vld [vmem:[#allocation5 + $0x108] sm:$0xff]
          %v4892 = vld [vmem:[#allocation5 + $0x110] sm:$0xf]
          %v4893 = vld [vmem:[#allocation5 + $0x114] sm:$0xff]
          %v4894 = vld [vmem:[#allocation5 + $0x11c] sm:$0xf]
          %v4895 = vld [vmem:[#allocation5 + $0x120] sm:$0xff]
          %v4896 = vld [vmem:[#allocation5 + $0x128] sm:$0xf]
          %v4897 = vld [vmem:[#allocation5 + $0x12c] sm:$0xff]
          %v4898 = vld [vmem:[#allocation5 + $0x134] sm:$0xf]
          %v4899 = vld [vmem:[#allocation5 + $0x138] sm:$0xff]
          %v4900 = vld [vmem:[#allocation5 + $0x140] sm:$0xf]
          %v4901 = vld [vmem:[#allocation5 + $0x144] sm:$0xff]
          %v4902 = vld [vmem:[#allocation5 + $0x14c] sm:$0xf]
          %v4903 = vld [vmem:[#allocation5 + $0x150] sm:$0xff]
          %v4904 = vld [vmem:[#allocation5 + $0x158] sm:$0xf]
          %v4905 = vld [vmem:[#allocation5 + $0x15c] sm:$0xff]
          %v4906 = vld [vmem:[#allocation5 + $0x164] sm:$0xf]
          %v4907 = vld [vmem:[#allocation5 + $0x168] sm:$0xff]
          %v4908 = vld [vmem:[#allocation5 + $0x170] sm:$0xf]
          %v4909 = vld [vmem:[#allocation5 + $0x174] sm:$0xff]
          %v4910 = vld [vmem:[#allocation5 + $0x17c] sm:$0xf]
          %v4911 = vld [vmem:[#allocation5 + $0x180] sm:$0xff]
          %v4912 = vld [vmem:[#allocation5 + $0x188] sm:$0xf]
          %v4913 = vld [vmem:[#allocation5 + $0x18c] sm:$0xff]
          %v4914 = vld [vmem:[#allocation5 + $0x194] sm:$0xf]
          %v4915 = vld [vmem:[#allocation5 + $0x198] sm:$0xff]
          %v4916 = vld [vmem:[#allocation5 + $0x1a0] sm:$0xf]
          %v4917 = vld [vmem:[#allocation5 + $0x1a4] sm:$0xff]
          %v4918 = vld [vmem:[#allocation5 + $0x1ac] sm:$0xf]
          %v4919 = vld [vmem:[#allocation5 + $0x1b0] sm:$0xff]
          %v4920 = vld [vmem:[#allocation5 + $0x1b8] sm:$0xf]
          %v4921 = vld [vmem:[#allocation5 + $0x1bc] sm:$0xff]
          %v4922 = vld [vmem:[#allocation5 + $0x1c4] sm:$0xf]
          %v4923 = vld [vmem:[#allocation5 + $0x1c8] sm:$0xff]
          %v4924 = vld [vmem:[#allocation5 + $0x1d0] sm:$0xf]
          %v4925 = vld [vmem:[#allocation5 + $0x1d4] sm:$0xff]
          %v4926 = vld [vmem:[#allocation5 + $0x1dc] sm:$0xf]
          %v4927 = vld [vmem:[#allocation5 + $0x1e0] sm:$0xff]
          %v4928 = vld [vmem:[#allocation5 + $0x1e8] sm:$0xf]
          %v4929 = vld [vmem:[#allocation5 + $0x1ec] sm:$0xff]
          %v4930 = vld [vmem:[#allocation5 + $0x1f4] sm:$0xf]
          %v4931 = vld [vmem:[#allocation5 + $0x1f8] sm:$0xff]
          %v4932 = vld [vmem:[#allocation5 + $0x200] sm:$0xf]
          %v4933 = vld [vmem:[#allocation5 + $0x204] sm:$0xff]
          %v4934 = vld [vmem:[#allocation5 + $0x20c] sm:$0xf]
          %v4935 = vld [vmem:[#allocation5 + $0x210] sm:$0xff]
          %v4936 = vld [vmem:[#allocation5 + $0x218] sm:$0xf]
          %v4937 = vld [vmem:[#allocation5 + $0x21c] sm:$0xff]
          %v4938 = vld [vmem:[#allocation5 + $0x224] sm:$0xf]
          %v4939 = vld [vmem:[#allocation5 + $0x228] sm:$0xff]
          %v4940 = vld [vmem:[#allocation5 + $0x230] sm:$0xf]
          %v4941 = vld [vmem:[#allocation5 + $0x234] sm:$0xff]
          %v4942 = vld [vmem:[#allocation5 + $0x23c] sm:$0xf]
          %v4943 = vld [vmem:[#allocation5 + $0x240] sm:$0xff]
          %v4944 = vld [vmem:[#allocation5 + $0x248] sm:$0xf]
          %v4945 = vld [vmem:[#allocation5 + $0x24c] sm:$0xff]
          %v4946 = vld [vmem:[#allocation5 + $0x254] sm:$0xf]
          %v4947 = vld [vmem:[#allocation5 + $0x258] sm:$0xff]
          %v4948 = vld [vmem:[#allocation5 + $0x260] sm:$0xf]
          %v4949 = vld [vmem:[#allocation5 + $0x264] sm:$0xff]
          %v4950 = vld [vmem:[#allocation5 + $0x26c] sm:$0xf]
          %v4951 = vld [vmem:[#allocation5 + $0x270] sm:$0xff]
          %v4952 = vld [vmem:[#allocation5 + $0x278] sm:$0xf]
          %v4953 = vld [vmem:[#allocation5 + $0x27c] sm:$0xff]
          %v4954 = vld [vmem:[#allocation5 + $0x284] sm:$0xf]
          %v4955 = vld [vmem:[#allocation5 + $0x288] sm:$0xff]
          %v4956 = vld [vmem:[#allocation5 + $0x290] sm:$0xf]
          %v4957 = vld [vmem:[#allocation5 + $0x294] sm:$0xff]
          %v4958 = vld [vmem:[#allocation5 + $0x29c] sm:$0xf]
          %v4959 = vld [vmem:[#allocation5 + $0x2a0] sm:$0xff]
          %v4960 = vld [vmem:[#allocation5 + $0x2a8] sm:$0xf]
          %v4961 = vld [vmem:[#allocation5 + $0x2ac] sm:$0xff]
          %v4962 = vld [vmem:[#allocation5 + $0x2b4] sm:$0xf]
          %v4963 = vld [vmem:[#allocation5 + $0x2b8] sm:$0xff]
          %v4964 = vld [vmem:[#allocation5 + $0x2c0] sm:$0xf]
          %v4965 = vld [vmem:[#allocation5 + $0x2c4] sm:$0xff]
          %v4966 = vld [vmem:[#allocation5 + $0x2cc] sm:$0xf]
          %v4967 = vld [vmem:[#allocation5 + $0x2d0] sm:$0xff]
          %v4968 = vld [vmem:[#allocation5 + $0x2d8] sm:$0xf]
          %v4969 = vld [vmem:[#allocation5 + $0x2dc] sm:$0xff]
          %v4970 = vld [vmem:[#allocation5 + $0x2e4] sm:$0xf]
          %v4971 = vld [vmem:[#allocation5 + $0x2e8] sm:$0xff]
          %v4972 = vld [vmem:[#allocation5 + $0x2f0] sm:$0xf]
          %v4973 = vld [vmem:[#allocation5 + $0x2f4] sm:$0xff]
          %v4974 = vld [vmem:[#allocation5 + $0x2fc] sm:$0xf]
          %v4975 = vld [vmem:[#allocation5 + $0x300] sm:$0xff]
          %v4976 = vld [vmem:[#allocation5 + $0x308] sm:$0xf]
          %v4977 = vld [vmem:[#allocation5 + $0x30c] sm:$0xff]
          %v4978 = vld [vmem:[#allocation5 + $0x314] sm:$0xf]
          %v4979 = vld [vmem:[#allocation5 + $0x318] sm:$0xff]
          %v4980 = vld [vmem:[#allocation5 + $0x320] sm:$0xf]
          %v4981 = vld [vmem:[#allocation5 + $0x324] sm:$0xff]
          %v4982 = vld [vmem:[#allocation5 + $0x32c] sm:$0xf]
          %v4983 = vld [vmem:[#allocation5 + $0x330] sm:$0xff]
          %v4984 = vld [vmem:[#allocation5 + $0x338] sm:$0xf]
          %v4985 = vld [vmem:[#allocation5 + $0x33c] sm:$0xff]
          %v4986 = vld [vmem:[#allocation5 + $0x344] sm:$0xf]
          %v4987 = vld [vmem:[#allocation5 + $0x348] sm:$0xff]
          %v4988 = vld [vmem:[#allocation5 + $0x350] sm:$0xf]
          %v4989 = vld [vmem:[#allocation5 + $0x354] sm:$0xff]
          %v4990 = vld [vmem:[#allocation5 + $0x35c] sm:$0xf]
          %v4991 = vld [vmem:[#allocation5 + $0x360] sm:$0xff]
          %v4992 = vld [vmem:[#allocation5 + $0x368] sm:$0xf]
          %v4993 = vld [vmem:[#allocation5 + $0x36c] sm:$0xff]
          %v4994 = vld [vmem:[#allocation5 + $0x374] sm:$0xf]
          %v4995 = vld [vmem:[#allocation5 + $0x378] sm:$0xff]
          %v4996 = vld [vmem:[#allocation5 + $0x380] sm:$0xf]
          %v4997 = vld [vmem:[#allocation5 + $0x384] sm:$0xff]
          %v4998 = vld [vmem:[#allocation5 + $0x38c] sm:$0xf]
          %v4999 = vld [vmem:[#allocation5 + $0x390] sm:$0xff]
          %v5000 = vld [vmem:[#allocation5 + $0x398] sm:$0xf]
          %v5001 = vld [vmem:[#allocation5 + $0x39c] sm:$0xff]
          %v5002 = vld [vmem:[#allocation5 + $0x3a4] sm:$0xf]
          %v5003 = vld [vmem:[#allocation5 + $0x3a8] sm:$0xff]
          %v5004 = vld [vmem:[#allocation5 + $0x3b0] sm:$0xf]
          %v5005 = vld [vmem:[#allocation5 + $0x3b4] sm:$0xff]
          %v5006 = vld [vmem:[#allocation5 + $0x3bc] sm:$0xf]
          %v5007 = vld [vmem:[%s10] sm:$0x7]
          %v5009 = vlaneseq
          %v5010 = vshrl.u32 %v5009, 7
          %v5011 = vsub.s32 0, %v5010
          %v5012 = vrot.slane %v5007, %v5011
          %v5013 = vlaneseq
          %v5014 = vshrl.u32 %v5013, 7
          %v5015 = vsub.s32 1, %v5014
          %v5016 = vrot.slane %v5007, %v5015
          %v5017 = vlaneseq
          %v5018 = vshrl.u32 %v5017, 7
          %v5019 = vsub.s32 2, %v5018
          %v5020 = vrot.slane %v5007, %v5019
          %v5030 = vunpack.c.l.b16 %v4841
          %v5031 = vunpack.c.h.b16 %v4841
          %v5032 = vunpack.c.l.b16 %v4842
          %v5033 = vunpack.c.h.b16 %v4842
          %v5034 = vunpack.c.l.b16 %v4843
          %v5035 = vunpack.c.l.b16 %v4844
          %v5036 = vunpack.c.h.b16 %v4844
          %v5037 = vunpack.c.l.b16 %v4845
          %v5038 = vunpack.c.h.b16 %v4845
          %v5039 = vunpack.c.l.b16 %v4846
          %v5040 = vpack.c.b16 %v5035, %v5030
          %v5041 = vpack.c.b16 %v5036, %v5031
          %v5042 = vpack.c.b16 %v5037, %v5032
          %v5043 = vpack.c.b16 %v5038, %v5033
          %v5044 = vpack.c.b16 %v5039, %v5034
          %v5210 = vunpack.c.l.b16 %v4847
          %v5211 = vunpack.c.h.b16 %v4847
          %v5212 = vunpack.c.l.b16 %v4848
          %v5213 = vunpack.c.l.b16 %v4849
          %v5214 = vunpack.c.h.b16 %v4849
          %v5215 = vunpack.c.l.b16 %v4850
          %v5216 = vunpack.c.l.b16 %v4851
          %v5217 = vunpack.c.h.b16 %v4851
          %v5218 = vunpack.c.l.b16 %v4852
          %v5219 = vunpack.c.l.b16 %v4853
          %v5220 = vunpack.c.h.b16 %v4853
          %v5221 = vunpack.c.l.b16 %v4854
          %v5222 = vunpack.c.l.b16 %v4855
          %v5223 = vunpack.c.h.b16 %v4855
          %v5224 = vunpack.c.l.b16 %v4856
          %v5225 = vunpack.c.l.b16 %v4857
          %v5226 = vunpack.c.h.b16 %v4857
          %v5227 = vunpack.c.l.b16 %v4858
          %v5228 = vunpack.c.l.b16 %v4859
          %v5229 = vunpack.c.h.b16 %v4859
          %v5230 = vunpack.c.l.b16 %v4860
          %v5231 = vunpack.c.l.b16 %v4861
          %v5232 = vunpack.c.h.b16 %v4861
          %v5233 = vunpack.c.l.b16 %v4862
          %v5234 = vunpack.c.l.b16 %v4863
          %v5235 = vunpack.c.h.b16 %v4863
          %v5236 = vunpack.c.l.b16 %v4864
          %v5237 = vunpack.c.l.b16 %v4865
          %v5238 = vunpack.c.h.b16 %v4865
          %v5239 = vunpack.c.l.b16 %v4866
          %v5240 = vunpack.c.l.b16 %v4867
          %v5241 = vunpack.c.h.b16 %v4867
          %v5242 = vunpack.c.l.b16 %v4868
          %v5243 = vunpack.c.l.b16 %v4869
          %v5244 = vunpack.c.h.b16 %v4869
          %v5245 = vunpack.c.l.b16 %v4870
          %v5246 = vunpack.c.l.b16 %v4871
          %v5247 = vunpack.c.h.b16 %v4871
          %v5248 = vunpack.c.l.b16 %v4872
          %v5249 = vunpack.c.l.b16 %v4873
          %v5250 = vunpack.c.h.b16 %v4873
          %v5251 = vunpack.c.l.b16 %v4874
          %v5252 = vunpack.c.l.b16 %v4875
          %v5253 = vunpack.c.h.b16 %v4875
          %v5254 = vunpack.c.l.b16 %v4876
          %v5255 = vunpack.c.l.b16 %v4877
          %v5256 = vunpack.c.h.b16 %v4877
          %v5257 = vunpack.c.l.b16 %v4878
          %v5258 = vunpack.c.l.b16 %v4879
          %v5259 = vunpack.c.h.b16 %v4879
          %v5260 = vunpack.c.l.b16 %v4880
          %v5261 = vunpack.c.l.b16 %v4881
          %v5262 = vunpack.c.h.b16 %v4881
          %v5263 = vunpack.c.l.b16 %v4882
          %v5264 = vunpack.c.l.b16 %v4883
          %v5265 = vunpack.c.h.b16 %v4883
          %v5266 = vunpack.c.l.b16 %v4884
          %v5267 = vunpack.c.l.b16 %v4885
          %v5268 = vunpack.c.h.b16 %v4885
          %v5269 = vunpack.c.l.b16 %v4886
          %v5270 = vunpack.c.l.b16 %v4887
          %v5271 = vunpack.c.h.b16 %v4887
          %v5272 = vunpack.c.l.b16 %v4888
          %v5273 = vunpack.c.l.b16 %v4889
          %v5274 = vunpack.c.h.b16 %v4889
          %v5275 = vunpack.c.l.b16 %v4890
          %v5276 = vunpack.c.l.b16 %v4891
          %v5277 = vunpack.c.h.b16 %v4891
          %v5278 = vunpack.c.l.b16 %v4892
          %v5279 = vunpack.c.l.b16 %v4893
          %v5280 = vunpack.c.h.b16 %v4893
          %v5281 = vunpack.c.l.b16 %v4894
          %v5282 = vunpack.c.l.b16 %v4895
          %v5283 = vunpack.c.h.b16 %v4895
          %v5284 = vunpack.c.l.b16 %v4896
          %v5285 = vunpack.c.l.b16 %v4897
          %v5286 = vunpack.c.h.b16 %v4897
          %v5287 = vunpack.c.l.b16 %v4898
          %v5288 = vunpack.c.l.b16 %v4899
          %v5289 = vunpack.c.h.b16 %v4899
          %v5290 = vunpack.c.l.b16 %v4900
          %v5291 = vunpack.c.l.b16 %v4901
          %v5292 = vunpack.c.h.b16 %v4901
          %v5293 = vunpack.c.l.b16 %v4902
          %v5294 = vunpack.c.l.b16 %v4903
          %v5295 = vunpack.c.h.b16 %v4903
          %v5296 = vunpack.c.l.b16 %v4904
          %v5297 = vunpack.c.l.b16 %v4905
          %v5298 = vunpack.c.h.b16 %v4905
          %v5299 = vunpack.c.l.b16 %v4906
          %v5300 = vunpack.c.l.b16 %v4907
          %v5301 = vunpack.c.h.b16 %v4907
          %v5302 = vunpack.c.l.b16 %v4908
          %v5303 = vunpack.c.l.b16 %v4909
          %v5304 = vunpack.c.h.b16 %v4909
          %v5305 = vunpack.c.l.b16 %v4910
          %v5306 = vunpack.c.l.b16 %v4911
          %v5307 = vunpack.c.h.b16 %v4911
          %v5308 = vunpack.c.l.b16 %v4912
          %v5309 = vunpack.c.l.b16 %v4913
          %v5310 = vunpack.c.h.b16 %v4913
          %v5311 = vunpack.c.l.b16 %v4914
          %v5312 = vunpack.c.l.b16 %v4915
          %v5313 = vunpack.c.h.b16 %v4915
          %v5314 = vunpack.c.l.b16 %v4916
          %v5315 = vunpack.c.l.b16 %v4917
          %v5316 = vunpack.c.h.b16 %v4917
          %v5317 = vunpack.c.l.b16 %v4918
          %v5318 = vunpack.c.l.b16 %v4919
          %v5319 = vunpack.c.h.b16 %v4919
          %v5320 = vunpack.c.l.b16 %v4920
          %v5321 = vunpack.c.l.b16 %v4921
          %v5322 = vunpack.c.h.b16 %v4921
          %v5323 = vunpack.c.l.b16 %v4922
          %v5324 = vunpack.c.l.b16 %v4923
          %v5325 = vunpack.c.h.b16 %v4923
          %v5326 = vunpack.c.l.b16 %v4924
          %v5327 = vunpack.c.l.b16 %v4925
          %v5328 = vunpack.c.h.b16 %v4925
          %v5329 = vunpack.c.l.b16 %v4926
          %v5330 = vunpack.c.l.b16 %v4927
          %v5331 = vunpack.c.h.b16 %v4927
          %v5332 = vunpack.c.l.b16 %v4928
          %v5333 = vunpack.c.l.b16 %v4929
          %v5334 = vunpack.c.h.b16 %v4929
          %v5335 = vunpack.c.l.b16 %v4930
          %v5336 = vunpack.c.l.b16 %v4931
          %v5337 = vunpack.c.h.b16 %v4931
          %v5338 = vunpack.c.l.b16 %v4932
          %v5339 = vunpack.c.l.b16 %v4933
          %v5340 = vunpack.c.h.b16 %v4933
          %v5341 = vunpack.c.l.b16 %v4934
          %v5342 = vunpack.c.l.b16 %v4935
          %v5343 = vunpack.c.h.b16 %v4935
          %v5344 = vunpack.c.l.b16 %v4936
          %v5345 = vunpack.c.l.b16 %v4937
          %v5346 = vunpack.c.h.b16 %v4937
          %v5347 = vunpack.c.l.b16 %v4938
          %v5348 = vunpack.c.l.b16 %v4939
          %v5349 = vunpack.c.h.b16 %v4939
          %v5350 = vunpack.c.l.b16 %v4940
          %v5351 = vunpack.c.l.b16 %v4941
          %v5352 = vunpack.c.h.b16 %v4941
          %v5353 = vunpack.c.l.b16 %v4942
          %v5354 = vunpack.c.l.b16 %v4943
          %v5355 = vunpack.c.h.b16 %v4943
          %v5356 = vunpack.c.l.b16 %v4944
          %v5357 = vunpack.c.l.b16 %v4945
          %v5358 = vunpack.c.h.b16 %v4945
          %v5359 = vunpack.c.l.b16 %v4946
          %v5360 = vunpack.c.l.b16 %v4947
          %v5361 = vunpack.c.h.b16 %v4947
          %v5362 = vunpack.c.l.b16 %v4948
          %v5363 = vunpack.c.l.b16 %v4949
          %v5364 = vunpack.c.h.b16 %v4949
          %v5365 = vunpack.c.l.b16 %v4950
          %v5366 = vunpack.c.l.b16 %v4951
          %v5367 = vunpack.c.h.b16 %v4951
          %v5368 = vunpack.c.l.b16 %v4952
          %v5369 = vunpack.c.l.b16 %v4953
          %v5370 = vunpack.c.h.b16 %v4953
          %v5371 = vunpack.c.l.b16 %v4954
          %v5372 = vunpack.c.l.b16 %v4955
          %v5373 = vunpack.c.h.b16 %v4955
          %v5374 = vunpack.c.l.b16 %v4956
          %v5375 = vunpack.c.l.b16 %v4957
          %v5376 = vunpack.c.h.b16 %v4957
          %v5377 = vunpack.c.l.b16 %v4958
          %v5378 = vunpack.c.l.b16 %v4959
          %v5379 = vunpack.c.h.b16 %v4959
          %v5380 = vunpack.c.l.b16 %v4960
          %v5381 = vunpack.c.l.b16 %v4961
          %v5382 = vunpack.c.h.b16 %v4961
          %v5383 = vunpack.c.l.b16 %v4962
          %v5384 = vunpack.c.l.b16 %v4963
          %v5385 = vunpack.c.h.b16 %v4963
          %v5386 = vunpack.c.l.b16 %v4964
          %v5387 = vunpack.c.l.b16 %v4965
          %v5388 = vunpack.c.h.b16 %v4965
          %v5389 = vunpack.c.l.b16 %v4966
          %v5390 = vunpack.c.l.b16 %v4967
          %v5391 = vunpack.c.h.b16 %v4967
          %v5392 = vunpack.c.l.b16 %v4968
          %v5393 = vunpack.c.l.b16 %v4969
          %v5394 = vunpack.c.h.b16 %v4969
          %v5395 = vunpack.c.l.b16 %v4970
          %v5396 = vunpack.c.l.b16 %v4971
          %v5397 = vunpack.c.h.b16 %v4971
          %v5398 = vunpack.c.l.b16 %v4972
          %v5399 = vunpack.c.l.b16 %v4973
          %v5400 = vunpack.c.h.b16 %v4973
          %v5401 = vunpack.c.l.b16 %v4974
          %v5402 = vunpack.c.l.b16 %v4975
          %v5403 = vunpack.c.h.b16 %v4975
          %v5404 = vunpack.c.l.b16 %v4976
          %v5405 = vunpack.c.l.b16 %v4977
          %v5406 = vunpack.c.h.b16 %v4977
          %v5407 = vunpack.c.l.b16 %v4978
          %v5408 = vunpack.c.l.b16 %v4979
          %v5409 = vunpack.c.h.b16 %v4979
          %v5410 = vunpack.c.l.b16 %v4980
          %v5411 = vunpack.c.l.b16 %v4981
          %v5412 = vunpack.c.h.b16 %v4981
          %v5413 = vunpack.c.l.b16 %v4982
          %v5414 = vunpack.c.l.b16 %v4983
          %v5415 = vunpack.c.h.b16 %v4983
          %v5416 = vunpack.c.l.b16 %v4984
          %v5417 = vunpack.c.l.b16 %v4985
          %v5418 = vunpack.c.h.b16 %v4985
          %v5419 = vunpack.c.l.b16 %v4986
          %v5420 = vunpack.c.l.b16 %v4987
          %v5421 = vunpack.c.h.b16 %v4987
          %v5422 = vunpack.c.l.b16 %v4988
          %v5423 = vunpack.c.l.b16 %v4989
          %v5424 = vunpack.c.h.b16 %v4989
          %v5425 = vunpack.c.l.b16 %v4990
          %v5426 = vunpack.c.l.b16 %v4991
          %v5427 = vunpack.c.h.b16 %v4991
          %v5428 = vunpack.c.l.b16 %v4992
          %v5429 = vunpack.c.l.b16 %v4993
          %v5430 = vunpack.c.h.b16 %v4993
          %v5431 = vunpack.c.l.b16 %v4994
          %v5432 = vunpack.c.l.b16 %v4995
          %v5433 = vunpack.c.h.b16 %v4995
          %v5434 = vunpack.c.l.b16 %v4996
          %v5435 = vunpack.c.l.b16 %v4997
          %v5436 = vunpack.c.h.b16 %v4997
          %v5437 = vunpack.c.l.b16 %v4998
          %v5438 = vunpack.c.l.b16 %v4999
          %v5439 = vunpack.c.h.b16 %v4999
          %v5440 = vunpack.c.l.b16 %v5000
          %v5441 = vunpack.c.l.b16 %v5001
          %v5442 = vunpack.c.h.b16 %v5001
          %v5443 = vunpack.c.l.b16 %v5002
          %v5444 = vunpack.c.l.b16 %v5003
          %v5445 = vunpack.c.h.b16 %v5003
          %v5446 = vunpack.c.l.b16 %v5004
          %v5447 = vunpack.c.l.b16 %v5005
          %v5448 = vunpack.c.h.b16 %v5005
          %v5449 = vunpack.c.l.b16 %v5006
          %v5450 = vpack.c.b16 %v5213, %v5210
          %v5451 = vpack.c.b16 %v5214, %v5211
          %v5452 = vpack.c.b16 %v5215, %v5212
          %v5453 = vpack.c.b16 %v5219, %v5216
          %v5454 = vpack.c.b16 %v5220, %v5217
          %v5455 = vpack.c.b16 %v5221, %v5218
          %v5456 = vpack.c.b16 %v5225, %v5222
          %v5457 = vpack.c.b16 %v5226, %v5223
          %v5458 = vpack.c.b16 %v5227, %v5224
          %v5459 = vpack.c.b16 %v5231, %v5228
          %v5460 = vpack.c.b16 %v5232, %v5229
          %v5461 = vpack.c.b16 %v5233, %v5230
          %v5462 = vpack.c.b16 %v5237, %v5234
          %v5463 = vpack.c.b16 %v5238, %v5235
          %v5464 = vpack.c.b16 %v5239, %v5236
          %v5465 = vpack.c.b16 %v5243, %v5240
          %v5466 = vpack.c.b16 %v5244, %v5241
          %v5467 = vpack.c.b16 %v5245, %v5242
          %v5468 = vpack.c.b16 %v5249, %v5246
          %v5469 = vpack.c.b16 %v5250, %v5247
          %v5470 = vpack.c.b16 %v5251, %v5248
          %v5471 = vpack.c.b16 %v5255, %v5252
          %v5472 = vpack.c.b16 %v5256, %v5253
          %v5473 = vpack.c.b16 %v5257, %v5254
          %v5474 = vpack.c.b16 %v5261, %v5258
          %v5475 = vpack.c.b16 %v5262, %v5259
          %v5476 = vpack.c.b16 %v5263, %v5260
          %v5477 = vpack.c.b16 %v5267, %v5264
          %v5478 = vpack.c.b16 %v5268, %v5265
          %v5479 = vpack.c.b16 %v5269, %v5266
          %v5480 = vpack.c.b16 %v5273, %v5270
          %v5481 = vpack.c.b16 %v5274, %v5271
          %v5482 = vpack.c.b16 %v5275, %v5272
          %v5483 = vpack.c.b16 %v5279, %v5276
          %v5484 = vpack.c.b16 %v5280, %v5277
          %v5485 = vpack.c.b16 %v5281, %v5278
          %v5486 = vpack.c.b16 %v5285, %v5282
          %v5487 = vpack.c.b16 %v5286, %v5283
          %v5488 = vpack.c.b16 %v5287, %v5284
          %v5489 = vpack.c.b16 %v5291, %v5288
          %v5490 = vpack.c.b16 %v5292, %v5289
          %v5491 = vpack.c.b16 %v5293, %v5290
          %v5492 = vpack.c.b16 %v5297, %v5294
          %v5493 = vpack.c.b16 %v5298, %v5295
          %v5494 = vpack.c.b16 %v5299, %v5296
          %v5495 = vpack.c.b16 %v5303, %v5300
          %v5496 = vpack.c.b16 %v5304, %v5301
          %v5497 = vpack.c.b16 %v5305, %v5302
          %v5498 = vpack.c.b16 %v5309, %v5306
          %v5499 = vpack.c.b16 %v5310, %v5307
          %v5500 = vpack.c.b16 %v5311, %v5308
          %v5501 = vpack.c.b16 %v5315, %v5312
          %v5502 = vpack.c.b16 %v5316, %v5313
          %v5503 = vpack.c.b16 %v5317, %v5314
          %v5504 = vpack.c.b16 %v5321, %v5318
          %v5505 = vpack.c.b16 %v5322, %v5319
          %v5506 = vpack.c.b16 %v5323, %v5320
          %v5507 = vpack.c.b16 %v5327, %v5324
          %v5508 = vpack.c.b16 %v5328, %v5325
          %v5509 = vpack.c.b16 %v5329, %v5326
          %v5510 = vpack.c.b16 %v5333, %v5330
          %v5511 = vpack.c.b16 %v5334, %v5331
          %v5512 = vpack.c.b16 %v5335, %v5332
          %v5513 = vpack.c.b16 %v5339, %v5336
          %v5514 = vpack.c.b16 %v5340, %v5337
          %v5515 = vpack.c.b16 %v5341, %v5338
          %v5516 = vpack.c.b16 %v5345, %v5342
          %v5517 = vpack.c.b16 %v5346, %v5343
          %v5518 = vpack.c.b16 %v5347, %v5344
          %v5519 = vpack.c.b16 %v5351, %v5348
          %v5520 = vpack.c.b16 %v5352, %v5349
          %v5521 = vpack.c.b16 %v5353, %v5350
          %v5522 = vpack.c.b16 %v5357, %v5354
          %v5523 = vpack.c.b16 %v5358, %v5355
          %v5524 = vpack.c.b16 %v5359, %v5356
          %v5525 = vpack.c.b16 %v5363, %v5360
          %v5526 = vpack.c.b16 %v5364, %v5361
          %v5527 = vpack.c.b16 %v5365, %v5362
          %v5528 = vpack.c.b16 %v5369, %v5366
          %v5529 = vpack.c.b16 %v5370, %v5367
          %v5530 = vpack.c.b16 %v5371, %v5368
          %v5531 = vpack.c.b16 %v5375, %v5372
          %v5532 = vpack.c.b16 %v5376, %v5373
          %v5533 = vpack.c.b16 %v5377, %v5374
          %v5534 = vpack.c.b16 %v5381, %v5378
          %v5535 = vpack.c.b16 %v5382, %v5379
          %v5536 = vpack.c.b16 %v5383, %v5380
          %v5537 = vpack.c.b16 %v5387, %v5384
          %v5538 = vpack.c.b16 %v5388, %v5385
          %v5539 = vpack.c.b16 %v5389, %v5386
          %v5540 = vpack.c.b16 %v5393, %v5390
          %v5541 = vpack.c.b16 %v5394, %v5391
          %v5542 = vpack.c.b16 %v5395, %v5392
          %v5543 = vpack.c.b16 %v5399, %v5396
          %v5544 = vpack.c.b16 %v5400, %v5397
          %v5545 = vpack.c.b16 %v5401, %v5398
          %v5546 = vpack.c.b16 %v5405, %v5402
          %v5547 = vpack.c.b16 %v5406, %v5403
          %v5548 = vpack.c.b16 %v5407, %v5404
          %v5549 = vpack.c.b16 %v5411, %v5408
          %v5550 = vpack.c.b16 %v5412, %v5409
          %v5551 = vpack.c.b16 %v5413, %v5410
          %v5552 = vpack.c.b16 %v5417, %v5414
          %v5553 = vpack.c.b16 %v5418, %v5415
          %v5554 = vpack.c.b16 %v5419, %v5416
          %v5555 = vpack.c.b16 %v5423, %v5420
          %v5556 = vpack.c.b16 %v5424, %v5421
          %v5557 = vpack.c.b16 %v5425, %v5422
          %v5558 = vpack.c.b16 %v5429, %v5426
          %v5559 = vpack.c.b16 %v5430, %v5427
          %v5560 = vpack.c.b16 %v5431, %v5428
          %v5561 = vpack.c.b16 %v5435, %v5432
          %v5562 = vpack.c.b16 %v5436, %v5433
          %v5563 = vpack.c.b16 %v5437, %v5434
          %v5564 = vpack.c.b16 %v5441, %v5438
          %v5565 = vpack.c.b16 %v5442, %v5439
          %v5566 = vpack.c.b16 %v5443, %v5440
          %v5567 = vpack.c.b16 %v5447, %v5444
          %v5568 = vpack.c.b16 %v5448, %v5445
          %v5569 = vpack.c.b16 %v5449, %v5446
          %5690 = vmatprep.subr.bf16.mxu0 %v5451
          %5691 = vmatpush1.bf16.msra.mxu0 %v5450
          %5692 = vmatprep.subr.bf16.mxu0 %v5454
          %5693 = vmatpush1.bf16.msra.mxu0 %v5453
          %5694 = vmatprep.subr.bf16.mxu0 %v5457
          %5695 = vmatpush1.bf16.msra.mxu0 %v5456
          %5696 = vmatprep.subr.bf16.mxu0 %v5460
          %5697 = vmatpush1.bf16.msra.mxu0 %v5459
          %5698 = vmatprep.subr.bf16.mxu0 %v5463
          %5699 = vmatpush1.bf16.msra.mxu0 %v5462
          %5700 = vmatprep.subr.bf16.mxu0 %v5466
          %5701 = vmatpush1.bf16.msra.mxu0 %v5465
          %5702 = vmatprep.subr.bf16.mxu0 %v5469
          %5703 = vmatpush1.bf16.msra.mxu0 %v5468
          %5704 = vmatprep.subr.bf16.mxu0 %v5472
          %5705 = vmatpush1.bf16.msra.mxu0 %v5471
          %5706 = vmatprep.subr.bf16.mxu0 %v5475
          %5707 = vmatpush1.bf16.msra.mxu0 %v5474
          %5708 = vmatprep.subr.bf16.mxu0 %v5478
          %5709 = vmatpush1.bf16.msra.mxu0 %v5477
          %5710 = vmatprep.subr.bf16.mxu0 %v5481
          %5711 = vmatpush1.bf16.msra.mxu0 %v5480
          %5712 = vmatprep.subr.bf16.mxu0 %v5484
          %5713 = vmatpush1.bf16.msra.mxu0 %v5483
          %5714 = vmatprep.subr.bf16.mxu0 %v5487
          %5715 = vmatpush1.bf16.msra.mxu0 %v5486
          %5716 = vmatprep.subr.bf16.mxu0 %v5490
          %5717 = vmatpush1.bf16.msra.mxu0 %v5489
          %5718 = vmatprep.subr.bf16.mxu0 %v5493
          %5719 = vmatpush1.bf16.msra.mxu0 %v5492
          %5720 = vmatprep.subr.bf16.mxu0 %v5496
          %5721 = vmatpush1.bf16.msra.mxu0 %v5495
          %5722 = vmatprep.mubr.bf16.mxu0 %v5041
          %5723 = vmatmul.mubr.bf16.gmra.mrb[0].mxu0 %v5040
          %v5724 = vpop.f32.mrb[0].mxu0
          %v5725 = vadd.f32 %v5012, %v5724
          %v5726 = vpop.f32.mrb[0].mxu0
          %v5727 = vadd.f32 %v5016, %v5726
          %v5728 = vpop.f32.mrb[0].mxu0
          %v5729 = vadd.f32 %v5012, %v5728
          %v5730 = vpop.f32.mrb[0].mxu0
          %v5731 = vadd.f32 %v5016, %v5730
          %5732 = vdwg.mxu0
          %5733 = vmatprep.subr.bf16.mxu0 %v5499
          %5734 = vmatpush1.bf16.msra.mxu0 %v5498
          %5735 = vmatprep.subr.bf16.mxu0 %v5502
          %5736 = vmatpush1.bf16.msra.mxu0 %v5501
          %5737 = vmatprep.subr.bf16.mxu0 %v5505
          %5738 = vmatpush1.bf16.msra.mxu0 %v5504
          %5739 = vmatprep.subr.bf16.mxu0 %v5508
          %5740 = vmatpush1.bf16.msra.mxu0 %v5507
          %5741 = vmatprep.subr.bf16.mxu0 %v5511
          %5742 = vmatpush1.bf16.msra.mxu0 %v5510
          %5743 = vmatprep.subr.bf16.mxu0 %v5514
          %5744 = vmatpush1.bf16.msra.mxu0 %v5513
          %5745 = vmatprep.subr.bf16.mxu0 %v5517
          %5746 = vmatpush1.bf16.msra.mxu0 %v5516
          %5747 = vmatprep.subr.bf16.mxu0 %v5520
          %5748 = vmatpush1.bf16.msra.mxu0 %v5519
          %5749 = vmatprep.subr.bf16.mxu0 %v5523
          %5750 = vmatpush1.bf16.msra.mxu0 %v5522
          %5751 = vmatprep.subr.bf16.mxu0 %v5526
          %5752 = vmatpush1.bf16.msra.mxu0 %v5525
          %5753 = vmatprep.subr.bf16.mxu0 %v5529
          %5754 = vmatpush1.bf16.msra.mxu0 %v5528
          %5755 = vmatprep.subr.bf16.mxu0 %v5532
          %5756 = vmatpush1.bf16.msra.mxu0 %v5531
          %5757 = vmatprep.subr.bf16.mxu0 %v5535
          %5758 = vmatpush1.bf16.msra.mxu0 %v5534
          %5759 = vmatprep.subr.bf16.mxu0 %v5538
          %5760 = vmatpush1.bf16.msra.mxu0 %v5537
          %5761 = vmatprep.subr.bf16.mxu0 %v5541
          %5762 = vmatpush1.bf16.msra.mxu0 %v5540
          %5763 = vmatprep.subr.bf16.mxu0 %v5544
          %5764 = vmatpush1.bf16.msra.mxu0 %v5543
          %5765 = vmatprep.mubr.bf16.mxu0 %v5043
          %5766 = vmatmul.mubr.bf16.gmra.mrb[0].mxu0 %v5042
          %v5767 = vpop.f32.mrb[0].mxu0
          %v5768 = vadd.f32 %v5725, %v5767
          %v5769 = vpop.f32.mrb[0].mxu0
          %v5770 = vadd.f32 %v5727, %v5769
          %v5771 = vpop.f32.mrb[0].mxu0
          %v5772 = vadd.f32 %v5729, %v5771
          %v5773 = vpop.f32.mrb[0].mxu0
          %v5774 = vadd.f32 %v5731, %v5773
          %5775 = vdwg.mxu0
          %5776 = vmatprep.subr.bf16.mxu0 %v5547
          %5777 = vmatpush1.bf16.msra.mxu0 %v5546
          %5778 = vmatprep.subr.bf16.mxu0 %v5550
          %5779 = vmatpush1.bf16.msra.mxu0 %v5549
          %5780 = vmatprep.subr.bf16.mxu0 %v5553
          %5781 = vmatpush1.bf16.msra.mxu0 %v5552
          %5782 = vmatprep.subr.bf16.mxu0 %v5556
          %5783 = vmatpush1.bf16.msra.mxu0 %v5555
          %5784 = vmatprep.subr.bf16.mxu0 %v5559
          %5785 = vmatpush1.bf16.msra.mxu0 %v5558
          %5786 = vmatprep.subr.bf16.mxu0 %v5562
          %5787 = vmatpush1.bf16.msra.mxu0 %v5561
          %5788 = vmatprep.subr.bf16.mxu0 %v5565
          %5789 = vmatpush1.bf16.msra.mxu0 %v5564
          %5790 = vmatprep.subr.bf16.mxu0 %v5568
          %5791 = vmatpush1.bf16.msra.mxu0 %v5567
          %5792 = vmatprep.subr.bf16.mxu0 0
          %5793 = vmatpush1.bf16.msra.mxu0 0
          %5794 = vmatprep.subr.bf16.mxu0 0
          %5795 = vmatpush1.bf16.msra.mxu0 0
          %5796 = vmatprep.subr.bf16.mxu0 0
          %5797 = vmatpush1.bf16.msra.mxu0 0
          %5798 = vmatprep.subr.bf16.mxu0 0
          %5799 = vmatpush1.bf16.msra.mxu0 0
          %5800 = vmatprep.subr.bf16.mxu0 0
          %5801 = vmatpush1.bf16.msra.mxu0 0
          %5802 = vmatprep.subr.bf16.mxu0 0
          %5803 = vmatpush1.bf16.msra.mxu0 0
          %5804 = vmatprep.subr.bf16.mxu0 0
          %5805 = vmatpush1.bf16.msra.mxu0 0
          %5806 = vmatprep.subr.bf16.mxu0 0
          %5807 = vmatpush1.bf16.msra.mxu0 0
          %5808 = vmatprep.mubr.bf16.mxu0 0
          %5809 = vmatmul.mubr.bf16.gmra.mrb[0].mxu0 %v5044
          %v5810 = vpop.f32.mrb[0].mxu0
          %v5811 = vadd.f32 %v5768, %v5810
          %v5812 = vpop.f32.mrb[0].mxu0
          %v5813 = vadd.f32 %v5770, %v5812
          %v5814 = vpop.f32.mrb[0].mxu0
          %v5815 = vadd.f32 %v5772, %v5814
          %v5816 = vpop.f32.mrb[0].mxu0
          %v5817 = vadd.f32 %v5774, %v5816
          %5818 = vdwg.mxu0
          %5819 = vmatprep.subr.bf16.mxu0 0
          %5820 = vmatpush1.bf16.msra.mxu0 %v5452
          %5821 = vmatprep.subr.bf16.mxu0 0
          %5822 = vmatpush1.bf16.msra.mxu0 %v5455
          %5823 = vmatprep.subr.bf16.mxu0 0
          %5824 = vmatpush1.bf16.msra.mxu0 %v5458
          %5825 = vmatprep.subr.bf16.mxu0 0
          %5826 = vmatpush1.bf16.msra.mxu0 %v5461
          %5827 = vmatprep.subr.bf16.mxu0 0
          %5828 = vmatpush1.bf16.msra.mxu0 %v5464
          %5829 = vmatprep.subr.bf16.mxu0 0
          %5830 = vmatpush1.bf16.msra.mxu0 %v5467
          %5831 = vmatprep.subr.bf16.mxu0 0
          %5832 = vmatpush1.bf16.msra.mxu0 %v5470
          %5833 = vmatprep.subr.bf16.mxu0 0
          %5834 = vmatpush1.bf16.msra.mxu0 %v5473
          %5835 = vmatprep.subr.bf16.mxu0 0
          %5836 = vmatpush1.bf16.msra.mxu0 %v5476
          %5837 = vmatprep.subr.bf16.mxu0 0
          %5838 = vmatpush1.bf16.msra.mxu0 %v5479
          %5839 = vmatprep.subr.bf16.mxu0 0
          %5840 = vmatpush1.bf16.msra.mxu0 %v5482
          %5841 = vmatprep.subr.bf16.mxu0 0
          %5842 = vmatpush1.bf16.msra.mxu0 %v5485
          %5843 = vmatprep.subr.bf16.mxu0 0
          %5844 = vmatpush1.bf16.msra.mxu0 %v5488
          %5845 = vmatprep.subr.bf16.mxu0 0
          %5846 = vmatpush1.bf16.msra.mxu0 %v5491
          %5847 = vmatprep.subr.bf16.mxu0 0
          %5848 = vmatpush1.bf16.msra.mxu0 %v5494
          %5849 = vmatprep.subr.bf16.mxu0 0
          %5850 = vmatpush1.bf16.msra.mxu0 %v5497
          %5851 = vmatprep.mubr.bf16.mxu0 %v5041
          %5852 = vmatmul.mubr.bf16.gmra.mrb[0].mxu0 %v5040
          %v5853 = vpop.f32.mrb[0].mxu0
          %v5854 = vadd.f32 %v5020, %v5853
          %v5855 = vpop.f32.mrb[0].mxu0
          %v5856 = vpop.f32.mrb[0].mxu0
          %v5857 = vadd.f32 %v5020, %v5856
          %v5858 = vpop.f32.mrb[0].mxu0
          %5859 = vdwg.mxu0
          %5860 = vmatprep.subr.bf16.mxu0 0
          %5861 = vmatpush1.bf16.msra.mxu0 %v5500
          %5862 = vmatprep.subr.bf16.mxu0 0
          %5863 = vmatpush1.bf16.msra.mxu0 %v5503
          %5864 = vmatprep.subr.bf16.mxu0 0
          %5865 = vmatpush1.bf16.msra.mxu0 %v5506
          %5866 = vmatprep.subr.bf16.mxu0 0
          %5867 = vmatpush1.bf16.msra.mxu0 %v5509
          %5868 = vmatprep.subr.bf16.mxu0 0
          %5869 = vmatpush1.bf16.msra.mxu0 %v5512
          %5870 = vmatprep.subr.bf16.mxu0 0
          %5871 = vmatpush1.bf16.msra.mxu0 %v5515
          %5872 = vmatprep.subr.bf16.mxu0 0
          %5873 = vmatpush1.bf16.msra.mxu0 %v5518
          %5874 = vmatprep.subr.bf16.mxu0 0
          %5875 = vmatpush1.bf16.msra.mxu0 %v5521
          %5876 = vmatprep.subr.bf16.mxu0 0
          %5877 = vmatpush1.bf16.msra.mxu0 %v5524
          %5878 = vmatprep.subr.bf16.mxu0 0
          %5879 = vmatpush1.bf16.msra.mxu0 %v5527
          %5880 = vmatprep.subr.bf16.mxu0 0
          %5881 = vmatpush1.bf16.msra.mxu0 %v5530
          %5882 = vmatprep.subr.bf16.mxu0 0
          %5883 = vmatpush1.bf16.msra.mxu0 %v5533
          %5884 = vmatprep.subr.bf16.mxu0 0
          %5885 = vmatpush1.bf16.msra.mxu0 %v5536
          %5886 = vmatprep.subr.bf16.mxu0 0
          %5887 = vmatpush1.bf16.msra.mxu0 %v5539
          %5888 = vmatprep.subr.bf16.mxu0 0
          %5889 = vmatpush1.bf16.msra.mxu0 %v5542
          %5890 = vmatprep.subr.bf16.mxu0 0
          %5891 = vmatpush1.bf16.msra.mxu0 %v5545
          %5892 = vmatprep.mubr.bf16.mxu0 %v5043
          %5893 = vmatmul.mubr.bf16.gmra.mrb[0].mxu0 %v5042
          %v5894 = vpop.f32.mrb[0].mxu0
          %v5895 = vadd.f32 %v5854, %v5894
          %v5896 = vpop.f32.mrb[0].mxu0
          %v5897 = vpop.f32.mrb[0].mxu0
          %v5898 = vadd.f32 %v5857, %v5897
          %v5899 = vpop.f32.mrb[0].mxu0
          %5900 = vdwg.mxu0
          %5901 = vmatprep.subr.bf16.mxu0 0
          %5902 = vmatpush1.bf16.msra.mxu0 %v5548
          %5903 = vmatprep.subr.bf16.mxu0 0
          %5904 = vmatpush1.bf16.msra.mxu0 %v5551
          %5905 = vmatprep.subr.bf16.mxu0 0
          %5906 = vmatpush1.bf16.msra.mxu0 %v5554
          %5907 = vmatprep.subr.bf16.mxu0 0
          %5908 = vmatpush1.bf16.msra.mxu0 %v5557
          %5909 = vmatprep.subr.bf16.mxu0 0
          %5910 = vmatpush1.bf16.msra.mxu0 %v5560
          %5911 = vmatprep.subr.bf16.mxu0 0
          %5912 = vmatpush1.bf16.msra.mxu0 %v5563
          %5913 = vmatprep.subr.bf16.mxu0 0
          %5914 = vmatpush1.bf16.msra.mxu0 %v5566
          %5915 = vmatprep.subr.bf16.mxu0 0
          %5916 = vmatpush1.bf16.msra.mxu0 %v5569
          %5917 = vmatprep.subr.bf16.mxu0 0
          %5918 = vmatpush1.bf16.msra.mxu0 0
          %5919 = vmatprep.subr.bf16.mxu0 0
          %5920 = vmatpush1.bf16.msra.mxu0 0
          %5921 = vmatprep.subr.bf16.mxu0 0
          %5922 = vmatpush1.bf16.msra.mxu0 0
          %5923 = vmatprep.subr.bf16.mxu0 0
          %5924 = vmatpush1.bf16.msra.mxu0 0
          %5925 = vmatprep.subr.bf16.mxu0 0
          %5926 = vmatpush1.bf16.msra.mxu0 0
          %5927 = vmatprep.subr.bf16.mxu0 0
          %5928 = vmatpush1.bf16.msra.mxu0 0
          %5929 = vmatprep.subr.bf16.mxu0 0
          %5930 = vmatpush1.bf16.msra.mxu0 0
          %5931 = vmatprep.subr.bf16.mxu0 0
          %5932 = vmatpush1.bf16.msra.mxu0 0
          %5933 = vmatprep.mubr.bf16.mxu0 0
          %5934 = vmatmul.mubr.bf16.gmra.mrb[0].mxu0 %v5044
          %v5935 = vpop.f32.mrb[0].mxu0
          %v5936 = vadd.f32 %v5895, %v5935
          %v5937 = vpop.f32.mrb[0].mxu0
          %v5938 = vpop.f32.mrb[0].mxu0
          %v5939 = vadd.f32 %v5898, %v5938
          %v5940 = vpop.f32.mrb[0].mxu0
          %5941 = vdwg.mxu0
          %v5942 = vmax.f32 %v5811, %v5813
          %5943 = vmax.xlane.f32.xlu0 %v5942
          %v5944 = vpop.xlane.xlu0 %5943
          %v5945 = vmax.f32 %v5815, %v5817
          %5946 = vmax.xlane.f32.xlu0 %v5945
          %v5947 = vpop.xlane.xlu0 %5946
          %v5948 = vsub.f32 %v5811, %v5944
          %v5949 = vsub.f32 %v5813, %v5944
          %v5950 = vsub.f32 %v5815, %v5947
          %v5951 = vsub.f32 %v5817, %v5947
          %v5952 = vmul.f32 %v5948, 1.442695
          %v5953 = vpow.pop %v5952
          %v5954 = vmul.f32 %v5949, 1.442695
          %v5955 = vpow.pop %v5954
          %v5956 = vmul.f32 %v5950, 1.442695
          %v5957 = vpow.pop %v5956
          %v5958 = vmul.f32 %v5951, 1.442695
          %v5959 = vpow.pop %v5958
          %v5960 = vadd.f32 %v5953, %v5955
          %5961 = vadd.xlane.f32.xlu0 %v5960
          %v5962 = vpop.xlane.xlu0 %5961
          %v5963 = vadd.f32 %v5957, %v5959
          %5964 = vadd.xlane.f32.xlu0 %v5963
          %v5965 = vpop.xlane.xlu0 %5964
          %v5966 = vrcp.pop %v5962
          %v5967 = vrcp.pop %v5965
          %v5968 = vmul.f32 %v5953, %v5966
          %v5969 = vmul.f32 %v5955, %v5966
          %v5970 = vmul.f32 %v5957, %v5967
          %v5971 = vmul.f32 %v5959, %v5967
          %v5972 = vadd.f32 %v5968, 0.5
          %v5973 = vadd.f32 %v5970, 0.5
          %v5974 = vmul.f32 %v5972, %v5936
          %v5975 = vmul.f32 %v5973, %v5939
          %v5976 = vmul.f32 %v5969, %v4839
          %v5977 = vmul.f32 %v5971, %v4840
          %v5978 = vadd.f32 %v5974, %v5976
          %v5979 = vadd.f32 %v5975, %v5977
          %v5980 = vmin.f32 %v5978, 20.0
          %v5981 = vmin.f32 %v5979, 20.0
          %v5982 = vmul.f32 %v5980, 1.442695
          %v5983 = vpow.pop %v5982
          %v5984 = vmul.f32 %v5981, 1.442695
          %v5985 = vpow.pop %v5984
          %v5986 = vadd.f32 %v5983, 2.0
          %v5987 = vadd.f32 %v5985, 2.0
          %v5988 = vmul.f32 %v5983, %v5986
          %v5989 = vmul.f32 %v5985, %v5987
          %v5990 = vmul.f32 %v5978, %v5988
          %v5991 = vmul.f32 %v5979, %v5989
          %v5992 = vadd.f32 %v5988, 2.0
          %v5993 = vadd.f32 %v5989, 2.0
          %v5994 = vrcp.pop %v5992
          %v5995 = vrcp.pop %v5993
          %v5996 = vmul.f32 %v5990, %v5994
          %v5997 = vmul.f32 %v5991, %v5995
          %v5998 = vld [vmem:[#allocation2 + $0x2] sm:$0x1]
          %v5999 = vmul.f32 %v5998, 0.5
          %v6000 = vld [vmem:[#allocation2 + $0x3] sm:$0x1]
          %v6001 = vmul.f32 %v6000, 0.5
          %v6002 = vmul.f32 %v5999, %v5999
          %v6003 = vsub.f32 %v6001, %v6002
          %v6004 = vmax.f32 %v6003, 0.0
          %v6005 = vlaneseq
          %v6006 = vshrl.u32 %v6005, 7
          %v6007 = vsub.s32 0, %v6006
          %v6008 = vrot.slane %v5999, %v6007
          %v6009 = vsub.f32 %v5996, %v6008
          %v6010 = vsub.f32 %v5997, %v6008
          %v6011 = vadd.f32 %v6004, 1e-05
          %v6012 = vrsqrt.pop %v6011
          %v6013 = vlaneseq
          %v6014 = vshrl.u32 %v6013, 7
          %v6015 = vsub.s32 0, %v6014
          %v6016 = vrot.slane %v6012, %v6015
          %v6017 = vmul.f32 %v6009, %v6016
          %v6018 = vmul.f32 %v6010, %v6016
          %v6019 = vpack.c.bf16 %v6018, %v6017
          %v6020 = vld [vmem:[%s11] sm:$0xf]
          %v6021 = vld [vmem:[%s11 + $0x4] sm:$0xf]
          %v6022 = vld [vmem:[%s11 + $0x8] sm:$0xf]
          %v6023 = vld [vmem:[%s11 + $0xc] sm:$0xf]
          %v6024 = vld [vmem:[%s11 + $0x10] sm:$0xf]
          %v6025 = vld [vmem:[%s11 + $0x14] sm:$0xf]
          %v6026 = vld [vmem:[%s11 + $0x18] sm:$0xf]
          %v6027 = vld [vmem:[%s11 + $0x1c] sm:$0xf]
          %v6028 = vld [vmem:[%s11 + $0x20] sm:$0xf]
          %v6029 = vld [vmem:[%s11 + $0x24] sm:$0xf]
          %v6030 = vld [vmem:[%s11 + $0x28] sm:$0xf]
          %v6031 = vld [vmem:[%s11 + $0x2c] sm:$0xf]
          %v6032 = vld [vmem:[%s11 + $0x30] sm:$0xf]
          %v6033 = vld [vmem:[%s11 + $0x34] sm:$0xf]
          %v6034 = vld [vmem:[%s11 + $0x38] sm:$0xf]
          %v6035 = vld [vmem:[%s11 + $0x3c] sm:$0xf]
          %v6036 = vld [vmem:[%s12] sm:$0x1]
          %v6038 = vlaneseq
          %v6039 = vshrl.u32 %v6038, 7
          %v6040 = vsub.s32 0, %v6039
          %v6041 = vrot.slane %v6036, %v6040
          %v6059 = vunpack.c.l.b16 %v6020
          %v6060 = vunpack.c.l.b16 %v6021
          %v6061 = vunpack.c.l.b16 %v6022
          %v6062 = vunpack.c.l.b16 %v6023
          %v6063 = vunpack.c.l.b16 %v6024
          %v6064 = vunpack.c.l.b16 %v6025
          %v6065 = vunpack.c.l.b16 %v6026
          %v6066 = vunpack.c.l.b16 %v6027
          %v6067 = vunpack.c.l.b16 %v6028
          %v6068 = vunpack.c.l.b16 %v6029
          %v6069 = vunpack.c.l.b16 %v6030
          %v6070 = vunpack.c.l.b16 %v6031
          %v6071 = vunpack.c.l.b16 %v6032
          %v6072 = vunpack.c.l.b16 %v6033
          %v6073 = vunpack.c.l.b16 %v6034
          %v6074 = vunpack.c.l.b16 %v6035
          %v6075 = vpack.c.b16 %v6060, %v6059
          %v6076 = vpack.c.b16 %v6062, %v6061
          %v6077 = vpack.c.b16 %v6064, %v6063
          %v6078 = vpack.c.b16 %v6066, %v6065
          %v6079 = vpack.c.b16 %v6068, %v6067
          %v6080 = vpack.c.b16 %v6070, %v6069
          %v6081 = vpack.c.b16 %v6072, %v6071
          %v6082 = vpack.c.b16 %v6074, %v6073
          %6091 = vmatprep.subr.bf16.mxu0 0
          %6092 = vmatpush1.bf16.msra.mxu0 %v6075
          %6093 = vmatprep.subr.bf16.mxu0 0
          %6094 = vmatpush1.bf16.msra.mxu0 %v6076
          %6095 = vmatprep.subr.bf16.mxu0 0
          %6096 = vmatpush1.bf16.msra.mxu0 %v6077
          %6097 = vmatprep.subr.bf16.mxu0 0
          %6098 = vmatpush1.bf16.msra.mxu0 %v6078
          %6099 = vmatprep.subr.bf16.mxu0 0
          %6100 = vmatpush1.bf16.msra.mxu0 %v6079
          %6101 = vmatprep.subr.bf16.mxu0 0
          %6102 = vmatpush1.bf16.msra.mxu0 %v6080
          %6103 = vmatprep.subr.bf16.mxu0 0
          %6104 = vmatpush1.bf16.msra.mxu0 %v6081
          %6105 = vmatprep.subr.bf16.mxu0 0
          %6106 = vmatpush1.bf16.msra.mxu0 %v6082
          %6107 = vmatprep.subr.bf16.mxu0 0
          %6108 = vmatpush1.bf16.msra.mxu0 0
          %6109 = vmatprep.subr.bf16.mxu0 0
          %6110 = vmatpush1.bf16.msra.mxu0 0
          %6111 = vmatprep.subr.bf16.mxu0 0
          %6112 = vmatpush1.bf16.msra.mxu0 0
          %6113 = vmatprep.subr.bf16.mxu0 0
          %6114 = vmatpush1.bf16.msra.mxu0 0
          %6115 = vmatprep.subr.bf16.mxu0 0
          %6116 = vmatpush1.bf16.msra.mxu0 0
          %6117 = vmatprep.subr.bf16.mxu0 0
          %6118 = vmatpush1.bf16.msra.mxu0 0
          %6119 = vmatprep.subr.bf16.mxu0 0
          %6120 = vmatpush1.bf16.msra.mxu0 0
          %6121 = vmatprep.subr.bf16.mxu0 0
          %6122 = vmatpush1.bf16.msra.mxu0 0
          %6123 = vmatprep.mubr.bf16.mxu0 0
          %6124 = vmatmul.mubr.bf16.gmra.mrb[0].mxu0 %v6019
          %v6125 = vpop.f32.mrb[0].mxu0
          %v6126 = vadd.f32 %v6041, %v6125
          %v6127 = vpop.f32.mrb[0].mxu0
          %v6128 = vpop.f32.mrb[0].mxu0
          %v6129 = vadd.f32 %v6041, %v6128
          %v6130 = vpop.f32.mrb[0].mxu0
          %6131 = vdwg.mxu0
          %v6132 = vmin.f32 %v6126, 20.0
          %v6133 = vmin.f32 %v6129, 20.0
          %v6134 = vmul.f32 %v6132, 1.442695
          %v6135 = vpow.pop %v6134
          %v6136 = vmul.f32 %v6133, 1.442695
          %v6137 = vpow.pop %v6136
          %v6138 = vadd.f32 %v6135, 2.0
          %v6139 = vadd.f32 %v6137, 2.0
          %v6140 = vmul.f32 %v6135, %v6138
          %v6141 = vmul.f32 %v6137, %v6139
          %v6142 = vmul.f32 %v6126, %v6140
          %v6143 = vmul.f32 %v6129, %v6141
          %v6144 = vadd.f32 %v6140, 2.0
          %v6145 = vadd.f32 %v6141, 2.0
          %v6146 = vrcp.pop %v6144
          %v6147 = vrcp.pop %v6145
          %v6148 = vmul.f32 %v6142, %v6146
          %v6149 = vmul.f32 %v6143, %v6147
          %v6150 = vmul.f32 %v6148, %v656
          %v6151 = vmul.f32 %v6149, %v657
          %v6152 = vld [vmem:[#allocation2 + $0x4] sm:$0x1]
          %v6153 = vadd.f32 %v6150, %v6151
          %v6154 = vrot.slane %v6153, 4
          %v6155 = vadd.f32 %v6153, %v6154
          %v6156 = vrot.slane %v6155, 2
          %v6157 = vadd.f32 %v6155, %v6156
          %v6158 = vrot.slane %v6157, 1
          %v6159 = vadd.f32 %v6157, %v6158
          %v6160 = vadd.f32 %v6152, %v6159
          %6161 = vst [vmem:[#allocation2 + $0x4] sm:$0x1] %v6160
          %v6162 = vld [vmem:[#allocation2 + $0x5] sm:$0x1]
          %v6163 = vmul.f32 %v6150, %v6148
          %v6164 = vmul.f32 %v6151, %v6149
          %v6165 = vadd.f32 %v6163, %v6164
          %v6166 = vrot.slane %v6165, 4
          %v6167 = vadd.f32 %v6165, %v6166
          %v6168 = vrot.slane %v6167, 2
          %v6169 = vadd.f32 %v6167, %v6168
          %v6170 = vrot.slane %v6169, 1
          %v6171 = vadd.f32 %v6169, %v6170
          %v6172 = vadd.f32 %v6162, %v6171
          %6173 = vst [vmem:[#allocation2 + $0x5] sm:$0x1] %v6172
        $region112: #{text_from_image_g.1} parent=87 // pred_fallthru
          _
        %p6174 = scmp.eq.s32.totalorder %s34, 3
        // Predicated region
        $region113: #{text_from_image_g.1} parent=87 // pred_check
          %p6175 = pneg %p6174
        $region114: #{text_from_image_g.1} parent=87 // pred_check_branch
          %6177 = sbr.rel (%p6175) target = $region116
        $region115: #{text_from_image_g.1} parent=87 // pred_region
          %v6178 = vld [vmem:[%s622] sm:$0xf]
          %v6179 = vld [vmem:[%s622 + $0x4] sm:$0xf]
          %v6180 = vld [vmem:[%s3] sm:$0xf]
          %v6181 = vld [vmem:[%s3 + $0x4] sm:$0xf]
          %v6182 = vld [vmem:[%s3 + $0x8] sm:$0xf]
          %v6183 = vld [vmem:[%s3 + $0xc] sm:$0xf]
          %v6184 = vld [vmem:[%s3 + $0x10] sm:$0xf]
          %v6185 = vld [vmem:[%s3 + $0x14] sm:$0xf]
          %v6186 = vld [vmem:[%s3 + $0x18] sm:$0xf]
          %v6187 = vld [vmem:[%s3 + $0x1c] sm:$0xf]
          %v6188 = vld [vmem:[%s3 + $0x20] sm:$0xf]
          %v6189 = vld [vmem:[%s3 + $0x24] sm:$0xf]
          %v6190 = vld [vmem:[%s3 + $0x28] sm:$0xf]
          %v6191 = vld [vmem:[%s3 + $0x2c] sm:$0xf]
          %v6192 = vld [vmem:[%s3 + $0x30] sm:$0xf]
          %v6193 = vld [vmem:[%s3 + $0x34] sm:$0xf]
          %v6194 = vld [vmem:[%s3 + $0x38] sm:$0xf]
          %v6195 = vld [vmem:[%s3 + $0x3c] sm:$0xf]
          %v6196 = vld [vmem:[%s4] sm:$0x1]
          %v6198 = vlaneseq
          %v6199 = vshrl.u32 %v6198, 7
          %v6200 = vsub.s32 0, %v6199
          %v6201 = vrot.slane %v6196, %v6200
          %v6205 = vunpack.c.l.b16 %v6178
          %v6206 = vunpack.c.l.b16 %v6179
          %v6207 = vpack.c.b16 %v6206, %v6205
          %v6225 = vunpack.c.l.b16 %v6180
          %v6226 = vunpack.c.l.b16 %v6181
          %v6227 = vunpack.c.l.b16 %v6182
          %v6228 = vunpack.c.l.b16 %v6183
          %v6229 = vunpack.c.l.b16 %v6184
          %v6230 = vunpack.c.l.b16 %v6185
          %v6231 = vunpack.c.l.b16 %v6186
          %v6232 = vunpack.c.l.b16 %v6187
          %v6233 = vunpack.c.l.b16 %v6188
          %v6234 = vunpack.c.l.b16 %v6189
          %v6235 = vunpack.c.l.b16 %v6190
          %v6236 = vunpack.c.l.b16 %v6191
          %v6237 = vunpack.c.l.b16 %v6192
          %v6238 = vunpack.c.l.b16 %v6193
          %v6239 = vunpack.c.l.b16 %v6194
          %v6240 = vunpack.c.l.b16 %v6195
          %v6241 = vpack.c.b16 %v6226, %v6225
          %v6242 = vpack.c.b16 %v6228, %v6227
          %v6243 = vpack.c.b16 %v6230, %v6229
          %v6244 = vpack.c.b16 %v6232, %v6231
          %v6245 = vpack.c.b16 %v6234, %v6233
          %v6246 = vpack.c.b16 %v6236, %v6235
          %v6247 = vpack.c.b16 %v6238, %v6237
          %v6248 = vpack.c.b16 %v6240, %v6239
          %6257 = vmatprep.subr.bf16.mxu0 0
          %6258 = vmatpush1.bf16.msra.mxu0 %v6241
          %6259 = vmatprep.subr.bf16.mxu0 0
          %6260 = vmatpush1.bf16.msra.mxu0 %v6242
          %6261 = vmatprep.subr.bf16.mxu0 0
          %6262 = vmatpush1.bf16.msra.mxu0 %v6243
          %6263 = vmatprep.subr.bf16.mxu0 0
          %6264 = vmatpush1.bf16.msra.mxu0 %v6244
          %6265 = vmatprep.subr.bf16.mxu0 0
          %6266 = vmatpush1.bf16.msra.mxu0 %v6245
          %6267 = vmatprep.subr.bf16.mxu0 0
          %6268 = vmatpush1.bf16.msra.mxu0 %v6246
          %6269 = vmatprep.subr.bf16.mxu0 0
          %6270 = vmatpush1.bf16.msra.mxu0 %v6247
          %6271 = vmatprep.subr.bf16.mxu0 0
          %6272 = vmatpush1.bf16.msra.mxu0 %v6248
          %6273 = vmatprep.subr.bf16.mxu0 0
          %6274 = vmatpush1.bf16.msra.mxu0 0
          %6275 = vmatprep.subr.bf16.mxu0 0
          %6276 = vmatpush1.bf16.msra.mxu0 0
          %6277 = vmatprep.subr.bf16.mxu0 0
          %6278 = vmatpush1.bf16.msra.mxu0 0
          %6279 = vmatprep.subr.bf16.mxu0 0
          %6280 = vmatpush1.bf16.msra.mxu0 0
          %6281 = vmatprep.subr.bf16.mxu0 0
          %6282 = vmatpush1.bf16.msra.mxu0 0
          %6283 = vmatprep.subr.bf16.mxu0 0
          %6284 = vmatpush1.bf16.msra.mxu0 0
          %6285 = vmatprep.subr.bf16.mxu0 0
          %6286 = vmatpush1.bf16.msra.mxu0 0
          %6287 = vmatprep.subr.bf16.mxu0 0
          %6288 = vmatpush1.bf16.msra.mxu0 0
          %6289 = vmatprep.mubr.bf16.mxu0 0
          %6290 = vmatmul.mubr.bf16.gmra.mrb[0].mxu0 %v6207
          %v6291 = vpop.f32.mrb[0].mxu0
          %v6292 = vadd.f32 %v6201, %v6291
          %v6293 = vpop.f32.mrb[0].mxu0
          %v6294 = vpop.f32.mrb[0].mxu0
          %v6295 = vadd.f32 %v6201, %v6294
          %v6296 = vpop.f32.mrb[0].mxu0
          %6297 = vdwg.mxu0
          %v6298 = vmin.f32 %v6292, 20.0
          %v6299 = vmin.f32 %v6295, 20.0
          %v6300 = vmul.f32 %v6298, 1.442695
          %v6301 = vpow.pop %v6300
          %v6302 = vmul.f32 %v6299, 1.442695
          %v6303 = vpow.pop %v6302
          %v6304 = vadd.f32 %v6301, 2.0
          %v6305 = vadd.f32 %v6303, 2.0
          %v6306 = vmul.f32 %v6301, %v6304
          %v6307 = vmul.f32 %v6303, %v6305
          %v6308 = vmul.f32 %v6292, %v6306
          %v6309 = vmul.f32 %v6295, %v6307
          %v6310 = vadd.f32 %v6306, 2.0
          %v6311 = vadd.f32 %v6307, 2.0
          %v6312 = vrcp.pop %v6310
          %v6313 = vrcp.pop %v6311
          %v6314 = vmul.f32 %v6308, %v6312
          %v6315 = vmul.f32 %v6309, %v6313
          %v6316 = vld [vmem:[#allocation2] sm:$0x1]
          %v6317 = vmul.f32 %v6316, 0.5
          %v6318 = vld [vmem:[#allocation2 + $0x1] sm:$0x1]
          %v6319 = vmul.f32 %v6318, 0.5
          %v6320 = vmul.f32 %v6317, %v6317
          %v6321 = vsub.f32 %v6319, %v6320
          %v6322 = vmax.f32 %v6321, 0.0
          %v6323 = vlaneseq
          %v6324 = vshrl.u32 %v6323, 7
          %v6325 = vsub.s32 0, %v6324
          %v6326 = vrot.slane %v6317, %v6325
          %v6327 = vsub.f32 %v6314, %v6326
          %v6328 = vsub.f32 %v6315, %v6326
          %v6329 = vadd.f32 %v6322, 1e-05
          %v6330 = vrsqrt.pop %v6329
          %v6331 = vlaneseq
          %v6332 = vshrl.u32 %v6331, 7
          %v6333 = vsub.s32 0, %v6332
          %v6334 = vrot.slane %v6330, %v6333
          %v6335 = vmul.f32 %v6327, %v6334
          %v6336 = vmul.f32 %v6328, %v6334
          %v6337 = vpack.c.bf16 %v6336, %v6335
          %v6338 = vld [vmem:[%s5] sm:$0xf]
          %v6339 = vld [vmem:[%s5 + $0x4] sm:$0xf]
          %v6340 = vld [vmem:[%s5 + $0x8] sm:$0xf]
          %v6341 = vld [vmem:[%s5 + $0xc] sm:$0xf]
          %v6342 = vld [vmem:[%s5 + $0x10] sm:$0xf]
          %v6343 = vld [vmem:[%s5 + $0x14] sm:$0xf]
          %v6344 = vld [vmem:[%s5 + $0x18] sm:$0xf]
          %v6345 = vld [vmem:[%s5 + $0x1c] sm:$0xf]
          %v6346 = vld [vmem:[%s5 + $0x20] sm:$0xf]
          %v6347 = vld [vmem:[%s5 + $0x24] sm:$0xf]
          %v6348 = vld [vmem:[%s5 + $0x28] sm:$0xf]
          %v6349 = vld [vmem:[%s5 + $0x2c] sm:$0xf]
          %v6350 = vld [vmem:[%s5 + $0x30] sm:$0xf]
          %v6351 = vld [vmem:[%s5 + $0x34] sm:$0xf]
          %v6352 = vld [vmem:[%s5 + $0x38] sm:$0xf]
          %v6353 = vld [vmem:[%s5 + $0x3c] sm:$0xf]
          %v6354 = vld [vmem:[%s6] sm:$0x1]
          %v6356 = vlaneseq
          %v6357 = vshrl.u32 %v6356, 7
          %v6358 = vsub.s32 0, %v6357
          %v6359 = vrot.slane %v6354, %v6358
          %v6377 = vunpack.c.l.b16 %v6338
          %v6378 = vunpack.c.l.b16 %v6339
          %v6379 = vunpack.c.l.b16 %v6340
          %v6380 = vunpack.c.l.b16 %v6341
          %v6381 = vunpack.c.l.b16 %v6342
          %v6382 = vunpack.c.l.b16 %v6343
          %v6383 = vunpack.c.l.b16 %v6344
          %v6384 = vunpack.c.l.b16 %v6345
          %v6385 = vunpack.c.l.b16 %v6346
          %v6386 = vunpack.c.l.b16 %v6347
          %v6387 = vunpack.c.l.b16 %v6348
          %v6388 = vunpack.c.l.b16 %v6349
          %v6389 = vunpack.c.l.b16 %v6350
          %v6390 = vunpack.c.l.b16 %v6351
          %v6391 = vunpack.c.l.b16 %v6352
          %v6392 = vunpack.c.l.b16 %v6353
          %v6393 = vpack.c.b16 %v6378, %v6377
          %v6394 = vpack.c.b16 %v6380, %v6379
          %v6395 = vpack.c.b16 %v6382, %v6381
          %v6396 = vpack.c.b16 %v6384, %v6383
          %v6397 = vpack.c.b16 %v6386, %v6385
          %v6398 = vpack.c.b16 %v6388, %v6387
          %v6399 = vpack.c.b16 %v6390, %v6389
          %v6400 = vpack.c.b16 %v6392, %v6391
          %6409 = vmatprep.subr.bf16.mxu0 0
          %6410 = vmatpush1.bf16.msra.mxu0 %v6393
          %6411 = vmatprep.subr.bf16.mxu0 0
          %6412 = vmatpush1.bf16.msra.mxu0 %v6394
          %6413 = vmatprep.subr.bf16.mxu0 0
          %6414 = vmatpush1.bf16.msra.mxu0 %v6395
          %6415 = vmatprep.subr.bf16.mxu0 0
          %6416 = vmatpush1.bf16.msra.mxu0 %v6396
          %6417 = vmatprep.subr.bf16.mxu0 0
          %6418 = vmatpush1.bf16.msra.mxu0 %v6397
          %6419 = vmatprep.subr.bf16.mxu0 0
          %6420 = vmatpush1.bf16.msra.mxu0 %v6398
          %6421 = vmatprep.subr.bf16.mxu0 0
          %6422 = vmatpush1.bf16.msra.mxu0 %v6399
          %6423 = vmatprep.subr.bf16.mxu0 0
          %6424 = vmatpush1.bf16.msra.mxu0 %v6400
          %6425 = vmatprep.subr.bf16.mxu0 0
          %6426 = vmatpush1.bf16.msra.mxu0 0
          %6427 = vmatprep.subr.bf16.mxu0 0
          %6428 = vmatpush1.bf16.msra.mxu0 0
          %6429 = vmatprep.subr.bf16.mxu0 0
          %6430 = vmatpush1.bf16.msra.mxu0 0
          %6431 = vmatprep.subr.bf16.mxu0 0
          %6432 = vmatpush1.bf16.msra.mxu0 0
          %6433 = vmatprep.subr.bf16.mxu0 0
          %6434 = vmatpush1.bf16.msra.mxu0 0
          %6435 = vmatprep.subr.bf16.mxu0 0
          %6436 = vmatpush1.bf16.msra.mxu0 0
          %6437 = vmatprep.subr.bf16.mxu0 0
          %6438 = vmatpush1.bf16.msra.mxu0 0
          %6439 = vmatprep.subr.bf16.mxu0 0
          %6440 = vmatpush1.bf16.msra.mxu0 0
          %6441 = vmatprep.mubr.bf16.mxu0 0
          %6442 = vmatmul.mubr.bf16.gmra.mrb[0].mxu0 %v6337
          %v6443 = vpop.f32.mrb[0].mxu0
          %v6444 = vadd.f32 %v6359, %v6443
          %v6445 = vpop.f32.mrb[0].mxu0
          %v6446 = vpop.f32.mrb[0].mxu0
          %v6447 = vadd.f32 %v6359, %v6446
          %v6448 = vpop.f32.mrb[0].mxu0
          %6449 = vdwg.mxu0
          %v6450 = vld [vmem:[%s629] sm:$0xff]
          %v6451 = vld [vmem:[%s629 + $0x8] sm:$0xff]
          %v6452 = vld [vmem:[%s629 + $0x10] sm:$0xf]
          %v6453 = vld [vmem:[%s629 + $0x14] sm:$0xff]
          %v6454 = vld [vmem:[%s629 + $0x1c] sm:$0xff]
          %v6455 = vld [vmem:[%s629 + $0x24] sm:$0xf]
          %v6456 = vld [vmem:[#allocation3] sm:$0xff]
          %v6457 = vld [vmem:[#allocation3 + $0x8] sm:$0xf]
          %v6458 = vld [vmem:[#allocation3 + $0xc] sm:$0xff]
          %v6459 = vld [vmem:[#allocation3 + $0x14] sm:$0xf]
          %v6460 = vld [vmem:[#allocation3 + $0x18] sm:$0xff]
          %v6461 = vld [vmem:[#allocation3 + $0x20] sm:$0xf]
          %v6462 = vld [vmem:[#allocation3 + $0x24] sm:$0xff]
          %v6463 = vld [vmem:[#allocation3 + $0x2c] sm:$0xf]
          %v6464 = vld [vmem:[#allocation3 + $0x30] sm:$0xff]
          %v6465 = vld [vmem:[#allocation3 + $0x38] sm:$0xf]
          %v6466 = vld [vmem:[#allocation3 + $0x3c] sm:$0xff]
          %v6467 = vld [vmem:[#allocation3 + $0x44] sm:$0xf]
          %v6468 = vld [vmem:[#allocation3 + $0x48] sm:$0xff]
          %v6469 = vld [vmem:[#allocation3 + $0x50] sm:$0xf]
          %v6470 = vld [vmem:[#allocation3 + $0x54] sm:$0xff]
          %v6471 = vld [vmem:[#allocation3 + $0x5c] sm:$0xf]
          %v6472 = vld [vmem:[#allocation3 + $0x60] sm:$0xff]
          %v6473 = vld [vmem:[#allocation3 + $0x68] sm:$0xf]
          %v6474 = vld [vmem:[#allocation3 + $0x6c] sm:$0xff]
          %v6475 = vld [vmem:[#allocation3 + $0x74] sm:$0xf]
          %v6476 = vld [vmem:[#allocation3 + $0x78] sm:$0xff]
          %v6477 = vld [vmem:[#allocation3 + $0x80] sm:$0xf]
          %v6478 = vld [vmem:[#allocation3 + $0x84] sm:$0xff]
          %v6479 = vld [vmem:[#allocation3 + $0x8c] sm:$0xf]
          %v6480 = vld [vmem:[#allocation3 + $0x90] sm:$0xff]
          %v6481 = vld [vmem:[#allocation3 + $0x98] sm:$0xf]
          %v6482 = vld [vmem:[#allocation3 + $0x9c] sm:$0xff]
          %v6483 = vld [vmem:[#allocation3 + $0xa4] sm:$0xf]
          %v6484 = vld [vmem:[#allocation3 + $0xa8] sm:$0xff]
          %v6485 = vld [vmem:[#allocation3 + $0xb0] sm:$0xf]
          %v6486 = vld [vmem:[#allocation3 + $0xb4] sm:$0xff]
          %v6487 = vld [vmem:[#allocation3 + $0xbc] sm:$0xf]
          %v6488 = vld [vmem:[#allocation3 + $0xc0] sm:$0xff]
          %v6489 = vld [vmem:[#allocation3 + $0xc8] sm:$0xf]
          %v6490 = vld [vmem:[#allocation3 + $0xcc] sm:$0xff]
          %v6491 = vld [vmem:[#allocation3 + $0xd4] sm:$0xf]
          %v6492 = vld [vmem:[#allocation3 + $0xd8] sm:$0xff]
          %v6493 = vld [vmem:[#allocation3 + $0xe0] sm:$0xf]
          %v6494 = vld [vmem:[#allocation3 + $0xe4] sm:$0xff]
          %v6495 = vld [vmem:[#allocation3 + $0xec] sm:$0xf]
          %v6496 = vld [vmem:[#allocation3 + $0xf0] sm:$0xff]
          %v6497 = vld [vmem:[#allocation3 + $0xf8] sm:$0xf]
          %v6498 = vld [vmem:[#allocation3 + $0xfc] sm:$0xff]
          %v6499 = vld [vmem:[#allocation3 + $0x104] sm:$0xf]
          %v6500 = vld [vmem:[#allocation3 + $0x108] sm:$0xff]
          %v6501 = vld [vmem:[#allocation3 + $0x110] sm:$0xf]
          %v6502 = vld [vmem:[#allocation3 + $0x114] sm:$0xff]
          %v6503 = vld [vmem:[#allocation3 + $0x11c] sm:$0xf]
          %v6504 = vld [vmem:[#allocation3 + $0x120] sm:$0xff]
          %v6505 = vld [vmem:[#allocation3 + $0x128] sm:$0xf]
          %v6506 = vld [vmem:[#allocation3 + $0x12c] sm:$0xff]
          %v6507 = vld [vmem:[#allocation3 + $0x134] sm:$0xf]
          %v6508 = vld [vmem:[#allocation3 + $0x138] sm:$0xff]
          %v6509 = vld [vmem:[#allocation3 + $0x140] sm:$0xf]
          %v6510 = vld [vmem:[#allocation3 + $0x144] sm:$0xff]
          %v6511 = vld [vmem:[#allocation3 + $0x14c] sm:$0xf]
          %v6512 = vld [vmem:[#allocation3 + $0x150] sm:$0xff]
          %v6513 = vld [vmem:[#allocation3 + $0x158] sm:$0xf]
          %v6514 = vld [vmem:[#allocation3 + $0x15c] sm:$0xff]
          %v6515 = vld [vmem:[#allocation3 + $0x164] sm:$0xf]
          %v6516 = vld [vmem:[#allocation3 + $0x168] sm:$0xff]
          %v6517 = vld [vmem:[#allocation3 + $0x170] sm:$0xf]
          %v6518 = vld [vmem:[#allocation3 + $0x174] sm:$0xff]
          %v6519 = vld [vmem:[#allocation3 + $0x17c] sm:$0xf]
          %v6520 = vld [vmem:[#allocation3 + $0x180] sm:$0xff]
          %v6521 = vld [vmem:[#allocation3 + $0x188] sm:$0xf]
          %v6522 = vld [vmem:[#allocation3 + $0x18c] sm:$0xff]
          %v6523 = vld [vmem:[#allocation3 + $0x194] sm:$0xf]
          %v6524 = vld [vmem:[#allocation3 + $0x198] sm:$0xff]
          %v6525 = vld [vmem:[#allocation3 + $0x1a0] sm:$0xf]
          %v6526 = vld [vmem:[#allocation3 + $0x1a4] sm:$0xff]
          %v6527 = vld [vmem:[#allocation3 + $0x1ac] sm:$0xf]
          %v6528 = vld [vmem:[#allocation3 + $0x1b0] sm:$0xff]
          %v6529 = vld [vmem:[#allocation3 + $0x1b8] sm:$0xf]
          %v6530 = vld [vmem:[#allocation3 + $0x1bc] sm:$0xff]
          %v6531 = vld [vmem:[#allocation3 + $0x1c4] sm:$0xf]
          %v6532 = vld [vmem:[#allocation3 + $0x1c8] sm:$0xff]
          %v6533 = vld [vmem:[#allocation3 + $0x1d0] sm:$0xf]
          %v6534 = vld [vmem:[#allocation3 + $0x1d4] sm:$0xff]
          %v6535 = vld [vmem:[#allocation3 + $0x1dc] sm:$0xf]
          %v6536 = vld [vmem:[#allocation3 + $0x1e0] sm:$0xff]
          %v6537 = vld [vmem:[#allocation3 + $0x1e8] sm:$0xf]
          %v6538 = vld [vmem:[#allocation3 + $0x1ec] sm:$0xff]
          %v6539 = vld [vmem:[#allocation3 + $0x1f4] sm:$0xf]
          %v6540 = vld [vmem:[#allocation3 + $0x1f8] sm:$0xff]
          %v6541 = vld [vmem:[#allocation3 + $0x200] sm:$0xf]
          %v6542 = vld [vmem:[#allocation3 + $0x204] sm:$0xff]
          %v6543 = vld [vmem:[#allocation3 + $0x20c] sm:$0xf]
          %v6544 = vld [vmem:[#allocation3 + $0x210] sm:$0xff]
          %v6545 = vld [vmem:[#allocation3 + $0x218] sm:$0xf]
          %v6546 = vld [vmem:[#allocation3 + $0x21c] sm:$0xff]
          %v6547 = vld [vmem:[#allocation3 + $0x224] sm:$0xf]
          %v6548 = vld [vmem:[#allocation3 + $0x228] sm:$0xff]
          %v6549 = vld [vmem:[#allocation3 + $0x230] sm:$0xf]
          %v6550 = vld [vmem:[#allocation3 + $0x234] sm:$0xff]
          %v6551 = vld [vmem:[#allocation3 + $0x23c] sm:$0xf]
          %v6552 = vld [vmem:[#allocation3 + $0x240] sm:$0xff]
          %v6553 = vld [vmem:[#allocation3 + $0x248] sm:$0xf]
          %v6554 = vld [vmem:[#allocation3 + $0x24c] sm:$0xff]
          %v6555 = vld [vmem:[#allocation3 + $0x254] sm:$0xf]
          %v6556 = vld [vmem:[#allocation3 + $0x258] sm:$0xff]
          %v6557 = vld [vmem:[#allocation3 + $0x260] sm:$0xf]
          %v6558 = vld [vmem:[#allocation3 + $0x264] sm:$0xff]
          %v6559 = vld [vmem:[#allocation3 + $0x26c] sm:$0xf]
          %v6560 = vld [vmem:[#allocation3 + $0x270] sm:$0xff]
          %v6561 = vld [vmem:[#allocation3 + $0x278] sm:$0xf]
          %v6562 = vld [vmem:[#allocation3 + $0x27c] sm:$0xff]
          %v6563 = vld [vmem:[#allocation3 + $0x284] sm:$0xf]
          %v6564 = vld [vmem:[#allocation3 + $0x288] sm:$0xff]
          %v6565 = vld [vmem:[#allocation3 + $0x290] sm:$0xf]
          %v6566 = vld [vmem:[#allocation3 + $0x294] sm:$0xff]
          %v6567 = vld [vmem:[#allocation3 + $0x29c] sm:$0xf]
          %v6568 = vld [vmem:[#allocation3 + $0x2a0] sm:$0xff]
          %v6569 = vld [vmem:[#allocation3 + $0x2a8] sm:$0xf]
          %v6570 = vld [vmem:[#allocation3 + $0x2ac] sm:$0xff]
          %v6571 = vld [vmem:[#allocation3 + $0x2b4] sm:$0xf]
          %v6572 = vld [vmem:[#allocation3 + $0x2b8] sm:$0xff]
          %v6573 = vld [vmem:[#allocation3 + $0x2c0] sm:$0xf]
          %v6574 = vld [vmem:[#allocation3 + $0x2c4] sm:$0xff]
          %v6575 = vld [vmem:[#allocation3 + $0x2cc] sm:$0xf]
          %v6576 = vld [vmem:[#allocation3 + $0x2d0] sm:$0xff]
          %v6577 = vld [vmem:[#allocation3 + $0x2d8] sm:$0xf]
          %v6578 = vld [vmem:[#allocation3 + $0x2dc] sm:$0xff]
          %v6579 = vld [vmem:[#allocation3 + $0x2e4] sm:$0xf]
          %v6580 = vld [vmem:[#allocation3 + $0x2e8] sm:$0xff]
          %v6581 = vld [vmem:[#allocation3 + $0x2f0] sm:$0xf]
          %v6582 = vld [vmem:[#allocation3 + $0x2f4] sm:$0xff]
          %v6583 = vld [vmem:[#allocation3 + $0x2fc] sm:$0xf]
          %v6584 = vld [vmem:[#allocation3 + $0x300] sm:$0xff]
          %v6585 = vld [vmem:[#allocation3 + $0x308] sm:$0xf]
          %v6586 = vld [vmem:[#allocation3 + $0x30c] sm:$0xff]
          %v6587 = vld [vmem:[#allocation3 + $0x314] sm:$0xf]
          %v6588 = vld [vmem:[#allocation3 + $0x318] sm:$0xff]
          %v6589 = vld [vmem:[#allocation3 + $0x320] sm:$0xf]
          %v6590 = vld [vmem:[#allocation3 + $0x324] sm:$0xff]
          %v6591 = vld [vmem:[#allocation3 + $0x32c] sm:$0xf]
          %v6592 = vld [vmem:[#allocation3 + $0x330] sm:$0xff]
          %v6593 = vld [vmem:[#allocation3 + $0x338] sm:$0xf]
          %v6594 = vld [vmem:[#allocation3 + $0x33c] sm:$0xff]
          %v6595 = vld [vmem:[#allocation3 + $0x344] sm:$0xf]
          %v6596 = vld [vmem:[#allocation3 + $0x348] sm:$0xff]
          %v6597 = vld [vmem:[#allocation3 + $0x350] sm:$0xf]
          %v6598 = vld [vmem:[#allocation3 + $0x354] sm:$0xff]
          %v6599 = vld [vmem:[#allocation3 + $0x35c] sm:$0xf]
          %v6600 = vld [vmem:[#allocation3 + $0x360] sm:$0xff]
          %v6601 = vld [vmem:[#allocation3 + $0x368] sm:$0xf]
          %v6602 = vld [vmem:[#allocation3 + $0x36c] sm:$0xff]
          %v6603 = vld [vmem:[#allocation3 + $0x374] sm:$0xf]
          %v6604 = vld [vmem:[#allocation3 + $0x378] sm:$0xff]
          %v6605 = vld [vmem:[#allocation3 + $0x380] sm:$0xf]
          %v6606 = vld [vmem:[#allocation3 + $0x384] sm:$0xff]
          %v6607 = vld [vmem:[#allocation3 + $0x38c] sm:$0xf]
          %v6608 = vld [vmem:[#allocation3 + $0x390] sm:$0xff]
          %v6609 = vld [vmem:[#allocation3 + $0x398] sm:$0xf]
          %v6610 = vld [vmem:[#allocation3 + $0x39c] sm:$0xff]
          %v6611 = vld [vmem:[#allocation3 + $0x3a4] sm:$0xf]
          %v6612 = vld [vmem:[#allocation3 + $0x3a8] sm:$0xff]
          %v6613 = vld [vmem:[#allocation3 + $0x3b0] sm:$0xf]
          %v6614 = vld [vmem:[#allocation3 + $0x3b4] sm:$0xff]
          %v6615 = vld [vmem:[#allocation3 + $0x3bc] sm:$0xf]
          %v6616 = vld [vmem:[%s8] sm:$0x7]
          %v6618 = vlaneseq
          %v6619 = vshrl.u32 %v6618, 7
          %v6620 = vsub.s32 0, %v6619
          %v6621 = vrot.slane %v6616, %v6620
          %v6622 = vlaneseq
          %v6623 = vshrl.u32 %v6622, 7
          %v6624 = vsub.s32 1, %v6623
          %v6625 = vrot.slane %v6616, %v6624
          %v6626 = vlaneseq
          %v6627 = vshrl.u32 %v6626, 7
          %v6628 = vsub.s32 2, %v6627
          %v6629 = vrot.slane %v6616, %v6628
          %v6639 = vunpack.c.l.b16 %v6450
          %v6640 = vunpack.c.h.b16 %v6450
          %v6641 = vunpack.c.l.b16 %v6451
          %v6642 = vunpack.c.h.b16 %v6451
          %v6643 = vunpack.c.l.b16 %v6452
          %v6644 = vunpack.c.l.b16 %v6453
          %v6645 = vunpack.c.h.b16 %v6453
          %v6646 = vunpack.c.l.b16 %v6454
          %v6647 = vunpack.c.h.b16 %v6454
          %v6648 = vunpack.c.l.b16 %v6455
          %v6649 = vpack.c.b16 %v6644, %v6639
          %v6650 = vpack.c.b16 %v6645, %v6640
          %v6651 = vpack.c.b16 %v6646, %v6641
          %v6652 = vpack.c.b16 %v6647, %v6642
          %v6653 = vpack.c.b16 %v6648, %v6643
          %v6819 = vunpack.c.l.b16 %v6456
          %v6820 = vunpack.c.h.b16 %v6456
          %v6821 = vunpack.c.l.b16 %v6457
          %v6822 = vunpack.c.l.b16 %v6458
          %v6823 = vunpack.c.h.b16 %v6458
          %v6824 = vunpack.c.l.b16 %v6459
          %v6825 = vunpack.c.l.b16 %v6460
          %v6826 = vunpack.c.h.b16 %v6460
          %v6827 = vunpack.c.l.b16 %v6461
          %v6828 = vunpack.c.l.b16 %v6462
          %v6829 = vunpack.c.h.b16 %v6462
          %v6830 = vunpack.c.l.b16 %v6463
          %v6831 = vunpack.c.l.b16 %v6464
          %v6832 = vunpack.c.h.b16 %v6464
          %v6833 = vunpack.c.l.b16 %v6465
          %v6834 = vunpack.c.l.b16 %v6466
          %v6835 = vunpack.c.h.b16 %v6466
          %v6836 = vunpack.c.l.b16 %v6467
          %v6837 = vunpack.c.l.b16 %v6468
          %v6838 = vunpack.c.h.b16 %v6468
          %v6839 = vunpack.c.l.b16 %v6469
          %v6840 = vunpack.c.l.b16 %v6470
          %v6841 = vunpack.c.h.b16 %v6470
          %v6842 = vunpack.c.l.b16 %v6471
          %v6843 = vunpack.c.l.b16 %v6472
          %v6844 = vunpack.c.h.b16 %v6472
          %v6845 = vunpack.c.l.b16 %v6473
          %v6846 = vunpack.c.l.b16 %v6474
          %v6847 = vunpack.c.h.b16 %v6474
          %v6848 = vunpack.c.l.b16 %v6475
          %v6849 = vunpack.c.l.b16 %v6476
          %v6850 = vunpack.c.h.b16 %v6476
          %v6851 = vunpack.c.l.b16 %v6477
          %v6852 = vunpack.c.l.b16 %v6478
          %v6853 = vunpack.c.h.b16 %v6478
          %v6854 = vunpack.c.l.b16 %v6479
          %v6855 = vunpack.c.l.b16 %v6480
          %v6856 = vunpack.c.h.b16 %v6480
          %v6857 = vunpack.c.l.b16 %v6481
          %v6858 = vunpack.c.l.b16 %v6482
          %v6859 = vunpack.c.h.b16 %v6482
          %v6860 = vunpack.c.l.b16 %v6483
          %v6861 = vunpack.c.l.b16 %v6484
          %v6862 = vunpack.c.h.b16 %v6484
          %v6863 = vunpack.c.l.b16 %v6485
          %v6864 = vunpack.c.l.b16 %v6486
          %v6865 = vunpack.c.h.b16 %v6486
          %v6866 = vunpack.c.l.b16 %v6487
          %v6867 = vunpack.c.l.b16 %v6488
          %v6868 = vunpack.c.h.b16 %v6488
          %v6869 = vunpack.c.l.b16 %v6489
          %v6870 = vunpack.c.l.b16 %v6490
          %v6871 = vunpack.c.h.b16 %v6490
          %v6872 = vunpack.c.l.b16 %v6491
          %v6873 = vunpack.c.l.b16 %v6492
          %v6874 = vunpack.c.h.b16 %v6492
          %v6875 = vunpack.c.l.b16 %v6493
          %v6876 = vunpack.c.l.b16 %v6494
          %v6877 = vunpack.c.h.b16 %v6494
          %v6878 = vunpack.c.l.b16 %v6495
          %v6879 = vunpack.c.l.b16 %v6496
          %v6880 = vunpack.c.h.b16 %v6496
          %v6881 = vunpack.c.l.b16 %v6497
          %v6882 = vunpack.c.l.b16 %v6498
          %v6883 = vunpack.c.h.b16 %v6498
          %v6884 = vunpack.c.l.b16 %v6499
          %v6885 = vunpack.c.l.b16 %v6500
          %v6886 = vunpack.c.h.b16 %v6500
          %v6887 = vunpack.c.l.b16 %v6501
          %v6888 = vunpack.c.l.b16 %v6502
          %v6889 = vunpack.c.h.b16 %v6502
          %v6890 = vunpack.c.l.b16 %v6503
          %v6891 = vunpack.c.l.b16 %v6504
          %v6892 = vunpack.c.h.b16 %v6504
          %v6893 = vunpack.c.l.b16 %v6505
          %v6894 = vunpack.c.l.b16 %v6506
          %v6895 = vunpack.c.h.b16 %v6506
          %v6896 = vunpack.c.l.b16 %v6507
          %v6897 = vunpack.c.l.b16 %v6508
          %v6898 = vunpack.c.h.b16 %v6508
          %v6899 = vunpack.c.l.b16 %v6509
          %v6900 = vunpack.c.l.b16 %v6510
          %v6901 = vunpack.c.h.b16 %v6510
          %v6902 = vunpack.c.l.b16 %v6511
          %v6903 = vunpack.c.l.b16 %v6512
          %v6904 = vunpack.c.h.b16 %v6512
          %v6905 = vunpack.c.l.b16 %v6513
          %v6906 = vunpack.c.l.b16 %v6514
          %v6907 = vunpack.c.h.b16 %v6514
          %v6908 = vunpack.c.l.b16 %v6515
          %v6909 = vunpack.c.l.b16 %v6516
          %v6910 = vunpack.c.h.b16 %v6516
          %v6911 = vunpack.c.l.b16 %v6517
          %v6912 = vunpack.c.l.b16 %v6518
          %v6913 = vunpack.c.h.b16 %v6518
          %v6914 = vunpack.c.l.b16 %v6519
          %v6915 = vunpack.c.l.b16 %v6520
          %v6916 = vunpack.c.h.b16 %v6520
          %v6917 = vunpack.c.l.b16 %v6521
          %v6918 = vunpack.c.l.b16 %v6522
          %v6919 = vunpack.c.h.b16 %v6522
          %v6920 = vunpack.c.l.b16 %v6523
          %v6921 = vunpack.c.l.b16 %v6524
          %v6922 = vunpack.c.h.b16 %v6524
          %v6923 = vunpack.c.l.b16 %v6525
          %v6924 = vunpack.c.l.b16 %v6526
          %v6925 = vunpack.c.h.b16 %v6526
          %v6926 = vunpack.c.l.b16 %v6527
          %v6927 = vunpack.c.l.b16 %v6528
          %v6928 = vunpack.c.h.b16 %v6528
          %v6929 = vunpack.c.l.b16 %v6529
          %v6930 = vunpack.c.l.b16 %v6530
          %v6931 = vunpack.c.h.b16 %v6530
          %v6932 = vunpack.c.l.b16 %v6531
          %v6933 = vunpack.c.l.b16 %v6532
          %v6934 = vunpack.c.h.b16 %v6532
          %v6935 = vunpack.c.l.b16 %v6533
          %v6936 = vunpack.c.l.b16 %v6534
          %v6937 = vunpack.c.h.b16 %v6534
          %v6938 = vunpack.c.l.b16 %v6535
          %v6939 = vunpack.c.l.b16 %v6536
          %v6940 = vunpack.c.h.b16 %v6536
          %v6941 = vunpack.c.l.b16 %v6537
          %v6942 = vunpack.c.l.b16 %v6538
          %v6943 = vunpack.c.h.b16 %v6538
          %v6944 = vunpack.c.l.b16 %v6539
          %v6945 = vunpack.c.l.b16 %v6540
          %v6946 = vunpack.c.h.b16 %v6540
          %v6947 = vunpack.c.l.b16 %v6541
          %v6948 = vunpack.c.l.b16 %v6542
          %v6949 = vunpack.c.h.b16 %v6542
          %v6950 = vunpack.c.l.b16 %v6543
          %v6951 = vunpack.c.l.b16 %v6544
          %v6952 = vunpack.c.h.b16 %v6544
          %v6953 = vunpack.c.l.b16 %v6545
          %v6954 = vunpack.c.l.b16 %v6546
          %v6955 = vunpack.c.h.b16 %v6546
          %v6956 = vunpack.c.l.b16 %v6547
          %v6957 = vunpack.c.l.b16 %v6548
          %v6958 = vunpack.c.h.b16 %v6548
          %v6959 = vunpack.c.l.b16 %v6549
          %v6960 = vunpack.c.l.b16 %v6550
          %v6961 = vunpack.c.h.b16 %v6550
          %v6962 = vunpack.c.l.b16 %v6551
          %v6963 = vunpack.c.l.b16 %v6552
          %v6964 = vunpack.c.h.b16 %v6552
          %v6965 = vunpack.c.l.b16 %v6553
          %v6966 = vunpack.c.l.b16 %v6554
          %v6967 = vunpack.c.h.b16 %v6554
          %v6968 = vunpack.c.l.b16 %v6555
          %v6969 = vunpack.c.l.b16 %v6556
          %v6970 = vunpack.c.h.b16 %v6556
          %v6971 = vunpack.c.l.b16 %v6557
          %v6972 = vunpack.c.l.b16 %v6558
          %v6973 = vunpack.c.h.b16 %v6558
          %v6974 = vunpack.c.l.b16 %v6559
          %v6975 = vunpack.c.l.b16 %v6560
          %v6976 = vunpack.c.h.b16 %v6560
          %v6977 = vunpack.c.l.b16 %v6561
          %v6978 = vunpack.c.l.b16 %v6562
          %v6979 = vunpack.c.h.b16 %v6562
          %v6980 = vunpack.c.l.b16 %v6563
          %v6981 = vunpack.c.l.b16 %v6564
          %v6982 = vunpack.c.h.b16 %v6564
          %v6983 = vunpack.c.l.b16 %v6565
          %v6984 = vunpack.c.l.b16 %v6566
          %v6985 = vunpack.c.h.b16 %v6566
          %v6986 = vunpack.c.l.b16 %v6567
          %v6987 = vunpack.c.l.b16 %v6568
          %v6988 = vunpack.c.h.b16 %v6568
          %v6989 = vunpack.c.l.b16 %v6569
          %v6990 = vunpack.c.l.b16 %v6570
          %v6991 = vunpack.c.h.b16 %v6570
          %v6992 = vunpack.c.l.b16 %v6571
          %v6993 = vunpack.c.l.b16 %v6572
          %v6994 = vunpack.c.h.b16 %v6572
          %v6995 = vunpack.c.l.b16 %v6573
          %v6996 = vunpack.c.l.b16 %v6574
          %v6997 = vunpack.c.h.b16 %v6574
          %v6998 = vunpack.c.l.b16 %v6575
          %v6999 = vunpack.c.l.b16 %v6576
          %v7000 = vunpack.c.h.b16 %v6576
          %v7001 = vunpack.c.l.b16 %v6577
          %v7002 = vunpack.c.l.b16 %v6578
          %v7003 = vunpack.c.h.b16 %v6578
          %v7004 = vunpack.c.l.b16 %v6579
          %v7005 = vunpack.c.l.b16 %v6580
          %v7006 = vunpack.c.h.b16 %v6580
          %v7007 = vunpack.c.l.b16 %v6581
          %v7008 = vunpack.c.l.b16 %v6582
          %v7009 = vunpack.c.h.b16 %v6582
          %v7010 = vunpack.c.l.b16 %v6583
          %v7011 = vunpack.c.l.b16 %v6584
          %v7012 = vunpack.c.h.b16 %v6584
          %v7013 = vunpack.c.l.b16 %v6585
          %v7014 = vunpack.c.l.b16 %v6586
          %v7015 = vunpack.c.h.b16 %v6586
          %v7016 = vunpack.c.l.b16 %v6587
          %v7017 = vunpack.c.l.b16 %v6588
          %v7018 = vunpack.c.h.b16 %v6588
          %v7019 = vunpack.c.l.b16 %v6589
          %v7020 = vunpack.c.l.b16 %v6590
          %v7021 = vunpack.c.h.b16 %v6590
          %v7022 = vunpack.c.l.b16 %v6591
          %v7023 = vunpack.c.l.b16 %v6592
          %v7024 = vunpack.c.h.b16 %v6592
          %v7025 = vunpack.c.l.b16 %v6593
          %v7026 = vunpack.c.l.b16 %v6594
          %v7027 = vunpack.c.h.b16 %v6594
          %v7028 = vunpack.c.l.b16 %v6595
          %v7029 = vunpack.c.l.b16 %v6596
          %v7030 = vunpack.c.h.b16 %v6596
          %v7031 = vunpack.c.l.b16 %v6597
          %v7032 = vunpack.c.l.b16 %v6598
          %v7033 = vunpack.c.h.b16 %v6598
          %v7034 = vunpack.c.l.b16 %v6599
          %v7035 = vunpack.c.l.b16 %v6600
          %v7036 = vunpack.c.h.b16 %v6600
          %v7037 = vunpack.c.l.b16 %v6601
          %v7038 = vunpack.c.l.b16 %v6602
          %v7039 = vunpack.c.h.b16 %v6602
          %v7040 = vunpack.c.l.b16 %v6603
          %v7041 = vunpack.c.l.b16 %v6604
          %v7042 = vunpack.c.h.b16 %v6604
          %v7043 = vunpack.c.l.b16 %v6605
          %v7044 = vunpack.c.l.b16 %v6606
          %v7045 = vunpack.c.h.b16 %v6606
          %v7046 = vunpack.c.l.b16 %v6607
          %v7047 = vunpack.c.l.b16 %v6608
          %v7048 = vunpack.c.h.b16 %v6608
          %v7049 = vunpack.c.l.b16 %v6609
          %v7050 = vunpack.c.l.b16 %v6610
          %v7051 = vunpack.c.h.b16 %v6610
          %v7052 = vunpack.c.l.b16 %v6611
          %v7053 = vunpack.c.l.b16 %v6612
          %v7054 = vunpack.c.h.b16 %v6612
          %v7055 = vunpack.c.l.b16 %v6613
          %v7056 = vunpack.c.l.b16 %v6614
          %v7057 = vunpack.c.h.b16 %v6614
          %v7058 = vunpack.c.l.b16 %v6615
          %v7059 = vpack.c.b16 %v6822, %v6819
          %v7060 = vpack.c.b16 %v6823, %v6820
          %v7061 = vpack.c.b16 %v6824, %v6821
          %v7062 = vpack.c.b16 %v6828, %v6825
          %v7063 = vpack.c.b16 %v6829, %v6826
          %v7064 = vpack.c.b16 %v6830, %v6827
          %v7065 = vpack.c.b16 %v6834, %v6831
          %v7066 = vpack.c.b16 %v6835, %v6832
          %v7067 = vpack.c.b16 %v6836, %v6833
          %v7068 = vpack.c.b16 %v6840, %v6837
          %v7069 = vpack.c.b16 %v6841, %v6838
          %v7070 = vpack.c.b16 %v6842, %v6839
          %v7071 = vpack.c.b16 %v6846, %v6843
          %v7072 = vpack.c.b16 %v6847, %v6844
          %v7073 = vpack.c.b16 %v6848, %v6845
          %v7074 = vpack.c.b16 %v6852, %v6849
          %v7075 = vpack.c.b16 %v6853, %v6850
          %v7076 = vpack.c.b16 %v6854, %v6851
          %v7077 = vpack.c.b16 %v6858, %v6855
          %v7078 = vpack.c.b16 %v6859, %v6856
          %v7079 = vpack.c.b16 %v6860, %v6857
          %v7080 = vpack.c.b16 %v6864, %v6861
          %v7081 = vpack.c.b16 %v6865, %v6862
          %v7082 = vpack.c.b16 %v6866, %v6863
          %v7083 = vpack.c.b16 %v6870, %v6867
          %v7084 = vpack.c.b16 %v6871, %v6868
          %v7085 = vpack.c.b16 %v6872, %v6869
          %v7086 = vpack.c.b16 %v6876, %v6873
          %v7087 = vpack.c.b16 %v6877, %v6874
          %v7088 = vpack.c.b16 %v6878, %v6875
          %v7089 = vpack.c.b16 %v6882, %v6879
          %v7090 = vpack.c.b16 %v6883, %v6880
          %v7091 = vpack.c.b16 %v6884, %v6881
          %v7092 = vpack.c.b16 %v6888, %v6885
          %v7093 = vpack.c.b16 %v6889, %v6886
          %v7094 = vpack.c.b16 %v6890, %v6887
          %v7095 = vpack.c.b16 %v6894, %v6891
          %v7096 = vpack.c.b16 %v6895, %v6892
          %v7097 = vpack.c.b16 %v6896, %v6893
          %v7098 = vpack.c.b16 %v6900, %v6897
          %v7099 = vpack.c.b16 %v6901, %v6898
          %v7100 = vpack.c.b16 %v6902, %v6899
          %v7101 = vpack.c.b16 %v6906, %v6903
          %v7102 = vpack.c.b16 %v6907, %v6904
          %v7103 = vpack.c.b16 %v6908, %v6905
          %v7104 = vpack.c.b16 %v6912, %v6909
          %v7105 = vpack.c.b16 %v6913, %v6910
          %v7106 = vpack.c.b16 %v6914, %v6911
          %v7107 = vpack.c.b16 %v6918, %v6915
          %v7108 = vpack.c.b16 %v6919, %v6916
          %v7109 = vpack.c.b16 %v6920, %v6917
          %v7110 = vpack.c.b16 %v6924, %v6921
          %v7111 = vpack.c.b16 %v6925, %v6922
          %v7112 = vpack.c.b16 %v6926, %v6923
          %v7113 = vpack.c.b16 %v6930, %v6927
          %v7114 = vpack.c.b16 %v6931, %v6928
          %v7115 = vpack.c.b16 %v6932, %v6929
          %v7116 = vpack.c.b16 %v6936, %v6933
          %v7117 = vpack.c.b16 %v6937, %v6934
          %v7118 = vpack.c.b16 %v6938, %v6935
          %v7119 = vpack.c.b16 %v6942, %v6939
          %v7120 = vpack.c.b16 %v6943, %v6940
          %v7121 = vpack.c.b16 %v6944, %v6941
          %v7122 = vpack.c.b16 %v6948, %v6945
          %v7123 = vpack.c.b16 %v6949, %v6946
          %v7124 = vpack.c.b16 %v6950, %v6947
          %v7125 = vpack.c.b16 %v6954, %v6951
          %v7126 = vpack.c.b16 %v6955, %v6952
          %v7127 = vpack.c.b16 %v6956, %v6953
          %v7128 = vpack.c.b16 %v6960, %v6957
          %v7129 = vpack.c.b16 %v6961, %v6958
          %v7130 = vpack.c.b16 %v6962, %v6959
          %v7131 = vpack.c.b16 %v6966, %v6963
          %v7132 = vpack.c.b16 %v6967, %v6964
          %v7133 = vpack.c.b16 %v6968, %v6965
          %v7134 = vpack.c.b16 %v6972, %v6969
          %v7135 = vpack.c.b16 %v6973, %v6970
          %v7136 = vpack.c.b16 %v6974, %v6971
          %v7137 = vpack.c.b16 %v6978, %v6975
          %v7138 = vpack.c.b16 %v6979, %v6976
          %v7139 = vpack.c.b16 %v6980, %v6977
          %v7140 = vpack.c.b16 %v6984, %v6981
          %v7141 = vpack.c.b16 %v6985, %v6982
          %v7142 = vpack.c.b16 %v6986, %v6983
          %v7143 = vpack.c.b16 %v6990, %v6987
          %v7144 = vpack.c.b16 %v6991, %v6988
          %v7145 = vpack.c.b16 %v6992, %v6989
          %v7146 = vpack.c.b16 %v6996, %v6993
          %v7147 = vpack.c.b16 %v6997, %v6994
          %v7148 = vpack.c.b16 %v6998, %v6995
          %v7149 = vpack.c.b16 %v7002, %v6999
          %v7150 = vpack.c.b16 %v7003, %v7000
          %v7151 = vpack.c.b16 %v7004, %v7001
          %v7152 = vpack.c.b16 %v7008, %v7005
          %v7153 = vpack.c.b16 %v7009, %v7006
          %v7154 = vpack.c.b16 %v7010, %v7007
          %v7155 = vpack.c.b16 %v7014, %v7011
          %v7156 = vpack.c.b16 %v7015, %v7012
          %v7157 = vpack.c.b16 %v7016, %v7013
          %v7158 = vpack.c.b16 %v7020, %v7017
          %v7159 = vpack.c.b16 %v7021, %v7018
          %v7160 = vpack.c.b16 %v7022, %v7019
          %v7161 = vpack.c.b16 %v7026, %v7023
          %v7162 = vpack.c.b16 %v7027, %v7024
          %v7163 = vpack.c.b16 %v7028, %v7025
          %v7164 = vpack.c.b16 %v7032, %v7029
          %v7165 = vpack.c.b16 %v7033, %v7030
          %v7166 = vpack.c.b16 %v7034, %v7031
          %v7167 = vpack.c.b16 %v7038, %v7035
          %v7168 = vpack.c.b16 %v7039, %v7036
          %v7169 = vpack.c.b16 %v7040, %v7037
          %v7170 = vpack.c.b16 %v7044, %v7041
          %v7171 = vpack.c.b16 %v7045, %v7042
          %v7172 = vpack.c.b16 %v7046, %v7043
          %v7173 = vpack.c.b16 %v7050, %v7047
          %v7174 = vpack.c.b16 %v7051, %v7048
          %v7175 = vpack.c.b16 %v7052, %v7049
          %v7176 = vpack.c.b16 %v7056, %v7053
          %v7177 = vpack.c.b16 %v7057, %v7054
          %v7178 = vpack.c.b16 %v7058, %v7055
          %7299 = vmatprep.subr.bf16.mxu0 %v7060
          %7300 = vmatpush1.bf16.msra.mxu0 %v7059
          %7301 = vmatprep.subr.bf16.mxu0 %v7063
          %7302 = vmatpush1.bf16.msra.mxu0 %v7062
          %7303 = vmatprep.subr.bf16.mxu0 %v7066
          %7304 = vmatpush1.bf16.msra.mxu0 %v7065
          %7305 = vmatprep.subr.bf16.mxu0 %v7069
          %7306 = vmatpush1.bf16.msra.mxu0 %v7068
          %7307 = vmatprep.subr.bf16.mxu0 %v7072
          %7308 = vmatpush1.bf16.msra.mxu0 %v7071
          %7309 = vmatprep.subr.bf16.mxu0 %v7075
          %7310 = vmatpush1.bf16.msra.mxu0 %v7074
          %7311 = vmatprep.subr.bf16.mxu0 %v7078
          %7312 = vmatpush1.bf16.msra.mxu0 %v7077
          %7313 = vmatprep.subr.bf16.mxu0 %v7081
          %7314 = vmatpush1.bf16.msra.mxu0 %v7080
          %7315 = vmatprep.subr.bf16.mxu0 %v7084
          %7316 = vmatpush1.bf16.msra.mxu0 %v7083
          %7317 = vmatprep.subr.bf16.mxu0 %v7087
          %7318 = vmatpush1.bf16.msra.mxu0 %v7086
          %7319 = vmatprep.subr.bf16.mxu0 %v7090
          %7320 = vmatpush1.bf16.msra.mxu0 %v7089
          %7321 = vmatprep.subr.bf16.mxu0 %v7093
          %7322 = vmatpush1.bf16.msra.mxu0 %v7092
          %7323 = vmatprep.subr.bf16.mxu0 %v7096
          %7324 = vmatpush1.bf16.msra.mxu0 %v7095
          %7325 = vmatprep.subr.bf16.mxu0 %v7099
          %7326 = vmatpush1.bf16.msra.mxu0 %v7098
          %7327 = vmatprep.subr.bf16.mxu0 %v7102
          %7328 = vmatpush1.bf16.msra.mxu0 %v7101
          %7329 = vmatprep.subr.bf16.mxu0 %v7105
          %7330 = vmatpush1.bf16.msra.mxu0 %v7104
          %7331 = vmatprep.mubr.bf16.mxu0 %v6650
          %7332 = vmatmul.mubr.bf16.gmra.mrb[0].mxu0 %v6649
          %v7333 = vpop.f32.mrb[0].mxu0
          %v7334 = vadd.f32 %v6621, %v7333
          %v7335 = vpop.f32.mrb[0].mxu0
          %v7336 = vadd.f32 %v6625, %v7335
          %v7337 = vpop.f32.mrb[0].mxu0
          %v7338 = vadd.f32 %v6621, %v7337
          %v7339 = vpop.f32.mrb[0].mxu0
          %v7340 = vadd.f32 %v6625, %v7339
          %7341 = vdwg.mxu0
          %7342 = vmatprep.subr.bf16.mxu0 %v7108
          %7343 = vmatpush1.bf16.msra.mxu0 %v7107
          %7344 = vmatprep.subr.bf16.mxu0 %v7111
          %7345 = vmatpush1.bf16.msra.mxu0 %v7110
          %7346 = vmatprep.subr.bf16.mxu0 %v7114
          %7347 = vmatpush1.bf16.msra.mxu0 %v7113
          %7348 = vmatprep.subr.bf16.mxu0 %v7117
          %7349 = vmatpush1.bf16.msra.mxu0 %v7116
          %7350 = vmatprep.subr.bf16.mxu0 %v7120
          %7351 = vmatpush1.bf16.msra.mxu0 %v7119
          %7352 = vmatprep.subr.bf16.mxu0 %v7123
          %7353 = vmatpush1.bf16.msra.mxu0 %v7122
          %7354 = vmatprep.subr.bf16.mxu0 %v7126
          %7355 = vmatpush1.bf16.msra.mxu0 %v7125
          %7356 = vmatprep.subr.bf16.mxu0 %v7129
          %7357 = vmatpush1.bf16.msra.mxu0 %v7128
          %7358 = vmatprep.subr.bf16.mxu0 %v7132
          %7359 = vmatpush1.bf16.msra.mxu0 %v7131
          %7360 = vmatprep.subr.bf16.mxu0 %v7135
          %7361 = vmatpush1.bf16.msra.mxu0 %v7134
          %7362 = vmatprep.subr.bf16.mxu0 %v7138
          %7363 = vmatpush1.bf16.msra.mxu0 %v7137
          %7364 = vmatprep.subr.bf16.mxu0 %v7141
          %7365 = vmatpush1.bf16.msra.mxu0 %v7140
          %7366 = vmatprep.subr.bf16.mxu0 %v7144
          %7367 = vmatpush1.bf16.msra.mxu0 %v7143
          %7368 = vmatprep.subr.bf16.mxu0 %v7147
          %7369 = vmatpush1.bf16.msra.mxu0 %v7146
          %7370 = vmatprep.subr.bf16.mxu0 %v7150
          %7371 = vmatpush1.bf16.msra.mxu0 %v7149
          %7372 = vmatprep.subr.bf16.mxu0 %v7153
          %7373 = vmatpush1.bf16.msra.mxu0 %v7152
          %7374 = vmatprep.mubr.bf16.mxu0 %v6652
          %7375 = vmatmul.mubr.bf16.gmra.mrb[0].mxu0 %v6651
          %v7376 = vpop.f32.mrb[0].mxu0
          %v7377 = vadd.f32 %v7334, %v7376
          %v7378 = vpop.f32.mrb[0].mxu0
          %v7379 = vadd.f32 %v7336, %v7378
          %v7380 = vpop.f32.mrb[0].mxu0
          %v7381 = vadd.f32 %v7338, %v7380
          %v7382 = vpop.f32.mrb[0].mxu0
          %v7383 = vadd.f32 %v7340, %v7382
          %7384 = vdwg.mxu0
          %7385 = vmatprep.subr.bf16.mxu0 %v7156
          %7386 = vmatpush1.bf16.msra.mxu0 %v7155
          %7387 = vmatprep.subr.bf16.mxu0 %v7159
          %7388 = vmatpush1.bf16.msra.mxu0 %v7158
          %7389 = vmatprep.subr.bf16.mxu0 %v7162
          %7390 = vmatpush1.bf16.msra.mxu0 %v7161
          %7391 = vmatprep.subr.bf16.mxu0 %v7165
          %7392 = vmatpush1.bf16.msra.mxu0 %v7164
          %7393 = vmatprep.subr.bf16.mxu0 %v7168
          %7394 = vmatpush1.bf16.msra.mxu0 %v7167
          %7395 = vmatprep.subr.bf16.mxu0 %v7171
          %7396 = vmatpush1.bf16.msra.mxu0 %v7170
          %7397 = vmatprep.subr.bf16.mxu0 %v7174
          %7398 = vmatpush1.bf16.msra.mxu0 %v7173
          %7399 = vmatprep.subr.bf16.mxu0 %v7177
          %7400 = vmatpush1.bf16.msra.mxu0 %v7176
          %7401 = vmatprep.subr.bf16.mxu0 0
          %7402 = vmatpush1.bf16.msra.mxu0 0
          %7403 = vmatprep.subr.bf16.mxu0 0
          %7404 = vmatpush1.bf16.msra.mxu0 0
          %7405 = vmatprep.subr.bf16.mxu0 0
          %7406 = vmatpush1.bf16.msra.mxu0 0
          %7407 = vmatprep.subr.bf16.mxu0 0
          %7408 = vmatpush1.bf16.msra.mxu0 0
          %7409 = vmatprep.subr.bf16.mxu0 0
          %7410 = vmatpush1.bf16.msra.mxu0 0
          %7411 = vmatprep.subr.bf16.mxu0 0
          %7412 = vmatpush1.bf16.msra.mxu0 0
          %7413 = vmatprep.subr.bf16.mxu0 0
          %7414 = vmatpush1.bf16.msra.mxu0 0
          %7415 = vmatprep.subr.bf16.mxu0 0
          %7416 = vmatpush1.bf16.msra.mxu0 0
          %7417 = vmatprep.mubr.bf16.mxu0 0
          %7418 = vmatmul.mubr.bf16.gmra.mrb[0].mxu0 %v6653
          %v7419 = vpop.f32.mrb[0].mxu0
          %v7420 = vadd.f32 %v7377, %v7419
          %v7421 = vpop.f32.mrb[0].mxu0
          %v7422 = vadd.f32 %v7379, %v7421
          %v7423 = vpop.f32.mrb[0].mxu0
          %v7424 = vadd.f32 %v7381, %v7423
          %v7425 = vpop.f32.mrb[0].mxu0
          %v7426 = vadd.f32 %v7383, %v7425
          %7427 = vdwg.mxu0
          %7428 = vmatprep.subr.bf16.mxu0 0
          %7429 = vmatpush1.bf16.msra.mxu0 %v7061
          %7430 = vmatprep.subr.bf16.mxu0 0
          %7431 = vmatpush1.bf16.msra.mxu0 %v7064
          %7432 = vmatprep.subr.bf16.mxu0 0
          %7433 = vmatpush1.bf16.msra.mxu0 %v7067
          %7434 = vmatprep.subr.bf16.mxu0 0
          %7435 = vmatpush1.bf16.msra.mxu0 %v7070
          %7436 = vmatprep.subr.bf16.mxu0 0
          %7437 = vmatpush1.bf16.msra.mxu0 %v7073
          %7438 = vmatprep.subr.bf16.mxu0 0
          %7439 = vmatpush1.bf16.msra.mxu0 %v7076
          %7440 = vmatprep.subr.bf16.mxu0 0
          %7441 = vmatpush1.bf16.msra.mxu0 %v7079
          %7442 = vmatprep.subr.bf16.mxu0 0
          %7443 = vmatpush1.bf16.msra.mxu0 %v7082
          %7444 = vmatprep.subr.bf16.mxu0 0
          %7445 = vmatpush1.bf16.msra.mxu0 %v7085
          %7446 = vmatprep.subr.bf16.mxu0 0
          %7447 = vmatpush1.bf16.msra.mxu0 %v7088
          %7448 = vmatprep.subr.bf16.mxu0 0
          %7449 = vmatpush1.bf16.msra.mxu0 %v7091
          %7450 = vmatprep.subr.bf16.mxu0 0
          %7451 = vmatpush1.bf16.msra.mxu0 %v7094
          %7452 = vmatprep.subr.bf16.mxu0 0
          %7453 = vmatpush1.bf16.msra.mxu0 %v7097
          %7454 = vmatprep.subr.bf16.mxu0 0
          %7455 = vmatpush1.bf16.msra.mxu0 %v7100
          %7456 = vmatprep.subr.bf16.mxu0 0
          %7457 = vmatpush1.bf16.msra.mxu0 %v7103
          %7458 = vmatprep.subr.bf16.mxu0 0
          %7459 = vmatpush1.bf16.msra.mxu0 %v7106
          %7460 = vmatprep.mubr.bf16.mxu0 %v6650
          %7461 = vmatmul.mubr.bf16.gmra.mrb[0].mxu0 %v6649
          %v7462 = vpop.f32.mrb[0].mxu0
          %v7463 = vadd.f32 %v6629, %v7462
          %v7464 = vpop.f32.mrb[0].mxu0
          %v7465 = vpop.f32.mrb[0].mxu0
          %v7466 = vadd.f32 %v6629, %v7465
          %v7467 = vpop.f32.mrb[0].mxu0
          %7468 = vdwg.mxu0
          %7469 = vmatprep.subr.bf16.mxu0 0
          %7470 = vmatpush1.bf16.msra.mxu0 %v7109
          %7471 = vmatprep.subr.bf16.mxu0 0
          %7472 = vmatpush1.bf16.msra.mxu0 %v7112
          %7473 = vmatprep.subr.bf16.mxu0 0
          %7474 = vmatpush1.bf16.msra.mxu0 %v7115
          %7475 = vmatprep.subr.bf16.mxu0 0
          %7476 = vmatpush1.bf16.msra.mxu0 %v7118
          %7477 = vmatprep.subr.bf16.mxu0 0
          %7478 = vmatpush1.bf16.msra.mxu0 %v7121
          %7479 = vmatprep.subr.bf16.mxu0 0
          %7480 = vmatpush1.bf16.msra.mxu0 %v7124
          %7481 = vmatprep.subr.bf16.mxu0 0
          %7482 = vmatpush1.bf16.msra.mxu0 %v7127
          %7483 = vmatprep.subr.bf16.mxu0 0
          %7484 = vmatpush1.bf16.msra.mxu0 %v7130
          %7485 = vmatprep.subr.bf16.mxu0 0
          %7486 = vmatpush1.bf16.msra.mxu0 %v7133
          %7487 = vmatprep.subr.bf16.mxu0 0
          %7488 = vmatpush1.bf16.msra.mxu0 %v7136
          %7489 = vmatprep.subr.bf16.mxu0 0
          %7490 = vmatpush1.bf16.msra.mxu0 %v7139
          %7491 = vmatprep.subr.bf16.mxu0 0
          %7492 = vmatpush1.bf16.msra.mxu0 %v7142
          %7493 = vmatprep.subr.bf16.mxu0 0
          %7494 = vmatpush1.bf16.msra.mxu0 %v7145
          %7495 = vmatprep.subr.bf16.mxu0 0
          %7496 = vmatpush1.bf16.msra.mxu0 %v7148
          %7497 = vmatprep.subr.bf16.mxu0 0
          %7498 = vmatpush1.bf16.msra.mxu0 %v7151
          %7499 = vmatprep.subr.bf16.mxu0 0
          %7500 = vmatpush1.bf16.msra.mxu0 %v7154
          %7501 = vmatprep.mubr.bf16.mxu0 %v6652
          %7502 = vmatmul.mubr.bf16.gmra.mrb[0].mxu0 %v6651
          %v7503 = vpop.f32.mrb[0].mxu0
          %v7504 = vadd.f32 %v7463, %v7503
          %v7505 = vpop.f32.mrb[0].mxu0
          %v7506 = vpop.f32.mrb[0].mxu0
          %v7507 = vadd.f32 %v7466, %v7506
          %v7508 = vpop.f32.mrb[0].mxu0
          %7509 = vdwg.mxu0
          %7510 = vmatprep.subr.bf16.mxu0 0
          %7511 = vmatpush1.bf16.msra.mxu0 %v7157
          %7512 = vmatprep.subr.bf16.mxu0 0
          %7513 = vmatpush1.bf16.msra.mxu0 %v7160
          %7514 = vmatprep.subr.bf16.mxu0 0
          %7515 = vmatpush1.bf16.msra.mxu0 %v7163
          %7516 = vmatprep.subr.bf16.mxu0 0
          %7517 = vmatpush1.bf16.msra.mxu0 %v7166
          %7518 = vmatprep.subr.bf16.mxu0 0
          %7519 = vmatpush1.bf16.msra.mxu0 %v7169
          %7520 = vmatprep.subr.bf16.mxu0 0
          %7521 = vmatpush1.bf16.msra.mxu0 %v7172
          %7522 = vmatprep.subr.bf16.mxu0 0
          %7523 = vmatpush1.bf16.msra.mxu0 %v7175
          %7524 = vmatprep.subr.bf16.mxu0 0
          %7525 = vmatpush1.bf16.msra.mxu0 %v7178
          %7526 = vmatprep.subr.bf16.mxu0 0
          %7527 = vmatpush1.bf16.msra.mxu0 0
          %7528 = vmatprep.subr.bf16.mxu0 0
          %7529 = vmatpush1.bf16.msra.mxu0 0
          %7530 = vmatprep.subr.bf16.mxu0 0
          %7531 = vmatpush1.bf16.msra.mxu0 0
          %7532 = vmatprep.subr.bf16.mxu0 0
          %7533 = vmatpush1.bf16.msra.mxu0 0
          %7534 = vmatprep.subr.bf16.mxu0 0
          %7535 = vmatpush1.bf16.msra.mxu0 0
          %7536 = vmatprep.subr.bf16.mxu0 0
          %7537 = vmatpush1.bf16.msra.mxu0 0
          %7538 = vmatprep.subr.bf16.mxu0 0
          %7539 = vmatpush1.bf16.msra.mxu0 0
          %7540 = vmatprep.subr.bf16.mxu0 0
          %7541 = vmatpush1.bf16.msra.mxu0 0
          %7542 = vmatprep.mubr.bf16.mxu0 0
          %7543 = vmatmul.mubr.bf16.gmra.mrb[0].mxu0 %v6653
          %v7544 = vpop.f32.mrb[0].mxu0
          %v7545 = vadd.f32 %v7504, %v7544
          %v7546 = vpop.f32.mrb[0].mxu0
          %v7547 = vpop.f32.mrb[0].mxu0
          %v7548 = vadd.f32 %v7507, %v7547
          %v7549 = vpop.f32.mrb[0].mxu0
          %7550 = vdwg.mxu0
          %v7551 = vmax.f32 %v7420, %v7422
          %7552 = vmax.xlane.f32.xlu0 %v7551
          %v7553 = vpop.xlane.xlu0 %7552
          %v7554 = vmax.f32 %v7424, %v7426
          %7555 = vmax.xlane.f32.xlu0 %v7554
          %v7556 = vpop.xlane.xlu0 %7555
          %v7557 = vsub.f32 %v7420, %v7553
          %v7558 = vsub.f32 %v7422, %v7553
          %v7559 = vsub.f32 %v7424, %v7556
          %v7560 = vsub.f32 %v7426, %v7556
          %v7561 = vmul.f32 %v7557, 1.442695
          %v7562 = vpow.pop %v7561
          %v7563 = vmul.f32 %v7558, 1.442695
          %v7564 = vpow.pop %v7563
          %v7565 = vmul.f32 %v7559, 1.442695
          %v7566 = vpow.pop %v7565
          %v7567 = vmul.f32 %v7560, 1.442695
          %v7568 = vpow.pop %v7567
          %v7569 = vadd.f32 %v7562, %v7564
          %7570 = vadd.xlane.f32.xlu0 %v7569
          %v7571 = vpop.xlane.xlu0 %7570
          %v7572 = vadd.f32 %v7566, %v7568
          %7573 = vadd.xlane.f32.xlu0 %v7572
          %v7574 = vpop.xlane.xlu0 %7573
          %v7575 = vrcp.pop %v7571
          %v7576 = vrcp.pop %v7574
          %v7577 = vmul.f32 %v7562, %v7575
          %v7578 = vmul.f32 %v7564, %v7575
          %v7579 = vmul.f32 %v7566, %v7576
          %v7580 = vmul.f32 %v7568, %v7576
          %v7581 = vadd.f32 %v7577, 0.5
          %v7582 = vadd.f32 %v7579, 0.5
          %v7583 = vmul.f32 %v7581, %v7545
          %v7584 = vmul.f32 %v7582, %v7548
          %v7585 = vmul.f32 %v7578, %v6444
          %v7586 = vmul.f32 %v7580, %v6447
          %v7587 = vadd.f32 %v7583, %v7585
          %v7588 = vadd.f32 %v7584, %v7586
          %v7589 = vld [vmem:[%s636] sm:$0xff]
          %v7590 = vld [vmem:[%s636 + $0x8] sm:$0xff]
          %v7591 = vld [vmem:[%s636 + $0x10] sm:$0xf]
          %v7592 = vld [vmem:[%s636 + $0x14] sm:$0xff]
          %v7593 = vld [vmem:[%s636 + $0x1c] sm:$0xff]
          %v7594 = vld [vmem:[%s636 + $0x24] sm:$0xf]
          %v7595 = vld [vmem:[#allocation5] sm:$0xff]
          %v7596 = vld [vmem:[#allocation5 + $0x8] sm:$0xf]
          %v7597 = vld [vmem:[#allocation5 + $0xc] sm:$0xff]
          %v7598 = vld [vmem:[#allocation5 + $0x14] sm:$0xf]
          %v7599 = vld [vmem:[#allocation5 + $0x18] sm:$0xff]
          %v7600 = vld [vmem:[#allocation5 + $0x20] sm:$0xf]
          %v7601 = vld [vmem:[#allocation5 + $0x24] sm:$0xff]
          %v7602 = vld [vmem:[#allocation5 + $0x2c] sm:$0xf]
          %v7603 = vld [vmem:[#allocation5 + $0x30] sm:$0xff]
          %v7604 = vld [vmem:[#allocation5 + $0x38] sm:$0xf]
          %v7605 = vld [vmem:[#allocation5 + $0x3c] sm:$0xff]
          %v7606 = vld [vmem:[#allocation5 + $0x44] sm:$0xf]
          %v7607 = vld [vmem:[#allocation5 + $0x48] sm:$0xff]
          %v7608 = vld [vmem:[#allocation5 + $0x50] sm:$0xf]
          %v7609 = vld [vmem:[#allocation5 + $0x54] sm:$0xff]
          %v7610 = vld [vmem:[#allocation5 + $0x5c] sm:$0xf]
          %v7611 = vld [vmem:[#allocation5 + $0x60] sm:$0xff]
          %v7612 = vld [vmem:[#allocation5 + $0x68] sm:$0xf]
          %v7613 = vld [vmem:[#allocation5 + $0x6c] sm:$0xff]
          %v7614 = vld [vmem:[#allocation5 + $0x74] sm:$0xf]
          %v7615 = vld [vmem:[#allocation5 + $0x78] sm:$0xff]
          %v7616 = vld [vmem:[#allocation5 + $0x80] sm:$0xf]
          %v7617 = vld [vmem:[#allocation5 + $0x84] sm:$0xff]
          %v7618 = vld [vmem:[#allocation5 + $0x8c] sm:$0xf]
          %v7619 = vld [vmem:[#allocation5 + $0x90] sm:$0xff]
          %v7620 = vld [vmem:[#allocation5 + $0x98] sm:$0xf]
          %v7621 = vld [vmem:[#allocation5 + $0x9c] sm:$0xff]
          %v7622 = vld [vmem:[#allocation5 + $0xa4] sm:$0xf]
          %v7623 = vld [vmem:[#allocation5 + $0xa8] sm:$0xff]
          %v7624 = vld [vmem:[#allocation5 + $0xb0] sm:$0xf]
          %v7625 = vld [vmem:[#allocation5 + $0xb4] sm:$0xff]
          %v7626 = vld [vmem:[#allocation5 + $0xbc] sm:$0xf]
          %v7627 = vld [vmem:[#allocation5 + $0xc0] sm:$0xff]
          %v7628 = vld [vmem:[#allocation5 + $0xc8] sm:$0xf]
          %v7629 = vld [vmem:[#allocation5 + $0xcc] sm:$0xff]
          %v7630 = vld [vmem:[#allocation5 + $0xd4] sm:$0xf]
          %v7631 = vld [vmem:[#allocation5 + $0xd8] sm:$0xff]
          %v7632 = vld [vmem:[#allocation5 + $0xe0] sm:$0xf]
          %v7633 = vld [vmem:[#allocation5 + $0xe4] sm:$0xff]
          %v7634 = vld [vmem:[#allocation5 + $0xec] sm:$0xf]
          %v7635 = vld [vmem:[#allocation5 + $0xf0] sm:$0xff]
          %v7636 = vld [vmem:[#allocation5 + $0xf8] sm:$0xf]
          %v7637 = vld [vmem:[#allocation5 + $0xfc] sm:$0xff]
          %v7638 = vld [vmem:[#allocation5 + $0x104] sm:$0xf]
          %v7639 = vld [vmem:[#allocation5 + $0x108] sm:$0xff]
          %v7640 = vld [vmem:[#allocation5 + $0x110] sm:$0xf]
          %v7641 = vld [vmem:[#allocation5 + $0x114] sm:$0xff]
          %v7642 = vld [vmem:[#allocation5 + $0x11c] sm:$0xf]
          %v7643 = vld [vmem:[#allocation5 + $0x120] sm:$0xff]
          %v7644 = vld [vmem:[#allocation5 + $0x128] sm:$0xf]
          %v7645 = vld [vmem:[#allocation5 + $0x12c] sm:$0xff]
          %v7646 = vld [vmem:[#allocation5 + $0x134] sm:$0xf]
          %v7647 = vld [vmem:[#allocation5 + $0x138] sm:$0xff]
          %v7648 = vld [vmem:[#allocation5 + $0x140] sm:$0xf]
          %v7649 = vld [vmem:[#allocation5 + $0x144] sm:$0xff]
          %v7650 = vld [vmem:[#allocation5 + $0x14c] sm:$0xf]
          %v7651 = vld [vmem:[#allocation5 + $0x150] sm:$0xff]
          %v7652 = vld [vmem:[#allocation5 + $0x158] sm:$0xf]
          %v7653 = vld [vmem:[#allocation5 + $0x15c] sm:$0xff]
          %v7654 = vld [vmem:[#allocation5 + $0x164] sm:$0xf]
          %v7655 = vld [vmem:[#allocation5 + $0x168] sm:$0xff]
          %v7656 = vld [vmem:[#allocation5 + $0x170] sm:$0xf]
          %v7657 = vld [vmem:[#allocation5 + $0x174] sm:$0xff]
          %v7658 = vld [vmem:[#allocation5 + $0x17c] sm:$0xf]
          %v7659 = vld [vmem:[#allocation5 + $0x180] sm:$0xff]
          %v7660 = vld [vmem:[#allocation5 + $0x188] sm:$0xf]
          %v7661 = vld [vmem:[#allocation5 + $0x18c] sm:$0xff]
          %v7662 = vld [vmem:[#allocation5 + $0x194] sm:$0xf]
          %v7663 = vld [vmem:[#allocation5 + $0x198] sm:$0xff]
          %v7664 = vld [vmem:[#allocation5 + $0x1a0] sm:$0xf]
          %v7665 = vld [vmem:[#allocation5 + $0x1a4] sm:$0xff]
          %v7666 = vld [vmem:[#allocation5 + $0x1ac] sm:$0xf]
          %v7667 = vld [vmem:[#allocation5 + $0x1b0] sm:$0xff]
          %v7668 = vld [vmem:[#allocation5 + $0x1b8] sm:$0xf]
          %v7669 = vld [vmem:[#allocation5 + $0x1bc] sm:$0xff]
          %v7670 = vld [vmem:[#allocation5 + $0x1c4] sm:$0xf]
          %v7671 = vld [vmem:[#allocation5 + $0x1c8] sm:$0xff]
          %v7672 = vld [vmem:[#allocation5 + $0x1d0] sm:$0xf]
          %v7673 = vld [vmem:[#allocation5 + $0x1d4] sm:$0xff]
          %v7674 = vld [vmem:[#allocation5 + $0x1dc] sm:$0xf]
          %v7675 = vld [vmem:[#allocation5 + $0x1e0] sm:$0xff]
          %v7676 = vld [vmem:[#allocation5 + $0x1e8] sm:$0xf]
          %v7677 = vld [vmem:[#allocation5 + $0x1ec] sm:$0xff]
          %v7678 = vld [vmem:[#allocation5 + $0x1f4] sm:$0xf]
          %v7679 = vld [vmem:[#allocation5 + $0x1f8] sm:$0xff]
          %v7680 = vld [vmem:[#allocation5 + $0x200] sm:$0xf]
          %v7681 = vld [vmem:[#allocation5 + $0x204] sm:$0xff]
          %v7682 = vld [vmem:[#allocation5 + $0x20c] sm:$0xf]
          %v7683 = vld [vmem:[#allocation5 + $0x210] sm:$0xff]
          %v7684 = vld [vmem:[#allocation5 + $0x218] sm:$0xf]
          %v7685 = vld [vmem:[#allocation5 + $0x21c] sm:$0xff]
          %v7686 = vld [vmem:[#allocation5 + $0x224] sm:$0xf]
          %v7687 = vld [vmem:[#allocation5 + $0x228] sm:$0xff]
          %v7688 = vld [vmem:[#allocation5 + $0x230] sm:$0xf]
          %v7689 = vld [vmem:[#allocation5 + $0x234] sm:$0xff]
          %v7690 = vld [vmem:[#allocation5 + $0x23c] sm:$0xf]
          %v7691 = vld [vmem:[#allocation5 + $0x240] sm:$0xff]
          %v7692 = vld [vmem:[#allocation5 + $0x248] sm:$0xf]
          %v7693 = vld [vmem:[#allocation5 + $0x24c] sm:$0xff]
          %v7694 = vld [vmem:[#allocation5 + $0x254] sm:$0xf]
          %v7695 = vld [vmem:[#allocation5 + $0x258] sm:$0xff]
          %v7696 = vld [vmem:[#allocation5 + $0x260] sm:$0xf]
          %v7697 = vld [vmem:[#allocation5 + $0x264] sm:$0xff]
          %v7698 = vld [vmem:[#allocation5 + $0x26c] sm:$0xf]
          %v7699 = vld [vmem:[#allocation5 + $0x270] sm:$0xff]
          %v7700 = vld [vmem:[#allocation5 + $0x278] sm:$0xf]
          %v7701 = vld [vmem:[#allocation5 + $0x27c] sm:$0xff]
          %v7702 = vld [vmem:[#allocation5 + $0x284] sm:$0xf]
          %v7703 = vld [vmem:[#allocation5 + $0x288] sm:$0xff]
          %v7704 = vld [vmem:[#allocation5 + $0x290] sm:$0xf]
          %v7705 = vld [vmem:[#allocation5 + $0x294] sm:$0xff]
          %v7706 = vld [vmem:[#allocation5 + $0x29c] sm:$0xf]
          %v7707 = vld [vmem:[#allocation5 + $0x2a0] sm:$0xff]
          %v7708 = vld [vmem:[#allocation5 + $0x2a8] sm:$0xf]
          %v7709 = vld [vmem:[#allocation5 + $0x2ac] sm:$0xff]
          %v7710 = vld [vmem:[#allocation5 + $0x2b4] sm:$0xf]
          %v7711 = vld [vmem:[#allocation5 + $0x2b8] sm:$0xff]
          %v7712 = vld [vmem:[#allocation5 + $0x2c0] sm:$0xf]
          %v7713 = vld [vmem:[#allocation5 + $0x2c4] sm:$0xff]
          %v7714 = vld [vmem:[#allocation5 + $0x2cc] sm:$0xf]
          %v7715 = vld [vmem:[#allocation5 + $0x2d0] sm:$0xff]
          %v7716 = vld [vmem:[#allocation5 + $0x2d8] sm:$0xf]
          %v7717 = vld [vmem:[#allocation5 + $0x2dc] sm:$0xff]
          %v7718 = vld [vmem:[#allocation5 + $0x2e4] sm:$0xf]
          %v7719 = vld [vmem:[#allocation5 + $0x2e8] sm:$0xff]
          %v7720 = vld [vmem:[#allocation5 + $0x2f0] sm:$0xf]
          %v7721 = vld [vmem:[#allocation5 + $0x2f4] sm:$0xff]
          %v7722 = vld [vmem:[#allocation5 + $0x2fc] sm:$0xf]
          %v7723 = vld [vmem:[#allocation5 + $0x300] sm:$0xff]
          %v7724 = vld [vmem:[#allocation5 + $0x308] sm:$0xf]
          %v7725 = vld [vmem:[#allocation5 + $0x30c] sm:$0xff]
          %v7726 = vld [vmem:[#allocation5 + $0x314] sm:$0xf]
          %v7727 = vld [vmem:[#allocation5 + $0x318] sm:$0xff]
          %v7728 = vld [vmem:[#allocation5 + $0x320] sm:$0xf]
          %v7729 = vld [vmem:[#allocation5 + $0x324] sm:$0xff]
          %v7730 = vld [vmem:[#allocation5 + $0x32c] sm:$0xf]
          %v7731 = vld [vmem:[#allocation5 + $0x330] sm:$0xff]
          %v7732 = vld [vmem:[#allocation5 + $0x338] sm:$0xf]
          %v7733 = vld [vmem:[#allocation5 + $0x33c] sm:$0xff]
          %v7734 = vld [vmem:[#allocation5 + $0x344] sm:$0xf]
          %v7735 = vld [vmem:[#allocation5 + $0x348] sm:$0xff]
          %v7736 = vld [vmem:[#allocation5 + $0x350] sm:$0xf]
          %v7737 = vld [vmem:[#allocation5 + $0x354] sm:$0xff]
          %v7738 = vld [vmem:[#allocation5 + $0x35c] sm:$0xf]
          %v7739 = vld [vmem:[#allocation5 + $0x360] sm:$0xff]
          %v7740 = vld [vmem:[#allocation5 + $0x368] sm:$0xf]
          %v7741 = vld [vmem:[#allocation5 + $0x36c] sm:$0xff]
          %v7742 = vld [vmem:[#allocation5 + $0x374] sm:$0xf]
          %v7743 = vld [vmem:[#allocation5 + $0x378] sm:$0xff]
          %v7744 = vld [vmem:[#allocation5 + $0x380] sm:$0xf]
          %v7745 = vld [vmem:[#allocation5 + $0x384] sm:$0xff]
          %v7746 = vld [vmem:[#allocation5 + $0x38c] sm:$0xf]
          %v7747 = vld [vmem:[#allocation5 + $0x390] sm:$0xff]
          %v7748 = vld [vmem:[#allocation5 + $0x398] sm:$0xf]
          %v7749 = vld [vmem:[#allocation5 + $0x39c] sm:$0xff]
          %v7750 = vld [vmem:[#allocation5 + $0x3a4] sm:$0xf]
          %v7751 = vld [vmem:[#allocation5 + $0x3a8] sm:$0xff]
          %v7752 = vld [vmem:[#allocation5 + $0x3b0] sm:$0xf]
          %v7753 = vld [vmem:[#allocation5 + $0x3b4] sm:$0xff]
          %v7754 = vld [vmem:[#allocation5 + $0x3bc] sm:$0xf]
          %v7755 = vld [vmem:[%s10] sm:$0x7]
          %v7757 = vlaneseq
          %v7758 = vshrl.u32 %v7757, 7
          %v7759 = vsub.s32 0, %v7758
          %v7760 = vrot.slane %v7755, %v7759
          %v7761 = vlaneseq
          %v7762 = vshrl.u32 %v7761, 7
          %v7763 = vsub.s32 1, %v7762
          %v7764 = vrot.slane %v7755, %v7763
          %v7765 = vlaneseq
          %v7766 = vshrl.u32 %v7765, 7
          %v7767 = vsub.s32 2, %v7766
          %v7768 = vrot.slane %v7755, %v7767
          %v7778 = vunpack.c.l.b16 %v7589
          %v7779 = vunpack.c.h.b16 %v7589
          %v7780 = vunpack.c.l.b16 %v7590
          %v7781 = vunpack.c.h.b16 %v7590
          %v7782 = vunpack.c.l.b16 %v7591
          %v7783 = vunpack.c.l.b16 %v7592
          %v7784 = vunpack.c.h.b16 %v7592
          %v7785 = vunpack.c.l.b16 %v7593
          %v7786 = vunpack.c.h.b16 %v7593
          %v7787 = vunpack.c.l.b16 %v7594
          %v7788 = vpack.c.b16 %v7783, %v7778
          %v7789 = vpack.c.b16 %v7784, %v7779
          %v7790 = vpack.c.b16 %v7785, %v7780
          %v7791 = vpack.c.b16 %v7786, %v7781
          %v7792 = vpack.c.b16 %v7787, %v7782
          %v7958 = vunpack.c.l.b16 %v7595
          %v7959 = vunpack.c.h.b16 %v7595
          %v7960 = vunpack.c.l.b16 %v7596
          %v7961 = vunpack.c.l.b16 %v7597
          %v7962 = vunpack.c.h.b16 %v7597
          %v7963 = vunpack.c.l.b16 %v7598
          %v7964 = vunpack.c.l.b16 %v7599
          %v7965 = vunpack.c.h.b16 %v7599
          %v7966 = vunpack.c.l.b16 %v7600
          %v7967 = vunpack.c.l.b16 %v7601
          %v7968 = vunpack.c.h.b16 %v7601
          %v7969 = vunpack.c.l.b16 %v7602
          %v7970 = vunpack.c.l.b16 %v7603
          %v7971 = vunpack.c.h.b16 %v7603
          %v7972 = vunpack.c.l.b16 %v7604
          %v7973 = vunpack.c.l.b16 %v7605
          %v7974 = vunpack.c.h.b16 %v7605
          %v7975 = vunpack.c.l.b16 %v7606
          %v7976 = vunpack.c.l.b16 %v7607
          %v7977 = vunpack.c.h.b16 %v7607
          %v7978 = vunpack.c.l.b16 %v7608
          %v7979 = vunpack.c.l.b16 %v7609
          %v7980 = vunpack.c.h.b16 %v7609
          %v7981 = vunpack.c.l.b16 %v7610
          %v7982 = vunpack.c.l.b16 %v7611
          %v7983 = vunpack.c.h.b16 %v7611
          %v7984 = vunpack.c.l.b16 %v7612
          %v7985 = vunpack.c.l.b16 %v7613
          %v7986 = vunpack.c.h.b16 %v7613
          %v7987 = vunpack.c.l.b16 %v7614
          %v7988 = vunpack.c.l.b16 %v7615
          %v7989 = vunpack.c.h.b16 %v7615
          %v7990 = vunpack.c.l.b16 %v7616
          %v7991 = vunpack.c.l.b16 %v7617
          %v7992 = vunpack.c.h.b16 %v7617
          %v7993 = vunpack.c.l.b16 %v7618
          %v7994 = vunpack.c.l.b16 %v7619
          %v7995 = vunpack.c.h.b16 %v7619
          %v7996 = vunpack.c.l.b16 %v7620
          %v7997 = vunpack.c.l.b16 %v7621
          %v7998 = vunpack.c.h.b16 %v7621
          %v7999 = vunpack.c.l.b16 %v7622
          %v8000 = vunpack.c.l.b16 %v7623
          %v8001 = vunpack.c.h.b16 %v7623
          %v8002 = vunpack.c.l.b16 %v7624
          %v8003 = vunpack.c.l.b16 %v7625
          %v8004 = vunpack.c.h.b16 %v7625
          %v8005 = vunpack.c.l.b16 %v7626
          %v8006 = vunpack.c.l.b16 %v7627
          %v8007 = vunpack.c.h.b16 %v7627
          %v8008 = vunpack.c.l.b16 %v7628
          %v8009 = vunpack.c.l.b16 %v7629
          %v8010 = vunpack.c.h.b16 %v7629
          %v8011 = vunpack.c.l.b16 %v7630
          %v8012 = vunpack.c.l.b16 %v7631
          %v8013 = vunpack.c.h.b16 %v7631
          %v8014 = vunpack.c.l.b16 %v7632
          %v8015 = vunpack.c.l.b16 %v7633
          %v8016 = vunpack.c.h.b16 %v7633
          %v8017 = vunpack.c.l.b16 %v7634
          %v8018 = vunpack.c.l.b16 %v7635
          %v8019 = vunpack.c.h.b16 %v7635
          %v8020 = vunpack.c.l.b16 %v7636
          %v8021 = vunpack.c.l.b16 %v7637
          %v8022 = vunpack.c.h.b16 %v7637
          %v8023 = vunpack.c.l.b16 %v7638
          %v8024 = vunpack.c.l.b16 %v7639
          %v8025 = vunpack.c.h.b16 %v7639
          %v8026 = vunpack.c.l.b16 %v7640
          %v8027 = vunpack.c.l.b16 %v7641
          %v8028 = vunpack.c.h.b16 %v7641
          %v8029 = vunpack.c.l.b16 %v7642
          %v8030 = vunpack.c.l.b16 %v7643
          %v8031 = vunpack.c.h.b16 %v7643
          %v8032 = vunpack.c.l.b16 %v7644
          %v8033 = vunpack.c.l.b16 %v7645
          %v8034 = vunpack.c.h.b16 %v7645
          %v8035 = vunpack.c.l.b16 %v7646
          %v8036 = vunpack.c.l.b16 %v7647
          %v8037 = vunpack.c.h.b16 %v7647
          %v8038 = vunpack.c.l.b16 %v7648
          %v8039 = vunpack.c.l.b16 %v7649
          %v8040 = vunpack.c.h.b16 %v7649
          %v8041 = vunpack.c.l.b16 %v7650
          %v8042 = vunpack.c.l.b16 %v7651
          %v8043 = vunpack.c.h.b16 %v7651
          %v8044 = vunpack.c.l.b16 %v7652
          %v8045 = vunpack.c.l.b16 %v7653
          %v8046 = vunpack.c.h.b16 %v7653
          %v8047 = vunpack.c.l.b16 %v7654
          %v8048 = vunpack.c.l.b16 %v7655
          %v8049 = vunpack.c.h.b16 %v7655
          %v8050 = vunpack.c.l.b16 %v7656
          %v8051 = vunpack.c.l.b16 %v7657
          %v8052 = vunpack.c.h.b16 %v7657
          %v8053 = vunpack.c.l.b16 %v7658
          %v8054 = vunpack.c.l.b16 %v7659
          %v8055 = vunpack.c.h.b16 %v7659
          %v8056 = vunpack.c.l.b16 %v7660
          %v8057 = vunpack.c.l.b16 %v7661
          %v8058 = vunpack.c.h.b16 %v7661
          %v8059 = vunpack.c.l.b16 %v7662
          %v8060 = vunpack.c.l.b16 %v7663
          %v8061 = vunpack.c.h.b16 %v7663
          %v8062 = vunpack.c.l.b16 %v7664
          %v8063 = vunpack.c.l.b16 %v7665
          %v8064 = vunpack.c.h.b16 %v7665
          %v8065 = vunpack.c.l.b16 %v7666
          %v8066 = vunpack.c.l.b16 %v7667
          %v8067 = vunpack.c.h.b16 %v7667
          %v8068 = vunpack.c.l.b16 %v7668
          %v8069 = vunpack.c.l.b16 %v7669
          %v8070 = vunpack.c.h.b16 %v7669
          %v8071 = vunpack.c.l.b16 %v7670
          %v8072 = vunpack.c.l.b16 %v7671
          %v8073 = vunpack.c.h.b16 %v7671
          %v8074 = vunpack.c.l.b16 %v7672
          %v8075 = vunpack.c.l.b16 %v7673
          %v8076 = vunpack.c.h.b16 %v7673
          %v8077 = vunpack.c.l.b16 %v7674
          %v8078 = vunpack.c.l.b16 %v7675
          %v8079 = vunpack.c.h.b16 %v7675
          %v8080 = vunpack.c.l.b16 %v7676
          %v8081 = vunpack.c.l.b16 %v7677
          %v8082 = vunpack.c.h.b16 %v7677
          %v8083 = vunpack.c.l.b16 %v7678
          %v8084 = vunpack.c.l.b16 %v7679
          %v8085 = vunpack.c.h.b16 %v7679
          %v8086 = vunpack.c.l.b16 %v7680
          %v8087 = vunpack.c.l.b16 %v7681
          %v8088 = vunpack.c.h.b16 %v7681
          %v8089 = vunpack.c.l.b16 %v7682
          %v8090 = vunpack.c.l.b16 %v7683
          %v8091 = vunpack.c.h.b16 %v7683
          %v8092 = vunpack.c.l.b16 %v7684
          %v8093 = vunpack.c.l.b16 %v7685
          %v8094 = vunpack.c.h.b16 %v7685
          %v8095 = vunpack.c.l.b16 %v7686
          %v8096 = vunpack.c.l.b16 %v7687
          %v8097 = vunpack.c.h.b16 %v7687
          %v8098 = vunpack.c.l.b16 %v7688
          %v8099 = vunpack.c.l.b16 %v7689
          %v8100 = vunpack.c.h.b16 %v7689
          %v8101 = vunpack.c.l.b16 %v7690
          %v8102 = vunpack.c.l.b16 %v7691
          %v8103 = vunpack.c.h.b16 %v7691
          %v8104 = vunpack.c.l.b16 %v7692
          %v8105 = vunpack.c.l.b16 %v7693
          %v8106 = vunpack.c.h.b16 %v7693
          %v8107 = vunpack.c.l.b16 %v7694
          %v8108 = vunpack.c.l.b16 %v7695
          %v8109 = vunpack.c.h.b16 %v7695
          %v8110 = vunpack.c.l.b16 %v7696
          %v8111 = vunpack.c.l.b16 %v7697
          %v8112 = vunpack.c.h.b16 %v7697
          %v8113 = vunpack.c.l.b16 %v7698
          %v8114 = vunpack.c.l.b16 %v7699
          %v8115 = vunpack.c.h.b16 %v7699
          %v8116 = vunpack.c.l.b16 %v7700
          %v8117 = vunpack.c.l.b16 %v7701
          %v8118 = vunpack.c.h.b16 %v7701
          %v8119 = vunpack.c.l.b16 %v7702
          %v8120 = vunpack.c.l.b16 %v7703
          %v8121 = vunpack.c.h.b16 %v7703
          %v8122 = vunpack.c.l.b16 %v7704
          %v8123 = vunpack.c.l.b16 %v7705
          %v8124 = vunpack.c.h.b16 %v7705
          %v8125 = vunpack.c.l.b16 %v7706
          %v8126 = vunpack.c.l.b16 %v7707
          %v8127 = vunpack.c.h.b16 %v7707
          %v8128 = vunpack.c.l.b16 %v7708
          %v8129 = vunpack.c.l.b16 %v7709
          %v8130 = vunpack.c.h.b16 %v7709
          %v8131 = vunpack.c.l.b16 %v7710
          %v8132 = vunpack.c.l.b16 %v7711
          %v8133 = vunpack.c.h.b16 %v7711
          %v8134 = vunpack.c.l.b16 %v7712
          %v8135 = vunpack.c.l.b16 %v7713
          %v8136 = vunpack.c.h.b16 %v7713
          %v8137 = vunpack.c.l.b16 %v7714
          %v8138 = vunpack.c.l.b16 %v7715
          %v8139 = vunpack.c.h.b16 %v7715
          %v8140 = vunpack.c.l.b16 %v7716
          %v8141 = vunpack.c.l.b16 %v7717
          %v8142 = vunpack.c.h.b16 %v7717
          %v8143 = vunpack.c.l.b16 %v7718
          %v8144 = vunpack.c.l.b16 %v7719
          %v8145 = vunpack.c.h.b16 %v7719
          %v8146 = vunpack.c.l.b16 %v7720
          %v8147 = vunpack.c.l.b16 %v7721
          %v8148 = vunpack.c.h.b16 %v7721
          %v8149 = vunpack.c.l.b16 %v7722
          %v8150 = vunpack.c.l.b16 %v7723
          %v8151 = vunpack.c.h.b16 %v7723
          %v8152 = vunpack.c.l.b16 %v7724
          %v8153 = vunpack.c.l.b16 %v7725
          %v8154 = vunpack.c.h.b16 %v7725
          %v8155 = vunpack.c.l.b16 %v7726
          %v8156 = vunpack.c.l.b16 %v7727
          %v8157 = vunpack.c.h.b16 %v7727
          %v8158 = vunpack.c.l.b16 %v7728
          %v8159 = vunpack.c.l.b16 %v7729
          %v8160 = vunpack.c.h.b16 %v7729
          %v8161 = vunpack.c.l.b16 %v7730
          %v8162 = vunpack.c.l.b16 %v7731
          %v8163 = vunpack.c.h.b16 %v7731
          %v8164 = vunpack.c.l.b16 %v7732
          %v8165 = vunpack.c.l.b16 %v7733
          %v8166 = vunpack.c.h.b16 %v7733
          %v8167 = vunpack.c.l.b16 %v7734
          %v8168 = vunpack.c.l.b16 %v7735
          %v8169 = vunpack.c.h.b16 %v7735
          %v8170 = vunpack.c.l.b16 %v7736
          %v8171 = vunpack.c.l.b16 %v7737
          %v8172 = vunpack.c.h.b16 %v7737
          %v8173 = vunpack.c.l.b16 %v7738
          %v8174 = vunpack.c.l.b16 %v7739
          %v8175 = vunpack.c.h.b16 %v7739
          %v8176 = vunpack.c.l.b16 %v7740
          %v8177 = vunpack.c.l.b16 %v7741
          %v8178 = vunpack.c.h.b16 %v7741
          %v8179 = vunpack.c.l.b16 %v7742
          %v8180 = vunpack.c.l.b16 %v7743
          %v8181 = vunpack.c.h.b16 %v7743
          %v8182 = vunpack.c.l.b16 %v7744
          %v8183 = vunpack.c.l.b16 %v7745
          %v8184 = vunpack.c.h.b16 %v7745
          %v8185 = vunpack.c.l.b16 %v7746
          %v8186 = vunpack.c.l.b16 %v7747
          %v8187 = vunpack.c.h.b16 %v7747
          %v8188 = vunpack.c.l.b16 %v7748
          %v8189 = vunpack.c.l.b16 %v7749
          %v8190 = vunpack.c.h.b16 %v7749
          %v8191 = vunpack.c.l.b16 %v7750
          %v8192 = vunpack.c.l.b16 %v7751
          %v8193 = vunpack.c.h.b16 %v7751
          %v8194 = vunpack.c.l.b16 %v7752
          %v8195 = vunpack.c.l.b16 %v7753
          %v8196 = vunpack.c.h.b16 %v7753
          %v8197 = vunpack.c.l.b16 %v7754
          %v8198 = vpack.c.b16 %v7961, %v7958
          %v8199 = vpack.c.b16 %v7962, %v7959
          %v8200 = vpack.c.b16 %v7963, %v7960
          %v8201 = vpack.c.b16 %v7967, %v7964
          %v8202 = vpack.c.b16 %v7968, %v7965
          %v8203 = vpack.c.b16 %v7969, %v7966
          %v8204 = vpack.c.b16 %v7973, %v7970
          %v8205 = vpack.c.b16 %v7974, %v7971
          %v8206 = vpack.c.b16 %v7975, %v7972
          %v8207 = vpack.c.b16 %v7979, %v7976
          %v8208 = vpack.c.b16 %v7980, %v7977
          %v8209 = vpack.c.b16 %v7981, %v7978
          %v8210 = vpack.c.b16 %v7985, %v7982
          %v8211 = vpack.c.b16 %v7986, %v7983
          %v8212 = vpack.c.b16 %v7987, %v7984
          %v8213 = vpack.c.b16 %v7991, %v7988
          %v8214 = vpack.c.b16 %v7992, %v7989
          %v8215 = vpack.c.b16 %v7993, %v7990
          %v8216 = vpack.c.b16 %v7997, %v7994
          %v8217 = vpack.c.b16 %v7998, %v7995
          %v8218 = vpack.c.b16 %v7999, %v7996
          %v8219 = vpack.c.b16 %v8003, %v8000
          %v8220 = vpack.c.b16 %v8004, %v8001
          %v8221 = vpack.c.b16 %v8005, %v8002
          %v8222 = vpack.c.b16 %v8009, %v8006
          %v8223 = vpack.c.b16 %v8010, %v8007
          %v8224 = vpack.c.b16 %v8011, %v8008
          %v8225 = vpack.c.b16 %v8015, %v8012
          %v8226 = vpack.c.b16 %v8016, %v8013
          %v8227 = vpack.c.b16 %v8017, %v8014
          %v8228 = vpack.c.b16 %v8021, %v8018
          %v8229 = vpack.c.b16 %v8022, %v8019
          %v8230 = vpack.c.b16 %v8023, %v8020
          %v8231 = vpack.c.b16 %v8027, %v8024
          %v8232 = vpack.c.b16 %v8028, %v8025
          %v8233 = vpack.c.b16 %v8029, %v8026
          %v8234 = vpack.c.b16 %v8033, %v8030
          %v8235 = vpack.c.b16 %v8034, %v8031
          %v8236 = vpack.c.b16 %v8035, %v8032
          %v8237 = vpack.c.b16 %v8039, %v8036
          %v8238 = vpack.c.b16 %v8040, %v8037
          %v8239 = vpack.c.b16 %v8041, %v8038
          %v8240 = vpack.c.b16 %v8045, %v8042
          %v8241 = vpack.c.b16 %v8046, %v8043
          %v8242 = vpack.c.b16 %v8047, %v8044
          %v8243 = vpack.c.b16 %v8051, %v8048
          %v8244 = vpack.c.b16 %v8052, %v8049
          %v8245 = vpack.c.b16 %v8053, %v8050
          %v8246 = vpack.c.b16 %v8057, %v8054
          %v8247 = vpack.c.b16 %v8058, %v8055
          %v8248 = vpack.c.b16 %v8059, %v8056
          %v8249 = vpack.c.b16 %v8063, %v8060
          %v8250 = vpack.c.b16 %v8064, %v8061
          %v8251 = vpack.c.b16 %v8065, %v8062
          %v8252 = vpack.c.b16 %v8069, %v8066
          %v8253 = vpack.c.b16 %v8070, %v8067
          %v8254 = vpack.c.b16 %v8071, %v8068
          %v8255 = vpack.c.b16 %v8075, %v8072
          %v8256 = vpack.c.b16 %v8076, %v8073
          %v8257 = vpack.c.b16 %v8077, %v8074
          %v8258 = vpack.c.b16 %v8081, %v8078
          %v8259 = vpack.c.b16 %v8082, %v8079
          %v8260 = vpack.c.b16 %v8083, %v8080
          %v8261 = vpack.c.b16 %v8087, %v8084
          %v8262 = vpack.c.b16 %v8088, %v8085
          %v8263 = vpack.c.b16 %v8089, %v8086
          %v8264 = vpack.c.b16 %v8093, %v8090
          %v8265 = vpack.c.b16 %v8094, %v8091
          %v8266 = vpack.c.b16 %v8095, %v8092
          %v8267 = vpack.c.b16 %v8099, %v8096
          %v8268 = vpack.c.b16 %v8100, %v8097
          %v8269 = vpack.c.b16 %v8101, %v8098
          %v8270 = vpack.c.b16 %v8105, %v8102
          %v8271 = vpack.c.b16 %v8106, %v8103
          %v8272 = vpack.c.b16 %v8107, %v8104
          %v8273 = vpack.c.b16 %v8111, %v8108
          %v8274 = vpack.c.b16 %v8112, %v8109
          %v8275 = vpack.c.b16 %v8113, %v8110
          %v8276 = vpack.c.b16 %v8117, %v8114
          %v8277 = vpack.c.b16 %v8118, %v8115
          %v8278 = vpack.c.b16 %v8119, %v8116
          %v8279 = vpack.c.b16 %v8123, %v8120
          %v8280 = vpack.c.b16 %v8124, %v8121
          %v8281 = vpack.c.b16 %v8125, %v8122
          %v8282 = vpack.c.b16 %v8129, %v8126
          %v8283 = vpack.c.b16 %v8130, %v8127
          %v8284 = vpack.c.b16 %v8131, %v8128
          %v8285 = vpack.c.b16 %v8135, %v8132
          %v8286 = vpack.c.b16 %v8136, %v8133
          %v8287 = vpack.c.b16 %v8137, %v8134
          %v8288 = vpack.c.b16 %v8141, %v8138
          %v8289 = vpack.c.b16 %v8142, %v8139
          %v8290 = vpack.c.b16 %v8143, %v8140
          %v8291 = vpack.c.b16 %v8147, %v8144
          %v8292 = vpack.c.b16 %v8148, %v8145
          %v8293 = vpack.c.b16 %v8149, %v8146
          %v8294 = vpack.c.b16 %v8153, %v8150
          %v8295 = vpack.c.b16 %v8154, %v8151
          %v8296 = vpack.c.b16 %v8155, %v8152
          %v8297 = vpack.c.b16 %v8159, %v8156
          %v8298 = vpack.c.b16 %v8160, %v8157
          %v8299 = vpack.c.b16 %v8161, %v8158
          %v8300 = vpack.c.b16 %v8165, %v8162
          %v8301 = vpack.c.b16 %v8166, %v8163
          %v8302 = vpack.c.b16 %v8167, %v8164
          %v8303 = vpack.c.b16 %v8171, %v8168
          %v8304 = vpack.c.b16 %v8172, %v8169
          %v8305 = vpack.c.b16 %v8173, %v8170
          %v8306 = vpack.c.b16 %v8177, %v8174
          %v8307 = vpack.c.b16 %v8178, %v8175
          %v8308 = vpack.c.b16 %v8179, %v8176
          %v8309 = vpack.c.b16 %v8183, %v8180
          %v8310 = vpack.c.b16 %v8184, %v8181
          %v8311 = vpack.c.b16 %v8185, %v8182
          %v8312 = vpack.c.b16 %v8189, %v8186
          %v8313 = vpack.c.b16 %v8190, %v8187
          %v8314 = vpack.c.b16 %v8191, %v8188
          %v8315 = vpack.c.b16 %v8195, %v8192
          %v8316 = vpack.c.b16 %v8196, %v8193
          %v8317 = vpack.c.b16 %v8197, %v8194
          %8438 = vmatprep.subr.bf16.mxu0 %v8199
          %8439 = vmatpush1.bf16.msra.mxu0 %v8198
          %8440 = vmatprep.subr.bf16.mxu0 %v8202
          %8441 = vmatpush1.bf16.msra.mxu0 %v8201
          %8442 = vmatprep.subr.bf16.mxu0 %v8205
          %8443 = vmatpush1.bf16.msra.mxu0 %v8204
          %8444 = vmatprep.subr.bf16.mxu0 %v8208
          %8445 = vmatpush1.bf16.msra.mxu0 %v8207
          %8446 = vmatprep.subr.bf16.mxu0 %v8211
          %8447 = vmatpush1.bf16.msra.mxu0 %v8210
          %8448 = vmatprep.subr.bf16.mxu0 %v8214
          %8449 = vmatpush1.bf16.msra.mxu0 %v8213
          %8450 = vmatprep.subr.bf16.mxu0 %v8217
          %8451 = vmatpush1.bf16.msra.mxu0 %v8216
          %8452 = vmatprep.subr.bf16.mxu0 %v8220
          %8453 = vmatpush1.bf16.msra.mxu0 %v8219
          %8454 = vmatprep.subr.bf16.mxu0 %v8223
          %8455 = vmatpush1.bf16.msra.mxu0 %v8222
          %8456 = vmatprep.subr.bf16.mxu0 %v8226
          %8457 = vmatpush1.bf16.msra.mxu0 %v8225
          %8458 = vmatprep.subr.bf16.mxu0 %v8229
          %8459 = vmatpush1.bf16.msra.mxu0 %v8228
          %8460 = vmatprep.subr.bf16.mxu0 %v8232
          %8461 = vmatpush1.bf16.msra.mxu0 %v8231
          %8462 = vmatprep.subr.bf16.mxu0 %v8235
          %8463 = vmatpush1.bf16.msra.mxu0 %v8234
          %8464 = vmatprep.subr.bf16.mxu0 %v8238
          %8465 = vmatpush1.bf16.msra.mxu0 %v8237
          %8466 = vmatprep.subr.bf16.mxu0 %v8241
          %8467 = vmatpush1.bf16.msra.mxu0 %v8240
          %8468 = vmatprep.subr.bf16.mxu0 %v8244
          %8469 = vmatpush1.bf16.msra.mxu0 %v8243
          %8470 = vmatprep.mubr.bf16.mxu0 %v7789
          %8471 = vmatmul.mubr.bf16.gmra.mrb[0].mxu0 %v7788
          %v8472 = vpop.f32.mrb[0].mxu0
          %v8473 = vadd.f32 %v7760, %v8472
          %v8474 = vpop.f32.mrb[0].mxu0
          %v8475 = vadd.f32 %v7764, %v8474
          %v8476 = vpop.f32.mrb[0].mxu0
          %v8477 = vadd.f32 %v7760, %v8476
          %v8478 = vpop.f32.mrb[0].mxu0
          %v8479 = vadd.f32 %v7764, %v8478
          %8480 = vdwg.mxu0
          %8481 = vmatprep.subr.bf16.mxu0 %v8247
          %8482 = vmatpush1.bf16.msra.mxu0 %v8246
          %8483 = vmatprep.subr.bf16.mxu0 %v8250
          %8484 = vmatpush1.bf16.msra.mxu0 %v8249
          %8485 = vmatprep.subr.bf16.mxu0 %v8253
          %8486 = vmatpush1.bf16.msra.mxu0 %v8252
          %8487 = vmatprep.subr.bf16.mxu0 %v8256
          %8488 = vmatpush1.bf16.msra.mxu0 %v8255
          %8489 = vmatprep.subr.bf16.mxu0 %v8259
          %8490 = vmatpush1.bf16.msra.mxu0 %v8258
          %8491 = vmatprep.subr.bf16.mxu0 %v8262
          %8492 = vmatpush1.bf16.msra.mxu0 %v8261
          %8493 = vmatprep.subr.bf16.mxu0 %v8265
          %8494 = vmatpush1.bf16.msra.mxu0 %v8264
          %8495 = vmatprep.subr.bf16.mxu0 %v8268
          %8496 = vmatpush1.bf16.msra.mxu0 %v8267
          %8497 = vmatprep.subr.bf16.mxu0 %v8271
          %8498 = vmatpush1.bf16.msra.mxu0 %v8270
          %8499 = vmatprep.subr.bf16.mxu0 %v8274
          %8500 = vmatpush1.bf16.msra.mxu0 %v8273
          %8501 = vmatprep.subr.bf16.mxu0 %v8277
          %8502 = vmatpush1.bf16.msra.mxu0 %v8276
          %8503 = vmatprep.subr.bf16.mxu0 %v8280
          %8504 = vmatpush1.bf16.msra.mxu0 %v8279
          %8505 = vmatprep.subr.bf16.mxu0 %v8283
          %8506 = vmatpush1.bf16.msra.mxu0 %v8282
          %8507 = vmatprep.subr.bf16.mxu0 %v8286
          %8508 = vmatpush1.bf16.msra.mxu0 %v8285
          %8509 = vmatprep.subr.bf16.mxu0 %v8289
          %8510 = vmatpush1.bf16.msra.mxu0 %v8288
          %8511 = vmatprep.subr.bf16.mxu0 %v8292
          %8512 = vmatpush1.bf16.msra.mxu0 %v8291
          %8513 = vmatprep.mubr.bf16.mxu0 %v7791
          %8514 = vmatmul.mubr.bf16.gmra.mrb[0].mxu0 %v7790
          %v8515 = vpop.f32.mrb[0].mxu0
          %v8516 = vadd.f32 %v8473, %v8515
          %v8517 = vpop.f32.mrb[0].mxu0
          %v8518 = vadd.f32 %v8475, %v8517
          %v8519 = vpop.f32.mrb[0].mxu0
          %v8520 = vadd.f32 %v8477, %v8519
          %v8521 = vpop.f32.mrb[0].mxu0
          %v8522 = vadd.f32 %v8479, %v8521
          %8523 = vdwg.mxu0
          %8524 = vmatprep.subr.bf16.mxu0 %v8295
          %8525 = vmatpush1.bf16.msra.mxu0 %v8294
          %8526 = vmatprep.subr.bf16.mxu0 %v8298
          %8527 = vmatpush1.bf16.msra.mxu0 %v8297
          %8528 = vmatprep.subr.bf16.mxu0 %v8301
          %8529 = vmatpush1.bf16.msra.mxu0 %v8300
          %8530 = vmatprep.subr.bf16.mxu0 %v8304
          %8531 = vmatpush1.bf16.msra.mxu0 %v8303
          %8532 = vmatprep.subr.bf16.mxu0 %v8307
          %8533 = vmatpush1.bf16.msra.mxu0 %v8306
          %8534 = vmatprep.subr.bf16.mxu0 %v8310
          %8535 = vmatpush1.bf16.msra.mxu0 %v8309
          %8536 = vmatprep.subr.bf16.mxu0 %v8313
          %8537 = vmatpush1.bf16.msra.mxu0 %v8312
          %8538 = vmatprep.subr.bf16.mxu0 %v8316
          %8539 = vmatpush1.bf16.msra.mxu0 %v8315
          %8540 = vmatprep.subr.bf16.mxu0 0
          %8541 = vmatpush1.bf16.msra.mxu0 0
          %8542 = vmatprep.subr.bf16.mxu0 0
          %8543 = vmatpush1.bf16.msra.mxu0 0
          %8544 = vmatprep.subr.bf16.mxu0 0
          %8545 = vmatpush1.bf16.msra.mxu0 0
          %8546 = vmatprep.subr.bf16.mxu0 0
          %8547 = vmatpush1.bf16.msra.mxu0 0
          %8548 = vmatprep.subr.bf16.mxu0 0
          %8549 = vmatpush1.bf16.msra.mxu0 0
          %8550 = vmatprep.subr.bf16.mxu0 0
          %8551 = vmatpush1.bf16.msra.mxu0 0
          %8552 = vmatprep.subr.bf16.mxu0 0
          %8553 = vmatpush1.bf16.msra.mxu0 0
          %8554 = vmatprep.subr.bf16.mxu0 0
          %8555 = vmatpush1.bf16.msra.mxu0 0
          %8556 = vmatprep.mubr.bf16.mxu0 0
          %8557 = vmatmul.mubr.bf16.gmra.mrb[0].mxu0 %v7792
          %v8558 = vpop.f32.mrb[0].mxu0
          %v8559 = vadd.f32 %v8516, %v8558
          %v8560 = vpop.f32.mrb[0].mxu0
          %v8561 = vadd.f32 %v8518, %v8560
          %v8562 = vpop.f32.mrb[0].mxu0
          %v8563 = vadd.f32 %v8520, %v8562
          %v8564 = vpop.f32.mrb[0].mxu0
          %v8565 = vadd.f32 %v8522, %v8564
          %8566 = vdwg.mxu0
          %8567 = vmatprep.subr.bf16.mxu0 0
          %8568 = vmatpush1.bf16.msra.mxu0 %v8200
          %8569 = vmatprep.subr.bf16.mxu0 0
          %8570 = vmatpush1.bf16.msra.mxu0 %v8203
          %8571 = vmatprep.subr.bf16.mxu0 0
          %8572 = vmatpush1.bf16.msra.mxu0 %v8206
          %8573 = vmatprep.subr.bf16.mxu0 0
          %8574 = vmatpush1.bf16.msra.mxu0 %v8209
          %8575 = vmatprep.subr.bf16.mxu0 0
          %8576 = vmatpush1.bf16.msra.mxu0 %v8212
          %8577 = vmatprep.subr.bf16.mxu0 0
          %8578 = vmatpush1.bf16.msra.mxu0 %v8215
          %8579 = vmatprep.subr.bf16.mxu0 0
          %8580 = vmatpush1.bf16.msra.mxu0 %v8218
          %8581 = vmatprep.subr.bf16.mxu0 0
          %8582 = vmatpush1.bf16.msra.mxu0 %v8221
          %8583 = vmatprep.subr.bf16.mxu0 0
          %8584 = vmatpush1.bf16.msra.mxu0 %v8224
          %8585 = vmatprep.subr.bf16.mxu0 0
          %8586 = vmatpush1.bf16.msra.mxu0 %v8227
          %8587 = vmatprep.subr.bf16.mxu0 0
          %8588 = vmatpush1.bf16.msra.mxu0 %v8230
          %8589 = vmatprep.subr.bf16.mxu0 0
          %8590 = vmatpush1.bf16.msra.mxu0 %v8233
          %8591 = vmatprep.subr.bf16.mxu0 0
          %8592 = vmatpush1.bf16.msra.mxu0 %v8236
          %8593 = vmatprep.subr.bf16.mxu0 0
          %8594 = vmatpush1.bf16.msra.mxu0 %v8239
          %8595 = vmatprep.subr.bf16.mxu0 0
          %8596 = vmatpush1.bf16.msra.mxu0 %v8242
          %8597 = vmatprep.subr.bf16.mxu0 0
          %8598 = vmatpush1.bf16.msra.mxu0 %v8245
          %8599 = vmatprep.mubr.bf16.mxu0 %v7789
          %8600 = vmatmul.mubr.bf16.gmra.mrb[0].mxu0 %v7788
          %v8601 = vpop.f32.mrb[0].mxu0
          %v8602 = vadd.f32 %v7768, %v8601
          %v8603 = vpop.f32.mrb[0].mxu0
          %v8604 = vpop.f32.mrb[0].mxu0
          %v8605 = vadd.f32 %v7768, %v8604
          %v8606 = vpop.f32.mrb[0].mxu0
          %8607 = vdwg.mxu0
          %8608 = vmatprep.subr.bf16.mxu0 0
          %8609 = vmatpush1.bf16.msra.mxu0 %v8248
          %8610 = vmatprep.subr.bf16.mxu0 0
          %8611 = vmatpush1.bf16.msra.mxu0 %v8251
          %8612 = vmatprep.subr.bf16.mxu0 0
          %8613 = vmatpush1.bf16.msra.mxu0 %v8254
          %8614 = vmatprep.subr.bf16.mxu0 0
          %8615 = vmatpush1.bf16.msra.mxu0 %v8257
          %8616 = vmatprep.subr.bf16.mxu0 0
          %8617 = vmatpush1.bf16.msra.mxu0 %v8260
          %8618 = vmatprep.subr.bf16.mxu0 0
          %8619 = vmatpush1.bf16.msra.mxu0 %v8263
          %8620 = vmatprep.subr.bf16.mxu0 0
          %8621 = vmatpush1.bf16.msra.mxu0 %v8266
          %8622 = vmatprep.subr.bf16.mxu0 0
          %8623 = vmatpush1.bf16.msra.mxu0 %v8269
          %8624 = vmatprep.subr.bf16.mxu0 0
          %8625 = vmatpush1.bf16.msra.mxu0 %v8272
          %8626 = vmatprep.subr.bf16.mxu0 0
          %8627 = vmatpush1.bf16.msra.mxu0 %v8275
          %8628 = vmatprep.subr.bf16.mxu0 0
          %8629 = vmatpush1.bf16.msra.mxu0 %v8278
          %8630 = vmatprep.subr.bf16.mxu0 0
          %8631 = vmatpush1.bf16.msra.mxu0 %v8281
          %8632 = vmatprep.subr.bf16.mxu0 0
          %8633 = vmatpush1.bf16.msra.mxu0 %v8284
          %8634 = vmatprep.subr.bf16.mxu0 0
          %8635 = vmatpush1.bf16.msra.mxu0 %v8287
          %8636 = vmatprep.subr.bf16.mxu0 0
          %8637 = vmatpush1.bf16.msra.mxu0 %v8290
          %8638 = vmatprep.subr.bf16.mxu0 0
          %8639 = vmatpush1.bf16.msra.mxu0 %v8293
          %8640 = vmatprep.mubr.bf16.mxu0 %v7791
          %8641 = vmatmul.mubr.bf16.gmra.mrb[0].mxu0 %v7790
          %v8642 = vpop.f32.mrb[0].mxu0
          %v8643 = vadd.f32 %v8602, %v8642
          %v8644 = vpop.f32.mrb[0].mxu0
          %v8645 = vpop.f32.mrb[0].mxu0
          %v8646 = vadd.f32 %v8605, %v8645
          %v8647 = vpop.f32.mrb[0].mxu0
          %8648 = vdwg.mxu0
          %8649 = vmatprep.subr.bf16.mxu0 0
          %8650 = vmatpush1.bf16.msra.mxu0 %v8296
          %8651 = vmatprep.subr.bf16.mxu0 0
          %8652 = vmatpush1.bf16.msra.mxu0 %v8299
          %8653 = vmatprep.subr.bf16.mxu0 0
          %8654 = vmatpush1.bf16.msra.mxu0 %v8302
          %8655 = vmatprep.subr.bf16.mxu0 0
          %8656 = vmatpush1.bf16.msra.mxu0 %v8305
          %8657 = vmatprep.subr.bf16.mxu0 0
          %8658 = vmatpush1.bf16.msra.mxu0 %v8308
          %8659 = vmatprep.subr.bf16.mxu0 0
          %8660 = vmatpush1.bf16.msra.mxu0 %v8311
          %8661 = vmatprep.subr.bf16.mxu0 0
          %8662 = vmatpush1.bf16.msra.mxu0 %v8314
          %8663 = vmatprep.subr.bf16.mxu0 0
          %8664 = vmatpush1.bf16.msra.mxu0 %v8317
          %8665 = vmatprep.subr.bf16.mxu0 0
          %8666 = vmatpush1.bf16.msra.mxu0 0
          %8667 = vmatprep.subr.bf16.mxu0 0
          %8668 = vmatpush1.bf16.msra.mxu0 0
          %8669 = vmatprep.subr.bf16.mxu0 0
          %8670 = vmatpush1.bf16.msra.mxu0 0
          %8671 = vmatprep.subr.bf16.mxu0 0
          %8672 = vmatpush1.bf16.msra.mxu0 0
          %8673 = vmatprep.subr.bf16.mxu0 0
          %8674 = vmatpush1.bf16.msra.mxu0 0
          %8675 = vmatprep.subr.bf16.mxu0 0
          %8676 = vmatpush1.bf16.msra.mxu0 0
          %8677 = vmatprep.subr.bf16.mxu0 0
          %8678 = vmatpush1.bf16.msra.mxu0 0
          %8679 = vmatprep.subr.bf16.mxu0 0
          %8680 = vmatpush1.bf16.msra.mxu0 0
          %8681 = vmatprep.mubr.bf16.mxu0 0
          %8682 = vmatmul.mubr.bf16.gmra.mrb[0].mxu0 %v7792
          %v8683 = vpop.f32.mrb[0].mxu0
          %v8684 = vadd.f32 %v8643, %v8683
          %v8685 = vpop.f32.mrb[0].mxu0
          %v8686 = vpop.f32.mrb[0].mxu0
          %v8687 = vadd.f32 %v8646, %v8686
          %v8688 = vpop.f32.mrb[0].mxu0
          %8689 = vdwg.mxu0
          %v8690 = vmax.f32 %v8559, %v8561
          %8691 = vmax.xlane.f32.xlu0 %v8690
          %v8692 = vpop.xlane.xlu0 %8691
          %v8693 = vmax.f32 %v8563, %v8565
          %8694 = vmax.xlane.f32.xlu0 %v8693
          %v8695 = vpop.xlane.xlu0 %8694
          %v8696 = vsub.f32 %v8559, %v8692
          %v8697 = vsub.f32 %v8561, %v8692
          %v8698 = vsub.f32 %v8563, %v8695
          %v8699 = vsub.f32 %v8565, %v8695
          %v8700 = vmul.f32 %v8696, 1.442695
          %v8701 = vpow.pop %v8700
          %v8702 = vmul.f32 %v8697, 1.442695
          %v8703 = vpow.pop %v8702
          %v8704 = vmul.f32 %v8698, 1.442695
          %v8705 = vpow.pop %v8704
          %v8706 = vmul.f32 %v8699, 1.442695
          %v8707 = vpow.pop %v8706
          %v8708 = vadd.f32 %v8701, %v8703
          %8709 = vadd.xlane.f32.xlu0 %v8708
          %v8710 = vpop.xlane.xlu0 %8709
          %v8711 = vadd.f32 %v8705, %v8707
          %8712 = vadd.xlane.f32.xlu0 %v8711
          %v8713 = vpop.xlane.xlu0 %8712
          %v8714 = vrcp.pop %v8710
          %v8715 = vrcp.pop %v8713
          %v8716 = vmul.f32 %v8701, %v8714
          %v8717 = vmul.f32 %v8703, %v8714
          %v8718 = vmul.f32 %v8705, %v8715
          %v8719 = vmul.f32 %v8707, %v8715
          %v8720 = vadd.f32 %v8716, 0.5
          %v8721 = vadd.f32 %v8718, 0.5
          %v8722 = vmul.f32 %v8720, %v8684
          %v8723 = vmul.f32 %v8721, %v8687
          %v8724 = vmul.f32 %v8717, %v7587
          %v8725 = vmul.f32 %v8719, %v7588
          %v8726 = vadd.f32 %v8722, %v8724
          %v8727 = vadd.f32 %v8723, %v8725
          %v8728 = vmin.f32 %v8726, 20.0
          %v8729 = vmin.f32 %v8727, 20.0
          %v8730 = vmul.f32 %v8728, 1.442695
          %v8731 = vpow.pop %v8730
          %v8732 = vmul.f32 %v8729, 1.442695
          %v8733 = vpow.pop %v8732
          %v8734 = vadd.f32 %v8731, 2.0
          %v8735 = vadd.f32 %v8733, 2.0
          %v8736 = vmul.f32 %v8731, %v8734
          %v8737 = vmul.f32 %v8733, %v8735
          %v8738 = vmul.f32 %v8726, %v8736
          %v8739 = vmul.f32 %v8727, %v8737
          %v8740 = vadd.f32 %v8736, 2.0
          %v8741 = vadd.f32 %v8737, 2.0
          %v8742 = vrcp.pop %v8740
          %v8743 = vrcp.pop %v8741
          %v8744 = vmul.f32 %v8738, %v8742
          %v8745 = vmul.f32 %v8739, %v8743
          %v8746 = vld [vmem:[#allocation2 + $0x2] sm:$0x1]
          %v8747 = vmul.f32 %v8746, 0.5
          %v8748 = vld [vmem:[#allocation2 + $0x3] sm:$0x1]
          %v8749 = vmul.f32 %v8748, 0.5
          %v8750 = vmul.f32 %v8747, %v8747
          %v8751 = vsub.f32 %v8749, %v8750
          %v8752 = vmax.f32 %v8751, 0.0
          %v8753 = vlaneseq
          %v8754 = vshrl.u32 %v8753, 7
          %v8755 = vsub.s32 0, %v8754
          %v8756 = vrot.slane %v8747, %v8755
          %v8757 = vsub.f32 %v8744, %v8756
          %v8758 = vsub.f32 %v8745, %v8756
          %v8759 = vadd.f32 %v8752, 1e-05
          %v8760 = vrsqrt.pop %v8759
          %v8761 = vlaneseq
          %v8762 = vshrl.u32 %v8761, 7
          %v8763 = vsub.s32 0, %v8762
          %v8764 = vrot.slane %v8760, %v8763
          %v8765 = vmul.f32 %v8757, %v8764
          %v8766 = vmul.f32 %v8758, %v8764
          %v8767 = vpack.c.bf16 %v8766, %v8765
          %v8768 = vld [vmem:[%s11] sm:$0xf]
          %v8769 = vld [vmem:[%s11 + $0x4] sm:$0xf]
          %v8770 = vld [vmem:[%s11 + $0x8] sm:$0xf]
          %v8771 = vld [vmem:[%s11 + $0xc] sm:$0xf]
          %v8772 = vld [vmem:[%s11 + $0x10] sm:$0xf]
          %v8773 = vld [vmem:[%s11 + $0x14] sm:$0xf]
          %v8774 = vld [vmem:[%s11 + $0x18] sm:$0xf]
          %v8775 = vld [vmem:[%s11 + $0x1c] sm:$0xf]
          %v8776 = vld [vmem:[%s11 + $0x20] sm:$0xf]
          %v8777 = vld [vmem:[%s11 + $0x24] sm:$0xf]
          %v8778 = vld [vmem:[%s11 + $0x28] sm:$0xf]
          %v8779 = vld [vmem:[%s11 + $0x2c] sm:$0xf]
          %v8780 = vld [vmem:[%s11 + $0x30] sm:$0xf]
          %v8781 = vld [vmem:[%s11 + $0x34] sm:$0xf]
          %v8782 = vld [vmem:[%s11 + $0x38] sm:$0xf]
          %v8783 = vld [vmem:[%s11 + $0x3c] sm:$0xf]
          %v8784 = vld [vmem:[%s12] sm:$0x1]
          %v8786 = vlaneseq
          %v8787 = vshrl.u32 %v8786, 7
          %v8788 = vsub.s32 0, %v8787
          %v8789 = vrot.slane %v8784, %v8788
          %v8807 = vunpack.c.l.b16 %v8768
          %v8808 = vunpack.c.l.b16 %v8769
          %v8809 = vunpack.c.l.b16 %v8770
          %v8810 = vunpack.c.l.b16 %v8771
          %v8811 = vunpack.c.l.b16 %v8772
          %v8812 = vunpack.c.l.b16 %v8773
          %v8813 = vunpack.c.l.b16 %v8774
          %v8814 = vunpack.c.l.b16 %v8775
          %v8815 = vunpack.c.l.b16 %v8776
          %v8816 = vunpack.c.l.b16 %v8777
          %v8817 = vunpack.c.l.b16 %v8778
          %v8818 = vunpack.c.l.b16 %v8779
          %v8819 = vunpack.c.l.b16 %v8780
          %v8820 = vunpack.c.l.b16 %v8781
          %v8821 = vunpack.c.l.b16 %v8782
          %v8822 = vunpack.c.l.b16 %v8783
          %v8823 = vpack.c.b16 %v8808, %v8807
          %v8824 = vpack.c.b16 %v8810, %v8809
          %v8825 = vpack.c.b16 %v8812, %v8811
          %v8826 = vpack.c.b16 %v8814, %v8813
          %v8827 = vpack.c.b16 %v8816, %v8815
          %v8828 = vpack.c.b16 %v8818, %v8817
          %v8829 = vpack.c.b16 %v8820, %v8819
          %v8830 = vpack.c.b16 %v8822, %v8821
          %8839 = vmatprep.subr.bf16.mxu0 0
          %8840 = vmatpush1.bf16.msra.mxu0 %v8823
          %8841 = vmatprep.subr.bf16.mxu0 0
          %8842 = vmatpush1.bf16.msra.mxu0 %v8824
          %8843 = vmatprep.subr.bf16.mxu0 0
          %8844 = vmatpush1.bf16.msra.mxu0 %v8825
          %8845 = vmatprep.subr.bf16.mxu0 0
          %8846 = vmatpush1.bf16.msra.mxu0 %v8826
          %8847 = vmatprep.subr.bf16.mxu0 0
          %8848 = vmatpush1.bf16.msra.mxu0 %v8827
          %8849 = vmatprep.subr.bf16.mxu0 0
          %8850 = vmatpush1.bf16.msra.mxu0 %v8828
          %8851 = vmatprep.subr.bf16.mxu0 0
          %8852 = vmatpush1.bf16.msra.mxu0 %v8829
          %8853 = vmatprep.subr.bf16.mxu0 0
          %8854 = vmatpush1.bf16.msra.mxu0 %v8830
          %8855 = vmatprep.subr.bf16.mxu0 0
          %8856 = vmatpush1.bf16.msra.mxu0 0
          %8857 = vmatprep.subr.bf16.mxu0 0
          %8858 = vmatpush1.bf16.msra.mxu0 0
          %8859 = vmatprep.subr.bf16.mxu0 0
          %8860 = vmatpush1.bf16.msra.mxu0 0
          %8861 = vmatprep.subr.bf16.mxu0 0
          %8862 = vmatpush1.bf16.msra.mxu0 0
          %8863 = vmatprep.subr.bf16.mxu0 0
          %8864 = vmatpush1.bf16.msra.mxu0 0
          %8865 = vmatprep.subr.bf16.mxu0 0
          %8866 = vmatpush1.bf16.msra.mxu0 0
          %8867 = vmatprep.subr.bf16.mxu0 0
          %8868 = vmatpush1.bf16.msra.mxu0 0
          %8869 = vmatprep.subr.bf16.mxu0 0
          %8870 = vmatpush1.bf16.msra.mxu0 0
          %8871 = vmatprep.mubr.bf16.mxu0 0
          %8872 = vmatmul.mubr.bf16.gmra.mrb[0].mxu0 %v8767
          %v8873 = vpop.f32.mrb[0].mxu0
          %v8874 = vadd.f32 %v8789, %v8873
          %v8875 = vpop.f32.mrb[0].mxu0
          %v8876 = vpop.f32.mrb[0].mxu0
          %v8877 = vadd.f32 %v8789, %v8876
          %v8878 = vpop.f32.mrb[0].mxu0
          %8879 = vdwg.mxu0
          %v8880 = vmin.f32 %v8874, 20.0
          %v8881 = vmin.f32 %v8877, 20.0
          %v8882 = vmul.f32 %v8880, 1.442695
          %v8883 = vpow.pop %v8882
          %v8884 = vmul.f32 %v8881, 1.442695
          %v8885 = vpow.pop %v8884
          %v8886 = vadd.f32 %v8883, 2.0
          %v8887 = vadd.f32 %v8885, 2.0
          %v8888 = vmul.f32 %v8883, %v8886
          %v8889 = vmul.f32 %v8885, %v8887
          %v8890 = vmul.f32 %v8874, %v8888
          %v8891 = vmul.f32 %v8877, %v8889
          %v8892 = vadd.f32 %v8888, 2.0
          %v8893 = vadd.f32 %v8889, 2.0
          %v8894 = vrcp.pop %v8892
          %v8895 = vrcp.pop %v8893
          %v8896 = vmul.f32 %v8890, %v8894
          %v8897 = vmul.f32 %v8891, %v8895
          %v8898 = vld [vmem:[#allocation2 + $0x4] sm:$0x1]
          %v8899 = vmul.f32 %v8898, 0.5
          %v8900 = vld [vmem:[#allocation2 + $0x5] sm:$0x1]
          %v8901 = vmul.f32 %v8900, 0.5
          %v8902 = vmul.f32 %v8899, %v8899
          %v8903 = vsub.f32 %v8901, %v8902
          %v8904 = vmax.f32 %v8903, 0.0
          %v8905 = vlaneseq
          %v8906 = vshrl.u32 %v8905, 7
          %v8907 = vsub.s32 0, %v8906
          %v8908 = vrot.slane %v8899, %v8907
          %v8909 = vsub.f32 %v8896, %v8908
          %v8910 = vsub.f32 %v8897, %v8908
          %v8911 = vadd.f32 %v8904, 1e-05
          %v8912 = vrsqrt.pop %v8911
          %v8913 = vlaneseq
          %v8914 = vshrl.u32 %v8913, 7
          %v8915 = vsub.s32 0, %v8914
          %v8916 = vrot.slane %v8912, %v8915
          %v8917 = vmul.f32 %v8909, %v8916
          %v8918 = vmul.f32 %v8910, %v8916
          %v8919 = vpack.c.bf16 %v8918, %v8917
          %v8920 = vld [vmem:[%s13] sm:$0xf]
          %v8921 = vld [vmem:[%s13 + $0x4] sm:$0xf]
          %v8922 = vld [vmem:[%s13 + $0x8] sm:$0xf]
          %v8923 = vld [vmem:[%s13 + $0xc] sm:$0xf]
          %v8924 = vld [vmem:[%s13 + $0x10] sm:$0xf]
          %v8925 = vld [vmem:[%s13 + $0x14] sm:$0xf]
          %v8926 = vld [vmem:[%s13 + $0x18] sm:$0xf]
          %v8927 = vld [vmem:[%s13 + $0x1c] sm:$0xf]
          %v8928 = vld [vmem:[%s13 + $0x20] sm:$0xf]
          %v8929 = vld [vmem:[%s13 + $0x24] sm:$0xf]
          %v8930 = vld [vmem:[%s13 + $0x28] sm:$0xf]
          %v8931 = vld [vmem:[%s13 + $0x2c] sm:$0xf]
          %v8932 = vld [vmem:[%s13 + $0x30] sm:$0xf]
          %v8933 = vld [vmem:[%s13 + $0x34] sm:$0xf]
          %v8934 = vld [vmem:[%s13 + $0x38] sm:$0xf]
          %v8935 = vld [vmem:[%s13 + $0x3c] sm:$0xf]
          %v8936 = vld [vmem:[%s14] sm:$0x1]
          %v8938 = vlaneseq
          %v8939 = vshrl.u32 %v8938, 7
          %v8940 = vsub.s32 0, %v8939
          %v8941 = vrot.slane %v8936, %v8940
          %v8959 = vunpack.c.l.b16 %v8920
          %v8960 = vunpack.c.l.b16 %v8921
          %v8961 = vunpack.c.l.b16 %v8922
          %v8962 = vunpack.c.l.b16 %v8923
          %v8963 = vunpack.c.l.b16 %v8924
          %v8964 = vunpack.c.l.b16 %v8925
          %v8965 = vunpack.c.l.b16 %v8926
          %v8966 = vunpack.c.l.b16 %v8927
          %v8967 = vunpack.c.l.b16 %v8928
          %v8968 = vunpack.c.l.b16 %v8929
          %v8969 = vunpack.c.l.b16 %v8930
          %v8970 = vunpack.c.l.b16 %v8931
          %v8971 = vunpack.c.l.b16 %v8932
          %v8972 = vunpack.c.l.b16 %v8933
          %v8973 = vunpack.c.l.b16 %v8934
          %v8974 = vunpack.c.l.b16 %v8935
          %v8975 = vpack.c.b16 %v8960, %v8959
          %v8976 = vpack.c.b16 %v8962, %v8961
          %v8977 = vpack.c.b16 %v8964, %v8963
          %v8978 = vpack.c.b16 %v8966, %v8965
          %v8979 = vpack.c.b16 %v8968, %v8967
          %v8980 = vpack.c.b16 %v8970, %v8969
          %v8981 = vpack.c.b16 %v8972, %v8971
          %v8982 = vpack.c.b16 %v8974, %v8973
          %8991 = vmatprep.subr.bf16.mxu0 0
          %8992 = vmatpush1.bf16.msra.mxu0 %v8975
          %8993 = vmatprep.subr.bf16.mxu0 0
          %8994 = vmatpush1.bf16.msra.mxu0 %v8976
          %8995 = vmatprep.subr.bf16.mxu0 0
          %8996 = vmatpush1.bf16.msra.mxu0 %v8977
          %8997 = vmatprep.subr.bf16.mxu0 0
          %8998 = vmatpush1.bf16.msra.mxu0 %v8978
          %8999 = vmatprep.subr.bf16.mxu0 0
          %9000 = vmatpush1.bf16.msra.mxu0 %v8979
          %9001 = vmatprep.subr.bf16.mxu0 0
          %9002 = vmatpush1.bf16.msra.mxu0 %v8980
          %9003 = vmatprep.subr.bf16.mxu0 0
          %9004 = vmatpush1.bf16.msra.mxu0 %v8981
          %9005 = vmatprep.subr.bf16.mxu0 0
          %9006 = vmatpush1.bf16.msra.mxu0 %v8982
          %9007 = vmatprep.subr.bf16.mxu0 0
          %9008 = vmatpush1.bf16.msra.mxu0 0
          %9009 = vmatprep.subr.bf16.mxu0 0
          %9010 = vmatpush1.bf16.msra.mxu0 0
          %9011 = vmatprep.subr.bf16.mxu0 0
          %9012 = vmatpush1.bf16.msra.mxu0 0
          %9013 = vmatprep.subr.bf16.mxu0 0
          %9014 = vmatpush1.bf16.msra.mxu0 0
          %9015 = vmatprep.subr.bf16.mxu0 0
          %9016 = vmatpush1.bf16.msra.mxu0 0
          %9017 = vmatprep.subr.bf16.mxu0 0
          %9018 = vmatpush1.bf16.msra.mxu0 0
          %9019 = vmatprep.subr.bf16.mxu0 0
          %9020 = vmatpush1.bf16.msra.mxu0 0
          %9021 = vmatprep.subr.bf16.mxu0 0
          %9022 = vmatpush1.bf16.msra.mxu0 0
          %9023 = vmatprep.mubr.bf16.mxu0 0
          %9024 = vmatmul.mubr.bf16.gmra.mrb[0].mxu0 %v8919
          %v9025 = vpop.f32.mrb[0].mxu0
          %v9026 = vadd.f32 %v8941, %v9025
          %v9027 = vpop.f32.mrb[0].mxu0
          %v9028 = vpop.f32.mrb[0].mxu0
          %v9029 = vadd.f32 %v8941, %v9028
          %v9030 = vpop.f32.mrb[0].mxu0
          %9031 = vdwg.mxu0
          %v9032 = vmin.f32 %v9026, 20.0
          %v9033 = vmin.f32 %v9029, 20.0
          %v9034 = vmul.f32 %v9032, 1.442695
          %v9035 = vpow.pop %v9034
          %v9036 = vmul.f32 %v9033, 1.442695
          %v9037 = vpow.pop %v9036
          %v9038 = vadd.f32 %v9035, 2.0
          %v9039 = vadd.f32 %v9037, 2.0
          %v9040 = vmul.f32 %v9035, %v9038
          %v9041 = vmul.f32 %v9037, %v9039
          %v9042 = vmul.f32 %v9026, %v9040
          %v9043 = vmul.f32 %v9029, %v9041
          %v9044 = vadd.f32 %v9040, 2.0
          %v9045 = vadd.f32 %v9041, 2.0
          %v9046 = vrcp.pop %v9044
          %v9047 = vrcp.pop %v9045
          %v9048 = vmul.f32 %v9042, %v9046
          %v9049 = vmul.f32 %v9043, %v9047
          %v9050 = vpack.c.bf16 %v9049, %v9048
          %v9051 = vld [vmem:[%s15] sm:$0xf]
          %v9052 = vld [vmem:[%s15 + $0x4] sm:$0xf]
          %v9053 = vld [vmem:[%s15 + $0x8] sm:$0xf]
          %v9054 = vld [vmem:[%s15 + $0xc] sm:$0xf]
          %v9055 = vld [vmem:[%s15 + $0x10] sm:$0xf]
          %v9056 = vld [vmem:[%s15 + $0x14] sm:$0xf]
          %v9057 = vld [vmem:[%s15 + $0x18] sm:$0xf]
          %v9058 = vld [vmem:[%s15 + $0x1c] sm:$0xf]
          %v9059 = vld [vmem:[%s15 + $0x20] sm:$0xf]
          %v9060 = vld [vmem:[%s15 + $0x24] sm:$0xf]
          %v9061 = vld [vmem:[%s15 + $0x28] sm:$0xf]
          %v9062 = vld [vmem:[%s15 + $0x2c] sm:$0xf]
          %v9063 = vld [vmem:[%s15 + $0x30] sm:$0xf]
          %v9064 = vld [vmem:[%s15 + $0x34] sm:$0xf]
          %v9065 = vld [vmem:[%s15 + $0x38] sm:$0xf]
          %v9066 = vld [vmem:[%s15 + $0x3c] sm:$0xf]
          %v9067 = vld [vmem:[%s16] sm:$0x1]
          %v9069 = vlaneseq
          %v9070 = vshrl.u32 %v9069, 7
          %v9071 = vsub.s32 0, %v9070
          %v9072 = vrot.slane %v9067, %v9071
          %v9090 = vunpack.c.l.b16 %v9051
          %v9091 = vunpack.c.l.b16 %v9052
          %v9092 = vunpack.c.l.b16 %v9053
          %v9093 = vunpack.c.l.b16 %v9054
          %v9094 = vunpack.c.l.b16 %v9055
          %v9095 = vunpack.c.l.b16 %v9056
          %v9096 = vunpack.c.l.b16 %v9057
          %v9097 = vunpack.c.l.b16 %v9058
          %v9098 = vunpack.c.l.b16 %v9059
          %v9099 = vunpack.c.l.b16 %v9060
          %v9100 = vunpack.c.l.b16 %v9061
          %v9101 = vunpack.c.l.b16 %v9062
          %v9102 = vunpack.c.l.b16 %v9063
          %v9103 = vunpack.c.l.b16 %v9064
          %v9104 = vunpack.c.l.b16 %v9065
          %v9105 = vunpack.c.l.b16 %v9066
          %v9106 = vpack.c.b16 %v9091, %v9090
          %v9107 = vpack.c.b16 %v9093, %v9092
          %v9108 = vpack.c.b16 %v9095, %v9094
          %v9109 = vpack.c.b16 %v9097, %v9096
          %v9110 = vpack.c.b16 %v9099, %v9098
          %v9111 = vpack.c.b16 %v9101, %v9100
          %v9112 = vpack.c.b16 %v9103, %v9102
          %v9113 = vpack.c.b16 %v9105, %v9104
          %9122 = vmatprep.subr.bf16.mxu0 0
          %9123 = vmatpush1.bf16.msra.mxu0 %v9106
          %9124 = vmatprep.subr.bf16.mxu0 0
          %9125 = vmatpush1.bf16.msra.mxu0 %v9107
          %9126 = vmatprep.subr.bf16.mxu0 0
          %9127 = vmatpush1.bf16.msra.mxu0 %v9108
          %9128 = vmatprep.subr.bf16.mxu0 0
          %9129 = vmatpush1.bf16.msra.mxu0 %v9109
          %9130 = vmatprep.subr.bf16.mxu0 0
          %9131 = vmatpush1.bf16.msra.mxu0 %v9110
          %9132 = vmatprep.subr.bf16.mxu0 0
          %9133 = vmatpush1.bf16.msra.mxu0 %v9111
          %9134 = vmatprep.subr.bf16.mxu0 0
          %9135 = vmatpush1.bf16.msra.mxu0 %v9112
          %9136 = vmatprep.subr.bf16.mxu0 0
          %9137 = vmatpush1.bf16.msra.mxu0 %v9113
          %9138 = vmatprep.subr.bf16.mxu0 0
          %9139 = vmatpush1.bf16.msra.mxu0 0
          %9140 = vmatprep.subr.bf16.mxu0 0
          %9141 = vmatpush1.bf16.msra.mxu0 0
          %9142 = vmatprep.subr.bf16.mxu0 0
          %9143 = vmatpush1.bf16.msra.mxu0 0
          %9144 = vmatprep.subr.bf16.mxu0 0
          %9145 = vmatpush1.bf16.msra.mxu0 0
          %9146 = vmatprep.subr.bf16.mxu0 0
          %9147 = vmatpush1.bf16.msra.mxu0 0
          %9148 = vmatprep.subr.bf16.mxu0 0
          %9149 = vmatpush1.bf16.msra.mxu0 0
          %9150 = vmatprep.subr.bf16.mxu0 0
          %9151 = vmatpush1.bf16.msra.mxu0 0
          %9152 = vmatprep.subr.bf16.mxu0 0
          %9153 = vmatpush1.bf16.msra.mxu0 0
          %9154 = vmatprep.mubr.bf16.mxu0 0
          %9155 = vmatmul.mubr.bf16.gmra.mrb[0].mxu0 %v9050
          %v9156 = vpop.f32.mrb[0].mxu0
          %v9157 = vadd.f32 %v9072, %v9156
          %v9158 = vpop.f32.mrb[0].mxu0
          %v9159 = vpop.f32.mrb[0].mxu0
          %v9160 = vadd.f32 %v9072, %v9159
          %v9161 = vpop.f32.mrb[0].mxu0
          %9162 = vdwg.mxu0
          %9163 = vst [vmem:[%s642] sm:$0xff] %v9157
          %9164 = vst [vmem:[%s642 + $0x8] sm:$0xff] %v9160
        $region116: #{text_from_image_g.1} parent=87 // pred_fallthru
          _
        %s9165 = smul.u32 2, %s35
        %p9166 = scmp.lt.s32.totalorder %s9165, 1
        %s9167 = scalar_select %p9166, %s9165, 1
        %s9168 = smul.addr %s9167, 8
        %s9169 = scalar_lea.vmem %s17, %s9168
        // Predicated region
        $region117: #{text_from_image_g.1} parent=87 // pred_check
          %p9170 = pneg %p432
        $region118: #{text_from_image_g.1} parent=87 // pred_check_branch
          %9172 = sbr.rel (%p9170) target = $region120
        $region119: #{text_from_image_g.1} parent=87 // pred_region
          %s9173 = smul.u32 2, %s35
        $region120: #{text_from_image_g.1} parent=87 // pred_fallthru
          _
        // Predicated region
        $region121: #{text_from_image_g.1} parent=87 // pred_check
          %p9174 = pneg %p432
        $region122: #{text_from_image_g.1} parent=87 // pred_check_branch
          %9176 = sbr.rel (%p9174) target = $region124
        $region123: #{text_from_image_g.1} parent=87 // pred_region
          %s9177 = smul.u32 2, %s35
          %p9178 = scmp.lt.s32.totalorder %s9177, 1
          %s9179 = scalar_select %p9178, %s9177, 1
          %s9180 = smul.addr %s9179, 8
          %s9181 = scalar_lea.vmem %s17, %s9180
        $region124: #{text_from_image_g.1} parent=87 // pred_fallthru
          _
      $region88: #{text_from_image_g.1} parent=5 // pred_fallthru
        _
      %p9182 = scmp.le.s32.totalorder 2, %s25
      // Predicated region
      $region125: #{text_from_image_g.1} parent=5 // pred_check
        %p9183 = pneg %p9182
      $region126: #{text_from_image_g.1} parent=5 // pred_check_branch
        %9185 = sbr.rel (%p9183) target = $region128
      $region127: #{text_from_image_g.1} parent=5 // pred_region
        %s9186 = ssub.s32 %s25, 2
      $region128: #{text_from_image_g.1} parent=5 // pred_fallthru
        _
    $region6: #{text_from_image_g.1} parent=1 // loop_footer
      %s29 = sadd.s32 1, %s25
    $region7: #{text_from_image_g.1} parent=1 // loop_footer_branch
      %24 = sbr.rel target = $region3
    $region8: #{text_from_image_g.1} parent=1 // loop_exit
      _
    %9187 = vsyncpa [#allocation4], 1
    %s9188 = scalar_lea.sflag [#allocation4], 1
    %9189 = vsyncpa %s9188, 1
    %9190 = vsyncpa [#allocation6], 1

</llo_original>
